<compile_context>
chip_gen: v7x
topology: tpu7x:2x2x1
jax: 0.10.0
libtpu: 0.0.40
codegen_flags: <defaults>
</compile_context>

<pallas_src>
import functools
from itertools import permutations

import jax
import jax.numpy as jnp
from jax.experimental import pallas as pl
from jax.experimental.pallas import tpu as pltpu

LOG_SIG_MIN, LOG_SIG_MAX = -20.0, 2.0


def rn_actor_kernel(x_ref,
                    w1_ref, b1_ref, w2_ref, b2_ref,          # mp_actor_1
                    w3_ref, b3_ref, w4_ref, b4_ref,          # mp_actor_2
                    wqkv_ref, bqkv_ref,                      # fused Q|K|V (Q pre-scaled by 1/sqrt(d))
                    wr_ref, br_ref, whead_ref, bhead_ref,    # rho actor (fused mean|logstd head)
                    out_ref,                                 # (B_TILE, 2*act): [mean | clamped logstd]
                    *, np_pad, n_valid, d_mp, act_dim):
    bt = out_ref.shape[0]

    def dense(h, w_ref, b_ref):
        # bf16 operands on the MXU, f32 accumulation, f32 bias add.
        return jnp.dot(h.astype(jnp.bfloat16), w_ref[...],
                       preferred_element_type=jnp.float32) + b_ref[...]

    # ---- message-passing MLPs on the flattened (B_TILE*np_pad, .) row matrix ----
    x = x_ref[...]                                            # (bt*np_pad, d_in) f32
    h = jnp.maximum(dense(x, w1_ref, b1_ref), 0.0)
    h = jnp.maximum(dense(h, w2_ref, b2_ref), 0.0)
    h = jnp.maximum(dense(h, w3_ref, b3_ref), 0.0)
    ef = jnp.maximum(dense(h, w4_ref, b4_ref), 0.0)           # (bt*np_pad, d_mp)

    # ---- fused QKV projection (Q already scaled by 1/sqrt(d) wrapper-side) ----
    qkv = dense(ef, wqkv_ref, bqkv_ref)                       # (bt*np_pad, 3*d_mp)
    q = qkv[:, 0:d_mp].reshape(bt, np_pad, d_mp)
    k = qkv[:, d_mp:2 * d_mp].reshape(bt, np_pad, d_mp)
    v = qkv[:, 2 * d_mp:3 * d_mp].reshape(bt, np_pad, d_mp)

    # ---- single-head self-attention over the (padded) edge axis ----
    scores = jax.lax.dot_general(
        q.astype(jnp.bfloat16), k.astype(jnp.bfloat16),
        (((2,), (2,)), ((0,), (0,))),
        preferred_element_type=jnp.float32)                   # (bt, np_pad, np_pad)
    key_idx = jax.lax.broadcasted_iota(jnp.int32, (1, 1, np_pad), 2)
    scores = jnp.where(key_idx < n_valid, scores, -1e30)      # mask padded key columns
    mx = jnp.max(scores, axis=-1, keepdims=True)
    e = jnp.exp(scores - mx)
    denom = jnp.sum(e, axis=-1, keepdims=True)
    attn = e * pl.reciprocal(denom, approx=True)              # (bt, np_pad, np_pad)

    # pooled = (sum over VALID query rows of attn) @ v, done as colsum + weighted sum
    # (VPU multiply + XLU sublane reduce; avoids a second batch of tiny MXU matmuls).
    qry_idx = jax.lax.broadcasted_iota(jnp.int32, (1, np_pad, 1), 1)
    qmask = (qry_idx < n_valid).astype(jnp.float32)
    colsum = jnp.sum(attn * qmask, axis=1)                    # (bt, np_pad)
    pooled = jnp.sum(colsum[:, :, None] * v, axis=1)          # (bt, d_mp)

    # ---- RhoActorDeepSet with fused mean|logstd head ----
    h2 = jnp.maximum(dense(pooled, wr_ref, br_ref), 0.0)      # (bt, hidden_rho)
    out = dense(h2, whead_ref, bhead_ref)                     # (bt, 2*act)
    lane = jax.lax.broadcasted_iota(jnp.int32, out.shape, 1)
    out_ref[...] = jnp.where(lane < act_dim, out,
                             jnp.clip(out, LOG_SIG_MIN, LOG_SIG_MAX))


def rn_actor_forward(params, inp_mp, *, b_tile=64):
    """inp_mp: (B, n_perm, d_in) float32 -> (mean, logstd), each (B, act)."""
    B, n_perm, d_in = inp_mp.shape
    act = params["wm"].shape[1]
    d_mp = params["w4"].shape[1]
    np_pad = ((n_perm + 7) // 8) * 8                          # pad edge axis to a sublane multiple
    b_tile = min(b_tile, ((B + 7) // 8) * 8)                  # don't over-tile tiny batches
    nb = (B + b_tile - 1) // b_tile
    b_pad = nb * b_tile

    # Pad batch and edge axes with zeros; padded edges are masked in-kernel, padded
    # batch rows are sliced off afterwards.
    x = jnp.pad(inp_mp.astype(jnp.float32),
                ((0, b_pad - B), (0, np_pad - n_perm), (0, 0)))
    x_flat = x.reshape(b_pad * np_pad, d_in)

    scale = 1.0 / float(d_mp) ** 0.5
    bf16 = lambda a: a.astype(jnp.bfloat16)
    wqkv = bf16(jnp.concatenate([params["wq"] * scale, params["wk"], params["wv"]], axis=1))
    bqkv = jnp.concatenate([params["bq"] * scale, params["bk"], params["bv"]], axis=1)
    whead = bf16(jnp.concatenate([params["wm"], params["ws"]], axis=1))
    bhead = jnp.concatenate([params["bm"], params["bs"]], axis=1)
    weights = [bf16(params["w1"]), params["b1"], bf16(params["w2"]), params["b2"],
               bf16(params["w3"]), params["b3"], bf16(params["w4"]), params["b4"],
               wqkv, bqkv, bf16(params["wr"]), params["br"], whead, bhead]

    in_specs = [pl.BlockSpec((b_tile * np_pad, d_in), lambda i: (i, 0))]
    # Constant index maps -> weights stay resident in VMEM across all grid steps.
    in_specs += [pl.BlockSpec(w.shape, lambda i: (0, 0)) for w in weights]
    out_specs = pl.BlockSpec((b_tile, 2 * act), lambda i: (i, 0))

    hid1 = params["w1"].shape[1]
    hid_rho = params["wr"].shape[1]
    rows = b_pad * np_pad
    flops = (2 * rows * (d_in * hid1 + hid1 * d_mp + d_mp * hid1 + hid1 * d_mp + d_mp * 3 * d_mp)
             + b_pad * (2 * np_pad * np_pad * d_mp + 4 * np_pad * d_mp)
             + 2 * b_pad * (d_mp * hid_rho + hid_rho * 2 * act))
    bytes_accessed = (int(x_flat.size) * 4
                      + sum(int(w.size) * w.dtype.itemsize for w in weights)
                      + b_pad * 2 * act * 4)
    transcendentals = b_pad * (np_pad * np_pad + np_pad)

    kern = functools.partial(rn_actor_kernel, np_pad=np_pad, n_valid=n_perm,
                             d_mp=d_mp, act_dim=act)
    out = pl.pallas_call(
        kern,
        grid_spec=pltpu.PrefetchScalarGridSpec(
            num_scalar_prefetch=0, grid=(nb,),
            in_specs=in_specs, out_specs=out_specs),
        out_shape=jax.ShapeDtypeStruct((b_pad, 2 * act), jnp.float32),
        compiler_params=pltpu.CompilerParams(dimension_semantics=("parallel",)),
        cost_estimate=pl.CostEstimate(flops=int(flops),
                                      transcendentals=int(transcendentals),
                                      bytes_accessed=int(bytes_accessed)),
    )(x_flat, *weights)
    return out[:B, :act], out[:B, act:]


def build_edge_inputs(obs, ag, g, cfg):
    """Glue: replicates RnActor.message_passing input assembly (batch-major)."""
    dim_body, dim_object = cfg["dim_body"], cfg["dim_object"]
    obs_body = obs[:, :dim_body]
    obs_objects = [obs[:, dim_body + dim_object * i: dim_body + dim_object * (i + 1)]
                   for i in range(cfg["nb_objects"])]
    delta_g = g - ag
    feats = []
    for i in range(cfg["n_permutations"]):
        s, t = cfg["edges"][i]
        feats.append(jnp.concatenate([
            obs_body,
            delta_g[:, jnp.array(cfg["predicate_ids"][i])],
            obs_objects[s][:, :3],
            obs_objects[t][:, :3],
        ], axis=-1))
    return jnp.stack(feats, axis=1)  # (B, n_perm, dim_mp_input)


def reference_forward_f32(params, inp_mp):
    """Pure-JAX f32 HIGHEST-precision reference (torch semantics)."""
    hi = jax.lax.Precision.HIGHEST

    def dense(h, w, b):
        return jnp.dot(h, w, precision=hi) + b

    h = jnp.maximum(dense(inp_mp, params["w1"], params["b1"]), 0.0)
    h = jnp.maximum(dense(h, params["w2"], params["b2"]), 0.0)
    h = jnp.maximum(dense(h, params["w3"], params["b3"]), 0.0)
    ef = jnp.maximum(dense(h, params["w4"], params["b4"]), 0.0)
    q = dense(ef, params["wq"], params["bq"])
    k = dense(ef, params["wk"], params["bk"])
    v = dense(ef, params["wv"], params["bv"])
    d = ef.shape[-1]
    scores = jnp.einsum("bnd,bmd->bnm", q, k, precision=hi) / (float(d) ** 0.5)
    attn = jax.nn.softmax(scores, axis=-1)
    pooled = jnp.einsum("bnm,bmd->bnd", attn, v, precision=hi).sum(axis=-2)
    h2 = jnp.maximum(dense(pooled, params["wr"], params["br"]), 0.0)
    mean = dense(h2, params["wm"], params["bm"])
    logstd = jnp.clip(dense(h2, params["ws"], params["bs"]), LOG_SIG_MIN, LOG_SIG_MAX)
    return mean, logstd


def reference_forward_matched(params, inp_mp):
    """Reference mirroring the kernel's numerics (bf16 MXU operands, f32 accumulation,
    1/sqrt(d) folded into Q weights) on the unpadded 6-edge problem."""
    d_mp = params["w4"].shape[1]
    scale = 1.0 / float(d_mp) ** 0.5

    def dense(h, w, b):
        return jnp.dot(h.astype(jnp.bfloat16), w.astype(jnp.bfloat16),
                       preferred_element_type=jnp.float32) + b

    h = jnp.maximum(dense(inp_mp, params["w1"], params["b1"]), 0.0)
    h = jnp.maximum(dense(h, params["w2"], params["b2"]), 0.0)
    h = jnp.maximum(dense(h, params["w3"], params["b3"]), 0.0)
    ef = jnp.maximum(dense(h, params["w4"], params["b4"]), 0.0)
    q = dense(ef, params["wq"] * scale, params["bq"] * scale)
    k = dense(ef, params["wk"], params["bk"])
    v = dense(ef, params["wv"], params["bv"])
    scores = jnp.einsum("bnd,bmd->bnm", q.astype(jnp.bfloat16), k.astype(jnp.bfloat16),
                        preferred_element_type=jnp.float32)
    attn = jax.nn.softmax(scores, axis=-1)
    pooled = jnp.einsum("bnm,bmd->bnd", attn, v).sum(axis=-2)
    h2 = jnp.maximum(dense(pooled, params["wr"], params["br"]), 0.0)
    mean = dense(h2, params["wm"], params["bm"])
    logstd = jnp.clip(dense(h2, params["ws"], params["bs"]), LOG_SIG_MIN, LOG_SIG_MAX)
    return mean, logstd


def init_linear(key, fan_in, fan_out):
    """Deterministic PyTorch-default-style init; W stored as (in, out), bias as (1, out)."""
    kw, kb = jax.random.split(key)
    bound = 1.0 / (fan_in ** 0.5)
    w = jax.random.uniform(kw, (fan_in, fan_out), jnp.float32, -bound, bound)
    b = jax.random.uniform(kb, (1, fan_out), jnp.float32, -bound, bound)
    return w, b


if __name__ == "__main__":
    # ---- small, self-consistent configuration ----
    nb_objects = 3
    edges = list(permutations(range(nb_objects), 2))          # 6 directed edges
    n_perm = nb_objects * (nb_objects - 1)                     # 6
    dim_body, dim_object = 10, 15
    dim_g = 9
    predicate_ids = [[i % dim_g, (i + 3) % dim_g] for i in range(n_perm)]
    dim_mp_input = dim_body + len(predicate_ids[0]) + 3 + 3    # 18
    dim_mp_output = 32
    hidden_mp = 256
    hidden_rho = 256
    dim_rho_actor_output = 4                                   # action dim
    B = 128                                                    # 2 grid blocks at b_tile=64
    B_TILE = 64

    cfg = dict(nb_objects=nb_objects, edges=edges, n_permutations=n_perm,
               dim_body=dim_body, dim_object=dim_object, predicate_ids=predicate_ids)

    key = jax.random.PRNGKey(0)
    keys = jax.random.split(key, 13)

    params = {}
    params["w1"], params["b1"] = init_linear(keys[0], dim_mp_input, hidden_mp)
    params["w2"], params["b2"] = init_linear(keys[1], hidden_mp, dim_mp_output)
    params["w3"], params["b3"] = init_linear(keys[2], dim_mp_output, hidden_mp)
    params["w4"], params["b4"] = init_linear(keys[3], hidden_mp, dim_mp_output)
    params["wq"], params["bq"] = init_linear(keys[4], dim_mp_output, dim_mp_output)
    params["wk"], params["bk"] = init_linear(keys[5], dim_mp_output, dim_mp_output)
    params["wv"], params["bv"] = init_linear(keys[6], dim_mp_output, dim_mp_output)
    params["wr"], params["br"] = init_linear(keys[7], dim_mp_output, hidden_rho)
    params["wm"], params["bm"] = init_linear(keys[8], hidden_rho, dim_rho_actor_output)
    params["ws"], params["bs"] = init_linear(keys[9], hidden_rho, dim_rho_actor_output)

    obs = jax.random.normal(keys[10], (B, dim_body + nb_objects * dim_object), jnp.float32)
    ag = jax.random.uniform(keys[11], (B, dim_g), jnp.float32)
    g = jax.random.uniform(keys[12], (B, dim_g), jnp.float32)

    inp_mp = build_edge_inputs(obs, ag, g, cfg)                # (B, n_perm, dim_mp_input)
    assert inp_mp.shape == (B, n_perm, dim_mp_input)

    mean, logstd = rn_actor_forward(params, inp_mp, b_tile=B_TILE)
    jax.block_until_ready((mean, logstd))
    assert mean.shape == (B, dim_rho_actor_output)
    assert logstd.shape == (B, dim_rho_actor_output)

    # primary correctness check: kernel logic (padding/masking/fusion/pooling) vs.
    # a pure-JAX reference that uses the same bf16-operand matmul numerics.
    mean_m, logstd_m = reference_forward_matched(params, inp_mp)
    assert jnp.allclose(mean, mean_m, atol=5e-3, rtol=5e-3)
    assert jnp.allclose(logstd, logstd_m, atol=5e-3, rtol=5e-3)

    # secondary smoke check: bf16-operand kernel vs. full-f32 reference.
    mean_f, logstd_f = reference_forward_f32(params, inp_mp)
    assert jnp.allclose(mean, mean_f, atol=5e-2, rtol=5e-2)
    assert jnp.allclose(logstd, logstd_f, atol=5e-2, rtol=5e-2)

    print("KERNEL_OK")
</pallas_src>

<mosaic_0001>
module attributes {stable_mosaic.version = 11 : i64} {
  func.func @rn_actor_kernel(%arg0: i32, %arg1: memref<512x18xf32, #tpu.memory_space<vmem>>, %arg2: memref<18x256xbf16, #tpu.memory_space<vmem>>, %arg3: memref<1x256xf32, #tpu.memory_space<vmem>>, %arg4: memref<256x32xbf16, #tpu.memory_space<vmem>>, %arg5: memref<1x32xf32, #tpu.memory_space<vmem>>, %arg6: memref<32x256xbf16, #tpu.memory_space<vmem>>, %arg7: memref<1x256xf32, #tpu.memory_space<vmem>>, %arg8: memref<256x32xbf16, #tpu.memory_space<vmem>>, %arg9: memref<1x32xf32, #tpu.memory_space<vmem>>, %arg10: memref<32x96xbf16, #tpu.memory_space<vmem>>, %arg11: memref<1x96xf32, #tpu.memory_space<vmem>>, %arg12: memref<32x256xbf16, #tpu.memory_space<vmem>>, %arg13: memref<1x256xf32, #tpu.memory_space<vmem>>, %arg14: memref<256x8xbf16, #tpu.memory_space<vmem>>, %arg15: memref<1x8xf32, #tpu.memory_space<vmem>>, %arg16: memref<64x8xf32, #tpu.memory_space<vmem>>) attributes {dimension_semantics = [#tpu.dimension_semantics<parallel>], iteration_bounds = array<i64: 2>, scalar_prefetch = 0 : i64, scratch_operands = 0 : i64, tpu.core_type = #tpu.core_type<tc>, window_params = [{transform_indices = @transform_0, window_bounds = array<i64: 512, 18>}, {pipeline_mode = #tpu.pipeline_mode<synchronous>, transform_indices = @transform_1, window_bounds = array<i64: 18, 256>}, {pipeline_mode = #tpu.pipeline_mode<synchronous>, transform_indices = @transform_2, window_bounds = array<i64: 1, 256>}, {pipeline_mode = #tpu.pipeline_mode<synchronous>, transform_indices = @transform_3, window_bounds = array<i64: 256, 32>}, {pipeline_mode = #tpu.pipeline_mode<synchronous>, transform_indices = @transform_4, window_bounds = array<i64: 1, 32>}, {pipeline_mode = #tpu.pipeline_mode<synchronous>, transform_indices = @transform_5, window_bounds = array<i64: 32, 256>}, {pipeline_mode = #tpu.pipeline_mode<synchronous>, transform_indices = @transform_6, window_bounds = array<i64: 1, 256>}, {pipeline_mode = #tpu.pipeline_mode<synchronous>, transform_indices = @transform_7, window_bounds = array<i64: 256, 32>}, {pipeline_mode = #tpu.pipeline_mode<synchronous>, transform_indices = @transform_8, window_bounds = array<i64: 1, 32>}, {pipeline_mode = #tpu.pipeline_mode<synchronous>, transform_indices = @transform_9, window_bounds = array<i64: 32, 96>}, {pipeline_mode = #tpu.pipeline_mode<synchronous>, transform_indices = @transform_10, window_bounds = array<i64: 1, 96>}, {pipeline_mode = #tpu.pipeline_mode<synchronous>, transform_indices = @transform_11, window_bounds = array<i64: 32, 256>}, {pipeline_mode = #tpu.pipeline_mode<synchronous>, transform_indices = @transform_12, window_bounds = array<i64: 1, 256>}, {pipeline_mode = #tpu.pipeline_mode<synchronous>, transform_indices = @transform_13, window_bounds = array<i64: 256, 8>}, {pipeline_mode = #tpu.pipeline_mode<synchronous>, transform_indices = @transform_14, window_bounds = array<i64: 1, 8>}, {transform_indices = @transform_15, window_bounds = array<i64: 64, 8>}]} {
    %c0 = arith.constant 0 : index
    %c0_0 = arith.constant 0 : index
    %0 = vector.load %arg1[%c0, %c0_0] : memref<512x18xf32, #tpu.memory_space<vmem>>, vector<512x18xf32>
    %1 = arith.truncf %0 : vector<512x18xf32> to vector<512x18xbf16>
    %c0_1 = arith.constant 0 : index
    %c0_2 = arith.constant 0 : index
    %2 = vector.load %arg2[%c0_1, %c0_2] : memref<18x256xbf16, #tpu.memory_space<vmem>>, vector<18x256xbf16>
    %cst = arith.constant dense<0.000000e+00> : vector<512x256xf32>
    %3 = tpu.matmul %1, %2, %cst {dimension_numbers = #tpu.dot_dimension_numbers<[1], [0], [0], [1], [0, 0, 1, 1], [], []>} : vector<512x18xbf16>, vector<18x256xbf16>, vector<512x256xf32> -> vector<512x256xf32>
    %c0_3 = arith.constant 0 : index
    %c0_4 = arith.constant 0 : index
    %4 = vector.load %arg3[%c0_3, %c0_4] : memref<1x256xf32, #tpu.memory_space<vmem>>, vector<1x256xf32>
    %5 = vector.broadcast %4 : vector<1x256xf32> to vector<512x256xf32>
    %6 = arith.addf %3, %5 : vector<512x256xf32>
    %cst_5 = arith.constant 0.000000e+00 : f32
    %7 = vector.broadcast %cst_5 : f32 to vector<512x256xf32>
    %8 = arith.maximumf %6, %7 : vector<512x256xf32>
    %9 = arith.truncf %8 : vector<512x256xf32> to vector<512x256xbf16>
    %c0_6 = arith.constant 0 : index
    %c0_7 = arith.constant 0 : index
    %10 = vector.load %arg4[%c0_6, %c0_7] : memref<256x32xbf16, #tpu.memory_space<vmem>>, vector<256x32xbf16>
    %cst_8 = arith.constant dense<0.000000e+00> : vector<512x32xf32>
    %11 = tpu.matmul %9, %10, %cst_8 {dimension_numbers = #tpu.dot_dimension_numbers<[1], [0], [0], [1], [0, 0, 1, 1], [], []>} : vector<512x256xbf16>, vector<256x32xbf16>, vector<512x32xf32> -> vector<512x32xf32>
    %c0_9 = arith.constant 0 : index
    %c0_10 = arith.constant 0 : index
    %12 = vector.load %arg5[%c0_9, %c0_10] : memref<1x32xf32, #tpu.memory_space<vmem>>, vector<1x32xf32>
    %13 = vector.broadcast %12 : vector<1x32xf32> to vector<512x32xf32>
    %14 = arith.addf %11, %13 : vector<512x32xf32>
    %cst_11 = arith.constant 0.000000e+00 : f32
    %15 = vector.broadcast %cst_11 : f32 to vector<512x32xf32>
    %16 = arith.maximumf %14, %15 : vector<512x32xf32>
    %17 = arith.truncf %16 : vector<512x32xf32> to vector<512x32xbf16>
    %c0_12 = arith.constant 0 : index
    %c0_13 = arith.constant 0 : index
    %18 = vector.load %arg6[%c0_12, %c0_13] : memref<32x256xbf16, #tpu.memory_space<vmem>>, vector<32x256xbf16>
    %cst_14 = arith.constant dense<0.000000e+00> : vector<512x256xf32>
    %19 = tpu.matmul %17, %18, %cst_14 {dimension_numbers = #tpu.dot_dimension_numbers<[1], [0], [0], [1], [0, 0, 1, 1], [], []>} : vector<512x32xbf16>, vector<32x256xbf16>, vector<512x256xf32> -> vector<512x256xf32>
    %c0_15 = arith.constant 0 : index
    %c0_16 = arith.constant 0 : index
    %20 = vector.load %arg7[%c0_15, %c0_16] : memref<1x256xf32, #tpu.memory_space<vmem>>, vector<1x256xf32>
    %21 = vector.broadcast %20 : vector<1x256xf32> to vector<512x256xf32>
    %22 = arith.addf %19, %21 : vector<512x256xf32>
    %cst_17 = arith.constant 0.000000e+00 : f32
    %23 = vector.broadcast %cst_17 : f32 to vector<512x256xf32>
    %24 = arith.maximumf %22, %23 : vector<512x256xf32>
    %25 = arith.truncf %24 : vector<512x256xf32> to vector<512x256xbf16>
    %c0_18 = arith.constant 0 : index
    %c0_19 = arith.constant 0 : index
    %26 = vector.load %arg8[%c0_18, %c0_19] : memref<256x32xbf16, #tpu.memory_space<vmem>>, vector<256x32xbf16>
    %cst_20 = arith.constant dense<0.000000e+00> : vector<512x32xf32>
    %27 = tpu.matmul %25, %26, %cst_20 {dimension_numbers = #tpu.dot_dimension_numbers<[1], [0], [0], [1], [0, 0, 1, 1], [], []>} : vector<512x256xbf16>, vector<256x32xbf16>, vector<512x32xf32> -> vector<512x32xf32>
    %c0_21 = arith.constant 0 : index
    %c0_22 = arith.constant 0 : index
    %28 = vector.load %arg9[%c0_21, %c0_22] : memref<1x32xf32, #tpu.memory_space<vmem>>, vector<1x32xf32>
    %29 = vector.broadcast %28 : vector<1x32xf32> to vector<512x32xf32>
    %30 = arith.addf %27, %29 : vector<512x32xf32>
    %cst_23 = arith.constant 0.000000e+00 : f32
    %31 = vector.broadcast %cst_23 : f32 to vector<512x32xf32>
    %32 = arith.maximumf %30, %31 : vector<512x32xf32>
    %33 = arith.truncf %32 : vector<512x32xf32> to vector<512x32xbf16>
    %c0_24 = arith.constant 0 : index
    %c0_25 = arith.constant 0 : index
    %34 = vector.load %arg10[%c0_24, %c0_25] : memref<32x96xbf16, #tpu.memory_space<vmem>>, vector<32x96xbf16>
    %cst_26 = arith.constant dense<0.000000e+00> : vector<512x96xf32>
    %35 = tpu.matmul %33, %34, %cst_26 {dimension_numbers = #tpu.dot_dimension_numbers<[1], [0], [0], [1], [0, 0, 1, 1], [], []>} : vector<512x32xbf16>, vector<32x96xbf16>, vector<512x96xf32> -> vector<512x96xf32>
    %c0_27 = arith.constant 0 : index
    %c0_28 = arith.constant 0 : index
    %36 = vector.load %arg11[%c0_27, %c0_28] : memref<1x96xf32, #tpu.memory_space<vmem>>, vector<1x96xf32>
    %37 = vector.broadcast %36 : vector<1x96xf32> to vector<512x96xf32>
    %38 = arith.addf %35, %37 : vector<512x96xf32>
    %39 = vector.extract_strided_slice %38 {offsets = [0, 0], sizes = [512, 32], strides = [1, 1]} : vector<512x96xf32> to vector<512x32xf32>
    %40 = vector.shape_cast %39 : vector<512x32xf32> to vector<64x8x32xf32>
    %41 = vector.extract_strided_slice %38 {offsets = [0, 32], sizes = [512, 32], strides = [1, 1]} : vector<512x96xf32> to vector<512x32xf32>
    %42 = vector.shape_cast %41 : vector<512x32xf32> to vector<64x8x32xf32>
    %43 = vector.extract_strided_slice %38 {offsets = [0, 64], sizes = [512, 32], strides = [1, 1]} : vector<512x96xf32> to vector<512x32xf32>
    %44 = vector.shape_cast %43 : vector<512x32xf32> to vector<64x8x32xf32>
    %45 = arith.truncf %40 : vector<64x8x32xf32> to vector<64x8x32xbf16>
    %46 = arith.truncf %42 : vector<64x8x32xf32> to vector<64x8x32xbf16>
    %cst_29 = arith.constant dense<0.000000e+00> : vector<64x8x8xf32>
    %47 = tpu.matmul %45, %46, %cst_29 {dimension_numbers = #tpu.dot_dimension_numbers<[2], [2], [1], [1], [0, 0, 0, 1, 1, 1], [0], [0]>} : vector<64x8x32xbf16>, vector<64x8x32xbf16>, vector<64x8x8xf32> -> vector<64x8x8xf32>
    %48 = tpu.iota {dimensions = array<i32: 2>} : vector<1x1x8xi32>
    %c6_i32 = arith.constant 6 : i32
    %49 = vector.broadcast %c6_i32 : i32 to vector<1x1x8xi32>
    %50 = arith.cmpi slt, %48, %49 : vector<1x1x8xi32>
    %cst_30 = arith.constant -1.000000e+30 : f32
    %51 = vector.shape_cast %50 : vector<1x1x8xi1> to vector<1x1x8xi1>
    %52 = vector.broadcast %51 : vector<1x1x8xi1> to vector<64x8x8xi1>
    %53 = vector.broadcast %cst_30 : f32 to vector<64x8x8xf32>
    %54 = arith.select %52, %47, %53 : vector<64x8x8xi1>, vector<64x8x8xf32>
    %cst_31 = arith.constant dense<0xFF800000> : vector<64x8xf32>
    %55 = vector.multi_reduction <maximumf>, %54, %cst_31 [2] : vector<64x8x8xf32> to vector<64x8xf32>
    %56 = vector.shape_cast %55 : vector<64x8xf32> to vector<64x8x1xf32>
    %57 = vector.broadcast %56 : vector<64x8x1xf32> to vector<64x8x8xf32>
    %58 = arith.subf %54, %57 : vector<64x8x8xf32>
    %59 = math.exp %58 : vector<64x8x8xf32>
    %cst_32 = arith.constant dense<0.000000e+00> : vector<64x8xf32>
    %60 = vector.multi_reduction <add>, %59, %cst_32 [2] : vector<64x8x8xf32> to vector<64x8xf32>
    %61 = vector.shape_cast %60 : vector<64x8xf32> to vector<64x8x1xf32>
    %62 = tpu.reciprocal %61 {approx = true} : vector<64x8x1xf32> -> vector<64x8x1xf32>
    %63 = vector.broadcast %62 : vector<64x8x1xf32> to vector<64x8x8xf32>
    %64 = arith.mulf %59, %63 : vector<64x8x8xf32>
    %65 = tpu.iota {dimensions = array<i32: 1>} : vector<1x8x1xi32>
    %c6_i32_33 = arith.constant 6 : i32
    %66 = vector.broadcast %c6_i32_33 : i32 to vector<1x8x1xi32>
    %67 = arith.cmpi slt, %65, %66 : vector<1x8x1xi32>
    %68 = arith.extui %67 : vector<1x8x1xi1> to vector<1x8x1xi32>
    %69 = arith.sitofp %68 : vector<1x8x1xi32> to vector<1x8x1xf32>
    %70 = vector.broadcast %69 : vector<1x8x1xf32> to vector<64x8x8xf32>
    %71 = arith.mulf %64, %70 : vector<64x8x8xf32>
    %cst_34 = arith.constant dense<0.000000e+00> : vector<64x8xf32>
    %72 = vector.multi_reduction <add>, %71, %cst_34 [1] : vector<64x8x8xf32> to vector<64x8xf32>
    %73 = vector.shape_cast %72 : vector<64x8xf32> to vector<64x8x1xf32>
    %74 = vector.broadcast %73 : vector<64x8x1xf32> to vector<64x8x32xf32>
    %75 = arith.mulf %74, %44 : vector<64x8x32xf32>
    %cst_35 = arith.constant dense<0.000000e+00> : vector<64x32xf32>
    %76 = vector.multi_reduction <add>, %75, %cst_35 [1] : vector<64x8x32xf32> to vector<64x32xf32>
    %77 = arith.truncf %76 : vector<64x32xf32> to vector<64x32xbf16>
    %c0_36 = arith.constant 0 : index
    %c0_37 = arith.constant 0 : index
    %78 = vector.load %arg12[%c0_36, %c0_37] : memref<32x256xbf16, #tpu.memory_space<vmem>>, vector<32x256xbf16>
    %cst_38 = arith.constant dense<0.000000e+00> : vector<64x256xf32>
    %79 = tpu.matmul %77, %78, %cst_38 {dimension_numbers = #tpu.dot_dimension_numbers<[1], [0], [0], [1], [0, 0, 1, 1], [], []>} : vector<64x32xbf16>, vector<32x256xbf16>, vector<64x256xf32> -> vector<64x256xf32>
    %c0_39 = arith.constant 0 : index
    %c0_40 = arith.constant 0 : index
    %80 = vector.load %arg13[%c0_39, %c0_40] : memref<1x256xf32, #tpu.memory_space<vmem>>, vector<1x256xf32>
    %81 = vector.broadcast %80 : vector<1x256xf32> to vector<64x256xf32>
    %82 = arith.addf %79, %81 : vector<64x256xf32>
    %cst_41 = arith.constant 0.000000e+00 : f32
    %83 = vector.broadcast %cst_41 : f32 to vector<64x256xf32>
    %84 = arith.maximumf %82, %83 : vector<64x256xf32>
    %85 = arith.truncf %84 : vector<64x256xf32> to vector<64x256xbf16>
    %c0_42 = arith.constant 0 : index
    %c0_43 = arith.constant 0 : index
    %86 = vector.load %arg14[%c0_42, %c0_43] : memref<256x8xbf16, #tpu.memory_space<vmem>>, vector<256x8xbf16>
    %cst_44 = arith.constant dense<0.000000e+00> : vector<64x8xf32>
    %87 = tpu.matmul %85, %86, %cst_44 {dimension_numbers = #tpu.dot_dimension_numbers<[1], [0], [0], [1], [0, 0, 1, 1], [], []>} : vector<64x256xbf16>, vector<256x8xbf16>, vector<64x8xf32> -> vector<64x8xf32>
    %c0_45 = arith.constant 0 : index
    %c0_46 = arith.constant 0 : index
    %88 = vector.load %arg15[%c0_45, %c0_46] : memref<1x8xf32, #tpu.memory_space<vmem>>, vector<1x8xf32>
    %89 = vector.broadcast %88 : vector<1x8xf32> to vector<64x8xf32>
    %90 = arith.addf %87, %89 : vector<64x8xf32>
    %91 = tpu.iota {dimensions = array<i32: 1>} : vector<64x8xi32>
    %c4_i32 = arith.constant 4 : i32
    %92 = vector.broadcast %c4_i32 : i32 to vector<64x8xi32>
    %93 = arith.cmpi slt, %91, %92 : vector<64x8xi32>
    %cst_47 = arith.constant -2.000000e+01 : f32
    %cst_48 = arith.constant 2.000000e+00 : f32
    %94 = vector.broadcast %cst_47 : f32 to vector<64x8xf32>
    %95 = arith.maximumf %94, %90 : vector<64x8xf32>
    %96 = vector.broadcast %cst_48 : f32 to vector<64x8xf32>
    %97 = arith.minimumf %96, %95 : vector<64x8xf32>
    %98 = arith.select %93, %90, %97 : vector<64x8xi1>, vector<64x8xf32>
    %c0_49 = arith.constant 0 : index
    %c0_50 = arith.constant 0 : index
    %99 = vector.load %arg16[%c0_49, %c0_50] : memref<64x8xf32, #tpu.memory_space<vmem>>, vector<64x8xf32>
    tpu.vector_store %arg16[%c0_49, %c0_50], %98 {strides = array<i32>} : memref<64x8xf32, #tpu.memory_space<vmem>>, vector<64x8xf32>,
    return
  }
  func.func @transform_0(%arg0: i32) -> (i32, i32) {
    %c0_i32 = arith.constant 0 : i32
    %c0_i32_0 = arith.constant 0 : i32
    return %arg0, %c0_i32 : i32, i32
  }
  func.func @transform_1(%arg0: i32) -> (i32, i32) {
    %c0_i32 = arith.constant 0 : i32
    %c0_i32_0 = arith.constant 0 : i32
    %c0_i32_1 = arith.constant 0 : i32
    return %c0_i32, %c0_i32_0 : i32, i32
  }
  func.func @transform_2(%arg0: i32) -> (i32, i32) {
    %c0_i32 = arith.constant 0 : i32
    %c0_i32_0 = arith.constant 0 : i32
    %c0_i32_1 = arith.constant 0 : i32
    return %c0_i32, %c0_i32_0 : i32, i32
  }
  func.func @transform_3(%arg0: i32) -> (i32, i32) {
    %c0_i32 = arith.constant 0 : i32
    %c0_i32_0 = arith.constant 0 : i32
    %c0_i32_1 = arith.constant 0 : i32
    return %c0_i32, %c0_i32_0 : i32, i32
  }
  func.func @transform_4(%arg0: i32) -> (i32, i32) {
    %c0_i32 = arith.constant 0 : i32
    %c0_i32_0 = arith.constant 0 : i32
    %c0_i32_1 = arith.constant 0 : i32
    return %c0_i32, %c0_i32_0 : i32, i32
  }
  func.func @transform_5(%arg0: i32) -> (i32, i32) {
    %c0_i32 = arith.constant 0 : i32
    %c0_i32_0 = arith.constant 0 : i32
    %c0_i32_1 = arith.constant 0 : i32
    return %c0_i32, %c0_i32_0 : i32, i32
  }
  func.func @transform_6(%arg0: i32) -> (i32, i32) {
    %c0_i32 = arith.constant 0 : i32
    %c0_i32_0 = arith.constant 0 : i32
    %c0_i32_1 = arith.constant 0 : i32
    return %c0_i32, %c0_i32_0 : i32, i32
  }
  func.func @transform_7(%arg0: i32) -> (i32, i32) {
    %c0_i32 = arith.constant 0 : i32
    %c0_i32_0 = arith.constant 0 : i32
    %c0_i32_1 = arith.constant 0 : i32
    return %c0_i32, %c0_i32_0 : i32, i32
  }
  func.func @transform_8(%arg0: i32) -> (i32, i32) {
    %c0_i32 = arith.constant 0 : i32
    %c0_i32_0 = arith.constant 0 : i32
    %c0_i32_1 = arith.constant 0 : i32
    return %c0_i32, %c0_i32_0 : i32, i32
  }
  func.func @transform_9(%arg0: i32) -> (i32, i32) {
    %c0_i32 = arith.constant 0 : i32
    %c0_i32_0 = arith.constant 0 : i32
    %c0_i32_1 = arith.constant 0 : i32
    return %c0_i32, %c0_i32_0 : i32, i32
  }
  func.func @transform_10(%arg0: i32) -> (i32, i32) {
    %c0_i32 = arith.constant 0 : i32
    %c0_i32_0 = arith.constant 0 : i32
    %c0_i32_1 = arith.constant 0 : i32
    return %c0_i32, %c0_i32_0 : i32, i32
  }
  func.func @transform_11(%arg0: i32) -> (i32, i32) {
    %c0_i32 = arith.constant 0 : i32
    %c0_i32_0 = arith.constant 0 : i32
    %c0_i32_1 = arith.constant 0 : i32
    return %c0_i32, %c0_i32_0 : i32, i32
  }
  func.func @transform_12(%arg0: i32) -> (i32, i32) {
    %c0_i32 = arith.constant 0 : i32
    %c0_i32_0 = arith.constant 0 : i32
    %c0_i32_1 = arith.constant 0 : i32
    return %c0_i32, %c0_i32_0 : i32, i32
  }
  func.func @transform_13(%arg0: i32) -> (i32, i32) {
    %c0_i32 = arith.constant 0 : i32
    %c0_i32_0 = arith.constant 0 : i32
    %c0_i32_1 = arith.constant 0 : i32
    return %c0_i32, %c0_i32_0 : i32, i32
  }
  func.func @transform_14(%arg0: i32) -> (i32, i32) {
    %c0_i32 = arith.constant 0 : i32
    %c0_i32_0 = arith.constant 0 : i32
    %c0_i32_1 = arith.constant 0 : i32
    return %c0_i32, %c0_i32_0 : i32, i32
  }
  func.func @transform_15(%arg0: i32) -> (i32, i32) {
    %c0_i32 = arith.constant 0 : i32
    %c0_i32_0 = arith.constant 0 : i32
    return %arg0, %c0_i32 : i32, i32
  }
}

</mosaic_0001>

<llo_original>
// kernel: tpu_custom_call.1
$region0: #{tpu_custom_call.1}
  #allocation0 [shape = 'u32[]', space=smem, size = 0x4, offset = 0x4, fixed_abs, tag = 'smem constant byte address 0x4 - core index']
  #allocation1 [shape = 'u32[144,128]{1,0:T(1,128)}', space=vmem, size = 0x12000, scoped, tag = 'internal scratch']
  %s0 = inlined_call_operand.vmem [shape: f32[1024,18], index: 0, kind: input, shape index: {}]
  %s1 = inlined_call_operand.vmem [shape: bf16[18,256], index: 1, kind: input, shape index: {}]
  %s2 = inlined_call_operand.vmem [shape: f32[1,256], index: 2, kind: input, shape index: {}]
  %s3 = inlined_call_operand.vmem [shape: bf16[256,32], index: 3, kind: input, shape index: {}]
  %s4 = inlined_call_operand.vmem [shape: f32[1,32], index: 4, kind: input, shape index: {}]
  %s5 = inlined_call_operand.vmem [shape: bf16[32,256], index: 5, kind: input, shape index: {}]
  %s6 = inlined_call_operand.vmem [shape: f32[1,256], index: 6, kind: input, shape index: {}]
  %s7 = inlined_call_operand.vmem [shape: bf16[256,32], index: 7, kind: input, shape index: {}]
  %s8 = inlined_call_operand.vmem [shape: f32[1,32], index: 8, kind: input, shape index: {}]
  %s9 = inlined_call_operand.vmem [shape: bf16[32,96], index: 9, kind: input, shape index: {}]
  %s10 = inlined_call_operand.vmem [shape: f32[1,96], index: 10, kind: input, shape index: {}]
  %s11 = inlined_call_operand.vmem [shape: bf16[32,256], index: 11, kind: input, shape index: {}]
  %s12 = inlined_call_operand.vmem [shape: f32[1,256], index: 12, kind: input, shape index: {}]
  %s13 = inlined_call_operand.vmem [shape: bf16[256,8], index: 13, kind: input, shape index: {}]
  %s14 = inlined_call_operand.vmem [shape: f32[1,8], index: 14, kind: input, shape index: {}]
  %s15 = inlined_call_operand.vmem [shape: f32[128,8], index: 15, kind: output, shape index: {}]
  %s16 = sld [smem:[#allocation0]]
  $region93: #{tpu_custom_call.1} parent=0
    _
  %s18 = ssub.s32 1, %s16
  %s19 = scalar_select 0, %s18, %s16
  loop: start=0, step=1, limit=4
  $region2: #{tpu_custom_call.1} parent=0 // loop_pre_header
    _
  $region3: #{tpu_custom_call.1} parent=0 // loop_header
    %s21 = sphi 0, %s25
    %p22 = scmp.ge.s32.totalorder %s21, 4
    %s31 = sphi 0, %s33
    %s34 = sphi 0, %s31
    %s35 = sphi 0, %s34
    %s51 = sphi 0, %s35
    %s55 = sphi 0, %s55
    %s57 = sphi 0, %s55
    %s58 = sphi 0, %s57
    %s72 = sphi 0, %s58
    %s76 = sphi 0, %s76
    %s78 = sphi 0, %s76
    %s79 = sphi 0, %s78
    %s93 = sphi 0, %s79
    %s97 = sphi 0, %s97
    %s99 = sphi 0, %s97
    %s100 = sphi 0, %s99
    %s114 = sphi 0, %s100
    %s118 = sphi 0, %s118
    %s120 = sphi 0, %s118
    %s121 = sphi 0, %s120
    %s135 = sphi 0, %s121
    %s139 = sphi 0, %s139
    %s141 = sphi 0, %s139
    %s142 = sphi 0, %s141
    %s156 = sphi 0, %s142
    %s160 = sphi 0, %s160
    %s162 = sphi 0, %s160
    %s163 = sphi 0, %s162
    %s177 = sphi 0, %s163
    %s181 = sphi 0, %s181
    %s183 = sphi 0, %s181
    %s184 = sphi 0, %s183
    %s198 = sphi 0, %s184
    %s202 = sphi 0, %s202
    %s204 = sphi 0, %s202
    %s205 = sphi 0, %s204
    %s219 = sphi 0, %s205
    %s223 = sphi 0, %s223
    %s225 = sphi 0, %s223
    %s226 = sphi 0, %s225
    %s240 = sphi 0, %s226
    %s244 = sphi 0, %s244
    %s246 = sphi 0, %s244
    %s247 = sphi 0, %s246
    %s261 = sphi 0, %s247
    %s265 = sphi 0, %s265
    %s267 = sphi 0, %s265
    %s268 = sphi 0, %s267
    %s282 = sphi 0, %s268
    %s286 = sphi 0, %s286
    %s288 = sphi 0, %s286
    %s289 = sphi 0, %s288
    %s303 = sphi 0, %s289
    %s307 = sphi 0, %s307
    %s309 = sphi 0, %s307
    %s310 = sphi 0, %s309
    %s324 = sphi 0, %s310
    %s328 = sphi 0, %s328
    %s330 = sphi 0, %s328
    %s331 = sphi 0, %s330
    %s345 = sphi 0, %s331
    %s351 = sphi 0, %s353
    %s354 = sphi 0, %s351
    %s355 = sphi 0, %s354
    %s371 = sphi 0, %s355
  $region4: #{tpu_custom_call.1} parent=0 // loop_header_branch
    %24 = sbr.rel (%p22) target = $region8
  $region5: #{tpu_custom_call.1} parent=0 // loop_body
    %s26 = ssub.s32 %s21, 1
    %s27 = ssub.s32 %s21, 2
    %s28 = sadd.s32 %s21, 1
    %s29 = ssub.s32 %s21, %s28
    %p30 = scmp.eq.s32.totalorder %s29, 0
    %s32 = sadd.s32 %s31, 1
    %s33 = scalar_select %p30, %s31, %s32
    %p36 = pneg %p30
    %p37 = scmp.eq.s32.totalorder %s21, 1
    %p38 = por %p36, %p37
    %p39 = scmp.ne.s32.totalorder %s31, %s34
    %p40 = scmp.eq.s32.totalorder %s21, 0
    %p41 = por %p39, %p40
    %p42 = scmp.ne.s32.totalorder %s31, %s34
    %p43 = scmp.eq.s32.totalorder %s26, 1
    %p44 = por %p42, %p43
    %p45 = scmp.ne.s32.totalorder %s34, %s35
    %p46 = scmp.eq.s32.totalorder %s26, 0
    %p47 = por %p45, %p46
    %p48 = scmp.ne.s32.totalorder %s34, %s35
    %p49 = scmp.eq.s32.totalorder %s27, 1
    %p50 = por %p48, %p49
    %p52 = scmp.ne.s32.totalorder %s35, %s51
    %p53 = scmp.eq.s32.totalorder %s27, 0
    %p54 = por %p52, %p53
    %s56 = sadd.s32 %s55, 1
    %p59 = scmp.eq.s32.totalorder %s21, 1
    %p60 = scmp.ne.s32.totalorder %s55, %s57
    %p61 = scmp.eq.s32.totalorder %s21, 0
    %p62 = por %p60, %p61
    %p63 = scmp.ne.s32.totalorder %s55, %s57
    %p64 = scmp.eq.s32.totalorder %s26, 1
    %p65 = por %p63, %p64
    %p66 = scmp.ne.s32.totalorder %s57, %s58
    %p67 = scmp.eq.s32.totalorder %s26, 0
    %p68 = por %p66, %p67
    %p69 = scmp.ne.s32.totalorder %s57, %s58
    %p70 = scmp.eq.s32.totalorder %s27, 1
    %p71 = por %p69, %p70
    %p73 = scmp.ne.s32.totalorder %s58, %s72
    %p74 = scmp.eq.s32.totalorder %s27, 0
    %p75 = por %p73, %p74
    %s77 = sadd.s32 %s76, 1
    %p80 = scmp.eq.s32.totalorder %s21, 1
    %p81 = scmp.ne.s32.totalorder %s76, %s78
    %p82 = scmp.eq.s32.totalorder %s21, 0
    %p83 = por %p81, %p82
    %p84 = scmp.ne.s32.totalorder %s76, %s78
    %p85 = scmp.eq.s32.totalorder %s26, 1
    %p86 = por %p84, %p85
    %p87 = scmp.ne.s32.totalorder %s78, %s79
    %p88 = scmp.eq.s32.totalorder %s26, 0
    %p89 = por %p87, %p88
    %p90 = scmp.ne.s32.totalorder %s78, %s79
    %p91 = scmp.eq.s32.totalorder %s27, 1
    %p92 = por %p90, %p91
    %p94 = scmp.ne.s32.totalorder %s79, %s93
    %p95 = scmp.eq.s32.totalorder %s27, 0
    %p96 = por %p94, %p95
    %s98 = sadd.s32 %s97, 1
    %p101 = scmp.eq.s32.totalorder %s21, 1
    %p102 = scmp.ne.s32.totalorder %s97, %s99
    %p103 = scmp.eq.s32.totalorder %s21, 0
    %p104 = por %p102, %p103
    %p105 = scmp.ne.s32.totalorder %s97, %s99
    %p106 = scmp.eq.s32.totalorder %s26, 1
    %p107 = por %p105, %p106
    %p108 = scmp.ne.s32.totalorder %s99, %s100
    %p109 = scmp.eq.s32.totalorder %s26, 0
    %p110 = por %p108, %p109
    %p111 = scmp.ne.s32.totalorder %s99, %s100
    %p112 = scmp.eq.s32.totalorder %s27, 1
    %p113 = por %p111, %p112
    %p115 = scmp.ne.s32.totalorder %s100, %s114
    %p116 = scmp.eq.s32.totalorder %s27, 0
    %p117 = por %p115, %p116
    %s119 = sadd.s32 %s118, 1
    %p122 = scmp.eq.s32.totalorder %s21, 1
    %p123 = scmp.ne.s32.totalorder %s118, %s120
    %p124 = scmp.eq.s32.totalorder %s21, 0
    %p125 = por %p123, %p124
    %p126 = scmp.ne.s32.totalorder %s118, %s120
    %p127 = scmp.eq.s32.totalorder %s26, 1
    %p128 = por %p126, %p127
    %p129 = scmp.ne.s32.totalorder %s120, %s121
    %p130 = scmp.eq.s32.totalorder %s26, 0
    %p131 = por %p129, %p130
    %p132 = scmp.ne.s32.totalorder %s120, %s121
    %p133 = scmp.eq.s32.totalorder %s27, 1
    %p134 = por %p132, %p133
    %p136 = scmp.ne.s32.totalorder %s121, %s135
    %p137 = scmp.eq.s32.totalorder %s27, 0
    %p138 = por %p136, %p137
    %s140 = sadd.s32 %s139, 1
    %p143 = scmp.eq.s32.totalorder %s21, 1
    %p144 = scmp.ne.s32.totalorder %s139, %s141
    %p145 = scmp.eq.s32.totalorder %s21, 0
    %p146 = por %p144, %p145
    %p147 = scmp.ne.s32.totalorder %s139, %s141
    %p148 = scmp.eq.s32.totalorder %s26, 1
    %p149 = por %p147, %p148
    %p150 = scmp.ne.s32.totalorder %s141, %s142
    %p151 = scmp.eq.s32.totalorder %s26, 0
    %p152 = por %p150, %p151
    %p153 = scmp.ne.s32.totalorder %s141, %s142
    %p154 = scmp.eq.s32.totalorder %s27, 1
    %p155 = por %p153, %p154
    %p157 = scmp.ne.s32.totalorder %s142, %s156
    %p158 = scmp.eq.s32.totalorder %s27, 0
    %p159 = por %p157, %p158
    %s161 = sadd.s32 %s160, 1
    %p164 = scmp.eq.s32.totalorder %s21, 1
    %p165 = scmp.ne.s32.totalorder %s160, %s162
    %p166 = scmp.eq.s32.totalorder %s21, 0
    %p167 = por %p165, %p166
    %p168 = scmp.ne.s32.totalorder %s160, %s162
    %p169 = scmp.eq.s32.totalorder %s26, 1
    %p170 = por %p168, %p169
    %p171 = scmp.ne.s32.totalorder %s162, %s163
    %p172 = scmp.eq.s32.totalorder %s26, 0
    %p173 = por %p171, %p172
    %p174 = scmp.ne.s32.totalorder %s162, %s163
    %p175 = scmp.eq.s32.totalorder %s27, 1
    %p176 = por %p174, %p175
    %p178 = scmp.ne.s32.totalorder %s163, %s177
    %p179 = scmp.eq.s32.totalorder %s27, 0
    %p180 = por %p178, %p179
    %s182 = sadd.s32 %s181, 1
    %p185 = scmp.eq.s32.totalorder %s21, 1
    %p186 = scmp.ne.s32.totalorder %s181, %s183
    %p187 = scmp.eq.s32.totalorder %s21, 0
    %p188 = por %p186, %p187
    %p189 = scmp.ne.s32.totalorder %s181, %s183
    %p190 = scmp.eq.s32.totalorder %s26, 1
    %p191 = por %p189, %p190
    %p192 = scmp.ne.s32.totalorder %s183, %s184
    %p193 = scmp.eq.s32.totalorder %s26, 0
    %p194 = por %p192, %p193
    %p195 = scmp.ne.s32.totalorder %s183, %s184
    %p196 = scmp.eq.s32.totalorder %s27, 1
    %p197 = por %p195, %p196
    %p199 = scmp.ne.s32.totalorder %s184, %s198
    %p200 = scmp.eq.s32.totalorder %s27, 0
    %p201 = por %p199, %p200
    %s203 = sadd.s32 %s202, 1
    %p206 = scmp.eq.s32.totalorder %s21, 1
    %p207 = scmp.ne.s32.totalorder %s202, %s204
    %p208 = scmp.eq.s32.totalorder %s21, 0
    %p209 = por %p207, %p208
    %p210 = scmp.ne.s32.totalorder %s202, %s204
    %p211 = scmp.eq.s32.totalorder %s26, 1
    %p212 = por %p210, %p211
    %p213 = scmp.ne.s32.totalorder %s204, %s205
    %p214 = scmp.eq.s32.totalorder %s26, 0
    %p215 = por %p213, %p214
    %p216 = scmp.ne.s32.totalorder %s204, %s205
    %p217 = scmp.eq.s32.totalorder %s27, 1
    %p218 = por %p216, %p217
    %p220 = scmp.ne.s32.totalorder %s205, %s219
    %p221 = scmp.eq.s32.totalorder %s27, 0
    %p222 = por %p220, %p221
    %s224 = sadd.s32 %s223, 1
    %p227 = scmp.eq.s32.totalorder %s21, 1
    %p228 = scmp.ne.s32.totalorder %s223, %s225
    %p229 = scmp.eq.s32.totalorder %s21, 0
    %p230 = por %p228, %p229
    %p231 = scmp.ne.s32.totalorder %s223, %s225
    %p232 = scmp.eq.s32.totalorder %s26, 1
    %p233 = por %p231, %p232
    %p234 = scmp.ne.s32.totalorder %s225, %s226
    %p235 = scmp.eq.s32.totalorder %s26, 0
    %p236 = por %p234, %p235
    %p237 = scmp.ne.s32.totalorder %s225, %s226
    %p238 = scmp.eq.s32.totalorder %s27, 1
    %p239 = por %p237, %p238
    %p241 = scmp.ne.s32.totalorder %s226, %s240
    %p242 = scmp.eq.s32.totalorder %s27, 0
    %p243 = por %p241, %p242
    %s245 = sadd.s32 %s244, 1
    %p248 = scmp.eq.s32.totalorder %s21, 1
    %p249 = scmp.ne.s32.totalorder %s244, %s246
    %p250 = scmp.eq.s32.totalorder %s21, 0
    %p251 = por %p249, %p250
    %p252 = scmp.ne.s32.totalorder %s244, %s246
    %p253 = scmp.eq.s32.totalorder %s26, 1
    %p254 = por %p252, %p253
    %p255 = scmp.ne.s32.totalorder %s246, %s247
    %p256 = scmp.eq.s32.totalorder %s26, 0
    %p257 = por %p255, %p256
    %p258 = scmp.ne.s32.totalorder %s246, %s247
    %p259 = scmp.eq.s32.totalorder %s27, 1
    %p260 = por %p258, %p259
    %p262 = scmp.ne.s32.totalorder %s247, %s261
    %p263 = scmp.eq.s32.totalorder %s27, 0
    %p264 = por %p262, %p263
    %s266 = sadd.s32 %s265, 1
    %p269 = scmp.eq.s32.totalorder %s21, 1
    %p270 = scmp.ne.s32.totalorder %s265, %s267
    %p271 = scmp.eq.s32.totalorder %s21, 0
    %p272 = por %p270, %p271
    %p273 = scmp.ne.s32.totalorder %s265, %s267
    %p274 = scmp.eq.s32.totalorder %s26, 1
    %p275 = por %p273, %p274
    %p276 = scmp.ne.s32.totalorder %s267, %s268
    %p277 = scmp.eq.s32.totalorder %s26, 0
    %p278 = por %p276, %p277
    %p279 = scmp.ne.s32.totalorder %s267, %s268
    %p280 = scmp.eq.s32.totalorder %s27, 1
    %p281 = por %p279, %p280
    %p283 = scmp.ne.s32.totalorder %s268, %s282
    %p284 = scmp.eq.s32.totalorder %s27, 0
    %p285 = por %p283, %p284
    %s287 = sadd.s32 %s286, 1
    %p290 = scmp.eq.s32.totalorder %s21, 1
    %p291 = scmp.ne.s32.totalorder %s286, %s288
    %p292 = scmp.eq.s32.totalorder %s21, 0
    %p293 = por %p291, %p292
    %p294 = scmp.ne.s32.totalorder %s286, %s288
    %p295 = scmp.eq.s32.totalorder %s26, 1
    %p296 = por %p294, %p295
    %p297 = scmp.ne.s32.totalorder %s288, %s289
    %p298 = scmp.eq.s32.totalorder %s26, 0
    %p299 = por %p297, %p298
    %p300 = scmp.ne.s32.totalorder %s288, %s289
    %p301 = scmp.eq.s32.totalorder %s27, 1
    %p302 = por %p300, %p301
    %p304 = scmp.ne.s32.totalorder %s289, %s303
    %p305 = scmp.eq.s32.totalorder %s27, 0
    %p306 = por %p304, %p305
    %s308 = sadd.s32 %s307, 1
    %p311 = scmp.eq.s32.totalorder %s21, 1
    %p312 = scmp.ne.s32.totalorder %s307, %s309
    %p313 = scmp.eq.s32.totalorder %s21, 0
    %p314 = por %p312, %p313
    %p315 = scmp.ne.s32.totalorder %s307, %s309
    %p316 = scmp.eq.s32.totalorder %s26, 1
    %p317 = por %p315, %p316
    %p318 = scmp.ne.s32.totalorder %s309, %s310
    %p319 = scmp.eq.s32.totalorder %s26, 0
    %p320 = por %p318, %p319
    %p321 = scmp.ne.s32.totalorder %s309, %s310
    %p322 = scmp.eq.s32.totalorder %s27, 1
    %p323 = por %p321, %p322
    %p325 = scmp.ne.s32.totalorder %s310, %s324
    %p326 = scmp.eq.s32.totalorder %s27, 0
    %p327 = por %p325, %p326
    %s329 = sadd.s32 %s328, 1
    %p332 = scmp.eq.s32.totalorder %s21, 1
    %p333 = scmp.ne.s32.totalorder %s328, %s330
    %p334 = scmp.eq.s32.totalorder %s21, 0
    %p335 = por %p333, %p334
    %p336 = scmp.ne.s32.totalorder %s328, %s330
    %p337 = scmp.eq.s32.totalorder %s26, 1
    %p338 = por %p336, %p337
    %p339 = scmp.ne.s32.totalorder %s330, %s331
    %p340 = scmp.eq.s32.totalorder %s26, 0
    %p341 = por %p339, %p340
    %p342 = scmp.ne.s32.totalorder %s330, %s331
    %p343 = scmp.eq.s32.totalorder %s27, 1
    %p344 = por %p342, %p343
    %p346 = scmp.ne.s32.totalorder %s331, %s345
    %p347 = scmp.eq.s32.totalorder %s27, 0
    %p348 = por %p346, %p347
    %s349 = ssub.s32 %s21, %s28
    %p350 = scmp.eq.s32.totalorder %s349, 0
    %s352 = sadd.s32 %s351, 1
    %s353 = scalar_select %p350, %s351, %s352
    %p356 = pneg %p350
    %p357 = scmp.eq.s32.totalorder %s21, 1
    %p358 = por %p356, %p357
    %p359 = scmp.ne.s32.totalorder %s351, %s354
    %p360 = scmp.eq.s32.totalorder %s21, 0
    %p361 = por %p359, %p360
    %p362 = scmp.ne.s32.totalorder %s351, %s354
    %p363 = scmp.eq.s32.totalorder %s26, 1
    %p364 = por %p362, %p363
    %p365 = scmp.ne.s32.totalorder %s354, %s355
    %p366 = scmp.eq.s32.totalorder %s26, 0
    %p367 = por %p365, %p366
    %p368 = scmp.ne.s32.totalorder %s354, %s355
    %p369 = scmp.eq.s32.totalorder %s27, 1
    %p370 = por %p368, %p369
    %p372 = scmp.ne.s32.totalorder %s355, %s371
    %p373 = scmp.eq.s32.totalorder %s27, 0
    %p374 = por %p372, %p373
    %p375 = scmp.le.s32.totalorder 1, %s21
    %p376 = scmp.lt.s32.totalorder %s21, 3
    %p377 = pnand %p375, %p376
    %p378 = pneg %p377
    // Predicated region
    $region9: #{tpu_custom_call.1} parent=5 // pred_check
      _
    $region10: #{tpu_custom_call.1} parent=5 // pred_check_branch
      %380 = sbr.rel (%p377) target = $region12
    $region11: #{tpu_custom_call.1} parent=5 // pred_region
      %s381 = ssub.s32 %s21, 1
      // Predicated region
      $region13: #{tpu_custom_call.1} parent=11 // pred_check
        %p382 = pneg %p68
      $region14: #{tpu_custom_call.1} parent=11 // pred_check_branch
        %384 = sbr.rel (%p382) target = $region16
      $region15: #{tpu_custom_call.1} parent=11 // pred_region
        _
      $region16: #{tpu_custom_call.1} parent=11 // pred_fallthru
        _
      // Predicated region
      $region17: #{tpu_custom_call.1} parent=11 // pred_check
        %p385 = pneg %p89
      $region18: #{tpu_custom_call.1} parent=11 // pred_check_branch
        %387 = sbr.rel (%p385) target = $region20
      $region19: #{tpu_custom_call.1} parent=11 // pred_region
        _
      $region20: #{tpu_custom_call.1} parent=11 // pred_fallthru
        _
      // Predicated region
      $region21: #{tpu_custom_call.1} parent=11 // pred_check
        %p388 = pneg %p110
      $region22: #{tpu_custom_call.1} parent=11 // pred_check_branch
        %390 = sbr.rel (%p388) target = $region24
      $region23: #{tpu_custom_call.1} parent=11 // pred_region
        _
      $region24: #{tpu_custom_call.1} parent=11 // pred_fallthru
        _
      // Predicated region
      $region25: #{tpu_custom_call.1} parent=11 // pred_check
        %p391 = pneg %p131
      $region26: #{tpu_custom_call.1} parent=11 // pred_check_branch
        %393 = sbr.rel (%p391) target = $region28
      $region27: #{tpu_custom_call.1} parent=11 // pred_region
        _
      $region28: #{tpu_custom_call.1} parent=11 // pred_fallthru
        _
      // Predicated region
      $region29: #{tpu_custom_call.1} parent=11 // pred_check
        %p394 = pneg %p152
      $region30: #{tpu_custom_call.1} parent=11 // pred_check_branch
        %396 = sbr.rel (%p394) target = $region32
      $region31: #{tpu_custom_call.1} parent=11 // pred_region
        _
      $region32: #{tpu_custom_call.1} parent=11 // pred_fallthru
        _
      // Predicated region
      $region33: #{tpu_custom_call.1} parent=11 // pred_check
        %p397 = pneg %p173
      $region34: #{tpu_custom_call.1} parent=11 // pred_check_branch
        %399 = sbr.rel (%p397) target = $region36
      $region35: #{tpu_custom_call.1} parent=11 // pred_region
        _
      $region36: #{tpu_custom_call.1} parent=11 // pred_fallthru
        _
      // Predicated region
      $region37: #{tpu_custom_call.1} parent=11 // pred_check
        %p400 = pneg %p194
      $region38: #{tpu_custom_call.1} parent=11 // pred_check_branch
        %402 = sbr.rel (%p400) target = $region40
      $region39: #{tpu_custom_call.1} parent=11 // pred_region
        _
      $region40: #{tpu_custom_call.1} parent=11 // pred_fallthru
        _
      // Predicated region
      $region41: #{tpu_custom_call.1} parent=11 // pred_check
        %p403 = pneg %p215
      $region42: #{tpu_custom_call.1} parent=11 // pred_check_branch
        %405 = sbr.rel (%p403) target = $region44
      $region43: #{tpu_custom_call.1} parent=11 // pred_region
        _
      $region44: #{tpu_custom_call.1} parent=11 // pred_fallthru
        _
      // Predicated region
      $region45: #{tpu_custom_call.1} parent=11 // pred_check
        %p406 = pneg %p236
      $region46: #{tpu_custom_call.1} parent=11 // pred_check_branch
        %408 = sbr.rel (%p406) target = $region48
      $region47: #{tpu_custom_call.1} parent=11 // pred_region
        _
      $region48: #{tpu_custom_call.1} parent=11 // pred_fallthru
        _
      // Predicated region
      $region49: #{tpu_custom_call.1} parent=11 // pred_check
        %p409 = pneg %p257
      $region50: #{tpu_custom_call.1} parent=11 // pred_check_branch
        %411 = sbr.rel (%p409) target = $region52
      $region51: #{tpu_custom_call.1} parent=11 // pred_region
        _
      $region52: #{tpu_custom_call.1} parent=11 // pred_fallthru
        _
      // Predicated region
      $region53: #{tpu_custom_call.1} parent=11 // pred_check
        %p412 = pneg %p278
      $region54: #{tpu_custom_call.1} parent=11 // pred_check_branch
        %414 = sbr.rel (%p412) target = $region56
      $region55: #{tpu_custom_call.1} parent=11 // pred_region
        _
      $region56: #{tpu_custom_call.1} parent=11 // pred_fallthru
        _
      // Predicated region
      $region57: #{tpu_custom_call.1} parent=11 // pred_check
        %p415 = pneg %p299
      $region58: #{tpu_custom_call.1} parent=11 // pred_check_branch
        %417 = sbr.rel (%p415) target = $region60
      $region59: #{tpu_custom_call.1} parent=11 // pred_region
        _
      $region60: #{tpu_custom_call.1} parent=11 // pred_fallthru
        _
      // Predicated region
      $region61: #{tpu_custom_call.1} parent=11 // pred_check
        %p418 = pneg %p320
      $region62: #{tpu_custom_call.1} parent=11 // pred_check_branch
        %420 = sbr.rel (%p418) target = $region64
      $region63: #{tpu_custom_call.1} parent=11 // pred_region
        _
      $region64: #{tpu_custom_call.1} parent=11 // pred_fallthru
        _
      // Predicated region
      $region65: #{tpu_custom_call.1} parent=11 // pred_check
        %p421 = pneg %p341
      $region66: #{tpu_custom_call.1} parent=11 // pred_check_branch
        %423 = sbr.rel (%p421) target = $region68
      $region67: #{tpu_custom_call.1} parent=11 // pred_region
        _
      $region68: #{tpu_custom_call.1} parent=11 // pred_fallthru
        _
    $region12: #{tpu_custom_call.1} parent=5 // pred_fallthru
      _
    %p424 = scmp.lt.s32.totalorder %s21, 2
    // Predicated region
    $region69: #{tpu_custom_call.1} parent=5 // pred_check
      %p425 = pneg %p424
    $region70: #{tpu_custom_call.1} parent=5 // pred_check_branch
      %427 = sbr.rel (%p425) target = $region72
    $region71: #{tpu_custom_call.1} parent=5 // pred_region
      // Predicated region
      $region73: #{tpu_custom_call.1} parent=71 // pred_check
        %p428 = pneg %p41
      $region74: #{tpu_custom_call.1} parent=71 // pred_check_branch
        %430 = sbr.rel (%p428) target = $region76
      $region75: #{tpu_custom_call.1} parent=71 // pred_region
        %s431 = smul.u32 64, %s21
        %p432 = scmp.lt.s32.totalorder %s431, 127
        %s433 = scalar_select %p432, %s431, 127
        %s434 = smul.addr %s433, 8
        %s435 = scalar_lea.vmem %s0, %s434
        %s436 = smul.u32 64, %s21
      $region76: #{tpu_custom_call.1} parent=71 // pred_fallthru
        _
    $region72: #{tpu_custom_call.1} parent=5 // pred_fallthru
      _
    %p437 = scmp.le.s32.totalorder 1, %s21
    %p438 = scmp.lt.s32.totalorder %s21, 3
    %p439 = pnand %p437, %p438
    %p440 = pneg %p439
    // Predicated region
    $region77: #{tpu_custom_call.1} parent=5 // pred_check
      _
    $region78: #{tpu_custom_call.1} parent=5 // pred_check_branch
      %442 = sbr.rel (%p439) target = $region80
    $region79: #{tpu_custom_call.1} parent=5 // pred_region
      %s443 = ssub.s32 %s21, 1
      %s444 = smul.u32 64, %s26
      %p445 = scmp.lt.s32.totalorder %s444, 127
      %s446 = scalar_select %p445, %s444, 127
      %s447 = smul.addr %s446, 8
      %s448 = scalar_lea.vmem %s0, %s447
      %p449 = pneg %p47
      %p450 = pneg %p44
      %p451 = pneg %p68
      %p452 = pneg %p65
      %p453 = pneg %p89
      %p454 = pneg %p86
      %p455 = pneg %p110
      %p456 = pneg %p107
      %p457 = pneg %p131
      %p458 = pneg %p128
      %p459 = pneg %p152
      %p460 = pneg %p149
      %p461 = pneg %p173
      %p462 = pneg %p170
      %p463 = pneg %p194
      %p464 = pneg %p191
      %p465 = pneg %p215
      %p466 = pneg %p212
      %p467 = pneg %p236
      %p468 = pneg %p233
      %p469 = pneg %p257
      %p470 = pneg %p254
      %p471 = pneg %p278
      %p472 = pneg %p275
      %p473 = pneg %p299
      %p474 = pneg %p296
      %p475 = pneg %p320
      %p476 = pneg %p317
      %p477 = pneg %p341
      %p478 = pneg %p338
      %p479 = pneg %p367
      %p480 = pneg %p364
      %s481 = smul.u32 8, %s26
      %p482 = scmp.lt.s32.totalorder %s481, 15
      %s483 = scalar_select %p482, %s481, 15
      %s484 = smul.addr %s483, 8
      %s485 = scalar_lea.vmem %s15, %s484
      %s486 = smul.u32 64, %s26
      %p487 = scmp.lt.s32.totalorder %s486, 127
      %s488 = scalar_select %p487, %s486, 127
      %s489 = smul.addr %s488, 8
      %s490 = scalar_lea.vmem %s0, %s489
      %s491 = smul.u32 64, %s26
      %s492 = smul.u32 8, %s26
      %p493 = scmp.lt.s32.totalorder %s492, 15
      %s494 = scalar_select %p493, %s492, 15
      %s495 = smul.addr %s494, 8
      %s496 = scalar_lea.vmem %s15, %s495
      %s497 = smul.u32 8, %s26
      %v499 = vld [vmem:[%s490] sm:$0xff]
      %v500 = vld [vmem:[%s490 + $0x8] sm:$0xff]
      %v501 = vld [vmem:[%s490 + $0x10] sm:$0xff]
      %v502 = vld [vmem:[%s490 + $0x18] sm:$0xff]
      %v503 = vld [vmem:[%s490 + $0x20] sm:$0xff]
      %v504 = vld [vmem:[%s490 + $0x28] sm:$0xff]
      %v505 = vld [vmem:[%s490 + $0x30] sm:$0xff]
      %v506 = vld [vmem:[%s490 + $0x38] sm:$0xff]
      %v507 = vld [vmem:[%s490 + $0x40] sm:$0xff]
      %v508 = vld [vmem:[%s490 + $0x48] sm:$0xff]
      %v509 = vld [vmem:[%s490 + $0x50] sm:$0xff]
      %v510 = vld [vmem:[%s490 + $0x58] sm:$0xff]
      %v511 = vld [vmem:[%s490 + $0x60] sm:$0xff]
      %v512 = vld [vmem:[%s490 + $0x68] sm:$0xff]
      %v513 = vld [vmem:[%s490 + $0x70] sm:$0xff]
      %v514 = vld [vmem:[%s490 + $0x78] sm:$0xff]
      %v515 = vld [vmem:[%s490 + $0x80] sm:$0xff]
      %v516 = vld [vmem:[%s490 + $0x88] sm:$0xff]
      %v517 = vld [vmem:[%s490 + $0x90] sm:$0xff]
      %v518 = vld [vmem:[%s490 + $0x98] sm:$0xff]
      %v519 = vld [vmem:[%s490 + $0xa0] sm:$0xff]
      %v520 = vld [vmem:[%s490 + $0xa8] sm:$0xff]
      %v521 = vld [vmem:[%s490 + $0xb0] sm:$0xff]
      %v522 = vld [vmem:[%s490 + $0xb8] sm:$0xff]
      %v523 = vld [vmem:[%s490 + $0xc0] sm:$0xff]
      %v524 = vld [vmem:[%s490 + $0xc8] sm:$0xff]
      %v525 = vld [vmem:[%s490 + $0xd0] sm:$0xff]
      %v526 = vld [vmem:[%s490 + $0xd8] sm:$0xff]
      %v527 = vld [vmem:[%s490 + $0xe0] sm:$0xff]
      %v528 = vld [vmem:[%s490 + $0xe8] sm:$0xff]
      %v529 = vld [vmem:[%s490 + $0xf0] sm:$0xff]
      %v530 = vld [vmem:[%s490 + $0xf8] sm:$0xff]
      %v531 = vld [vmem:[%s490 + $0x100] sm:$0xff]
      %v532 = vld [vmem:[%s490 + $0x108] sm:$0xff]
      %v533 = vld [vmem:[%s490 + $0x110] sm:$0xff]
      %v534 = vld [vmem:[%s490 + $0x118] sm:$0xff]
      %v535 = vld [vmem:[%s490 + $0x120] sm:$0xff]
      %v536 = vld [vmem:[%s490 + $0x128] sm:$0xff]
      %v537 = vld [vmem:[%s490 + $0x130] sm:$0xff]
      %v538 = vld [vmem:[%s490 + $0x138] sm:$0xff]
      %v539 = vld [vmem:[%s490 + $0x140] sm:$0xff]
      %v540 = vld [vmem:[%s490 + $0x148] sm:$0xff]
      %v541 = vld [vmem:[%s490 + $0x150] sm:$0xff]
      %v542 = vld [vmem:[%s490 + $0x158] sm:$0xff]
      %v543 = vld [vmem:[%s490 + $0x160] sm:$0xff]
      %v544 = vld [vmem:[%s490 + $0x168] sm:$0xff]
      %v545 = vld [vmem:[%s490 + $0x170] sm:$0xff]
      %v546 = vld [vmem:[%s490 + $0x178] sm:$0xff]
      %v547 = vld [vmem:[%s490 + $0x180] sm:$0xff]
      %v548 = vld [vmem:[%s490 + $0x188] sm:$0xff]
      %v549 = vld [vmem:[%s490 + $0x190] sm:$0xff]
      %v550 = vld [vmem:[%s490 + $0x198] sm:$0xff]
      %v551 = vld [vmem:[%s490 + $0x1a0] sm:$0xff]
      %v552 = vld [vmem:[%s490 + $0x1a8] sm:$0xff]
      %v553 = vld [vmem:[%s490 + $0x1b0] sm:$0xff]
      %v554 = vld [vmem:[%s490 + $0x1b8] sm:$0xff]
      %v555 = vld [vmem:[%s490 + $0x1c0] sm:$0xff]
      %v556 = vld [vmem:[%s490 + $0x1c8] sm:$0xff]
      %v557 = vld [vmem:[%s490 + $0x1d0] sm:$0xff]
      %v558 = vld [vmem:[%s490 + $0x1d8] sm:$0xff]
      %v559 = vld [vmem:[%s490 + $0x1e0] sm:$0xff]
      %v560 = vld [vmem:[%s490 + $0x1e8] sm:$0xff]
      %v561 = vld [vmem:[%s490 + $0x1f0] sm:$0xff]
      %v562 = vld [vmem:[%s490 + $0x1f8] sm:$0xff]
      %v563 = vpack.c.bf16 %v500, %v499
      %v564 = vpack.c.bf16 %v502, %v501
      %v565 = vpack.c.bf16 %v504, %v503
      %v566 = vpack.c.bf16 %v506, %v505
      %v567 = vpack.c.bf16 %v508, %v507
      %v568 = vpack.c.bf16 %v510, %v509
      %v569 = vpack.c.bf16 %v512, %v511
      %v570 = vpack.c.bf16 %v514, %v513
      %v571 = vpack.c.bf16 %v516, %v515
      %v572 = vpack.c.bf16 %v518, %v517
      %v573 = vpack.c.bf16 %v520, %v519
      %v574 = vpack.c.bf16 %v522, %v521
      %v575 = vpack.c.bf16 %v524, %v523
      %v576 = vpack.c.bf16 %v526, %v525
      %v577 = vpack.c.bf16 %v528, %v527
      %v578 = vpack.c.bf16 %v530, %v529
      %v579 = vpack.c.bf16 %v532, %v531
      %v580 = vpack.c.bf16 %v534, %v533
      %v581 = vpack.c.bf16 %v536, %v535
      %v582 = vpack.c.bf16 %v538, %v537
      %v583 = vpack.c.bf16 %v540, %v539
      %v584 = vpack.c.bf16 %v542, %v541
      %v585 = vpack.c.bf16 %v544, %v543
      %v586 = vpack.c.bf16 %v546, %v545
      %v587 = vpack.c.bf16 %v548, %v547
      %v588 = vpack.c.bf16 %v550, %v549
      %v589 = vpack.c.bf16 %v552, %v551
      %v590 = vpack.c.bf16 %v554, %v553
      %v591 = vpack.c.bf16 %v556, %v555
      %v592 = vpack.c.bf16 %v558, %v557
      %v593 = vpack.c.bf16 %v560, %v559
      %v594 = vpack.c.bf16 %v562, %v561
      %v595 = vld [vmem:[%s1] sm:$0xff]
      %v596 = vld [vmem:[%s1 + $0x8] sm:$0xff]
      %v597 = vld [vmem:[%s1 + $0x10] sm:$0x11]
      %v598 = vld [vmem:[%s2] sm:$0x3]
      %v600 = vlaneseq
      %v601 = vshrl.u32 %v600, 7
      %v602 = vsub.s32 0, %v601
      %v603 = vrot.slane %v598, %v602
      %v604 = vlaneseq
      %v605 = vshrl.u32 %v604, 7
      %v606 = vsub.s32 1, %v605
      %v607 = vrot.slane %v598, %v606
      %v613 = vunpack.c.l.b16 %v595
      %v614 = vunpack.c.h.b16 %v595
      %v615 = vunpack.c.l.b16 %v596
      %v616 = vunpack.c.h.b16 %v596
      %v617 = vunpack.c.l.b16 %v597
      %v618 = vunpack.c.h.b16 %v597
      %v619 = vpack.c.b16 %v615, %v613
      %v620 = vpack.c.b16 %v616, %v614
      %v621 = vpack.c.b16 %v617, %v617
      %v622 = vpack.c.b16 %v618, %v618
      %vm625 = vcmask 146432
      %v627 = vsel %vm625, %v563, 0
      %v630 = vsel %vm625, %v564, 0
      %v633 = vsel %vm625, %v565, 0
      %v636 = vsel %vm625, %v566, 0
      %v639 = vsel %vm625, %v567, 0
      %v642 = vsel %vm625, %v568, 0
      %v645 = vsel %vm625, %v569, 0
      %v648 = vsel %vm625, %v570, 0
      %v651 = vsel %vm625, %v571, 0
      %v654 = vsel %vm625, %v572, 0
      %v657 = vsel %vm625, %v573, 0
      %v660 = vsel %vm625, %v574, 0
      %v663 = vsel %vm625, %v575, 0
      %v666 = vsel %vm625, %v576, 0
      %v669 = vsel %vm625, %v577, 0
      %v672 = vsel %vm625, %v578, 0
      %v675 = vsel %vm625, %v579, 0
      %v678 = vsel %vm625, %v580, 0
      %v681 = vsel %vm625, %v581, 0
      %v684 = vsel %vm625, %v582, 0
      %v687 = vsel %vm625, %v583, 0
      %v690 = vsel %vm625, %v584, 0
      %v693 = vsel %vm625, %v585, 0
      %v696 = vsel %vm625, %v586, 0
      %v699 = vsel %vm625, %v587, 0
      %v702 = vsel %vm625, %v588, 0
      %v705 = vsel %vm625, %v589, 0
      %v708 = vsel %vm625, %v590, 0
      %v711 = vsel %vm625, %v591, 0
      %v714 = vsel %vm625, %v592, 0
      %v717 = vsel %vm625, %v593, 0
      %v720 = vsel %vm625, %v594, 0
      %vm722 = vcmask 1040384
      %v724 = vsel %vm722, %v621, 0
      %v727 = vsel %vm722, %v622, 0
      %729 = vmatprep.subr.bf16.mxu0 %v620
      %730 = vmatpush1.bf16.msra.mxu0 %v619
      %731 = vmatprep.subr.bf16.mxu0 %v727
      %732 = vmatpush1.bf16.msra.mxu0 %v724
      %733 = vmatprep.subr.bf16.mxu0 0
      %734 = vmatpush1.bf16.msra.mxu0 0
      %735 = vmatprep.subr.bf16.mxu0 0
      %736 = vmatpush1.bf16.msra.mxu0 0
      %737 = vmatprep.subr.bf16.mxu0 0
      %738 = vmatpush1.bf16.msra.mxu0 0
      %739 = vmatprep.subr.bf16.mxu0 0
      %740 = vmatpush1.bf16.msra.mxu0 0
      %741 = vmatprep.subr.bf16.mxu0 0
      %742 = vmatpush1.bf16.msra.mxu0 0
      %743 = vmatprep.subr.bf16.mxu0 0
      %744 = vmatpush1.bf16.msra.mxu0 0
      %745 = vmatprep.subr.bf16.mxu0 0
      %746 = vmatpush1.bf16.msra.mxu0 0
      %747 = vmatprep.subr.bf16.mxu0 0
      %748 = vmatpush1.bf16.msra.mxu0 0
      %749 = vmatprep.subr.bf16.mxu0 0
      %750 = vmatpush1.bf16.msra.mxu0 0
      %751 = vmatprep.subr.bf16.mxu0 0
      %752 = vmatpush1.bf16.msra.mxu0 0
      %753 = vmatprep.subr.bf16.mxu0 0
      %754 = vmatpush1.bf16.msra.mxu0 0
      %755 = vmatprep.subr.bf16.mxu0 0
      %756 = vmatpush1.bf16.msra.mxu0 0
      %757 = vmatprep.subr.bf16.mxu0 0
      %758 = vmatpush1.bf16.msra.mxu0 0
      %759 = vmatprep.subr.bf16.mxu0 0
      %760 = vmatpush1.bf16.msra.mxu0 0
      %761 = vmatprep.mubr.bf16.mxu0 0
      %762 = vmatmul.mubr.bf16.gmra.mrb[0].mxu0 %v627
      %v763 = vpop.f32.mrb[0].mxu0
      %v764 = vadd.f32 %v603, %v763
      %v765 = vpop.f32.mrb[0].mxu0
      %v766 = vadd.f32 %v607, %v765
      %v767 = vpop.f32.mrb[0].mxu0
      %v768 = vadd.f32 %v603, %v767
      %v769 = vpop.f32.mrb[0].mxu0
      %v770 = vadd.f32 %v607, %v769
      %771 = vmatprep.mubr.bf16.mxu0 0
      %772 = vmatmul.mubr.bf16.gmra.mrb[0].mxu0 %v630
      %v773 = vpop.f32.mrb[0].mxu0
      %v774 = vadd.f32 %v603, %v773
      %v775 = vpop.f32.mrb[0].mxu0
      %v776 = vadd.f32 %v607, %v775
      %v777 = vpop.f32.mrb[0].mxu0
      %v778 = vadd.f32 %v603, %v777
      %v779 = vpop.f32.mrb[0].mxu0
      %v780 = vadd.f32 %v607, %v779
      %781 = vmatprep.mubr.bf16.mxu0 0
      %782 = vmatmul.mubr.bf16.gmra.mrb[0].mxu0 %v633
      %v783 = vpop.f32.mrb[0].mxu0
      %v784 = vadd.f32 %v603, %v783
      %v785 = vpop.f32.mrb[0].mxu0
      %v786 = vadd.f32 %v607, %v785
      %v787 = vpop.f32.mrb[0].mxu0
      %v788 = vadd.f32 %v603, %v787
      %v789 = vpop.f32.mrb[0].mxu0
      %v790 = vadd.f32 %v607, %v789
      %791 = vmatprep.mubr.bf16.mxu0 0
      %792 = vmatmul.mubr.bf16.gmra.mrb[0].mxu0 %v636
      %v793 = vpop.f32.mrb[0].mxu0
      %v794 = vadd.f32 %v603, %v793
      %v795 = vpop.f32.mrb[0].mxu0
      %v796 = vadd.f32 %v607, %v795
      %v797 = vpop.f32.mrb[0].mxu0
      %v798 = vadd.f32 %v603, %v797
      %v799 = vpop.f32.mrb[0].mxu0
      %v800 = vadd.f32 %v607, %v799
      %801 = vmatprep.mubr.bf16.mxu0 0
      %802 = vmatmul.mubr.bf16.gmra.mrb[0].mxu0 %v639
      %v803 = vpop.f32.mrb[0].mxu0
      %v804 = vadd.f32 %v603, %v803
      %v805 = vpop.f32.mrb[0].mxu0
      %v806 = vadd.f32 %v607, %v805
      %v807 = vpop.f32.mrb[0].mxu0
      %v808 = vadd.f32 %v603, %v807
      %v809 = vpop.f32.mrb[0].mxu0
      %v810 = vadd.f32 %v607, %v809
      %811 = vmatprep.mubr.bf16.mxu0 0
      %812 = vmatmul.mubr.bf16.gmra.mrb[0].mxu0 %v642
      %v813 = vpop.f32.mrb[0].mxu0
      %v814 = vadd.f32 %v603, %v813
      %v815 = vpop.f32.mrb[0].mxu0
      %v816 = vadd.f32 %v607, %v815
      %v817 = vpop.f32.mrb[0].mxu0
      %v818 = vadd.f32 %v603, %v817
      %v819 = vpop.f32.mrb[0].mxu0
      %v820 = vadd.f32 %v607, %v819
      %821 = vmatprep.mubr.bf16.mxu0 0
      %822 = vmatmul.mubr.bf16.gmra.mrb[0].mxu0 %v645
      %v823 = vpop.f32.mrb[0].mxu0
      %v824 = vadd.f32 %v603, %v823
      %v825 = vpop.f32.mrb[0].mxu0
      %v826 = vadd.f32 %v607, %v825
      %v827 = vpop.f32.mrb[0].mxu0
      %v828 = vadd.f32 %v603, %v827
      %v829 = vpop.f32.mrb[0].mxu0
      %v830 = vadd.f32 %v607, %v829
      %831 = vmatprep.mubr.bf16.mxu0 0
      %832 = vmatmul.mubr.bf16.gmra.mrb[0].mxu0 %v648
      %v833 = vpop.f32.mrb[0].mxu0
      %v834 = vadd.f32 %v603, %v833
      %v835 = vpop.f32.mrb[0].mxu0
      %v836 = vadd.f32 %v607, %v835
      %v837 = vpop.f32.mrb[0].mxu0
      %v838 = vadd.f32 %v603, %v837
      %v839 = vpop.f32.mrb[0].mxu0
      %v840 = vadd.f32 %v607, %v839
      %841 = vmatprep.mubr.bf16.mxu0 0
      %842 = vmatmul.mubr.bf16.gmra.mrb[0].mxu0 %v651
      %v843 = vpop.f32.mrb[0].mxu0
      %v844 = vadd.f32 %v603, %v843
      %v845 = vpop.f32.mrb[0].mxu0
      %v846 = vadd.f32 %v607, %v845
      %v847 = vpop.f32.mrb[0].mxu0
      %v848 = vadd.f32 %v603, %v847
      %v849 = vpop.f32.mrb[0].mxu0
      %v850 = vadd.f32 %v607, %v849
      %851 = vmatprep.mubr.bf16.mxu0 0
      %852 = vmatmul.mubr.bf16.gmra.mrb[0].mxu0 %v654
      %v853 = vpop.f32.mrb[0].mxu0
      %v854 = vadd.f32 %v603, %v853
      %v855 = vpop.f32.mrb[0].mxu0
      %v856 = vadd.f32 %v607, %v855
      %v857 = vpop.f32.mrb[0].mxu0
      %v858 = vadd.f32 %v603, %v857
      %v859 = vpop.f32.mrb[0].mxu0
      %v860 = vadd.f32 %v607, %v859
      %861 = vmatprep.mubr.bf16.mxu0 0
      %862 = vmatmul.mubr.bf16.gmra.mrb[0].mxu0 %v657
      %v863 = vpop.f32.mrb[0].mxu0
      %v864 = vadd.f32 %v603, %v863
      %v865 = vpop.f32.mrb[0].mxu0
      %v866 = vadd.f32 %v607, %v865
      %v867 = vpop.f32.mrb[0].mxu0
      %v868 = vadd.f32 %v603, %v867
      %v869 = vpop.f32.mrb[0].mxu0
      %v870 = vadd.f32 %v607, %v869
      %871 = vmatprep.mubr.bf16.mxu0 0
      %872 = vmatmul.mubr.bf16.gmra.mrb[0].mxu0 %v660
      %v873 = vpop.f32.mrb[0].mxu0
      %v874 = vadd.f32 %v603, %v873
      %v875 = vpop.f32.mrb[0].mxu0
      %v876 = vadd.f32 %v607, %v875
      %v877 = vpop.f32.mrb[0].mxu0
      %v878 = vadd.f32 %v603, %v877
      %v879 = vpop.f32.mrb[0].mxu0
      %v880 = vadd.f32 %v607, %v879
      %881 = vmatprep.mubr.bf16.mxu0 0
      %882 = vmatmul.mubr.bf16.gmra.mrb[0].mxu0 %v663
      %v883 = vpop.f32.mrb[0].mxu0
      %v884 = vadd.f32 %v603, %v883
      %v885 = vpop.f32.mrb[0].mxu0
      %v886 = vadd.f32 %v607, %v885
      %v887 = vpop.f32.mrb[0].mxu0
      %v888 = vadd.f32 %v603, %v887
      %v889 = vpop.f32.mrb[0].mxu0
      %v890 = vadd.f32 %v607, %v889
      %891 = vmatprep.mubr.bf16.mxu0 0
      %892 = vmatmul.mubr.bf16.gmra.mrb[0].mxu0 %v666
      %v893 = vpop.f32.mrb[0].mxu0
      %v894 = vadd.f32 %v603, %v893
      %v895 = vpop.f32.mrb[0].mxu0
      %v896 = vadd.f32 %v607, %v895
      %v897 = vpop.f32.mrb[0].mxu0
      %v898 = vadd.f32 %v603, %v897
      %v899 = vpop.f32.mrb[0].mxu0
      %v900 = vadd.f32 %v607, %v899
      %901 = vmatprep.mubr.bf16.mxu0 0
      %902 = vmatmul.mubr.bf16.gmra.mrb[0].mxu0 %v669
      %v903 = vpop.f32.mrb[0].mxu0
      %v904 = vadd.f32 %v603, %v903
      %v905 = vpop.f32.mrb[0].mxu0
      %v906 = vadd.f32 %v607, %v905
      %v907 = vpop.f32.mrb[0].mxu0
      %v908 = vadd.f32 %v603, %v907
      %v909 = vpop.f32.mrb[0].mxu0
      %v910 = vadd.f32 %v607, %v909
      %911 = vmatprep.mubr.bf16.mxu0 0
      %912 = vmatmul.mubr.bf16.gmra.mrb[0].mxu0 %v672
      %v913 = vpop.f32.mrb[0].mxu0
      %v914 = vadd.f32 %v603, %v913
      %v915 = vpop.f32.mrb[0].mxu0
      %v916 = vadd.f32 %v607, %v915
      %v917 = vpop.f32.mrb[0].mxu0
      %v918 = vadd.f32 %v603, %v917
      %v919 = vpop.f32.mrb[0].mxu0
      %v920 = vadd.f32 %v607, %v919
      %921 = vmatprep.mubr.bf16.mxu0 0
      %922 = vmatmul.mubr.bf16.gmra.mrb[0].mxu0 %v675
      %v923 = vpop.f32.mrb[0].mxu0
      %v924 = vadd.f32 %v603, %v923
      %v925 = vpop.f32.mrb[0].mxu0
      %v926 = vadd.f32 %v607, %v925
      %v927 = vpop.f32.mrb[0].mxu0
      %v928 = vadd.f32 %v603, %v927
      %v929 = vpop.f32.mrb[0].mxu0
      %v930 = vadd.f32 %v607, %v929
      %931 = vmatprep.mubr.bf16.mxu0 0
      %932 = vmatmul.mubr.bf16.gmra.mrb[0].mxu0 %v678
      %v933 = vpop.f32.mrb[0].mxu0
      %v934 = vadd.f32 %v603, %v933
      %v935 = vpop.f32.mrb[0].mxu0
      %v936 = vadd.f32 %v607, %v935
      %v937 = vpop.f32.mrb[0].mxu0
      %v938 = vadd.f32 %v603, %v937
      %v939 = vpop.f32.mrb[0].mxu0
      %v940 = vadd.f32 %v607, %v939
      %941 = vmatprep.mubr.bf16.mxu0 0
      %942 = vmatmul.mubr.bf16.gmra.mrb[0].mxu0 %v681
      %v943 = vpop.f32.mrb[0].mxu0
      %v944 = vadd.f32 %v603, %v943
      %v945 = vpop.f32.mrb[0].mxu0
      %v946 = vadd.f32 %v607, %v945
      %v947 = vpop.f32.mrb[0].mxu0
      %v948 = vadd.f32 %v603, %v947
      %v949 = vpop.f32.mrb[0].mxu0
      %v950 = vadd.f32 %v607, %v949
      %951 = vmatprep.mubr.bf16.mxu0 0
      %952 = vmatmul.mubr.bf16.gmra.mrb[0].mxu0 %v684
      %v953 = vpop.f32.mrb[0].mxu0
      %v954 = vadd.f32 %v603, %v953
      %v955 = vpop.f32.mrb[0].mxu0
      %v956 = vadd.f32 %v607, %v955
      %v957 = vpop.f32.mrb[0].mxu0
      %v958 = vadd.f32 %v603, %v957
      %v959 = vpop.f32.mrb[0].mxu0
      %v960 = vadd.f32 %v607, %v959
      %961 = vmatprep.mubr.bf16.mxu0 0
      %962 = vmatmul.mubr.bf16.gmra.mrb[0].mxu0 %v687
      %v963 = vpop.f32.mrb[0].mxu0
      %v964 = vadd.f32 %v603, %v963
      %v965 = vpop.f32.mrb[0].mxu0
      %v966 = vadd.f32 %v607, %v965
      %v967 = vpop.f32.mrb[0].mxu0
      %v968 = vadd.f32 %v603, %v967
      %v969 = vpop.f32.mrb[0].mxu0
      %v970 = vadd.f32 %v607, %v969
      %971 = vmatprep.mubr.bf16.mxu0 0
      %972 = vmatmul.mubr.bf16.gmra.mrb[0].mxu0 %v690
      %v973 = vpop.f32.mrb[0].mxu0
      %v974 = vadd.f32 %v603, %v973
      %v975 = vpop.f32.mrb[0].mxu0
      %v976 = vadd.f32 %v607, %v975
      %v977 = vpop.f32.mrb[0].mxu0
      %v978 = vadd.f32 %v603, %v977
      %v979 = vpop.f32.mrb[0].mxu0
      %v980 = vadd.f32 %v607, %v979
      %981 = vmatprep.mubr.bf16.mxu0 0
      %982 = vmatmul.mubr.bf16.gmra.mrb[0].mxu0 %v693
      %v983 = vpop.f32.mrb[0].mxu0
      %v984 = vadd.f32 %v603, %v983
      %v985 = vpop.f32.mrb[0].mxu0
      %v986 = vadd.f32 %v607, %v985
      %v987 = vpop.f32.mrb[0].mxu0
      %v988 = vadd.f32 %v603, %v987
      %v989 = vpop.f32.mrb[0].mxu0
      %v990 = vadd.f32 %v607, %v989
      %991 = vmatprep.mubr.bf16.mxu0 0
      %992 = vmatmul.mubr.bf16.gmra.mrb[0].mxu0 %v696
      %v993 = vpop.f32.mrb[0].mxu0
      %v994 = vadd.f32 %v603, %v993
      %v995 = vpop.f32.mrb[0].mxu0
      %v996 = vadd.f32 %v607, %v995
      %v997 = vpop.f32.mrb[0].mxu0
      %v998 = vadd.f32 %v603, %v997
      %v999 = vpop.f32.mrb[0].mxu0
      %v1000 = vadd.f32 %v607, %v999
      %1001 = vmatprep.mubr.bf16.mxu0 0
      %1002 = vmatmul.mubr.bf16.gmra.mrb[0].mxu0 %v699
      %v1003 = vpop.f32.mrb[0].mxu0
      %v1004 = vadd.f32 %v603, %v1003
      %v1005 = vpop.f32.mrb[0].mxu0
      %v1006 = vadd.f32 %v607, %v1005
      %v1007 = vpop.f32.mrb[0].mxu0
      %v1008 = vadd.f32 %v603, %v1007
      %v1009 = vpop.f32.mrb[0].mxu0
      %v1010 = vadd.f32 %v607, %v1009
      %1011 = vmatprep.mubr.bf16.mxu0 0
      %1012 = vmatmul.mubr.bf16.gmra.mrb[0].mxu0 %v702
      %v1013 = vpop.f32.mrb[0].mxu0
      %v1014 = vadd.f32 %v603, %v1013
      %v1015 = vpop.f32.mrb[0].mxu0
      %v1016 = vadd.f32 %v607, %v1015
      %v1017 = vpop.f32.mrb[0].mxu0
      %v1018 = vadd.f32 %v603, %v1017
      %v1019 = vpop.f32.mrb[0].mxu0
      %v1020 = vadd.f32 %v607, %v1019
      %1021 = vmatprep.mubr.bf16.mxu0 0
      %1022 = vmatmul.mubr.bf16.gmra.mrb[0].mxu0 %v705
      %v1023 = vpop.f32.mrb[0].mxu0
      %v1024 = vadd.f32 %v603, %v1023
      %v1025 = vpop.f32.mrb[0].mxu0
      %v1026 = vadd.f32 %v607, %v1025
      %v1027 = vpop.f32.mrb[0].mxu0
      %v1028 = vadd.f32 %v603, %v1027
      %v1029 = vpop.f32.mrb[0].mxu0
      %v1030 = vadd.f32 %v607, %v1029
      %1031 = vmatprep.mubr.bf16.mxu0 0
      %1032 = vmatmul.mubr.bf16.gmra.mrb[0].mxu0 %v708
      %v1033 = vpop.f32.mrb[0].mxu0
      %v1034 = vadd.f32 %v603, %v1033
      %v1035 = vpop.f32.mrb[0].mxu0
      %v1036 = vadd.f32 %v607, %v1035
      %v1037 = vpop.f32.mrb[0].mxu0
      %v1038 = vadd.f32 %v603, %v1037
      %v1039 = vpop.f32.mrb[0].mxu0
      %v1040 = vadd.f32 %v607, %v1039
      %1041 = vmatprep.mubr.bf16.mxu0 0
      %1042 = vmatmul.mubr.bf16.gmra.mrb[0].mxu0 %v711
      %v1043 = vpop.f32.mrb[0].mxu0
      %v1044 = vadd.f32 %v603, %v1043
      %v1045 = vpop.f32.mrb[0].mxu0
      %v1046 = vadd.f32 %v607, %v1045
      %v1047 = vpop.f32.mrb[0].mxu0
      %v1048 = vadd.f32 %v603, %v1047
      %v1049 = vpop.f32.mrb[0].mxu0
      %v1050 = vadd.f32 %v607, %v1049
      %1051 = vmatprep.mubr.bf16.mxu0 0
      %1052 = vmatmul.mubr.bf16.gmra.mrb[0].mxu0 %v714
      %v1053 = vpop.f32.mrb[0].mxu0
      %v1054 = vadd.f32 %v603, %v1053
      %v1055 = vpop.f32.mrb[0].mxu0
      %v1056 = vadd.f32 %v607, %v1055
      %v1057 = vpop.f32.mrb[0].mxu0
      %v1058 = vadd.f32 %v603, %v1057
      %v1059 = vpop.f32.mrb[0].mxu0
      %v1060 = vadd.f32 %v607, %v1059
      %1061 = vmatprep.mubr.bf16.mxu0 0
      %1062 = vmatmul.mubr.bf16.gmra.mrb[0].mxu0 %v717
      %v1063 = vpop.f32.mrb[0].mxu0
      %v1064 = vadd.f32 %v603, %v1063
      %v1065 = vpop.f32.mrb[0].mxu0
      %v1066 = vadd.f32 %v607, %v1065
      %v1067 = vpop.f32.mrb[0].mxu0
      %v1068 = vadd.f32 %v603, %v1067
      %v1069 = vpop.f32.mrb[0].mxu0
      %v1070 = vadd.f32 %v607, %v1069
      %1071 = vmatprep.mubr.bf16.mxu0 0
      %1072 = vmatmul.mubr.bf16.gmra.mrb[0].mxu0 %v720
      %v1073 = vpop.f32.mrb[0].mxu0
      %v1074 = vadd.f32 %v603, %v1073
      %v1075 = vpop.f32.mrb[0].mxu0
      %v1076 = vadd.f32 %v607, %v1075
      %v1077 = vpop.f32.mrb[0].mxu0
      %v1078 = vadd.f32 %v603, %v1077
      %v1079 = vpop.f32.mrb[0].mxu0
      %v1080 = vadd.f32 %v607, %v1079
      %1081 = vdwg.mxu0
      %v1082 = vmax.f32 %v764, 0.0
      %v1083 = vmax.f32 %v766, 0.0
      %v1084 = vmax.f32 %v768, 0.0
      %v1085 = vmax.f32 %v770, 0.0
      %v1086 = vmax.f32 %v774, 0.0
      %v1087 = vmax.f32 %v776, 0.0
      %v1088 = vmax.f32 %v778, 0.0
      %v1089 = vmax.f32 %v780, 0.0
      %v1090 = vmax.f32 %v784, 0.0
      %v1091 = vmax.f32 %v786, 0.0
      %v1092 = vmax.f32 %v788, 0.0
      %v1093 = vmax.f32 %v790, 0.0
      %v1094 = vmax.f32 %v794, 0.0
      %v1095 = vmax.f32 %v796, 0.0
      %v1096 = vmax.f32 %v798, 0.0
      %v1097 = vmax.f32 %v800, 0.0
      %v1098 = vmax.f32 %v804, 0.0
      %v1099 = vmax.f32 %v806, 0.0
      %v1100 = vmax.f32 %v808, 0.0
      %v1101 = vmax.f32 %v810, 0.0
      %v1102 = vmax.f32 %v814, 0.0
      %v1103 = vmax.f32 %v816, 0.0
      %v1104 = vmax.f32 %v818, 0.0
      %v1105 = vmax.f32 %v820, 0.0
      %v1106 = vmax.f32 %v824, 0.0
      %v1107 = vmax.f32 %v826, 0.0
      %v1108 = vmax.f32 %v828, 0.0
      %v1109 = vmax.f32 %v830, 0.0
      %v1110 = vmax.f32 %v834, 0.0
      %v1111 = vmax.f32 %v836, 0.0
      %v1112 = vmax.f32 %v838, 0.0
      %v1113 = vmax.f32 %v840, 0.0
      %v1114 = vmax.f32 %v844, 0.0
      %v1115 = vmax.f32 %v846, 0.0
      %v1116 = vmax.f32 %v848, 0.0
      %v1117 = vmax.f32 %v850, 0.0
      %v1118 = vmax.f32 %v854, 0.0
      %v1119 = vmax.f32 %v856, 0.0
      %v1120 = vmax.f32 %v858, 0.0
      %v1121 = vmax.f32 %v860, 0.0
      %v1122 = vmax.f32 %v864, 0.0
      %v1123 = vmax.f32 %v866, 0.0
      %v1124 = vmax.f32 %v868, 0.0
      %v1125 = vmax.f32 %v870, 0.0
      %v1126 = vmax.f32 %v874, 0.0
      %v1127 = vmax.f32 %v876, 0.0
      %v1128 = vmax.f32 %v878, 0.0
      %v1129 = vmax.f32 %v880, 0.0
      %v1130 = vmax.f32 %v884, 0.0
      %v1131 = vmax.f32 %v886, 0.0
      %v1132 = vmax.f32 %v888, 0.0
      %v1133 = vmax.f32 %v890, 0.0
      %v1134 = vmax.f32 %v894, 0.0
      %v1135 = vmax.f32 %v896, 0.0
      %v1136 = vmax.f32 %v898, 0.0
      %v1137 = vmax.f32 %v900, 0.0
      %v1138 = vmax.f32 %v904, 0.0
      %v1139 = vmax.f32 %v906, 0.0
      %v1140 = vmax.f32 %v908, 0.0
      %v1141 = vmax.f32 %v910, 0.0
      %v1142 = vmax.f32 %v914, 0.0
      %v1143 = vmax.f32 %v916, 0.0
      %v1144 = vmax.f32 %v918, 0.0
      %v1145 = vmax.f32 %v920, 0.0
      %v1146 = vmax.f32 %v924, 0.0
      %v1147 = vmax.f32 %v926, 0.0
      %v1148 = vmax.f32 %v928, 0.0
      %v1149 = vmax.f32 %v930, 0.0
      %v1150 = vmax.f32 %v934, 0.0
      %v1151 = vmax.f32 %v936, 0.0
      %v1152 = vmax.f32 %v938, 0.0
      %v1153 = vmax.f32 %v940, 0.0
      %v1154 = vmax.f32 %v944, 0.0
      %v1155 = vmax.f32 %v946, 0.0
      %v1156 = vmax.f32 %v948, 0.0
      %v1157 = vmax.f32 %v950, 0.0
      %v1158 = vmax.f32 %v954, 0.0
      %v1159 = vmax.f32 %v956, 0.0
      %v1160 = vmax.f32 %v958, 0.0
      %v1161 = vmax.f32 %v960, 0.0
      %v1162 = vmax.f32 %v964, 0.0
      %v1163 = vmax.f32 %v966, 0.0
      %v1164 = vmax.f32 %v968, 0.0
      %v1165 = vmax.f32 %v970, 0.0
      %v1166 = vmax.f32 %v974, 0.0
      %v1167 = vmax.f32 %v976, 0.0
      %v1168 = vmax.f32 %v978, 0.0
      %v1169 = vmax.f32 %v980, 0.0
      %v1170 = vmax.f32 %v984, 0.0
      %v1171 = vmax.f32 %v986, 0.0
      %v1172 = vmax.f32 %v988, 0.0
      %v1173 = vmax.f32 %v990, 0.0
      %v1174 = vmax.f32 %v994, 0.0
      %v1175 = vmax.f32 %v996, 0.0
      %v1176 = vmax.f32 %v998, 0.0
      %v1177 = vmax.f32 %v1000, 0.0
      %v1178 = vmax.f32 %v1004, 0.0
      %v1179 = vmax.f32 %v1006, 0.0
      %v1180 = vmax.f32 %v1008, 0.0
      %v1181 = vmax.f32 %v1010, 0.0
      %v1182 = vmax.f32 %v1014, 0.0
      %v1183 = vmax.f32 %v1016, 0.0
      %v1184 = vmax.f32 %v1018, 0.0
      %v1185 = vmax.f32 %v1020, 0.0
      %v1186 = vmax.f32 %v1024, 0.0
      %v1187 = vmax.f32 %v1026, 0.0
      %v1188 = vmax.f32 %v1028, 0.0
      %v1189 = vmax.f32 %v1030, 0.0
      %v1190 = vmax.f32 %v1034, 0.0
      %v1191 = vmax.f32 %v1036, 0.0
      %v1192 = vmax.f32 %v1038, 0.0
      %v1193 = vmax.f32 %v1040, 0.0
      %v1194 = vmax.f32 %v1044, 0.0
      %v1195 = vmax.f32 %v1046, 0.0
      %v1196 = vmax.f32 %v1048, 0.0
      %v1197 = vmax.f32 %v1050, 0.0
      %v1198 = vmax.f32 %v1054, 0.0
      %v1199 = vmax.f32 %v1056, 0.0
      %v1200 = vmax.f32 %v1058, 0.0
      %v1201 = vmax.f32 %v1060, 0.0
      %v1202 = vmax.f32 %v1064, 0.0
      %v1203 = vmax.f32 %v1066, 0.0
      %v1204 = vmax.f32 %v1068, 0.0
      %v1205 = vmax.f32 %v1070, 0.0
      %v1206 = vmax.f32 %v1074, 0.0
      %v1207 = vmax.f32 %v1076, 0.0
      %v1208 = vmax.f32 %v1078, 0.0
      %v1209 = vmax.f32 %v1080, 0.0
      %v1210 = vpack.c.bf16 %v1084, %v1082
      %v1211 = vpack.c.bf16 %v1085, %v1083
      %v1212 = vpack.c.bf16 %v1088, %v1086
      %v1213 = vpack.c.bf16 %v1089, %v1087
      %v1214 = vpack.c.bf16 %v1092, %v1090
      %v1215 = vpack.c.bf16 %v1093, %v1091
      %v1216 = vpack.c.bf16 %v1096, %v1094
      %v1217 = vpack.c.bf16 %v1097, %v1095
      %v1218 = vpack.c.bf16 %v1100, %v1098
      %v1219 = vpack.c.bf16 %v1101, %v1099
      %v1220 = vpack.c.bf16 %v1104, %v1102
      %v1221 = vpack.c.bf16 %v1105, %v1103
      %v1222 = vpack.c.bf16 %v1108, %v1106
      %v1223 = vpack.c.bf16 %v1109, %v1107
      %v1224 = vpack.c.bf16 %v1112, %v1110
      %v1225 = vpack.c.bf16 %v1113, %v1111
      %v1226 = vpack.c.bf16 %v1116, %v1114
      %v1227 = vpack.c.bf16 %v1117, %v1115
      %v1228 = vpack.c.bf16 %v1120, %v1118
      %v1229 = vpack.c.bf16 %v1121, %v1119
      %v1230 = vpack.c.bf16 %v1124, %v1122
      %v1231 = vpack.c.bf16 %v1125, %v1123
      %v1232 = vpack.c.bf16 %v1128, %v1126
      %v1233 = vpack.c.bf16 %v1129, %v1127
      %v1234 = vpack.c.bf16 %v1132, %v1130
      %v1235 = vpack.c.bf16 %v1133, %v1131
      %v1236 = vpack.c.bf16 %v1136, %v1134
      %v1237 = vpack.c.bf16 %v1137, %v1135
      %v1238 = vpack.c.bf16 %v1140, %v1138
      %v1239 = vpack.c.bf16 %v1141, %v1139
      %v1240 = vpack.c.bf16 %v1144, %v1142
      %v1241 = vpack.c.bf16 %v1145, %v1143
      %v1242 = vpack.c.bf16 %v1148, %v1146
      %v1243 = vpack.c.bf16 %v1149, %v1147
      %v1244 = vpack.c.bf16 %v1152, %v1150
      %v1245 = vpack.c.bf16 %v1153, %v1151
      %v1246 = vpack.c.bf16 %v1156, %v1154
      %v1247 = vpack.c.bf16 %v1157, %v1155
      %v1248 = vpack.c.bf16 %v1160, %v1158
      %v1249 = vpack.c.bf16 %v1161, %v1159
      %v1250 = vpack.c.bf16 %v1164, %v1162
      %v1251 = vpack.c.bf16 %v1165, %v1163
      %v1252 = vpack.c.bf16 %v1168, %v1166
      %v1253 = vpack.c.bf16 %v1169, %v1167
      %v1254 = vpack.c.bf16 %v1172, %v1170
      %v1255 = vpack.c.bf16 %v1173, %v1171
      %v1256 = vpack.c.bf16 %v1176, %v1174
      %v1257 = vpack.c.bf16 %v1177, %v1175
      %v1258 = vpack.c.bf16 %v1180, %v1178
      %v1259 = vpack.c.bf16 %v1181, %v1179
      %v1260 = vpack.c.bf16 %v1184, %v1182
      %v1261 = vpack.c.bf16 %v1185, %v1183
      %v1262 = vpack.c.bf16 %v1188, %v1186
      %v1263 = vpack.c.bf16 %v1189, %v1187
      %v1264 = vpack.c.bf16 %v1192, %v1190
      %v1265 = vpack.c.bf16 %v1193, %v1191
      %v1266 = vpack.c.bf16 %v1196, %v1194
      %v1267 = vpack.c.bf16 %v1197, %v1195
      %v1268 = vpack.c.bf16 %v1200, %v1198
      %v1269 = vpack.c.bf16 %v1201, %v1199
      %v1270 = vpack.c.bf16 %v1204, %v1202
      %v1271 = vpack.c.bf16 %v1205, %v1203
      %v1272 = vpack.c.bf16 %v1208, %v1206
      %v1273 = vpack.c.bf16 %v1209, %v1207
      %v1274 = vld [vmem:[%s3] sm:$0xf]
      %v1275 = vld [vmem:[%s3 + $0x4] sm:$0xf]
      %v1276 = vld [vmem:[%s3 + $0x8] sm:$0xf]
      %v1277 = vld [vmem:[%s3 + $0xc] sm:$0xf]
      %v1278 = vld [vmem:[%s3 + $0x10] sm:$0xf]
      %v1279 = vld [vmem:[%s3 + $0x14] sm:$0xf]
      %v1280 = vld [vmem:[%s3 + $0x18] sm:$0xf]
      %v1281 = vld [vmem:[%s3 + $0x1c] sm:$0xf]
      %v1282 = vld [vmem:[%s3 + $0x20] sm:$0xf]
      %v1283 = vld [vmem:[%s3 + $0x24] sm:$0xf]
      %v1284 = vld [vmem:[%s3 + $0x28] sm:$0xf]
      %v1285 = vld [vmem:[%s3 + $0x2c] sm:$0xf]
      %v1286 = vld [vmem:[%s3 + $0x30] sm:$0xf]
      %v1287 = vld [vmem:[%s3 + $0x34] sm:$0xf]
      %v1288 = vld [vmem:[%s3 + $0x38] sm:$0xf]
      %v1289 = vld [vmem:[%s3 + $0x3c] sm:$0xf]
      %v1290 = vld [vmem:[%s3 + $0x40] sm:$0xf]
      %v1291 = vld [vmem:[%s3 + $0x44] sm:$0xf]
      %v1292 = vld [vmem:[%s3 + $0x48] sm:$0xf]
      %v1293 = vld [vmem:[%s3 + $0x4c] sm:$0xf]
      %v1294 = vld [vmem:[%s3 + $0x50] sm:$0xf]
      %v1295 = vld [vmem:[%s3 + $0x54] sm:$0xf]
      %v1296 = vld [vmem:[%s3 + $0x58] sm:$0xf]
      %v1297 = vld [vmem:[%s3 + $0x5c] sm:$0xf]
      %v1298 = vld [vmem:[%s3 + $0x60] sm:$0xf]
      %v1299 = vld [vmem:[%s3 + $0x64] sm:$0xf]
      %v1300 = vld [vmem:[%s3 + $0x68] sm:$0xf]
      %v1301 = vld [vmem:[%s3 + $0x6c] sm:$0xf]
      %v1302 = vld [vmem:[%s3 + $0x70] sm:$0xf]
      %v1303 = vld [vmem:[%s3 + $0x74] sm:$0xf]
      %v1304 = vld [vmem:[%s3 + $0x78] sm:$0xf]
      %v1305 = vld [vmem:[%s3 + $0x7c] sm:$0xf]
      %v1306 = vld [vmem:[%s4] sm:$0x1]
      %v1308 = vlaneseq
      %v1309 = vshrl.u32 %v1308, 7
      %v1310 = vsub.s32 0, %v1309
      %v1311 = vrot.slane %v1306, %v1310
      %v1345 = vunpack.c.l.b16 %v1274
      %v1346 = vunpack.c.l.b16 %v1275
      %v1347 = vunpack.c.l.b16 %v1276
      %v1348 = vunpack.c.l.b16 %v1277
      %v1349 = vunpack.c.l.b16 %v1278
      %v1350 = vunpack.c.l.b16 %v1279
      %v1351 = vunpack.c.l.b16 %v1280
      %v1352 = vunpack.c.l.b16 %v1281
      %v1353 = vunpack.c.l.b16 %v1282
      %v1354 = vunpack.c.l.b16 %v1283
      %v1355 = vunpack.c.l.b16 %v1284
      %v1356 = vunpack.c.l.b16 %v1285
      %v1357 = vunpack.c.l.b16 %v1286
      %v1358 = vunpack.c.l.b16 %v1287
      %v1359 = vunpack.c.l.b16 %v1288
      %v1360 = vunpack.c.l.b16 %v1289
      %v1361 = vunpack.c.l.b16 %v1290
      %v1362 = vunpack.c.l.b16 %v1291
      %v1363 = vunpack.c.l.b16 %v1292
      %v1364 = vunpack.c.l.b16 %v1293
      %v1365 = vunpack.c.l.b16 %v1294
      %v1366 = vunpack.c.l.b16 %v1295
      %v1367 = vunpack.c.l.b16 %v1296
      %v1368 = vunpack.c.l.b16 %v1297
      %v1369 = vunpack.c.l.b16 %v1298
      %v1370 = vunpack.c.l.b16 %v1299
      %v1371 = vunpack.c.l.b16 %v1300
      %v1372 = vunpack.c.l.b16 %v1301
      %v1373 = vunpack.c.l.b16 %v1302
      %v1374 = vunpack.c.l.b16 %v1303
      %v1375 = vunpack.c.l.b16 %v1304
      %v1376 = vunpack.c.l.b16 %v1305
      %v1377 = vpack.c.b16 %v1346, %v1345
      %v1378 = vpack.c.b16 %v1348, %v1347
      %v1379 = vpack.c.b16 %v1350, %v1349
      %v1380 = vpack.c.b16 %v1352, %v1351
      %v1381 = vpack.c.b16 %v1354, %v1353
      %v1382 = vpack.c.b16 %v1356, %v1355
      %v1383 = vpack.c.b16 %v1358, %v1357
      %v1384 = vpack.c.b16 %v1360, %v1359
      %v1385 = vpack.c.b16 %v1362, %v1361
      %v1386 = vpack.c.b16 %v1364, %v1363
      %v1387 = vpack.c.b16 %v1366, %v1365
      %v1388 = vpack.c.b16 %v1368, %v1367
      %v1389 = vpack.c.b16 %v1370, %v1369
      %v1390 = vpack.c.b16 %v1372, %v1371
      %v1391 = vpack.c.b16 %v1374, %v1373
      %v1392 = vpack.c.b16 %v1376, %v1375
      %1409 = vmatprep.subr.bf16.mxu0 0
      %1410 = vmatpush1.bf16.msra.mxu0 %v1377
      %1411 = vmatprep.subr.bf16.mxu0 0
      %1412 = vmatpush1.bf16.msra.mxu0 %v1378
      %1413 = vmatprep.subr.bf16.mxu0 0
      %1414 = vmatpush1.bf16.msra.mxu0 %v1379
      %1415 = vmatprep.subr.bf16.mxu0 0
      %1416 = vmatpush1.bf16.msra.mxu0 %v1380
      %1417 = vmatprep.subr.bf16.mxu0 0
      %1418 = vmatpush1.bf16.msra.mxu0 %v1381
      %1419 = vmatprep.subr.bf16.mxu0 0
      %1420 = vmatpush1.bf16.msra.mxu0 %v1382
      %1421 = vmatprep.subr.bf16.mxu0 0
      %1422 = vmatpush1.bf16.msra.mxu0 %v1383
      %1423 = vmatprep.subr.bf16.mxu0 0
      %1424 = vmatpush1.bf16.msra.mxu0 %v1384
      %1425 = vmatprep.subr.bf16.mxu0 0
      %1426 = vmatpush1.bf16.msra.mxu0 %v1385
      %1427 = vmatprep.subr.bf16.mxu0 0
      %1428 = vmatpush1.bf16.msra.mxu0 %v1386
      %1429 = vmatprep.subr.bf16.mxu0 0
      %1430 = vmatpush1.bf16.msra.mxu0 %v1387
      %1431 = vmatprep.subr.bf16.mxu0 0
      %1432 = vmatpush1.bf16.msra.mxu0 %v1388
      %1433 = vmatprep.subr.bf16.mxu0 0
      %1434 = vmatpush1.bf16.msra.mxu0 %v1389
      %1435 = vmatprep.subr.bf16.mxu0 0
      %1436 = vmatpush1.bf16.msra.mxu0 %v1390
      %1437 = vmatprep.subr.bf16.mxu0 0
      %1438 = vmatpush1.bf16.msra.mxu0 %v1391
      %1439 = vmatprep.subr.bf16.mxu0 0
      %1440 = vmatpush1.bf16.msra.mxu0 %v1392
      %1441 = vmatprep.mubr.bf16.mxu0 %v1211
      %1442 = vmatmul.mubr.bf16.gmra.mrb[0].mxu0 %v1210
      %v1443 = vpop.f32.mrb[0].mxu0
      %v1444 = vadd.f32 %v1311, %v1443
      %v1445 = vpop.f32.mrb[0].mxu0
      %v1446 = vpop.f32.mrb[0].mxu0
      %v1447 = vadd.f32 %v1311, %v1446
      %v1448 = vpop.f32.mrb[0].mxu0
      %1449 = vmatprep.mubr.bf16.mxu0 %v1213
      %1450 = vmatmul.mubr.bf16.gmra.mrb[0].mxu0 %v1212
      %v1451 = vpop.f32.mrb[0].mxu0
      %v1452 = vadd.f32 %v1311, %v1451
      %v1453 = vpop.f32.mrb[0].mxu0
      %v1454 = vpop.f32.mrb[0].mxu0
      %v1455 = vadd.f32 %v1311, %v1454
      %v1456 = vpop.f32.mrb[0].mxu0
      %1457 = vmatprep.mubr.bf16.mxu0 %v1215
      %1458 = vmatmul.mubr.bf16.gmra.mrb[0].mxu0 %v1214
      %v1459 = vpop.f32.mrb[0].mxu0
      %v1460 = vadd.f32 %v1311, %v1459
      %v1461 = vpop.f32.mrb[0].mxu0
      %v1462 = vpop.f32.mrb[0].mxu0
      %v1463 = vadd.f32 %v1311, %v1462
      %v1464 = vpop.f32.mrb[0].mxu0
      %1465 = vmatprep.mubr.bf16.mxu0 %v1217
      %1466 = vmatmul.mubr.bf16.gmra.mrb[0].mxu0 %v1216
      %v1467 = vpop.f32.mrb[0].mxu0
      %v1468 = vadd.f32 %v1311, %v1467
      %v1469 = vpop.f32.mrb[0].mxu0
      %v1470 = vpop.f32.mrb[0].mxu0
      %v1471 = vadd.f32 %v1311, %v1470
      %v1472 = vpop.f32.mrb[0].mxu0
      %1473 = vmatprep.mubr.bf16.mxu0 %v1219
      %1474 = vmatmul.mubr.bf16.gmra.mrb[0].mxu0 %v1218
      %v1475 = vpop.f32.mrb[0].mxu0
      %v1476 = vadd.f32 %v1311, %v1475
      %v1477 = vpop.f32.mrb[0].mxu0
      %v1478 = vpop.f32.mrb[0].mxu0
      %v1479 = vadd.f32 %v1311, %v1478
      %v1480 = vpop.f32.mrb[0].mxu0
      %1481 = vmatprep.mubr.bf16.mxu0 %v1221
      %1482 = vmatmul.mubr.bf16.gmra.mrb[0].mxu0 %v1220
      %v1483 = vpop.f32.mrb[0].mxu0
      %v1484 = vadd.f32 %v1311, %v1483
      %v1485 = vpop.f32.mrb[0].mxu0
      %v1486 = vpop.f32.mrb[0].mxu0
      %v1487 = vadd.f32 %v1311, %v1486
      %v1488 = vpop.f32.mrb[0].mxu0
      %1489 = vmatprep.mubr.bf16.mxu0 %v1223
      %1490 = vmatmul.mubr.bf16.gmra.mrb[0].mxu0 %v1222
      %v1491 = vpop.f32.mrb[0].mxu0
      %v1492 = vadd.f32 %v1311, %v1491
      %v1493 = vpop.f32.mrb[0].mxu0
      %v1494 = vpop.f32.mrb[0].mxu0
      %v1495 = vadd.f32 %v1311, %v1494
      %v1496 = vpop.f32.mrb[0].mxu0
      %1497 = vmatprep.mubr.bf16.mxu0 %v1225
      %1498 = vmatmul.mubr.bf16.gmra.mrb[0].mxu0 %v1224
      %v1499 = vpop.f32.mrb[0].mxu0
      %v1500 = vadd.f32 %v1311, %v1499
      %v1501 = vpop.f32.mrb[0].mxu0
      %v1502 = vpop.f32.mrb[0].mxu0
      %v1503 = vadd.f32 %v1311, %v1502
      %v1504 = vpop.f32.mrb[0].mxu0
      %1505 = vmatprep.mubr.bf16.mxu0 %v1227
      %1506 = vmatmul.mubr.bf16.gmra.mrb[0].mxu0 %v1226
      %v1507 = vpop.f32.mrb[0].mxu0
      %v1508 = vadd.f32 %v1311, %v1507
      %v1509 = vpop.f32.mrb[0].mxu0
      %v1510 = vpop.f32.mrb[0].mxu0
      %v1511 = vadd.f32 %v1311, %v1510
      %v1512 = vpop.f32.mrb[0].mxu0
      %1513 = vmatprep.mubr.bf16.mxu0 %v1229
      %1514 = vmatmul.mubr.bf16.gmra.mrb[0].mxu0 %v1228
      %v1515 = vpop.f32.mrb[0].mxu0
      %v1516 = vadd.f32 %v1311, %v1515
      %v1517 = vpop.f32.mrb[0].mxu0
      %v1518 = vpop.f32.mrb[0].mxu0
      %v1519 = vadd.f32 %v1311, %v1518
      %v1520 = vpop.f32.mrb[0].mxu0
      %1521 = vmatprep.mubr.bf16.mxu0 %v1231
      %1522 = vmatmul.mubr.bf16.gmra.mrb[0].mxu0 %v1230
      %v1523 = vpop.f32.mrb[0].mxu0
      %v1524 = vadd.f32 %v1311, %v1523
      %v1525 = vpop.f32.mrb[0].mxu0
      %v1526 = vpop.f32.mrb[0].mxu0
      %v1527 = vadd.f32 %v1311, %v1526
      %v1528 = vpop.f32.mrb[0].mxu0
      %1529 = vmatprep.mubr.bf16.mxu0 %v1233
      %1530 = vmatmul.mubr.bf16.gmra.mrb[0].mxu0 %v1232
      %v1531 = vpop.f32.mrb[0].mxu0
      %v1532 = vadd.f32 %v1311, %v1531
      %v1533 = vpop.f32.mrb[0].mxu0
      %v1534 = vpop.f32.mrb[0].mxu0
      %v1535 = vadd.f32 %v1311, %v1534
      %v1536 = vpop.f32.mrb[0].mxu0
      %1537 = vmatprep.mubr.bf16.mxu0 %v1235
      %1538 = vmatmul.mubr.bf16.gmra.mrb[0].mxu0 %v1234
      %v1539 = vpop.f32.mrb[0].mxu0
      %v1540 = vadd.f32 %v1311, %v1539
      %v1541 = vpop.f32.mrb[0].mxu0
      %v1542 = vpop.f32.mrb[0].mxu0
      %v1543 = vadd.f32 %v1311, %v1542
      %v1544 = vpop.f32.mrb[0].mxu0
      %1545 = vmatprep.mubr.bf16.mxu0 %v1237
      %1546 = vmatmul.mubr.bf16.gmra.mrb[0].mxu0 %v1236
      %v1547 = vpop.f32.mrb[0].mxu0
      %v1548 = vadd.f32 %v1311, %v1547
      %v1549 = vpop.f32.mrb[0].mxu0
      %v1550 = vpop.f32.mrb[0].mxu0
      %v1551 = vadd.f32 %v1311, %v1550
      %v1552 = vpop.f32.mrb[0].mxu0
      %1553 = vmatprep.mubr.bf16.mxu0 %v1239
      %1554 = vmatmul.mubr.bf16.gmra.mrb[0].mxu0 %v1238
      %v1555 = vpop.f32.mrb[0].mxu0
      %v1556 = vadd.f32 %v1311, %v1555
      %v1557 = vpop.f32.mrb[0].mxu0
      %v1558 = vpop.f32.mrb[0].mxu0
      %v1559 = vadd.f32 %v1311, %v1558
      %v1560 = vpop.f32.mrb[0].mxu0
      %1561 = vmatprep.mubr.bf16.mxu0 %v1241
      %1562 = vmatmul.mubr.bf16.gmra.mrb[0].mxu0 %v1240
      %v1563 = vpop.f32.mrb[0].mxu0
      %v1564 = vadd.f32 %v1311, %v1563
      %v1565 = vpop.f32.mrb[0].mxu0
      %v1566 = vpop.f32.mrb[0].mxu0
      %v1567 = vadd.f32 %v1311, %v1566
      %v1568 = vpop.f32.mrb[0].mxu0
      %1569 = vmatprep.mubr.bf16.mxu0 %v1243
      %1570 = vmatmul.mubr.bf16.gmra.mrb[0].mxu0 %v1242
      %v1571 = vpop.f32.mrb[0].mxu0
      %v1572 = vadd.f32 %v1311, %v1571
      %v1573 = vpop.f32.mrb[0].mxu0
      %v1574 = vpop.f32.mrb[0].mxu0
      %v1575 = vadd.f32 %v1311, %v1574
      %v1576 = vpop.f32.mrb[0].mxu0
      %1577 = vmatprep.mubr.bf16.mxu0 %v1245
      %1578 = vmatmul.mubr.bf16.gmra.mrb[0].mxu0 %v1244
      %v1579 = vpop.f32.mrb[0].mxu0
      %v1580 = vadd.f32 %v1311, %v1579
      %v1581 = vpop.f32.mrb[0].mxu0
      %v1582 = vpop.f32.mrb[0].mxu0
      %v1583 = vadd.f32 %v1311, %v1582
      %v1584 = vpop.f32.mrb[0].mxu0
      %1585 = vmatprep.mubr.bf16.mxu0 %v1247
      %1586 = vmatmul.mubr.bf16.gmra.mrb[0].mxu0 %v1246
      %v1587 = vpop.f32.mrb[0].mxu0
      %v1588 = vadd.f32 %v1311, %v1587
      %v1589 = vpop.f32.mrb[0].mxu0
      %v1590 = vpop.f32.mrb[0].mxu0
      %v1591 = vadd.f32 %v1311, %v1590
      %v1592 = vpop.f32.mrb[0].mxu0
      %1593 = vmatprep.mubr.bf16.mxu0 %v1249
      %1594 = vmatmul.mubr.bf16.gmra.mrb[0].mxu0 %v1248
      %v1595 = vpop.f32.mrb[0].mxu0
      %v1596 = vadd.f32 %v1311, %v1595
      %v1597 = vpop.f32.mrb[0].mxu0
      %v1598 = vpop.f32.mrb[0].mxu0
      %v1599 = vadd.f32 %v1311, %v1598
      %v1600 = vpop.f32.mrb[0].mxu0
      %1601 = vmatprep.mubr.bf16.mxu0 %v1251
      %1602 = vmatmul.mubr.bf16.gmra.mrb[0].mxu0 %v1250
      %v1603 = vpop.f32.mrb[0].mxu0
      %v1604 = vadd.f32 %v1311, %v1603
      %v1605 = vpop.f32.mrb[0].mxu0
      %v1606 = vpop.f32.mrb[0].mxu0
      %v1607 = vadd.f32 %v1311, %v1606
      %v1608 = vpop.f32.mrb[0].mxu0
      %1609 = vmatprep.mubr.bf16.mxu0 %v1253
      %1610 = vmatmul.mubr.bf16.gmra.mrb[0].mxu0 %v1252
      %v1611 = vpop.f32.mrb[0].mxu0
      %v1612 = vadd.f32 %v1311, %v1611
      %v1613 = vpop.f32.mrb[0].mxu0
      %v1614 = vpop.f32.mrb[0].mxu0
      %v1615 = vadd.f32 %v1311, %v1614
      %v1616 = vpop.f32.mrb[0].mxu0
      %1617 = vmatprep.mubr.bf16.mxu0 %v1255
      %1618 = vmatmul.mubr.bf16.gmra.mrb[0].mxu0 %v1254
      %v1619 = vpop.f32.mrb[0].mxu0
      %v1620 = vadd.f32 %v1311, %v1619
      %v1621 = vpop.f32.mrb[0].mxu0
      %v1622 = vpop.f32.mrb[0].mxu0
      %v1623 = vadd.f32 %v1311, %v1622
      %v1624 = vpop.f32.mrb[0].mxu0
      %1625 = vmatprep.mubr.bf16.mxu0 %v1257
      %1626 = vmatmul.mubr.bf16.gmra.mrb[0].mxu0 %v1256
      %v1627 = vpop.f32.mrb[0].mxu0
      %v1628 = vadd.f32 %v1311, %v1627
      %v1629 = vpop.f32.mrb[0].mxu0
      %v1630 = vpop.f32.mrb[0].mxu0
      %v1631 = vadd.f32 %v1311, %v1630
      %v1632 = vpop.f32.mrb[0].mxu0
      %1633 = vmatprep.mubr.bf16.mxu0 %v1259
      %1634 = vmatmul.mubr.bf16.gmra.mrb[0].mxu0 %v1258
      %v1635 = vpop.f32.mrb[0].mxu0
      %v1636 = vadd.f32 %v1311, %v1635
      %v1637 = vpop.f32.mrb[0].mxu0
      %v1638 = vpop.f32.mrb[0].mxu0
      %v1639 = vadd.f32 %v1311, %v1638
      %v1640 = vpop.f32.mrb[0].mxu0
      %1641 = vmatprep.mubr.bf16.mxu0 %v1261
      %1642 = vmatmul.mubr.bf16.gmra.mrb[0].mxu0 %v1260
      %v1643 = vpop.f32.mrb[0].mxu0
      %v1644 = vadd.f32 %v1311, %v1643
      %v1645 = vpop.f32.mrb[0].mxu0
      %v1646 = vpop.f32.mrb[0].mxu0
      %v1647 = vadd.f32 %v1311, %v1646
      %v1648 = vpop.f32.mrb[0].mxu0
      %1649 = vmatprep.mubr.bf16.mxu0 %v1263
      %1650 = vmatmul.mubr.bf16.gmra.mrb[0].mxu0 %v1262
      %v1651 = vpop.f32.mrb[0].mxu0
      %v1652 = vadd.f32 %v1311, %v1651
      %v1653 = vpop.f32.mrb[0].mxu0
      %v1654 = vpop.f32.mrb[0].mxu0
      %v1655 = vadd.f32 %v1311, %v1654
      %v1656 = vpop.f32.mrb[0].mxu0
      %1657 = vmatprep.mubr.bf16.mxu0 %v1265
      %1658 = vmatmul.mubr.bf16.gmra.mrb[0].mxu0 %v1264
      %v1659 = vpop.f32.mrb[0].mxu0
      %v1660 = vadd.f32 %v1311, %v1659
      %v1661 = vpop.f32.mrb[0].mxu0
      %v1662 = vpop.f32.mrb[0].mxu0
      %v1663 = vadd.f32 %v1311, %v1662
      %v1664 = vpop.f32.mrb[0].mxu0
      %1665 = vmatprep.mubr.bf16.mxu0 %v1267
      %1666 = vmatmul.mubr.bf16.gmra.mrb[0].mxu0 %v1266
      %v1667 = vpop.f32.mrb[0].mxu0
      %v1668 = vadd.f32 %v1311, %v1667
      %v1669 = vpop.f32.mrb[0].mxu0
      %v1670 = vpop.f32.mrb[0].mxu0
      %v1671 = vadd.f32 %v1311, %v1670
      %v1672 = vpop.f32.mrb[0].mxu0
      %1673 = vmatprep.mubr.bf16.mxu0 %v1269
      %1674 = vmatmul.mubr.bf16.gmra.mrb[0].mxu0 %v1268
      %v1675 = vpop.f32.mrb[0].mxu0
      %v1676 = vadd.f32 %v1311, %v1675
      %v1677 = vpop.f32.mrb[0].mxu0
      %v1678 = vpop.f32.mrb[0].mxu0
      %v1679 = vadd.f32 %v1311, %v1678
      %v1680 = vpop.f32.mrb[0].mxu0
      %1681 = vmatprep.mubr.bf16.mxu0 %v1271
      %1682 = vmatmul.mubr.bf16.gmra.mrb[0].mxu0 %v1270
      %v1683 = vpop.f32.mrb[0].mxu0
      %v1684 = vadd.f32 %v1311, %v1683
      %v1685 = vpop.f32.mrb[0].mxu0
      %v1686 = vpop.f32.mrb[0].mxu0
      %v1687 = vadd.f32 %v1311, %v1686
      %v1688 = vpop.f32.mrb[0].mxu0
      %1689 = vmatprep.mubr.bf16.mxu0 %v1273
      %1690 = vmatmul.mubr.bf16.gmra.mrb[0].mxu0 %v1272
      %v1691 = vpop.f32.mrb[0].mxu0
      %v1692 = vadd.f32 %v1311, %v1691
      %v1693 = vpop.f32.mrb[0].mxu0
      %v1694 = vpop.f32.mrb[0].mxu0
      %v1695 = vadd.f32 %v1311, %v1694
      %v1696 = vpop.f32.mrb[0].mxu0
      %1697 = vdwg.mxu0
      %v1698 = vmax.f32 %v1444, 0.0
      %v1699 = vmax.f32 %v1447, 0.0
      %v1700 = vmax.f32 %v1452, 0.0
      %v1701 = vmax.f32 %v1455, 0.0
      %v1702 = vmax.f32 %v1460, 0.0
      %v1703 = vmax.f32 %v1463, 0.0
      %v1704 = vmax.f32 %v1468, 0.0
      %v1705 = vmax.f32 %v1471, 0.0
      %v1706 = vmax.f32 %v1476, 0.0
      %v1707 = vmax.f32 %v1479, 0.0
      %v1708 = vmax.f32 %v1484, 0.0
      %v1709 = vmax.f32 %v1487, 0.0
      %v1710 = vmax.f32 %v1492, 0.0
      %v1711 = vmax.f32 %v1495, 0.0
      %v1712 = vmax.f32 %v1500, 0.0
      %v1713 = vmax.f32 %v1503, 0.0
      %v1714 = vmax.f32 %v1508, 0.0
      %v1715 = vmax.f32 %v1511, 0.0
      %v1716 = vmax.f32 %v1516, 0.0
      %v1717 = vmax.f32 %v1519, 0.0
      %v1718 = vmax.f32 %v1524, 0.0
      %v1719 = vmax.f32 %v1527, 0.0
      %v1720 = vmax.f32 %v1532, 0.0
      %v1721 = vmax.f32 %v1535, 0.0
      %v1722 = vmax.f32 %v1540, 0.0
      %v1723 = vmax.f32 %v1543, 0.0
      %v1724 = vmax.f32 %v1548, 0.0
      %v1725 = vmax.f32 %v1551, 0.0
      %v1726 = vmax.f32 %v1556, 0.0
      %v1727 = vmax.f32 %v1559, 0.0
      %v1728 = vmax.f32 %v1564, 0.0
      %v1729 = vmax.f32 %v1567, 0.0
      %v1730 = vmax.f32 %v1572, 0.0
      %v1731 = vmax.f32 %v1575, 0.0
      %v1732 = vmax.f32 %v1580, 0.0
      %v1733 = vmax.f32 %v1583, 0.0
      %v1734 = vmax.f32 %v1588, 0.0
      %v1735 = vmax.f32 %v1591, 0.0
      %v1736 = vmax.f32 %v1596, 0.0
      %v1737 = vmax.f32 %v1599, 0.0
      %v1738 = vmax.f32 %v1604, 0.0
      %v1739 = vmax.f32 %v1607, 0.0
      %v1740 = vmax.f32 %v1612, 0.0
      %v1741 = vmax.f32 %v1615, 0.0
      %v1742 = vmax.f32 %v1620, 0.0
      %v1743 = vmax.f32 %v1623, 0.0
      %v1744 = vmax.f32 %v1628, 0.0
      %v1745 = vmax.f32 %v1631, 0.0
      %v1746 = vmax.f32 %v1636, 0.0
      %v1747 = vmax.f32 %v1639, 0.0
      %v1748 = vmax.f32 %v1644, 0.0
      %v1749 = vmax.f32 %v1647, 0.0
      %v1750 = vmax.f32 %v1652, 0.0
      %v1751 = vmax.f32 %v1655, 0.0
      %v1752 = vmax.f32 %v1660, 0.0
      %v1753 = vmax.f32 %v1663, 0.0
      %v1754 = vmax.f32 %v1668, 0.0
      %v1755 = vmax.f32 %v1671, 0.0
      %v1756 = vmax.f32 %v1676, 0.0
      %v1757 = vmax.f32 %v1679, 0.0
      %v1758 = vmax.f32 %v1684, 0.0
      %v1759 = vmax.f32 %v1687, 0.0
      %v1760 = vmax.f32 %v1692, 0.0
      %v1761 = vmax.f32 %v1695, 0.0
      %v1762 = vpack.c.bf16 %v1699, %v1698
      %v1763 = vpack.c.bf16 %v1701, %v1700
      %v1764 = vpack.c.bf16 %v1703, %v1702
      %v1765 = vpack.c.bf16 %v1705, %v1704
      %v1766 = vpack.c.bf16 %v1707, %v1706
      %v1767 = vpack.c.bf16 %v1709, %v1708
      %v1768 = vpack.c.bf16 %v1711, %v1710
      %v1769 = vpack.c.bf16 %v1713, %v1712
      %v1770 = vpack.c.bf16 %v1715, %v1714
      %v1771 = vpack.c.bf16 %v1717, %v1716
      %v1772 = vpack.c.bf16 %v1719, %v1718
      %v1773 = vpack.c.bf16 %v1721, %v1720
      %v1774 = vpack.c.bf16 %v1723, %v1722
      %v1775 = vpack.c.bf16 %v1725, %v1724
      %v1776 = vpack.c.bf16 %v1727, %v1726
      %v1777 = vpack.c.bf16 %v1729, %v1728
      %v1778 = vpack.c.bf16 %v1731, %v1730
      %v1779 = vpack.c.bf16 %v1733, %v1732
      %v1780 = vpack.c.bf16 %v1735, %v1734
      %v1781 = vpack.c.bf16 %v1737, %v1736
      %v1782 = vpack.c.bf16 %v1739, %v1738
      %v1783 = vpack.c.bf16 %v1741, %v1740
      %v1784 = vpack.c.bf16 %v1743, %v1742
      %v1785 = vpack.c.bf16 %v1745, %v1744
      %v1786 = vpack.c.bf16 %v1747, %v1746
      %v1787 = vpack.c.bf16 %v1749, %v1748
      %v1788 = vpack.c.bf16 %v1751, %v1750
      %v1789 = vpack.c.bf16 %v1753, %v1752
      %v1790 = vpack.c.bf16 %v1755, %v1754
      %v1791 = vpack.c.bf16 %v1757, %v1756
      %v1792 = vpack.c.bf16 %v1759, %v1758
      %v1793 = vpack.c.bf16 %v1761, %v1760
      %v1794 = vld [vmem:[%s5] sm:$0xff]
      %v1795 = vld [vmem:[%s5 + $0x8] sm:$0xff]
      %v1796 = vld [vmem:[%s5 + $0x10] sm:$0xff]
      %v1797 = vld [vmem:[%s5 + $0x18] sm:$0xff]
      %v1798 = vld [vmem:[%s6] sm:$0x3]
      %v1800 = vlaneseq
      %v1801 = vshrl.u32 %v1800, 7
      %v1802 = vsub.s32 0, %v1801
      %v1803 = vrot.slane %v1798, %v1802
      %v1804 = vlaneseq
      %v1805 = vshrl.u32 %v1804, 7
      %v1806 = vsub.s32 1, %v1805
      %v1807 = vrot.slane %v1798, %v1806
      %v1814 = vunpack.c.l.b16 %v1794
      %v1815 = vunpack.c.h.b16 %v1794
      %v1816 = vunpack.c.l.b16 %v1795
      %v1817 = vunpack.c.h.b16 %v1795
      %v1818 = vunpack.c.l.b16 %v1796
      %v1819 = vunpack.c.h.b16 %v1796
      %v1820 = vunpack.c.l.b16 %v1797
      %v1821 = vunpack.c.h.b16 %v1797
      %v1822 = vpack.c.b16 %v1816, %v1814
      %v1823 = vpack.c.b16 %v1817, %v1815
      %v1824 = vpack.c.b16 %v1820, %v1818
      %v1825 = vpack.c.b16 %v1821, %v1819
      %vm1830 = vcmask 261120
      %v1832 = vsel %vm1830, %v1762, 0
      %v1835 = vsel %vm1830, %v1763, 0
      %v1838 = vsel %vm1830, %v1764, 0
      %v1841 = vsel %vm1830, %v1765, 0
      %v1844 = vsel %vm1830, %v1766, 0
      %v1847 = vsel %vm1830, %v1767, 0
      %v1850 = vsel %vm1830, %v1768, 0
      %v1853 = vsel %vm1830, %v1769, 0
      %v1856 = vsel %vm1830, %v1770, 0
      %v1859 = vsel %vm1830, %v1771, 0
      %v1862 = vsel %vm1830, %v1772, 0
      %v1865 = vsel %vm1830, %v1773, 0
      %v1868 = vsel %vm1830, %v1774, 0
      %v1871 = vsel %vm1830, %v1775, 0
      %v1874 = vsel %vm1830, %v1776, 0
      %v1877 = vsel %vm1830, %v1777, 0
      %v1880 = vsel %vm1830, %v1778, 0
      %v1883 = vsel %vm1830, %v1779, 0
      %v1886 = vsel %vm1830, %v1780, 0
      %v1889 = vsel %vm1830, %v1781, 0
      %v1892 = vsel %vm1830, %v1782, 0
      %v1895 = vsel %vm1830, %v1783, 0
      %v1898 = vsel %vm1830, %v1784, 0
      %v1901 = vsel %vm1830, %v1785, 0
      %v1904 = vsel %vm1830, %v1786, 0
      %v1907 = vsel %vm1830, %v1787, 0
      %v1910 = vsel %vm1830, %v1788, 0
      %v1913 = vsel %vm1830, %v1789, 0
      %v1916 = vsel %vm1830, %v1790, 0
      %v1919 = vsel %vm1830, %v1791, 0
      %v1922 = vsel %vm1830, %v1792, 0
      %v1925 = vsel %vm1830, %v1793, 0
      %1927 = vmatprep.subr.bf16.mxu0 %v1823
      %1928 = vmatpush1.bf16.msra.mxu0 %v1822
      %1929 = vmatprep.subr.bf16.mxu0 %v1825
      %1930 = vmatpush1.bf16.msra.mxu0 %v1824
      %1931 = vmatprep.subr.bf16.mxu0 0
      %1932 = vmatpush1.bf16.msra.mxu0 0
      %1933 = vmatprep.subr.bf16.mxu0 0
      %1934 = vmatpush1.bf16.msra.mxu0 0
      %1935 = vmatprep.subr.bf16.mxu0 0
      %1936 = vmatpush1.bf16.msra.mxu0 0
      %1937 = vmatprep.subr.bf16.mxu0 0
      %1938 = vmatpush1.bf16.msra.mxu0 0
      %1939 = vmatprep.subr.bf16.mxu0 0
      %1940 = vmatpush1.bf16.msra.mxu0 0
      %1941 = vmatprep.subr.bf16.mxu0 0
      %1942 = vmatpush1.bf16.msra.mxu0 0
      %1943 = vmatprep.subr.bf16.mxu0 0
      %1944 = vmatpush1.bf16.msra.mxu0 0
      %1945 = vmatprep.subr.bf16.mxu0 0
      %1946 = vmatpush1.bf16.msra.mxu0 0
      %1947 = vmatprep.subr.bf16.mxu0 0
      %1948 = vmatpush1.bf16.msra.mxu0 0
      %1949 = vmatprep.subr.bf16.mxu0 0
      %1950 = vmatpush1.bf16.msra.mxu0 0
      %1951 = vmatprep.subr.bf16.mxu0 0
      %1952 = vmatpush1.bf16.msra.mxu0 0
      %1953 = vmatprep.subr.bf16.mxu0 0
      %1954 = vmatpush1.bf16.msra.mxu0 0
      %1955 = vmatprep.subr.bf16.mxu0 0
      %1956 = vmatpush1.bf16.msra.mxu0 0
      %1957 = vmatprep.subr.bf16.mxu0 0
      %1958 = vmatpush1.bf16.msra.mxu0 0
      %1959 = vmatprep.mubr.bf16.mxu0 0
      %1960 = vmatmul.mubr.bf16.gmra.mrb[0].mxu0 %v1832
      %v1961 = vpop.f32.mrb[0].mxu0
      %v1962 = vadd.f32 %v1803, %v1961
      %v1963 = vpop.f32.mrb[0].mxu0
      %v1964 = vadd.f32 %v1807, %v1963
      %v1965 = vpop.f32.mrb[0].mxu0
      %v1966 = vadd.f32 %v1803, %v1965
      %v1967 = vpop.f32.mrb[0].mxu0
      %v1968 = vadd.f32 %v1807, %v1967
      %1969 = vmatprep.mubr.bf16.mxu0 0
      %1970 = vmatmul.mubr.bf16.gmra.mrb[0].mxu0 %v1835
      %v1971 = vpop.f32.mrb[0].mxu0
      %v1972 = vadd.f32 %v1803, %v1971
      %v1973 = vpop.f32.mrb[0].mxu0
      %v1974 = vadd.f32 %v1807, %v1973
      %v1975 = vpop.f32.mrb[0].mxu0
      %v1976 = vadd.f32 %v1803, %v1975
      %v1977 = vpop.f32.mrb[0].mxu0
      %v1978 = vadd.f32 %v1807, %v1977
      %1979 = vmatprep.mubr.bf16.mxu0 0
      %1980 = vmatmul.mubr.bf16.gmra.mrb[0].mxu0 %v1838
      %v1981 = vpop.f32.mrb[0].mxu0
      %v1982 = vadd.f32 %v1803, %v1981
      %v1983 = vpop.f32.mrb[0].mxu0
      %v1984 = vadd.f32 %v1807, %v1983
      %v1985 = vpop.f32.mrb[0].mxu0
      %v1986 = vadd.f32 %v1803, %v1985
      %v1987 = vpop.f32.mrb[0].mxu0
      %v1988 = vadd.f32 %v1807, %v1987
      %1989 = vmatprep.mubr.bf16.mxu0 0
      %1990 = vmatmul.mubr.bf16.gmra.mrb[0].mxu0 %v1841
      %v1991 = vpop.f32.mrb[0].mxu0
      %v1992 = vadd.f32 %v1803, %v1991
      %v1993 = vpop.f32.mrb[0].mxu0
      %v1994 = vadd.f32 %v1807, %v1993
      %v1995 = vpop.f32.mrb[0].mxu0
      %v1996 = vadd.f32 %v1803, %v1995
      %v1997 = vpop.f32.mrb[0].mxu0
      %v1998 = vadd.f32 %v1807, %v1997
      %1999 = vmatprep.mubr.bf16.mxu0 0
      %2000 = vmatmul.mubr.bf16.gmra.mrb[0].mxu0 %v1844
      %v2001 = vpop.f32.mrb[0].mxu0
      %v2002 = vadd.f32 %v1803, %v2001
      %v2003 = vpop.f32.mrb[0].mxu0
      %v2004 = vadd.f32 %v1807, %v2003
      %v2005 = vpop.f32.mrb[0].mxu0
      %v2006 = vadd.f32 %v1803, %v2005
      %v2007 = vpop.f32.mrb[0].mxu0
      %v2008 = vadd.f32 %v1807, %v2007
      %2009 = vmatprep.mubr.bf16.mxu0 0
      %2010 = vmatmul.mubr.bf16.gmra.mrb[0].mxu0 %v1847
      %v2011 = vpop.f32.mrb[0].mxu0
      %v2012 = vadd.f32 %v1803, %v2011
      %v2013 = vpop.f32.mrb[0].mxu0
      %v2014 = vadd.f32 %v1807, %v2013
      %v2015 = vpop.f32.mrb[0].mxu0
      %v2016 = vadd.f32 %v1803, %v2015
      %v2017 = vpop.f32.mrb[0].mxu0
      %v2018 = vadd.f32 %v1807, %v2017
      %2019 = vmatprep.mubr.bf16.mxu0 0
      %2020 = vmatmul.mubr.bf16.gmra.mrb[0].mxu0 %v1850
      %v2021 = vpop.f32.mrb[0].mxu0
      %v2022 = vadd.f32 %v1803, %v2021
      %v2023 = vpop.f32.mrb[0].mxu0
      %v2024 = vadd.f32 %v1807, %v2023
      %v2025 = vpop.f32.mrb[0].mxu0
      %v2026 = vadd.f32 %v1803, %v2025
      %v2027 = vpop.f32.mrb[0].mxu0
      %v2028 = vadd.f32 %v1807, %v2027
      %2029 = vmatprep.mubr.bf16.mxu0 0
      %2030 = vmatmul.mubr.bf16.gmra.mrb[0].mxu0 %v1853
      %v2031 = vpop.f32.mrb[0].mxu0
      %v2032 = vadd.f32 %v1803, %v2031
      %v2033 = vpop.f32.mrb[0].mxu0
      %v2034 = vadd.f32 %v1807, %v2033
      %v2035 = vpop.f32.mrb[0].mxu0
      %v2036 = vadd.f32 %v1803, %v2035
      %v2037 = vpop.f32.mrb[0].mxu0
      %v2038 = vadd.f32 %v1807, %v2037
      %2039 = vmatprep.mubr.bf16.mxu0 0
      %2040 = vmatmul.mubr.bf16.gmra.mrb[0].mxu0 %v1856
      %v2041 = vpop.f32.mrb[0].mxu0
      %v2042 = vadd.f32 %v1803, %v2041
      %v2043 = vpop.f32.mrb[0].mxu0
      %v2044 = vadd.f32 %v1807, %v2043
      %v2045 = vpop.f32.mrb[0].mxu0
      %v2046 = vadd.f32 %v1803, %v2045
      %v2047 = vpop.f32.mrb[0].mxu0
      %v2048 = vadd.f32 %v1807, %v2047
      %2049 = vmatprep.mubr.bf16.mxu0 0
      %2050 = vmatmul.mubr.bf16.gmra.mrb[0].mxu0 %v1859
      %v2051 = vpop.f32.mrb[0].mxu0
      %v2052 = vadd.f32 %v1803, %v2051
      %v2053 = vpop.f32.mrb[0].mxu0
      %v2054 = vadd.f32 %v1807, %v2053
      %v2055 = vpop.f32.mrb[0].mxu0
      %v2056 = vadd.f32 %v1803, %v2055
      %v2057 = vpop.f32.mrb[0].mxu0
      %v2058 = vadd.f32 %v1807, %v2057
      %2059 = vmatprep.mubr.bf16.mxu0 0
      %2060 = vmatmul.mubr.bf16.gmra.mrb[0].mxu0 %v1862
      %v2061 = vpop.f32.mrb[0].mxu0
      %v2062 = vadd.f32 %v1803, %v2061
      %v2063 = vpop.f32.mrb[0].mxu0
      %v2064 = vadd.f32 %v1807, %v2063
      %v2065 = vpop.f32.mrb[0].mxu0
      %v2066 = vadd.f32 %v1803, %v2065
      %v2067 = vpop.f32.mrb[0].mxu0
      %v2068 = vadd.f32 %v1807, %v2067
      %2069 = vmatprep.mubr.bf16.mxu0 0
      %2070 = vmatmul.mubr.bf16.gmra.mrb[0].mxu0 %v1865
      %v2071 = vpop.f32.mrb[0].mxu0
      %v2072 = vadd.f32 %v1803, %v2071
      %v2073 = vpop.f32.mrb[0].mxu0
      %v2074 = vadd.f32 %v1807, %v2073
      %v2075 = vpop.f32.mrb[0].mxu0
      %v2076 = vadd.f32 %v1803, %v2075
      %v2077 = vpop.f32.mrb[0].mxu0
      %v2078 = vadd.f32 %v1807, %v2077
      %2079 = vmatprep.mubr.bf16.mxu0 0
      %2080 = vmatmul.mubr.bf16.gmra.mrb[0].mxu0 %v1868
      %v2081 = vpop.f32.mrb[0].mxu0
      %v2082 = vadd.f32 %v1803, %v2081
      %v2083 = vpop.f32.mrb[0].mxu0
      %v2084 = vadd.f32 %v1807, %v2083
      %v2085 = vpop.f32.mrb[0].mxu0
      %v2086 = vadd.f32 %v1803, %v2085
      %v2087 = vpop.f32.mrb[0].mxu0
      %v2088 = vadd.f32 %v1807, %v2087
      %2089 = vmatprep.mubr.bf16.mxu0 0
      %2090 = vmatmul.mubr.bf16.gmra.mrb[0].mxu0 %v1871
      %v2091 = vpop.f32.mrb[0].mxu0
      %v2092 = vadd.f32 %v1803, %v2091
      %v2093 = vpop.f32.mrb[0].mxu0
      %v2094 = vadd.f32 %v1807, %v2093
      %v2095 = vpop.f32.mrb[0].mxu0
      %v2096 = vadd.f32 %v1803, %v2095
      %v2097 = vpop.f32.mrb[0].mxu0
      %v2098 = vadd.f32 %v1807, %v2097
      %2099 = vmatprep.mubr.bf16.mxu0 0
      %2100 = vmatmul.mubr.bf16.gmra.mrb[0].mxu0 %v1874
      %v2101 = vpop.f32.mrb[0].mxu0
      %v2102 = vadd.f32 %v1803, %v2101
      %v2103 = vpop.f32.mrb[0].mxu0
      %v2104 = vadd.f32 %v1807, %v2103
      %v2105 = vpop.f32.mrb[0].mxu0
      %v2106 = vadd.f32 %v1803, %v2105
      %v2107 = vpop.f32.mrb[0].mxu0
      %v2108 = vadd.f32 %v1807, %v2107
      %2109 = vmatprep.mubr.bf16.mxu0 0
      %2110 = vmatmul.mubr.bf16.gmra.mrb[0].mxu0 %v1877
      %v2111 = vpop.f32.mrb[0].mxu0
      %v2112 = vadd.f32 %v1803, %v2111
      %v2113 = vpop.f32.mrb[0].mxu0
      %v2114 = vadd.f32 %v1807, %v2113
      %v2115 = vpop.f32.mrb[0].mxu0
      %v2116 = vadd.f32 %v1803, %v2115
      %v2117 = vpop.f32.mrb[0].mxu0
      %v2118 = vadd.f32 %v1807, %v2117
      %2119 = vmatprep.mubr.bf16.mxu0 0
      %2120 = vmatmul.mubr.bf16.gmra.mrb[0].mxu0 %v1880
      %v2121 = vpop.f32.mrb[0].mxu0
      %v2122 = vadd.f32 %v1803, %v2121
      %v2123 = vpop.f32.mrb[0].mxu0
      %v2124 = vadd.f32 %v1807, %v2123
      %v2125 = vpop.f32.mrb[0].mxu0
      %v2126 = vadd.f32 %v1803, %v2125
      %v2127 = vpop.f32.mrb[0].mxu0
      %v2128 = vadd.f32 %v1807, %v2127
      %2129 = vmatprep.mubr.bf16.mxu0 0
      %2130 = vmatmul.mubr.bf16.gmra.mrb[0].mxu0 %v1883
      %v2131 = vpop.f32.mrb[0].mxu0
      %v2132 = vadd.f32 %v1803, %v2131
      %v2133 = vpop.f32.mrb[0].mxu0
      %v2134 = vadd.f32 %v1807, %v2133
      %v2135 = vpop.f32.mrb[0].mxu0
      %v2136 = vadd.f32 %v1803, %v2135
      %v2137 = vpop.f32.mrb[0].mxu0
      %v2138 = vadd.f32 %v1807, %v2137
      %2139 = vmatprep.mubr.bf16.mxu0 0
      %2140 = vmatmul.mubr.bf16.gmra.mrb[0].mxu0 %v1886
      %v2141 = vpop.f32.mrb[0].mxu0
      %v2142 = vadd.f32 %v1803, %v2141
      %v2143 = vpop.f32.mrb[0].mxu0
      %v2144 = vadd.f32 %v1807, %v2143
      %v2145 = vpop.f32.mrb[0].mxu0
      %v2146 = vadd.f32 %v1803, %v2145
      %v2147 = vpop.f32.mrb[0].mxu0
      %v2148 = vadd.f32 %v1807, %v2147
      %2149 = vmatprep.mubr.bf16.mxu0 0
      %2150 = vmatmul.mubr.bf16.gmra.mrb[0].mxu0 %v1889
      %v2151 = vpop.f32.mrb[0].mxu0
      %v2152 = vadd.f32 %v1803, %v2151
      %v2153 = vpop.f32.mrb[0].mxu0
      %v2154 = vadd.f32 %v1807, %v2153
      %v2155 = vpop.f32.mrb[0].mxu0
      %v2156 = vadd.f32 %v1803, %v2155
      %v2157 = vpop.f32.mrb[0].mxu0
      %v2158 = vadd.f32 %v1807, %v2157
      %2159 = vmatprep.mubr.bf16.mxu0 0
      %2160 = vmatmul.mubr.bf16.gmra.mrb[0].mxu0 %v1892
      %v2161 = vpop.f32.mrb[0].mxu0
      %v2162 = vadd.f32 %v1803, %v2161
      %v2163 = vpop.f32.mrb[0].mxu0
      %v2164 = vadd.f32 %v1807, %v2163
      %v2165 = vpop.f32.mrb[0].mxu0
      %v2166 = vadd.f32 %v1803, %v2165
      %v2167 = vpop.f32.mrb[0].mxu0
      %v2168 = vadd.f32 %v1807, %v2167
      %2169 = vmatprep.mubr.bf16.mxu0 0
      %2170 = vmatmul.mubr.bf16.gmra.mrb[0].mxu0 %v1895
      %v2171 = vpop.f32.mrb[0].mxu0
      %v2172 = vadd.f32 %v1803, %v2171
      %v2173 = vpop.f32.mrb[0].mxu0
      %v2174 = vadd.f32 %v1807, %v2173
      %v2175 = vpop.f32.mrb[0].mxu0
      %v2176 = vadd.f32 %v1803, %v2175
      %v2177 = vpop.f32.mrb[0].mxu0
      %v2178 = vadd.f32 %v1807, %v2177
      %2179 = vmatprep.mubr.bf16.mxu0 0
      %2180 = vmatmul.mubr.bf16.gmra.mrb[0].mxu0 %v1898
      %v2181 = vpop.f32.mrb[0].mxu0
      %v2182 = vadd.f32 %v1803, %v2181
      %v2183 = vpop.f32.mrb[0].mxu0
      %v2184 = vadd.f32 %v1807, %v2183
      %v2185 = vpop.f32.mrb[0].mxu0
      %v2186 = vadd.f32 %v1803, %v2185
      %v2187 = vpop.f32.mrb[0].mxu0
      %v2188 = vadd.f32 %v1807, %v2187
      %2189 = vmatprep.mubr.bf16.mxu0 0
      %2190 = vmatmul.mubr.bf16.gmra.mrb[0].mxu0 %v1901
      %v2191 = vpop.f32.mrb[0].mxu0
      %v2192 = vadd.f32 %v1803, %v2191
      %v2193 = vpop.f32.mrb[0].mxu0
      %v2194 = vadd.f32 %v1807, %v2193
      %v2195 = vpop.f32.mrb[0].mxu0
      %v2196 = vadd.f32 %v1803, %v2195
      %v2197 = vpop.f32.mrb[0].mxu0
      %v2198 = vadd.f32 %v1807, %v2197
      %2199 = vmatprep.mubr.bf16.mxu0 0
      %2200 = vmatmul.mubr.bf16.gmra.mrb[0].mxu0 %v1904
      %v2201 = vpop.f32.mrb[0].mxu0
      %v2202 = vadd.f32 %v1803, %v2201
      %v2203 = vpop.f32.mrb[0].mxu0
      %v2204 = vadd.f32 %v1807, %v2203
      %v2205 = vpop.f32.mrb[0].mxu0
      %v2206 = vadd.f32 %v1803, %v2205
      %v2207 = vpop.f32.mrb[0].mxu0
      %v2208 = vadd.f32 %v1807, %v2207
      %2209 = vmatprep.mubr.bf16.mxu0 0
      %2210 = vmatmul.mubr.bf16.gmra.mrb[0].mxu0 %v1907
      %v2211 = vpop.f32.mrb[0].mxu0
      %v2212 = vadd.f32 %v1803, %v2211
      %v2213 = vpop.f32.mrb[0].mxu0
      %v2214 = vadd.f32 %v1807, %v2213
      %v2215 = vpop.f32.mrb[0].mxu0
      %v2216 = vadd.f32 %v1803, %v2215
      %v2217 = vpop.f32.mrb[0].mxu0
      %v2218 = vadd.f32 %v1807, %v2217
      %2219 = vmatprep.mubr.bf16.mxu0 0
      %2220 = vmatmul.mubr.bf16.gmra.mrb[0].mxu0 %v1910
      %v2221 = vpop.f32.mrb[0].mxu0
      %v2222 = vadd.f32 %v1803, %v2221
      %v2223 = vpop.f32.mrb[0].mxu0
      %v2224 = vadd.f32 %v1807, %v2223
      %v2225 = vpop.f32.mrb[0].mxu0
      %v2226 = vadd.f32 %v1803, %v2225
      %v2227 = vpop.f32.mrb[0].mxu0
      %v2228 = vadd.f32 %v1807, %v2227
      %2229 = vmatprep.mubr.bf16.mxu0 0
      %2230 = vmatmul.mubr.bf16.gmra.mrb[0].mxu0 %v1913
      %v2231 = vpop.f32.mrb[0].mxu0
      %v2232 = vadd.f32 %v1803, %v2231
      %v2233 = vpop.f32.mrb[0].mxu0
      %v2234 = vadd.f32 %v1807, %v2233
      %v2235 = vpop.f32.mrb[0].mxu0
      %v2236 = vadd.f32 %v1803, %v2235
      %v2237 = vpop.f32.mrb[0].mxu0
      %v2238 = vadd.f32 %v1807, %v2237
      %2239 = vmatprep.mubr.bf16.mxu0 0
      %2240 = vmatmul.mubr.bf16.gmra.mrb[0].mxu0 %v1916
      %v2241 = vpop.f32.mrb[0].mxu0
      %v2242 = vadd.f32 %v1803, %v2241
      %v2243 = vpop.f32.mrb[0].mxu0
      %v2244 = vadd.f32 %v1807, %v2243
      %v2245 = vpop.f32.mrb[0].mxu0
      %v2246 = vadd.f32 %v1803, %v2245
      %v2247 = vpop.f32.mrb[0].mxu0
      %v2248 = vadd.f32 %v1807, %v2247
      %2249 = vmatprep.mubr.bf16.mxu0 0
      %2250 = vmatmul.mubr.bf16.gmra.mrb[0].mxu0 %v1919
      %v2251 = vpop.f32.mrb[0].mxu0
      %v2252 = vadd.f32 %v1803, %v2251
      %v2253 = vpop.f32.mrb[0].mxu0
      %v2254 = vadd.f32 %v1807, %v2253
      %v2255 = vpop.f32.mrb[0].mxu0
      %v2256 = vadd.f32 %v1803, %v2255
      %v2257 = vpop.f32.mrb[0].mxu0
      %v2258 = vadd.f32 %v1807, %v2257
      %2259 = vmatprep.mubr.bf16.mxu0 0
      %2260 = vmatmul.mubr.bf16.gmra.mrb[0].mxu0 %v1922
      %v2261 = vpop.f32.mrb[0].mxu0
      %v2262 = vadd.f32 %v1803, %v2261
      %v2263 = vpop.f32.mrb[0].mxu0
      %v2264 = vadd.f32 %v1807, %v2263
      %v2265 = vpop.f32.mrb[0].mxu0
      %v2266 = vadd.f32 %v1803, %v2265
      %v2267 = vpop.f32.mrb[0].mxu0
      %v2268 = vadd.f32 %v1807, %v2267
      %2269 = vmatprep.mubr.bf16.mxu0 0
      %2270 = vmatmul.mubr.bf16.gmra.mrb[0].mxu0 %v1925
      %v2271 = vpop.f32.mrb[0].mxu0
      %v2272 = vadd.f32 %v1803, %v2271
      %v2273 = vpop.f32.mrb[0].mxu0
      %v2274 = vadd.f32 %v1807, %v2273
      %v2275 = vpop.f32.mrb[0].mxu0
      %v2276 = vadd.f32 %v1803, %v2275
      %v2277 = vpop.f32.mrb[0].mxu0
      %v2278 = vadd.f32 %v1807, %v2277
      %2279 = vdwg.mxu0
      %v2280 = vmax.f32 %v1962, 0.0
      %v2281 = vmax.f32 %v1964, 0.0
      %v2282 = vmax.f32 %v1966, 0.0
      %v2283 = vmax.f32 %v1968, 0.0
      %v2284 = vmax.f32 %v1972, 0.0
      %v2285 = vmax.f32 %v1974, 0.0
      %v2286 = vmax.f32 %v1976, 0.0
      %v2287 = vmax.f32 %v1978, 0.0
      %v2288 = vmax.f32 %v1982, 0.0
      %v2289 = vmax.f32 %v1984, 0.0
      %v2290 = vmax.f32 %v1986, 0.0
      %v2291 = vmax.f32 %v1988, 0.0
      %v2292 = vmax.f32 %v1992, 0.0
      %v2293 = vmax.f32 %v1994, 0.0
      %v2294 = vmax.f32 %v1996, 0.0
      %v2295 = vmax.f32 %v1998, 0.0
      %v2296 = vmax.f32 %v2002, 0.0
      %v2297 = vmax.f32 %v2004, 0.0
      %v2298 = vmax.f32 %v2006, 0.0
      %v2299 = vmax.f32 %v2008, 0.0
      %v2300 = vmax.f32 %v2012, 0.0
      %v2301 = vmax.f32 %v2014, 0.0
      %v2302 = vmax.f32 %v2016, 0.0
      %v2303 = vmax.f32 %v2018, 0.0
      %v2304 = vmax.f32 %v2022, 0.0
      %v2305 = vmax.f32 %v2024, 0.0
      %v2306 = vmax.f32 %v2026, 0.0
      %v2307 = vmax.f32 %v2028, 0.0
      %v2308 = vmax.f32 %v2032, 0.0
      %v2309 = vmax.f32 %v2034, 0.0
      %v2310 = vmax.f32 %v2036, 0.0
      %v2311 = vmax.f32 %v2038, 0.0
      %v2312 = vmax.f32 %v2042, 0.0
      %v2313 = vmax.f32 %v2044, 0.0
      %v2314 = vmax.f32 %v2046, 0.0
      %v2315 = vmax.f32 %v2048, 0.0
      %v2316 = vmax.f32 %v2052, 0.0
      %v2317 = vmax.f32 %v2054, 0.0
      %v2318 = vmax.f32 %v2056, 0.0
      %v2319 = vmax.f32 %v2058, 0.0
      %v2320 = vmax.f32 %v2062, 0.0
      %v2321 = vmax.f32 %v2064, 0.0
      %v2322 = vmax.f32 %v2066, 0.0
      %v2323 = vmax.f32 %v2068, 0.0
      %v2324 = vmax.f32 %v2072, 0.0
      %v2325 = vmax.f32 %v2074, 0.0
      %v2326 = vmax.f32 %v2076, 0.0
      %v2327 = vmax.f32 %v2078, 0.0
      %v2328 = vmax.f32 %v2082, 0.0
      %v2329 = vmax.f32 %v2084, 0.0
      %v2330 = vmax.f32 %v2086, 0.0
      %v2331 = vmax.f32 %v2088, 0.0
      %v2332 = vmax.f32 %v2092, 0.0
      %v2333 = vmax.f32 %v2094, 0.0
      %v2334 = vmax.f32 %v2096, 0.0
      %v2335 = vmax.f32 %v2098, 0.0
      %v2336 = vmax.f32 %v2102, 0.0
      %v2337 = vmax.f32 %v2104, 0.0
      %v2338 = vmax.f32 %v2106, 0.0
      %v2339 = vmax.f32 %v2108, 0.0
      %v2340 = vmax.f32 %v2112, 0.0
      %v2341 = vmax.f32 %v2114, 0.0
      %v2342 = vmax.f32 %v2116, 0.0
      %v2343 = vmax.f32 %v2118, 0.0
      %v2344 = vmax.f32 %v2122, 0.0
      %v2345 = vmax.f32 %v2124, 0.0
      %v2346 = vmax.f32 %v2126, 0.0
      %v2347 = vmax.f32 %v2128, 0.0
      %v2348 = vmax.f32 %v2132, 0.0
      %v2349 = vmax.f32 %v2134, 0.0
      %v2350 = vmax.f32 %v2136, 0.0
      %v2351 = vmax.f32 %v2138, 0.0
      %v2352 = vmax.f32 %v2142, 0.0
      %v2353 = vmax.f32 %v2144, 0.0
      %v2354 = vmax.f32 %v2146, 0.0
      %v2355 = vmax.f32 %v2148, 0.0
      %v2356 = vmax.f32 %v2152, 0.0
      %v2357 = vmax.f32 %v2154, 0.0
      %v2358 = vmax.f32 %v2156, 0.0
      %v2359 = vmax.f32 %v2158, 0.0
      %v2360 = vmax.f32 %v2162, 0.0
      %v2361 = vmax.f32 %v2164, 0.0
      %v2362 = vmax.f32 %v2166, 0.0
      %v2363 = vmax.f32 %v2168, 0.0
      %v2364 = vmax.f32 %v2172, 0.0
      %v2365 = vmax.f32 %v2174, 0.0
      %v2366 = vmax.f32 %v2176, 0.0
      %v2367 = vmax.f32 %v2178, 0.0
      %v2368 = vmax.f32 %v2182, 0.0
      %v2369 = vmax.f32 %v2184, 0.0
      %v2370 = vmax.f32 %v2186, 0.0
      %v2371 = vmax.f32 %v2188, 0.0
      %v2372 = vmax.f32 %v2192, 0.0
      %v2373 = vmax.f32 %v2194, 0.0
      %v2374 = vmax.f32 %v2196, 0.0
      %v2375 = vmax.f32 %v2198, 0.0
      %v2376 = vmax.f32 %v2202, 0.0
      %v2377 = vmax.f32 %v2204, 0.0
      %v2378 = vmax.f32 %v2206, 0.0
      %v2379 = vmax.f32 %v2208, 0.0
      %v2380 = vmax.f32 %v2212, 0.0
      %v2381 = vmax.f32 %v2214, 0.0
      %v2382 = vmax.f32 %v2216, 0.0
      %v2383 = vmax.f32 %v2218, 0.0
      %v2384 = vmax.f32 %v2222, 0.0
      %v2385 = vmax.f32 %v2224, 0.0
      %v2386 = vmax.f32 %v2226, 0.0
      %v2387 = vmax.f32 %v2228, 0.0
      %v2388 = vmax.f32 %v2232, 0.0
      %v2389 = vmax.f32 %v2234, 0.0
      %v2390 = vmax.f32 %v2236, 0.0
      %v2391 = vmax.f32 %v2238, 0.0
      %v2392 = vmax.f32 %v2242, 0.0
      %v2393 = vmax.f32 %v2244, 0.0
      %v2394 = vmax.f32 %v2246, 0.0
      %v2395 = vmax.f32 %v2248, 0.0
      %v2396 = vmax.f32 %v2252, 0.0
      %v2397 = vmax.f32 %v2254, 0.0
      %v2398 = vmax.f32 %v2256, 0.0
      %v2399 = vmax.f32 %v2258, 0.0
      %v2400 = vmax.f32 %v2262, 0.0
      %v2401 = vmax.f32 %v2264, 0.0
      %v2402 = vmax.f32 %v2266, 0.0
      %v2403 = vmax.f32 %v2268, 0.0
      %v2404 = vmax.f32 %v2272, 0.0
      %v2405 = vmax.f32 %v2274, 0.0
      %v2406 = vmax.f32 %v2276, 0.0
      %v2407 = vmax.f32 %v2278, 0.0
      %v2408 = vpack.c.bf16 %v2282, %v2280
      %v2409 = vpack.c.bf16 %v2283, %v2281
      %v2410 = vpack.c.bf16 %v2286, %v2284
      %v2411 = vpack.c.bf16 %v2287, %v2285
      %v2412 = vpack.c.bf16 %v2290, %v2288
      %v2413 = vpack.c.bf16 %v2291, %v2289
      %v2414 = vpack.c.bf16 %v2294, %v2292
      %v2415 = vpack.c.bf16 %v2295, %v2293
      %v2416 = vpack.c.bf16 %v2298, %v2296
      %v2417 = vpack.c.bf16 %v2299, %v2297
      %v2418 = vpack.c.bf16 %v2302, %v2300
      %v2419 = vpack.c.bf16 %v2303, %v2301
      %v2420 = vpack.c.bf16 %v2306, %v2304
      %v2421 = vpack.c.bf16 %v2307, %v2305
      %v2422 = vpack.c.bf16 %v2310, %v2308
      %v2423 = vpack.c.bf16 %v2311, %v2309
      %v2424 = vpack.c.bf16 %v2314, %v2312
      %v2425 = vpack.c.bf16 %v2315, %v2313
      %v2426 = vpack.c.bf16 %v2318, %v2316
      %v2427 = vpack.c.bf16 %v2319, %v2317
      %v2428 = vpack.c.bf16 %v2322, %v2320
      %v2429 = vpack.c.bf16 %v2323, %v2321
      %v2430 = vpack.c.bf16 %v2326, %v2324
      %v2431 = vpack.c.bf16 %v2327, %v2325
      %v2432 = vpack.c.bf16 %v2330, %v2328
      %v2433 = vpack.c.bf16 %v2331, %v2329
      %v2434 = vpack.c.bf16 %v2334, %v2332
      %v2435 = vpack.c.bf16 %v2335, %v2333
      %v2436 = vpack.c.bf16 %v2338, %v2336
      %v2437 = vpack.c.bf16 %v2339, %v2337
      %v2438 = vpack.c.bf16 %v2342, %v2340
      %v2439 = vpack.c.bf16 %v2343, %v2341
      %v2440 = vpack.c.bf16 %v2346, %v2344
      %v2441 = vpack.c.bf16 %v2347, %v2345
      %v2442 = vpack.c.bf16 %v2350, %v2348
      %v2443 = vpack.c.bf16 %v2351, %v2349
      %v2444 = vpack.c.bf16 %v2354, %v2352
      %v2445 = vpack.c.bf16 %v2355, %v2353
      %v2446 = vpack.c.bf16 %v2358, %v2356
      %v2447 = vpack.c.bf16 %v2359, %v2357
      %v2448 = vpack.c.bf16 %v2362, %v2360
      %v2449 = vpack.c.bf16 %v2363, %v2361
      %v2450 = vpack.c.bf16 %v2366, %v2364
      %v2451 = vpack.c.bf16 %v2367, %v2365
      %v2452 = vpack.c.bf16 %v2370, %v2368
      %v2453 = vpack.c.bf16 %v2371, %v2369
      %v2454 = vpack.c.bf16 %v2374, %v2372
      %v2455 = vpack.c.bf16 %v2375, %v2373
      %v2456 = vpack.c.bf16 %v2378, %v2376
      %v2457 = vpack.c.bf16 %v2379, %v2377
      %v2458 = vpack.c.bf16 %v2382, %v2380
      %v2459 = vpack.c.bf16 %v2383, %v2381
      %v2460 = vpack.c.bf16 %v2386, %v2384
      %v2461 = vpack.c.bf16 %v2387, %v2385
      %v2462 = vpack.c.bf16 %v2390, %v2388
      %v2463 = vpack.c.bf16 %v2391, %v2389
      %v2464 = vpack.c.bf16 %v2394, %v2392
      %v2465 = vpack.c.bf16 %v2395, %v2393
      %v2466 = vpack.c.bf16 %v2398, %v2396
      %v2467 = vpack.c.bf16 %v2399, %v2397
      %v2468 = vpack.c.bf16 %v2402, %v2400
      %v2469 = vpack.c.bf16 %v2403, %v2401
      %v2470 = vpack.c.bf16 %v2406, %v2404
      %v2471 = vpack.c.bf16 %v2407, %v2405
      %v2472 = vld [vmem:[%s7] sm:$0xf]
      %v2473 = vld [vmem:[%s7 + $0x4] sm:$0xf]
      %v2474 = vld [vmem:[%s7 + $0x8] sm:$0xf]
      %v2475 = vld [vmem:[%s7 + $0xc] sm:$0xf]
      %v2476 = vld [vmem:[%s7 + $0x10] sm:$0xf]
      %v2477 = vld [vmem:[%s7 + $0x14] sm:$0xf]
      %v2478 = vld [vmem:[%s7 + $0x18] sm:$0xf]
      %v2479 = vld [vmem:[%s7 + $0x1c] sm:$0xf]
      %v2480 = vld [vmem:[%s7 + $0x20] sm:$0xf]
      %v2481 = vld [vmem:[%s7 + $0x24] sm:$0xf]
      %v2482 = vld [vmem:[%s7 + $0x28] sm:$0xf]
      %v2483 = vld [vmem:[%s7 + $0x2c] sm:$0xf]
      %v2484 = vld [vmem:[%s7 + $0x30] sm:$0xf]
      %v2485 = vld [vmem:[%s7 + $0x34] sm:$0xf]
      %v2486 = vld [vmem:[%s7 + $0x38] sm:$0xf]
      %v2487 = vld [vmem:[%s7 + $0x3c] sm:$0xf]
      %v2488 = vld [vmem:[%s7 + $0x40] sm:$0xf]
      %v2489 = vld [vmem:[%s7 + $0x44] sm:$0xf]
      %v2490 = vld [vmem:[%s7 + $0x48] sm:$0xf]
      %v2491 = vld [vmem:[%s7 + $0x4c] sm:$0xf]
      %v2492 = vld [vmem:[%s7 + $0x50] sm:$0xf]
      %v2493 = vld [vmem:[%s7 + $0x54] sm:$0xf]
      %v2494 = vld [vmem:[%s7 + $0x58] sm:$0xf]
      %v2495 = vld [vmem:[%s7 + $0x5c] sm:$0xf]
      %v2496 = vld [vmem:[%s7 + $0x60] sm:$0xf]
      %v2497 = vld [vmem:[%s7 + $0x64] sm:$0xf]
      %v2498 = vld [vmem:[%s7 + $0x68] sm:$0xf]
      %v2499 = vld [vmem:[%s7 + $0x6c] sm:$0xf]
      %v2500 = vld [vmem:[%s7 + $0x70] sm:$0xf]
      %v2501 = vld [vmem:[%s7 + $0x74] sm:$0xf]
      %v2502 = vld [vmem:[%s7 + $0x78] sm:$0xf]
      %v2503 = vld [vmem:[%s7 + $0x7c] sm:$0xf]
      %v2504 = vld [vmem:[%s8] sm:$0x1]
      %v2506 = vlaneseq
      %v2507 = vshrl.u32 %v2506, 7
      %v2508 = vsub.s32 0, %v2507
      %v2509 = vrot.slane %v2504, %v2508
      %v2543 = vunpack.c.l.b16 %v2472
      %v2544 = vunpack.c.l.b16 %v2473
      %v2545 = vunpack.c.l.b16 %v2474
      %v2546 = vunpack.c.l.b16 %v2475
      %v2547 = vunpack.c.l.b16 %v2476
      %v2548 = vunpack.c.l.b16 %v2477
      %v2549 = vunpack.c.l.b16 %v2478
      %v2550 = vunpack.c.l.b16 %v2479
      %v2551 = vunpack.c.l.b16 %v2480
      %v2552 = vunpack.c.l.b16 %v2481
      %v2553 = vunpack.c.l.b16 %v2482
      %v2554 = vunpack.c.l.b16 %v2483
      %v2555 = vunpack.c.l.b16 %v2484
      %v2556 = vunpack.c.l.b16 %v2485
      %v2557 = vunpack.c.l.b16 %v2486
      %v2558 = vunpack.c.l.b16 %v2487
      %v2559 = vunpack.c.l.b16 %v2488
      %v2560 = vunpack.c.l.b16 %v2489
      %v2561 = vunpack.c.l.b16 %v2490
      %v2562 = vunpack.c.l.b16 %v2491
      %v2563 = vunpack.c.l.b16 %v2492
      %v2564 = vunpack.c.l.b16 %v2493
      %v2565 = vunpack.c.l.b16 %v2494
      %v2566 = vunpack.c.l.b16 %v2495
      %v2567 = vunpack.c.l.b16 %v2496
      %v2568 = vunpack.c.l.b16 %v2497
      %v2569 = vunpack.c.l.b16 %v2498
      %v2570 = vunpack.c.l.b16 %v2499
      %v2571 = vunpack.c.l.b16 %v2500
      %v2572 = vunpack.c.l.b16 %v2501
      %v2573 = vunpack.c.l.b16 %v2502
      %v2574 = vunpack.c.l.b16 %v2503
      %v2575 = vpack.c.b16 %v2544, %v2543
      %v2576 = vpack.c.b16 %v2546, %v2545
      %v2577 = vpack.c.b16 %v2548, %v2547
      %v2578 = vpack.c.b16 %v2550, %v2549
      %v2579 = vpack.c.b16 %v2552, %v2551
      %v2580 = vpack.c.b16 %v2554, %v2553
      %v2581 = vpack.c.b16 %v2556, %v2555
      %v2582 = vpack.c.b16 %v2558, %v2557
      %v2583 = vpack.c.b16 %v2560, %v2559
      %v2584 = vpack.c.b16 %v2562, %v2561
      %v2585 = vpack.c.b16 %v2564, %v2563
      %v2586 = vpack.c.b16 %v2566, %v2565
      %v2587 = vpack.c.b16 %v2568, %v2567
      %v2588 = vpack.c.b16 %v2570, %v2569
      %v2589 = vpack.c.b16 %v2572, %v2571
      %v2590 = vpack.c.b16 %v2574, %v2573
      %2607 = vmatprep.subr.bf16.mxu0 0
      %2608 = vmatpush1.bf16.msra.mxu0 %v2575
      %2609 = vmatprep.subr.bf16.mxu0 0
      %2610 = vmatpush1.bf16.msra.mxu0 %v2576
      %2611 = vmatprep.subr.bf16.mxu0 0
      %2612 = vmatpush1.bf16.msra.mxu0 %v2577
      %2613 = vmatprep.subr.bf16.mxu0 0
      %2614 = vmatpush1.bf16.msra.mxu0 %v2578
      %2615 = vmatprep.subr.bf16.mxu0 0
      %2616 = vmatpush1.bf16.msra.mxu0 %v2579
      %2617 = vmatprep.subr.bf16.mxu0 0
      %2618 = vmatpush1.bf16.msra.mxu0 %v2580
      %2619 = vmatprep.subr.bf16.mxu0 0
      %2620 = vmatpush1.bf16.msra.mxu0 %v2581
      %2621 = vmatprep.subr.bf16.mxu0 0
      %2622 = vmatpush1.bf16.msra.mxu0 %v2582
      %2623 = vmatprep.subr.bf16.mxu0 0
      %2624 = vmatpush1.bf16.msra.mxu0 %v2583
      %2625 = vmatprep.subr.bf16.mxu0 0
      %2626 = vmatpush1.bf16.msra.mxu0 %v2584
      %2627 = vmatprep.subr.bf16.mxu0 0
      %2628 = vmatpush1.bf16.msra.mxu0 %v2585
      %2629 = vmatprep.subr.bf16.mxu0 0
      %2630 = vmatpush1.bf16.msra.mxu0 %v2586
      %2631 = vmatprep.subr.bf16.mxu0 0
      %2632 = vmatpush1.bf16.msra.mxu0 %v2587
      %2633 = vmatprep.subr.bf16.mxu0 0
      %2634 = vmatpush1.bf16.msra.mxu0 %v2588
      %2635 = vmatprep.subr.bf16.mxu0 0
      %2636 = vmatpush1.bf16.msra.mxu0 %v2589
      %2637 = vmatprep.subr.bf16.mxu0 0
      %2638 = vmatpush1.bf16.msra.mxu0 %v2590
      %2639 = vmatprep.mubr.bf16.mxu0 %v2409
      %2640 = vmatmul.mubr.bf16.gmra.mrb[0].mxu0 %v2408
      %v2641 = vpop.f32.mrb[0].mxu0
      %v2642 = vadd.f32 %v2509, %v2641
      %v2643 = vpop.f32.mrb[0].mxu0
      %v2644 = vpop.f32.mrb[0].mxu0
      %v2645 = vadd.f32 %v2509, %v2644
      %v2646 = vpop.f32.mrb[0].mxu0
      %2647 = vmatprep.mubr.bf16.mxu0 %v2411
      %2648 = vmatmul.mubr.bf16.gmra.mrb[0].mxu0 %v2410
      %v2649 = vpop.f32.mrb[0].mxu0
      %v2650 = vadd.f32 %v2509, %v2649
      %v2651 = vpop.f32.mrb[0].mxu0
      %v2652 = vpop.f32.mrb[0].mxu0
      %v2653 = vadd.f32 %v2509, %v2652
      %v2654 = vpop.f32.mrb[0].mxu0
      %2655 = vmatprep.mubr.bf16.mxu0 %v2413
      %2656 = vmatmul.mubr.bf16.gmra.mrb[0].mxu0 %v2412
      %v2657 = vpop.f32.mrb[0].mxu0
      %v2658 = vadd.f32 %v2509, %v2657
      %v2659 = vpop.f32.mrb[0].mxu0
      %v2660 = vpop.f32.mrb[0].mxu0
      %v2661 = vadd.f32 %v2509, %v2660
      %v2662 = vpop.f32.mrb[0].mxu0
      %2663 = vmatprep.mubr.bf16.mxu0 %v2415
      %2664 = vmatmul.mubr.bf16.gmra.mrb[0].mxu0 %v2414
      %v2665 = vpop.f32.mrb[0].mxu0
      %v2666 = vadd.f32 %v2509, %v2665
      %v2667 = vpop.f32.mrb[0].mxu0
      %v2668 = vpop.f32.mrb[0].mxu0
      %v2669 = vadd.f32 %v2509, %v2668
      %v2670 = vpop.f32.mrb[0].mxu0
      %2671 = vmatprep.mubr.bf16.mxu0 %v2417
      %2672 = vmatmul.mubr.bf16.gmra.mrb[0].mxu0 %v2416
      %v2673 = vpop.f32.mrb[0].mxu0
      %v2674 = vadd.f32 %v2509, %v2673
      %v2675 = vpop.f32.mrb[0].mxu0
      %v2676 = vpop.f32.mrb[0].mxu0
      %v2677 = vadd.f32 %v2509, %v2676
      %v2678 = vpop.f32.mrb[0].mxu0
      %2679 = vmatprep.mubr.bf16.mxu0 %v2419
      %2680 = vmatmul.mubr.bf16.gmra.mrb[0].mxu0 %v2418
      %v2681 = vpop.f32.mrb[0].mxu0
      %v2682 = vadd.f32 %v2509, %v2681
      %v2683 = vpop.f32.mrb[0].mxu0
      %v2684 = vpop.f32.mrb[0].mxu0
      %v2685 = vadd.f32 %v2509, %v2684
      %v2686 = vpop.f32.mrb[0].mxu0
      %2687 = vmatprep.mubr.bf16.mxu0 %v2421
      %2688 = vmatmul.mubr.bf16.gmra.mrb[0].mxu0 %v2420
      %v2689 = vpop.f32.mrb[0].mxu0
      %v2690 = vadd.f32 %v2509, %v2689
      %v2691 = vpop.f32.mrb[0].mxu0
      %v2692 = vpop.f32.mrb[0].mxu0
      %v2693 = vadd.f32 %v2509, %v2692
      %v2694 = vpop.f32.mrb[0].mxu0
      %2695 = vmatprep.mubr.bf16.mxu0 %v2423
      %2696 = vmatmul.mubr.bf16.gmra.mrb[0].mxu0 %v2422
      %v2697 = vpop.f32.mrb[0].mxu0
      %v2698 = vadd.f32 %v2509, %v2697
      %v2699 = vpop.f32.mrb[0].mxu0
      %v2700 = vpop.f32.mrb[0].mxu0
      %v2701 = vadd.f32 %v2509, %v2700
      %v2702 = vpop.f32.mrb[0].mxu0
      %2703 = vmatprep.mubr.bf16.mxu0 %v2425
      %2704 = vmatmul.mubr.bf16.gmra.mrb[0].mxu0 %v2424
      %v2705 = vpop.f32.mrb[0].mxu0
      %v2706 = vadd.f32 %v2509, %v2705
      %v2707 = vpop.f32.mrb[0].mxu0
      %v2708 = vpop.f32.mrb[0].mxu0
      %v2709 = vadd.f32 %v2509, %v2708
      %v2710 = vpop.f32.mrb[0].mxu0
      %2711 = vmatprep.mubr.bf16.mxu0 %v2427
      %2712 = vmatmul.mubr.bf16.gmra.mrb[0].mxu0 %v2426
      %v2713 = vpop.f32.mrb[0].mxu0
      %v2714 = vadd.f32 %v2509, %v2713
      %v2715 = vpop.f32.mrb[0].mxu0
      %v2716 = vpop.f32.mrb[0].mxu0
      %v2717 = vadd.f32 %v2509, %v2716
      %v2718 = vpop.f32.mrb[0].mxu0
      %2719 = vmatprep.mubr.bf16.mxu0 %v2429
      %2720 = vmatmul.mubr.bf16.gmra.mrb[0].mxu0 %v2428
      %v2721 = vpop.f32.mrb[0].mxu0
      %v2722 = vadd.f32 %v2509, %v2721
      %v2723 = vpop.f32.mrb[0].mxu0
      %v2724 = vpop.f32.mrb[0].mxu0
      %v2725 = vadd.f32 %v2509, %v2724
      %v2726 = vpop.f32.mrb[0].mxu0
      %2727 = vmatprep.mubr.bf16.mxu0 %v2431
      %2728 = vmatmul.mubr.bf16.gmra.mrb[0].mxu0 %v2430
      %v2729 = vpop.f32.mrb[0].mxu0
      %v2730 = vadd.f32 %v2509, %v2729
      %v2731 = vpop.f32.mrb[0].mxu0
      %v2732 = vpop.f32.mrb[0].mxu0
      %v2733 = vadd.f32 %v2509, %v2732
      %v2734 = vpop.f32.mrb[0].mxu0
      %2735 = vmatprep.mubr.bf16.mxu0 %v2433
      %2736 = vmatmul.mubr.bf16.gmra.mrb[0].mxu0 %v2432
      %v2737 = vpop.f32.mrb[0].mxu0
      %v2738 = vadd.f32 %v2509, %v2737
      %v2739 = vpop.f32.mrb[0].mxu0
      %v2740 = vpop.f32.mrb[0].mxu0
      %v2741 = vadd.f32 %v2509, %v2740
      %v2742 = vpop.f32.mrb[0].mxu0
      %2743 = vmatprep.mubr.bf16.mxu0 %v2435
      %2744 = vmatmul.mubr.bf16.gmra.mrb[0].mxu0 %v2434
      %v2745 = vpop.f32.mrb[0].mxu0
      %v2746 = vadd.f32 %v2509, %v2745
      %v2747 = vpop.f32.mrb[0].mxu0
      %v2748 = vpop.f32.mrb[0].mxu0
      %v2749 = vadd.f32 %v2509, %v2748
      %v2750 = vpop.f32.mrb[0].mxu0
      %2751 = vmatprep.mubr.bf16.mxu0 %v2437
      %2752 = vmatmul.mubr.bf16.gmra.mrb[0].mxu0 %v2436
      %v2753 = vpop.f32.mrb[0].mxu0
      %v2754 = vadd.f32 %v2509, %v2753
      %v2755 = vpop.f32.mrb[0].mxu0
      %v2756 = vpop.f32.mrb[0].mxu0
      %v2757 = vadd.f32 %v2509, %v2756
      %v2758 = vpop.f32.mrb[0].mxu0
      %2759 = vmatprep.mubr.bf16.mxu0 %v2439
      %2760 = vmatmul.mubr.bf16.gmra.mrb[0].mxu0 %v2438
      %v2761 = vpop.f32.mrb[0].mxu0
      %v2762 = vadd.f32 %v2509, %v2761
      %v2763 = vpop.f32.mrb[0].mxu0
      %v2764 = vpop.f32.mrb[0].mxu0
      %v2765 = vadd.f32 %v2509, %v2764
      %v2766 = vpop.f32.mrb[0].mxu0
      %2767 = vmatprep.mubr.bf16.mxu0 %v2441
      %2768 = vmatmul.mubr.bf16.gmra.mrb[0].mxu0 %v2440
      %v2769 = vpop.f32.mrb[0].mxu0
      %v2770 = vadd.f32 %v2509, %v2769
      %v2771 = vpop.f32.mrb[0].mxu0
      %v2772 = vpop.f32.mrb[0].mxu0
      %v2773 = vadd.f32 %v2509, %v2772
      %v2774 = vpop.f32.mrb[0].mxu0
      %2775 = vmatprep.mubr.bf16.mxu0 %v2443
      %2776 = vmatmul.mubr.bf16.gmra.mrb[0].mxu0 %v2442
      %v2777 = vpop.f32.mrb[0].mxu0
      %v2778 = vadd.f32 %v2509, %v2777
      %v2779 = vpop.f32.mrb[0].mxu0
      %v2780 = vpop.f32.mrb[0].mxu0
      %v2781 = vadd.f32 %v2509, %v2780
      %v2782 = vpop.f32.mrb[0].mxu0
      %2783 = vmatprep.mubr.bf16.mxu0 %v2445
      %2784 = vmatmul.mubr.bf16.gmra.mrb[0].mxu0 %v2444
      %v2785 = vpop.f32.mrb[0].mxu0
      %v2786 = vadd.f32 %v2509, %v2785
      %v2787 = vpop.f32.mrb[0].mxu0
      %v2788 = vpop.f32.mrb[0].mxu0
      %v2789 = vadd.f32 %v2509, %v2788
      %v2790 = vpop.f32.mrb[0].mxu0
      %2791 = vmatprep.mubr.bf16.mxu0 %v2447
      %2792 = vmatmul.mubr.bf16.gmra.mrb[0].mxu0 %v2446
      %v2793 = vpop.f32.mrb[0].mxu0
      %v2794 = vadd.f32 %v2509, %v2793
      %v2795 = vpop.f32.mrb[0].mxu0
      %v2796 = vpop.f32.mrb[0].mxu0
      %v2797 = vadd.f32 %v2509, %v2796
      %v2798 = vpop.f32.mrb[0].mxu0
      %2799 = vmatprep.mubr.bf16.mxu0 %v2449
      %2800 = vmatmul.mubr.bf16.gmra.mrb[0].mxu0 %v2448
      %v2801 = vpop.f32.mrb[0].mxu0
      %v2802 = vadd.f32 %v2509, %v2801
      %v2803 = vpop.f32.mrb[0].mxu0
      %v2804 = vpop.f32.mrb[0].mxu0
      %v2805 = vadd.f32 %v2509, %v2804
      %v2806 = vpop.f32.mrb[0].mxu0
      %2807 = vmatprep.mubr.bf16.mxu0 %v2451
      %2808 = vmatmul.mubr.bf16.gmra.mrb[0].mxu0 %v2450
      %v2809 = vpop.f32.mrb[0].mxu0
      %v2810 = vadd.f32 %v2509, %v2809
      %v2811 = vpop.f32.mrb[0].mxu0
      %v2812 = vpop.f32.mrb[0].mxu0
      %v2813 = vadd.f32 %v2509, %v2812
      %v2814 = vpop.f32.mrb[0].mxu0
      %2815 = vmatprep.mubr.bf16.mxu0 %v2453
      %2816 = vmatmul.mubr.bf16.gmra.mrb[0].mxu0 %v2452
      %v2817 = vpop.f32.mrb[0].mxu0
      %v2818 = vadd.f32 %v2509, %v2817
      %v2819 = vpop.f32.mrb[0].mxu0
      %v2820 = vpop.f32.mrb[0].mxu0
      %v2821 = vadd.f32 %v2509, %v2820
      %v2822 = vpop.f32.mrb[0].mxu0
      %2823 = vmatprep.mubr.bf16.mxu0 %v2455
      %2824 = vmatmul.mubr.bf16.gmra.mrb[0].mxu0 %v2454
      %v2825 = vpop.f32.mrb[0].mxu0
      %v2826 = vadd.f32 %v2509, %v2825
      %v2827 = vpop.f32.mrb[0].mxu0
      %v2828 = vpop.f32.mrb[0].mxu0
      %v2829 = vadd.f32 %v2509, %v2828
      %v2830 = vpop.f32.mrb[0].mxu0
      %2831 = vmatprep.mubr.bf16.mxu0 %v2457
      %2832 = vmatmul.mubr.bf16.gmra.mrb[0].mxu0 %v2456
      %v2833 = vpop.f32.mrb[0].mxu0
      %v2834 = vadd.f32 %v2509, %v2833
      %v2835 = vpop.f32.mrb[0].mxu0
      %v2836 = vpop.f32.mrb[0].mxu0
      %v2837 = vadd.f32 %v2509, %v2836
      %v2838 = vpop.f32.mrb[0].mxu0
      %2839 = vmatprep.mubr.bf16.mxu0 %v2459
      %2840 = vmatmul.mubr.bf16.gmra.mrb[0].mxu0 %v2458
      %v2841 = vpop.f32.mrb[0].mxu0
      %v2842 = vadd.f32 %v2509, %v2841
      %v2843 = vpop.f32.mrb[0].mxu0
      %v2844 = vpop.f32.mrb[0].mxu0
      %v2845 = vadd.f32 %v2509, %v2844
      %v2846 = vpop.f32.mrb[0].mxu0
      %2847 = vmatprep.mubr.bf16.mxu0 %v2461
      %2848 = vmatmul.mubr.bf16.gmra.mrb[0].mxu0 %v2460
      %v2849 = vpop.f32.mrb[0].mxu0
      %v2850 = vadd.f32 %v2509, %v2849
      %v2851 = vpop.f32.mrb[0].mxu0
      %v2852 = vpop.f32.mrb[0].mxu0
      %v2853 = vadd.f32 %v2509, %v2852
      %v2854 = vpop.f32.mrb[0].mxu0
      %2855 = vmatprep.mubr.bf16.mxu0 %v2463
      %2856 = vmatmul.mubr.bf16.gmra.mrb[0].mxu0 %v2462
      %v2857 = vpop.f32.mrb[0].mxu0
      %v2858 = vadd.f32 %v2509, %v2857
      %v2859 = vpop.f32.mrb[0].mxu0
      %v2860 = vpop.f32.mrb[0].mxu0
      %v2861 = vadd.f32 %v2509, %v2860
      %v2862 = vpop.f32.mrb[0].mxu0
      %2863 = vmatprep.mubr.bf16.mxu0 %v2465
      %2864 = vmatmul.mubr.bf16.gmra.mrb[0].mxu0 %v2464
      %v2865 = vpop.f32.mrb[0].mxu0
      %v2866 = vadd.f32 %v2509, %v2865
      %v2867 = vpop.f32.mrb[0].mxu0
      %v2868 = vpop.f32.mrb[0].mxu0
      %v2869 = vadd.f32 %v2509, %v2868
      %v2870 = vpop.f32.mrb[0].mxu0
      %2871 = vmatprep.mubr.bf16.mxu0 %v2467
      %2872 = vmatmul.mubr.bf16.gmra.mrb[0].mxu0 %v2466
      %v2873 = vpop.f32.mrb[0].mxu0
      %v2874 = vadd.f32 %v2509, %v2873
      %v2875 = vpop.f32.mrb[0].mxu0
      %v2876 = vpop.f32.mrb[0].mxu0
      %v2877 = vadd.f32 %v2509, %v2876
      %v2878 = vpop.f32.mrb[0].mxu0
      %2879 = vmatprep.mubr.bf16.mxu0 %v2469
      %2880 = vmatmul.mubr.bf16.gmra.mrb[0].mxu0 %v2468
      %v2881 = vpop.f32.mrb[0].mxu0
      %v2882 = vadd.f32 %v2509, %v2881
      %v2883 = vpop.f32.mrb[0].mxu0
      %v2884 = vpop.f32.mrb[0].mxu0
      %v2885 = vadd.f32 %v2509, %v2884
      %v2886 = vpop.f32.mrb[0].mxu0
      %2887 = vmatprep.mubr.bf16.mxu0 %v2471
      %2888 = vmatmul.mubr.bf16.gmra.mrb[0].mxu0 %v2470
      %v2889 = vpop.f32.mrb[0].mxu0
      %v2890 = vadd.f32 %v2509, %v2889
      %v2891 = vpop.f32.mrb[0].mxu0
      %v2892 = vpop.f32.mrb[0].mxu0
      %v2893 = vadd.f32 %v2509, %v2892
      %v2894 = vpop.f32.mrb[0].mxu0
      %2895 = vdwg.mxu0
      %v2896 = vmax.f32 %v2642, 0.0
      %v2897 = vmax.f32 %v2645, 0.0
      %v2898 = vmax.f32 %v2650, 0.0
      %v2899 = vmax.f32 %v2653, 0.0
      %v2900 = vmax.f32 %v2658, 0.0
      %v2901 = vmax.f32 %v2661, 0.0
      %v2902 = vmax.f32 %v2666, 0.0
      %v2903 = vmax.f32 %v2669, 0.0
      %v2904 = vmax.f32 %v2674, 0.0
      %v2905 = vmax.f32 %v2677, 0.0
      %v2906 = vmax.f32 %v2682, 0.0
      %v2907 = vmax.f32 %v2685, 0.0
      %v2908 = vmax.f32 %v2690, 0.0
      %v2909 = vmax.f32 %v2693, 0.0
      %v2910 = vmax.f32 %v2698, 0.0
      %v2911 = vmax.f32 %v2701, 0.0
      %v2912 = vmax.f32 %v2706, 0.0
      %v2913 = vmax.f32 %v2709, 0.0
      %v2914 = vmax.f32 %v2714, 0.0
      %v2915 = vmax.f32 %v2717, 0.0
      %v2916 = vmax.f32 %v2722, 0.0
      %v2917 = vmax.f32 %v2725, 0.0
      %v2918 = vmax.f32 %v2730, 0.0
      %v2919 = vmax.f32 %v2733, 0.0
      %v2920 = vmax.f32 %v2738, 0.0
      %v2921 = vmax.f32 %v2741, 0.0
      %v2922 = vmax.f32 %v2746, 0.0
      %v2923 = vmax.f32 %v2749, 0.0
      %v2924 = vmax.f32 %v2754, 0.0
      %v2925 = vmax.f32 %v2757, 0.0
      %v2926 = vmax.f32 %v2762, 0.0
      %v2927 = vmax.f32 %v2765, 0.0
      %v2928 = vmax.f32 %v2770, 0.0
      %v2929 = vmax.f32 %v2773, 0.0
      %v2930 = vmax.f32 %v2778, 0.0
      %v2931 = vmax.f32 %v2781, 0.0
      %v2932 = vmax.f32 %v2786, 0.0
      %v2933 = vmax.f32 %v2789, 0.0
      %v2934 = vmax.f32 %v2794, 0.0
      %v2935 = vmax.f32 %v2797, 0.0
      %v2936 = vmax.f32 %v2802, 0.0
      %v2937 = vmax.f32 %v2805, 0.0
      %v2938 = vmax.f32 %v2810, 0.0
      %v2939 = vmax.f32 %v2813, 0.0
      %v2940 = vmax.f32 %v2818, 0.0
      %v2941 = vmax.f32 %v2821, 0.0
      %v2942 = vmax.f32 %v2826, 0.0
      %v2943 = vmax.f32 %v2829, 0.0
      %v2944 = vmax.f32 %v2834, 0.0
      %v2945 = vmax.f32 %v2837, 0.0
      %v2946 = vmax.f32 %v2842, 0.0
      %v2947 = vmax.f32 %v2845, 0.0
      %v2948 = vmax.f32 %v2850, 0.0
      %v2949 = vmax.f32 %v2853, 0.0
      %v2950 = vmax.f32 %v2858, 0.0
      %v2951 = vmax.f32 %v2861, 0.0
      %v2952 = vmax.f32 %v2866, 0.0
      %v2953 = vmax.f32 %v2869, 0.0
      %v2954 = vmax.f32 %v2874, 0.0
      %v2955 = vmax.f32 %v2877, 0.0
      %v2956 = vmax.f32 %v2882, 0.0
      %v2957 = vmax.f32 %v2885, 0.0
      %v2958 = vmax.f32 %v2890, 0.0
      %v2959 = vmax.f32 %v2893, 0.0
      %v2960 = vpack.c.bf16 %v2897, %v2896
      %v2961 = vpack.c.bf16 %v2899, %v2898
      %v2962 = vpack.c.bf16 %v2901, %v2900
      %v2963 = vpack.c.bf16 %v2903, %v2902
      %v2964 = vpack.c.bf16 %v2905, %v2904
      %v2965 = vpack.c.bf16 %v2907, %v2906
      %v2966 = vpack.c.bf16 %v2909, %v2908
      %v2967 = vpack.c.bf16 %v2911, %v2910
      %v2968 = vpack.c.bf16 %v2913, %v2912
      %v2969 = vpack.c.bf16 %v2915, %v2914
      %v2970 = vpack.c.bf16 %v2917, %v2916
      %v2971 = vpack.c.bf16 %v2919, %v2918
      %v2972 = vpack.c.bf16 %v2921, %v2920
      %v2973 = vpack.c.bf16 %v2923, %v2922
      %v2974 = vpack.c.bf16 %v2925, %v2924
      %v2975 = vpack.c.bf16 %v2927, %v2926
      %v2976 = vpack.c.bf16 %v2929, %v2928
      %v2977 = vpack.c.bf16 %v2931, %v2930
      %v2978 = vpack.c.bf16 %v2933, %v2932
      %v2979 = vpack.c.bf16 %v2935, %v2934
      %v2980 = vpack.c.bf16 %v2937, %v2936
      %v2981 = vpack.c.bf16 %v2939, %v2938
      %v2982 = vpack.c.bf16 %v2941, %v2940
      %v2983 = vpack.c.bf16 %v2943, %v2942
      %v2984 = vpack.c.bf16 %v2945, %v2944
      %v2985 = vpack.c.bf16 %v2947, %v2946
      %v2986 = vpack.c.bf16 %v2949, %v2948
      %v2987 = vpack.c.bf16 %v2951, %v2950
      %v2988 = vpack.c.bf16 %v2953, %v2952
      %v2989 = vpack.c.bf16 %v2955, %v2954
      %v2990 = vpack.c.bf16 %v2957, %v2956
      %v2991 = vpack.c.bf16 %v2959, %v2958
      %v2992 = vld [vmem:[%s9] sm:$0xf]
      %v2993 = vld [vmem:[%s9 + $0x4] sm:$0xf]
      %v2994 = vld [vmem:[%s9 + $0x8] sm:$0xf]
      %v2995 = vld [vmem:[%s9 + $0xc] sm:$0xf]
      %v2996 = vld [vmem:[%s10] sm:$0x1]
      %v2998 = vlaneseq
      %v2999 = vshrl.u32 %v2998, 7
      %v3000 = vsub.s32 0, %v2999
      %v3001 = vrot.slane %v2996, %v3000
      %v3007 = vunpack.c.l.b16 %v2992
      %v3008 = vunpack.c.l.b16 %v2993
      %v3009 = vunpack.c.l.b16 %v2994
      %v3010 = vunpack.c.l.b16 %v2995
      %v3011 = vpack.c.b16 %v3008, %v3007
      %v3012 = vpack.c.b16 %v3010, %v3009
      %v3016 = vsel %vm1830, %v2960, 0
      %v3019 = vsel %vm1830, %v2961, 0
      %v3022 = vsel %vm1830, %v2962, 0
      %v3025 = vsel %vm1830, %v2963, 0
      %v3028 = vsel %vm1830, %v2964, 0
      %v3031 = vsel %vm1830, %v2965, 0
      %v3034 = vsel %vm1830, %v2966, 0
      %v3037 = vsel %vm1830, %v2967, 0
      %v3040 = vsel %vm1830, %v2968, 0
      %v3043 = vsel %vm1830, %v2969, 0
      %v3046 = vsel %vm1830, %v2970, 0
      %v3049 = vsel %vm1830, %v2971, 0
      %v3052 = vsel %vm1830, %v2972, 0
      %v3055 = vsel %vm1830, %v2973, 0
      %v3058 = vsel %vm1830, %v2974, 0
      %v3061 = vsel %vm1830, %v2975, 0
      %v3064 = vsel %vm1830, %v2976, 0
      %v3067 = vsel %vm1830, %v2977, 0
      %v3070 = vsel %vm1830, %v2978, 0
      %v3073 = vsel %vm1830, %v2979, 0
      %v3076 = vsel %vm1830, %v2980, 0
      %v3079 = vsel %vm1830, %v2981, 0
      %v3082 = vsel %vm1830, %v2982, 0
      %v3085 = vsel %vm1830, %v2983, 0
      %v3088 = vsel %vm1830, %v2984, 0
      %v3091 = vsel %vm1830, %v2985, 0
      %v3094 = vsel %vm1830, %v2986, 0
      %v3097 = vsel %vm1830, %v2987, 0
      %v3100 = vsel %vm1830, %v2988, 0
      %v3103 = vsel %vm1830, %v2989, 0
      %v3106 = vsel %vm1830, %v2990, 0
      %v3109 = vsel %vm1830, %v2991, 0
      %3111 = vmatprep.subr.bf16.mxu0 0
      %3112 = vmatpush1.bf16.msra.mxu0 %v3011
      %3113 = vmatprep.subr.bf16.mxu0 0
      %3114 = vmatpush1.bf16.msra.mxu0 %v3012
      %3115 = vmatprep.subr.bf16.mxu0 0
      %3116 = vmatpush1.bf16.msra.mxu0 0
      %3117 = vmatprep.subr.bf16.mxu0 0
      %3118 = vmatpush1.bf16.msra.mxu0 0
      %3119 = vmatprep.subr.bf16.mxu0 0
      %3120 = vmatpush1.bf16.msra.mxu0 0
      %3121 = vmatprep.subr.bf16.mxu0 0
      %3122 = vmatpush1.bf16.msra.mxu0 0
      %3123 = vmatprep.subr.bf16.mxu0 0
      %3124 = vmatpush1.bf16.msra.mxu0 0
      %3125 = vmatprep.subr.bf16.mxu0 0
      %3126 = vmatpush1.bf16.msra.mxu0 0
      %3127 = vmatprep.subr.bf16.mxu0 0
      %3128 = vmatpush1.bf16.msra.mxu0 0
      %3129 = vmatprep.subr.bf16.mxu0 0
      %3130 = vmatpush1.bf16.msra.mxu0 0
      %3131 = vmatprep.subr.bf16.mxu0 0
      %3132 = vmatpush1.bf16.msra.mxu0 0
      %3133 = vmatprep.subr.bf16.mxu0 0
      %3134 = vmatpush1.bf16.msra.mxu0 0
      %3135 = vmatprep.subr.bf16.mxu0 0
      %3136 = vmatpush1.bf16.msra.mxu0 0
      %3137 = vmatprep.subr.bf16.mxu0 0
      %3138 = vmatpush1.bf16.msra.mxu0 0
      %3139 = vmatprep.subr.bf16.mxu0 0
      %3140 = vmatpush1.bf16.msra.mxu0 0
      %3141 = vmatprep.subr.bf16.mxu0 0
      %3142 = vmatpush1.bf16.msra.mxu0 0
      %3143 = vmatprep.mubr.bf16.mxu0 0
      %3144 = vmatmul.mubr.bf16.gmra.mrb[0].mxu0 %v3016
      %v3145 = vpop.f32.mrb[0].mxu0
      %v3146 = vadd.f32 %v3001, %v3145
      %v3147 = vpop.f32.mrb[0].mxu0
      %v3148 = vpop.f32.mrb[0].mxu0
      %v3149 = vadd.f32 %v3001, %v3148
      %v3150 = vpop.f32.mrb[0].mxu0
      %3151 = vmatprep.mubr.bf16.mxu0 0
      %3152 = vmatmul.mubr.bf16.gmra.mrb[0].mxu0 %v3019
      %v3153 = vpop.f32.mrb[0].mxu0
      %v3154 = vadd.f32 %v3001, %v3153
      %v3155 = vpop.f32.mrb[0].mxu0
      %v3156 = vpop.f32.mrb[0].mxu0
      %v3157 = vadd.f32 %v3001, %v3156
      %v3158 = vpop.f32.mrb[0].mxu0
      %3159 = vmatprep.mubr.bf16.mxu0 0
      %3160 = vmatmul.mubr.bf16.gmra.mrb[0].mxu0 %v3022
      %v3161 = vpop.f32.mrb[0].mxu0
      %v3162 = vadd.f32 %v3001, %v3161
      %v3163 = vpop.f32.mrb[0].mxu0
      %v3164 = vpop.f32.mrb[0].mxu0
      %v3165 = vadd.f32 %v3001, %v3164
      %v3166 = vpop.f32.mrb[0].mxu0
      %3167 = vmatprep.mubr.bf16.mxu0 0
      %3168 = vmatmul.mubr.bf16.gmra.mrb[0].mxu0 %v3025
      %v3169 = vpop.f32.mrb[0].mxu0
      %v3170 = vadd.f32 %v3001, %v3169
      %v3171 = vpop.f32.mrb[0].mxu0
      %v3172 = vpop.f32.mrb[0].mxu0
      %v3173 = vadd.f32 %v3001, %v3172
      %v3174 = vpop.f32.mrb[0].mxu0
      %3175 = vmatprep.mubr.bf16.mxu0 0
      %3176 = vmatmul.mubr.bf16.gmra.mrb[0].mxu0 %v3028
      %v3177 = vpop.f32.mrb[0].mxu0
      %v3178 = vadd.f32 %v3001, %v3177
      %v3179 = vpop.f32.mrb[0].mxu0
      %v3180 = vpop.f32.mrb[0].mxu0
      %v3181 = vadd.f32 %v3001, %v3180
      %v3182 = vpop.f32.mrb[0].mxu0
      %3183 = vmatprep.mubr.bf16.mxu0 0
      %3184 = vmatmul.mubr.bf16.gmra.mrb[0].mxu0 %v3031
      %v3185 = vpop.f32.mrb[0].mxu0
      %v3186 = vadd.f32 %v3001, %v3185
      %v3187 = vpop.f32.mrb[0].mxu0
      %v3188 = vpop.f32.mrb[0].mxu0
      %v3189 = vadd.f32 %v3001, %v3188
      %v3190 = vpop.f32.mrb[0].mxu0
      %3191 = vmatprep.mubr.bf16.mxu0 0
      %3192 = vmatmul.mubr.bf16.gmra.mrb[0].mxu0 %v3034
      %v3193 = vpop.f32.mrb[0].mxu0
      %v3194 = vadd.f32 %v3001, %v3193
      %v3195 = vpop.f32.mrb[0].mxu0
      %v3196 = vpop.f32.mrb[0].mxu0
      %v3197 = vadd.f32 %v3001, %v3196
      %v3198 = vpop.f32.mrb[0].mxu0
      %3199 = vmatprep.mubr.bf16.mxu0 0
      %3200 = vmatmul.mubr.bf16.gmra.mrb[0].mxu0 %v3037
      %v3201 = vpop.f32.mrb[0].mxu0
      %v3202 = vadd.f32 %v3001, %v3201
      %v3203 = vpop.f32.mrb[0].mxu0
      %v3204 = vpop.f32.mrb[0].mxu0
      %v3205 = vadd.f32 %v3001, %v3204
      %v3206 = vpop.f32.mrb[0].mxu0
      %3207 = vmatprep.mubr.bf16.mxu0 0
      %3208 = vmatmul.mubr.bf16.gmra.mrb[0].mxu0 %v3040
      %v3209 = vpop.f32.mrb[0].mxu0
      %v3210 = vadd.f32 %v3001, %v3209
      %v3211 = vpop.f32.mrb[0].mxu0
      %v3212 = vpop.f32.mrb[0].mxu0
      %v3213 = vadd.f32 %v3001, %v3212
      %v3214 = vpop.f32.mrb[0].mxu0
      %3215 = vmatprep.mubr.bf16.mxu0 0
      %3216 = vmatmul.mubr.bf16.gmra.mrb[0].mxu0 %v3043
      %v3217 = vpop.f32.mrb[0].mxu0
      %v3218 = vadd.f32 %v3001, %v3217
      %v3219 = vpop.f32.mrb[0].mxu0
      %v3220 = vpop.f32.mrb[0].mxu0
      %v3221 = vadd.f32 %v3001, %v3220
      %v3222 = vpop.f32.mrb[0].mxu0
      %3223 = vmatprep.mubr.bf16.mxu0 0
      %3224 = vmatmul.mubr.bf16.gmra.mrb[0].mxu0 %v3046
      %v3225 = vpop.f32.mrb[0].mxu0
      %v3226 = vadd.f32 %v3001, %v3225
      %v3227 = vpop.f32.mrb[0].mxu0
      %v3228 = vpop.f32.mrb[0].mxu0
      %v3229 = vadd.f32 %v3001, %v3228
      %v3230 = vpop.f32.mrb[0].mxu0
      %3231 = vmatprep.mubr.bf16.mxu0 0
      %3232 = vmatmul.mubr.bf16.gmra.mrb[0].mxu0 %v3049
      %v3233 = vpop.f32.mrb[0].mxu0
      %v3234 = vadd.f32 %v3001, %v3233
      %v3235 = vpop.f32.mrb[0].mxu0
      %v3236 = vpop.f32.mrb[0].mxu0
      %v3237 = vadd.f32 %v3001, %v3236
      %v3238 = vpop.f32.mrb[0].mxu0
      %3239 = vmatprep.mubr.bf16.mxu0 0
      %3240 = vmatmul.mubr.bf16.gmra.mrb[0].mxu0 %v3052
      %v3241 = vpop.f32.mrb[0].mxu0
      %v3242 = vadd.f32 %v3001, %v3241
      %v3243 = vpop.f32.mrb[0].mxu0
      %v3244 = vpop.f32.mrb[0].mxu0
      %v3245 = vadd.f32 %v3001, %v3244
      %v3246 = vpop.f32.mrb[0].mxu0
      %3247 = vmatprep.mubr.bf16.mxu0 0
      %3248 = vmatmul.mubr.bf16.gmra.mrb[0].mxu0 %v3055
      %v3249 = vpop.f32.mrb[0].mxu0
      %v3250 = vadd.f32 %v3001, %v3249
      %v3251 = vpop.f32.mrb[0].mxu0
      %v3252 = vpop.f32.mrb[0].mxu0
      %v3253 = vadd.f32 %v3001, %v3252
      %v3254 = vpop.f32.mrb[0].mxu0
      %3255 = vmatprep.mubr.bf16.mxu0 0
      %3256 = vmatmul.mubr.bf16.gmra.mrb[0].mxu0 %v3058
      %v3257 = vpop.f32.mrb[0].mxu0
      %v3258 = vadd.f32 %v3001, %v3257
      %v3259 = vpop.f32.mrb[0].mxu0
      %v3260 = vpop.f32.mrb[0].mxu0
      %v3261 = vadd.f32 %v3001, %v3260
      %v3262 = vpop.f32.mrb[0].mxu0
      %3263 = vmatprep.mubr.bf16.mxu0 0
      %3264 = vmatmul.mubr.bf16.gmra.mrb[0].mxu0 %v3061
      %v3265 = vpop.f32.mrb[0].mxu0
      %v3266 = vadd.f32 %v3001, %v3265
      %v3267 = vpop.f32.mrb[0].mxu0
      %v3268 = vpop.f32.mrb[0].mxu0
      %v3269 = vadd.f32 %v3001, %v3268
      %v3270 = vpop.f32.mrb[0].mxu0
      %3271 = vmatprep.mubr.bf16.mxu0 0
      %3272 = vmatmul.mubr.bf16.gmra.mrb[0].mxu0 %v3064
      %v3273 = vpop.f32.mrb[0].mxu0
      %v3274 = vadd.f32 %v3001, %v3273
      %v3275 = vpop.f32.mrb[0].mxu0
      %v3276 = vpop.f32.mrb[0].mxu0
      %v3277 = vadd.f32 %v3001, %v3276
      %v3278 = vpop.f32.mrb[0].mxu0
      %3279 = vmatprep.mubr.bf16.mxu0 0
      %3280 = vmatmul.mubr.bf16.gmra.mrb[0].mxu0 %v3067
      %v3281 = vpop.f32.mrb[0].mxu0
      %v3282 = vadd.f32 %v3001, %v3281
      %v3283 = vpop.f32.mrb[0].mxu0
      %v3284 = vpop.f32.mrb[0].mxu0
      %v3285 = vadd.f32 %v3001, %v3284
      %v3286 = vpop.f32.mrb[0].mxu0
      %3287 = vmatprep.mubr.bf16.mxu0 0
      %3288 = vmatmul.mubr.bf16.gmra.mrb[0].mxu0 %v3070
      %v3289 = vpop.f32.mrb[0].mxu0
      %v3290 = vadd.f32 %v3001, %v3289
      %v3291 = vpop.f32.mrb[0].mxu0
      %v3292 = vpop.f32.mrb[0].mxu0
      %v3293 = vadd.f32 %v3001, %v3292
      %v3294 = vpop.f32.mrb[0].mxu0
      %3295 = vmatprep.mubr.bf16.mxu0 0
      %3296 = vmatmul.mubr.bf16.gmra.mrb[0].mxu0 %v3073
      %v3297 = vpop.f32.mrb[0].mxu0
      %v3298 = vadd.f32 %v3001, %v3297
      %v3299 = vpop.f32.mrb[0].mxu0
      %v3300 = vpop.f32.mrb[0].mxu0
      %v3301 = vadd.f32 %v3001, %v3300
      %v3302 = vpop.f32.mrb[0].mxu0
      %3303 = vmatprep.mubr.bf16.mxu0 0
      %3304 = vmatmul.mubr.bf16.gmra.mrb[0].mxu0 %v3076
      %v3305 = vpop.f32.mrb[0].mxu0
      %v3306 = vadd.f32 %v3001, %v3305
      %v3307 = vpop.f32.mrb[0].mxu0
      %v3308 = vpop.f32.mrb[0].mxu0
      %v3309 = vadd.f32 %v3001, %v3308
      %v3310 = vpop.f32.mrb[0].mxu0
      %3311 = vmatprep.mubr.bf16.mxu0 0
      %3312 = vmatmul.mubr.bf16.gmra.mrb[0].mxu0 %v3079
      %v3313 = vpop.f32.mrb[0].mxu0
      %v3314 = vadd.f32 %v3001, %v3313
      %v3315 = vpop.f32.mrb[0].mxu0
      %v3316 = vpop.f32.mrb[0].mxu0
      %v3317 = vadd.f32 %v3001, %v3316
      %v3318 = vpop.f32.mrb[0].mxu0
      %3319 = vmatprep.mubr.bf16.mxu0 0
      %3320 = vmatmul.mubr.bf16.gmra.mrb[0].mxu0 %v3082
      %v3321 = vpop.f32.mrb[0].mxu0
      %v3322 = vadd.f32 %v3001, %v3321
      %v3323 = vpop.f32.mrb[0].mxu0
      %v3324 = vpop.f32.mrb[0].mxu0
      %v3325 = vadd.f32 %v3001, %v3324
      %v3326 = vpop.f32.mrb[0].mxu0
      %3327 = vmatprep.mubr.bf16.mxu0 0
      %3328 = vmatmul.mubr.bf16.gmra.mrb[0].mxu0 %v3085
      %v3329 = vpop.f32.mrb[0].mxu0
      %v3330 = vadd.f32 %v3001, %v3329
      %v3331 = vpop.f32.mrb[0].mxu0
      %v3332 = vpop.f32.mrb[0].mxu0
      %v3333 = vadd.f32 %v3001, %v3332
      %v3334 = vpop.f32.mrb[0].mxu0
      %3335 = vmatprep.mubr.bf16.mxu0 0
      %3336 = vmatmul.mubr.bf16.gmra.mrb[0].mxu0 %v3088
      %v3337 = vpop.f32.mrb[0].mxu0
      %v3338 = vadd.f32 %v3001, %v3337
      %v3339 = vpop.f32.mrb[0].mxu0
      %v3340 = vpop.f32.mrb[0].mxu0
      %v3341 = vadd.f32 %v3001, %v3340
      %v3342 = vpop.f32.mrb[0].mxu0
      %3343 = vmatprep.mubr.bf16.mxu0 0
      %3344 = vmatmul.mubr.bf16.gmra.mrb[0].mxu0 %v3091
      %v3345 = vpop.f32.mrb[0].mxu0
      %v3346 = vadd.f32 %v3001, %v3345
      %v3347 = vpop.f32.mrb[0].mxu0
      %v3348 = vpop.f32.mrb[0].mxu0
      %v3349 = vadd.f32 %v3001, %v3348
      %v3350 = vpop.f32.mrb[0].mxu0
      %3351 = vmatprep.mubr.bf16.mxu0 0
      %3352 = vmatmul.mubr.bf16.gmra.mrb[0].mxu0 %v3094
      %v3353 = vpop.f32.mrb[0].mxu0
      %v3354 = vadd.f32 %v3001, %v3353
      %v3355 = vpop.f32.mrb[0].mxu0
      %v3356 = vpop.f32.mrb[0].mxu0
      %v3357 = vadd.f32 %v3001, %v3356
      %v3358 = vpop.f32.mrb[0].mxu0
      %3359 = vmatprep.mubr.bf16.mxu0 0
      %3360 = vmatmul.mubr.bf16.gmra.mrb[0].mxu0 %v3097
      %v3361 = vpop.f32.mrb[0].mxu0
      %v3362 = vadd.f32 %v3001, %v3361
      %v3363 = vpop.f32.mrb[0].mxu0
      %v3364 = vpop.f32.mrb[0].mxu0
      %v3365 = vadd.f32 %v3001, %v3364
      %v3366 = vpop.f32.mrb[0].mxu0
      %3367 = vmatprep.mubr.bf16.mxu0 0
      %3368 = vmatmul.mubr.bf16.gmra.mrb[0].mxu0 %v3100
      %v3369 = vpop.f32.mrb[0].mxu0
      %v3370 = vadd.f32 %v3001, %v3369
      %v3371 = vpop.f32.mrb[0].mxu0
      %v3372 = vpop.f32.mrb[0].mxu0
      %v3373 = vadd.f32 %v3001, %v3372
      %v3374 = vpop.f32.mrb[0].mxu0
      %3375 = vmatprep.mubr.bf16.mxu0 0
      %3376 = vmatmul.mubr.bf16.gmra.mrb[0].mxu0 %v3103
      %v3377 = vpop.f32.mrb[0].mxu0
      %v3378 = vadd.f32 %v3001, %v3377
      %v3379 = vpop.f32.mrb[0].mxu0
      %v3380 = vpop.f32.mrb[0].mxu0
      %v3381 = vadd.f32 %v3001, %v3380
      %v3382 = vpop.f32.mrb[0].mxu0
      %3383 = vmatprep.mubr.bf16.mxu0 0
      %3384 = vmatmul.mubr.bf16.gmra.mrb[0].mxu0 %v3106
      %v3385 = vpop.f32.mrb[0].mxu0
      %v3386 = vadd.f32 %v3001, %v3385
      %v3387 = vpop.f32.mrb[0].mxu0
      %v3388 = vpop.f32.mrb[0].mxu0
      %v3389 = vadd.f32 %v3001, %v3388
      %v3390 = vpop.f32.mrb[0].mxu0
      %3391 = vmatprep.mubr.bf16.mxu0 0
      %3392 = vmatmul.mubr.bf16.gmra.mrb[0].mxu0 %v3109
      %v3393 = vpop.f32.mrb[0].mxu0
      %v3394 = vadd.f32 %v3001, %v3393
      %v3395 = vpop.f32.mrb[0].mxu0
      %v3396 = vpop.f32.mrb[0].mxu0
      %v3397 = vadd.f32 %v3001, %v3396
      %v3398 = vpop.f32.mrb[0].mxu0
      %3399 = vdwg.mxu0
      %v3400 = vpack.c.bf16 %v3146, %v3146
      %v3401 = vpack.c.bf16 %v3149, %v3149
      %v3402 = vpack.c.bf16 %v3154, %v3154
      %v3403 = vpack.c.bf16 %v3157, %v3157
      %v3404 = vpack.c.bf16 %v3162, %v3162
      %v3405 = vpack.c.bf16 %v3165, %v3165
      %v3406 = vpack.c.bf16 %v3170, %v3170
      %v3407 = vpack.c.bf16 %v3173, %v3173
      %v3408 = vpack.c.bf16 %v3178, %v3178
      %v3409 = vpack.c.bf16 %v3181, %v3181
      %v3410 = vpack.c.bf16 %v3186, %v3186
      %v3411 = vpack.c.bf16 %v3189, %v3189
      %v3412 = vpack.c.bf16 %v3194, %v3194
      %v3413 = vpack.c.bf16 %v3197, %v3197
      %v3414 = vpack.c.bf16 %v3202, %v3202
      %v3415 = vpack.c.bf16 %v3205, %v3205
      %v3416 = vpack.c.bf16 %v3210, %v3210
      %v3417 = vpack.c.bf16 %v3213, %v3213
      %v3418 = vpack.c.bf16 %v3218, %v3218
      %v3419 = vpack.c.bf16 %v3221, %v3221
      %v3420 = vpack.c.bf16 %v3226, %v3226
      %v3421 = vpack.c.bf16 %v3229, %v3229
      %v3422 = vpack.c.bf16 %v3234, %v3234
      %v3423 = vpack.c.bf16 %v3237, %v3237
      %v3424 = vpack.c.bf16 %v3242, %v3242
      %v3425 = vpack.c.bf16 %v3245, %v3245
      %v3426 = vpack.c.bf16 %v3250, %v3250
      %v3427 = vpack.c.bf16 %v3253, %v3253
      %v3428 = vpack.c.bf16 %v3258, %v3258
      %v3429 = vpack.c.bf16 %v3261, %v3261
      %v3430 = vpack.c.bf16 %v3266, %v3266
      %v3431 = vpack.c.bf16 %v3269, %v3269
      %v3432 = vpack.c.bf16 %v3274, %v3274
      %v3433 = vpack.c.bf16 %v3277, %v3277
      %v3434 = vpack.c.bf16 %v3282, %v3282
      %v3435 = vpack.c.bf16 %v3285, %v3285
      %v3436 = vpack.c.bf16 %v3290, %v3290
      %v3437 = vpack.c.bf16 %v3293, %v3293
      %v3438 = vpack.c.bf16 %v3298, %v3298
      %v3439 = vpack.c.bf16 %v3301, %v3301
      %v3440 = vpack.c.bf16 %v3306, %v3306
      %v3441 = vpack.c.bf16 %v3309, %v3309
      %v3442 = vpack.c.bf16 %v3314, %v3314
      %v3443 = vpack.c.bf16 %v3317, %v3317
      %v3444 = vpack.c.bf16 %v3322, %v3322
      %v3445 = vpack.c.bf16 %v3325, %v3325
      %v3446 = vpack.c.bf16 %v3330, %v3330
      %v3447 = vpack.c.bf16 %v3333, %v3333
      %v3448 = vpack.c.bf16 %v3338, %v3338
      %v3449 = vpack.c.bf16 %v3341, %v3341
      %v3450 = vpack.c.bf16 %v3346, %v3346
      %v3451 = vpack.c.bf16 %v3349, %v3349
      %v3452 = vpack.c.bf16 %v3354, %v3354
      %v3453 = vpack.c.bf16 %v3357, %v3357
      %v3454 = vpack.c.bf16 %v3362, %v3362
      %v3455 = vpack.c.bf16 %v3365, %v3365
      %v3456 = vpack.c.bf16 %v3370, %v3370
      %v3457 = vpack.c.bf16 %v3373, %v3373
      %v3458 = vpack.c.bf16 %v3378, %v3378
      %v3459 = vpack.c.bf16 %v3381, %v3381
      %v3460 = vpack.c.bf16 %v3386, %v3386
      %v3461 = vpack.c.bf16 %v3389, %v3389
      %v3462 = vpack.c.bf16 %v3394, %v3394
      %v3463 = vpack.c.bf16 %v3397, %v3397
      %3465 = vrot.lane.b32.xlu0 %v3400, 96
      %v3466 = vpop.permute.xlu0 %3465
      %v3468 = vsel %vm1830, %v3400, 0
      %v3471 = vsel %vm1830, %v3466, 0
      %3473 = vmatprep.subr.bf16.mxu0 0
      %3474 = vmatpush1.bf16.xpose.msra.mxu0 %v3471
      %3475 = vmatprep.subr.bf16.mxu0 0
      %3476 = vmatpush1.bf16.xpose.msra.mxu0 0
      %3477 = vmatprep.subr.bf16.mxu0 0
      %3478 = vmatpush1.bf16.xpose.msra.mxu0 0
      %3479 = vmatprep.subr.bf16.mxu0 0
      %3480 = vmatpush1.bf16.xpose.msra.mxu0 0
      %3481 = vmatprep.subr.bf16.mxu0 0
      %3482 = vmatpush1.bf16.xpose.msra.mxu0 0
      %3483 = vmatprep.subr.bf16.mxu0 0
      %3484 = vmatpush1.bf16.xpose.msra.mxu0 0
      %3485 = vmatprep.subr.bf16.mxu0 0
      %3486 = vmatpush1.bf16.xpose.msra.mxu0 0
      %3487 = vmatprep.subr.bf16.mxu0 0
      %3488 = vmatpush1.bf16.xpose.msra.mxu0 0
      %3489 = vmatprep.subr.bf16.mxu0 0
      %3490 = vmatpush1.bf16.xpose.msra.mxu0 0
      %3491 = vmatprep.subr.bf16.mxu0 0
      %3492 = vmatpush1.bf16.xpose.msra.mxu0 0
      %3493 = vmatprep.subr.bf16.mxu0 0
      %3494 = vmatpush1.bf16.xpose.msra.mxu0 0
      %3495 = vmatprep.subr.bf16.mxu0 0
      %3496 = vmatpush1.bf16.xpose.msra.mxu0 0
      %3497 = vmatprep.subr.bf16.mxu0 0
      %3498 = vmatpush1.bf16.xpose.msra.mxu0 0
      %3499 = vmatprep.subr.bf16.mxu0 0
      %3500 = vmatpush1.bf16.xpose.msra.mxu0 0
      %3501 = vmatprep.subr.bf16.mxu0 0
      %3502 = vmatpush1.bf16.xpose.msra.mxu0 0
      %3503 = vmatprep.subr.bf16.mxu0 0
      %3504 = vmatpush1.bf16.xpose.msra.mxu0 0
      %3505 = vmatprep.mubr.bf16.mxu0 0
      %3506 = vmatmul.mubr.bf16.gmra.mrb[0].mxu0 %v3468
      %v3507 = vpop.f32.mrb[0].mxu0
      %v3508 = vadd.f32 0.0, %v3507
      %v3509 = vpop.f32.mrb[0].mxu0
      %v3510 = vpop.f32.mrb[0].mxu0
      %v3511 = vpop.f32.mrb[0].mxu0
      %3512 = vdwg.mxu0
      %3514 = vrot.lane.b32.xlu0 %v3401, 96
      %v3515 = vpop.permute.xlu0 %3514
      %v3517 = vsel %vm1830, %v3401, 0
      %v3520 = vsel %vm1830, %v3515, 0
      %3522 = vmatprep.subr.bf16.mxu0 0
      %3523 = vmatpush1.bf16.xpose.msra.mxu0 %v3520
      %3524 = vmatprep.subr.bf16.mxu0 0
      %3525 = vmatpush1.bf16.xpose.msra.mxu0 0
      %3526 = vmatprep.subr.bf16.mxu0 0
      %3527 = vmatpush1.bf16.xpose.msra.mxu0 0
      %3528 = vmatprep.subr.bf16.mxu0 0
      %3529 = vmatpush1.bf16.xpose.msra.mxu0 0
      %3530 = vmatprep.subr.bf16.mxu0 0
      %3531 = vmatpush1.bf16.xpose.msra.mxu0 0
      %3532 = vmatprep.subr.bf16.mxu0 0
      %3533 = vmatpush1.bf16.xpose.msra.mxu0 0
      %3534 = vmatprep.subr.bf16.mxu0 0
      %3535 = vmatpush1.bf16.xpose.msra.mxu0 0
      %3536 = vmatprep.subr.bf16.mxu0 0
      %3537 = vmatpush1.bf16.xpose.msra.mxu0 0
      %3538 = vmatprep.subr.bf16.mxu0 0
      %3539 = vmatpush1.bf16.xpose.msra.mxu0 0
      %3540 = vmatprep.subr.bf16.mxu0 0
      %3541 = vmatpush1.bf16.xpose.msra.mxu0 0
      %3542 = vmatprep.subr.bf16.mxu0 0
      %3543 = vmatpush1.bf16.xpose.msra.mxu0 0
      %3544 = vmatprep.subr.bf16.mxu0 0
      %3545 = vmatpush1.bf16.xpose.msra.mxu0 0
      %3546 = vmatprep.subr.bf16.mxu0 0
      %3547 = vmatpush1.bf16.xpose.msra.mxu0 0
      %3548 = vmatprep.subr.bf16.mxu0 0
      %3549 = vmatpush1.bf16.xpose.msra.mxu0 0
      %3550 = vmatprep.subr.bf16.mxu0 0
      %3551 = vmatpush1.bf16.xpose.msra.mxu0 0
      %3552 = vmatprep.subr.bf16.mxu0 0
      %3553 = vmatpush1.bf16.xpose.msra.mxu0 0
      %3554 = vmatprep.mubr.bf16.mxu0 0
      %3555 = vmatmul.mubr.bf16.gmra.mrb[0].mxu0 %v3517
      %v3556 = vpop.f32.mrb[0].mxu0
      %v3557 = vadd.f32 0.0, %v3556
      %v3558 = vpop.f32.mrb[0].mxu0
      %v3559 = vpop.f32.mrb[0].mxu0
      %v3560 = vpop.f32.mrb[0].mxu0
      %3561 = vdwg.mxu0
      %3563 = vrot.lane.b32.xlu0 %v3402, 96
      %v3564 = vpop.permute.xlu0 %3563
      %v3566 = vsel %vm1830, %v3402, 0
      %v3569 = vsel %vm1830, %v3564, 0
      %3571 = vmatprep.subr.bf16.mxu0 0
      %3572 = vmatpush1.bf16.xpose.msra.mxu0 %v3569
      %3573 = vmatprep.subr.bf16.mxu0 0
      %3574 = vmatpush1.bf16.xpose.msra.mxu0 0
      %3575 = vmatprep.subr.bf16.mxu0 0
      %3576 = vmatpush1.bf16.xpose.msra.mxu0 0
      %3577 = vmatprep.subr.bf16.mxu0 0
      %3578 = vmatpush1.bf16.xpose.msra.mxu0 0
      %3579 = vmatprep.subr.bf16.mxu0 0
      %3580 = vmatpush1.bf16.xpose.msra.mxu0 0
      %3581 = vmatprep.subr.bf16.mxu0 0
      %3582 = vmatpush1.bf16.xpose.msra.mxu0 0
      %3583 = vmatprep.subr.bf16.mxu0 0
      %3584 = vmatpush1.bf16.xpose.msra.mxu0 0
      %3585 = vmatprep.subr.bf16.mxu0 0
      %3586 = vmatpush1.bf16.xpose.msra.mxu0 0
      %3587 = vmatprep.subr.bf16.mxu0 0
      %3588 = vmatpush1.bf16.xpose.msra.mxu0 0
      %3589 = vmatprep.subr.bf16.mxu0 0
      %3590 = vmatpush1.bf16.xpose.msra.mxu0 0
      %3591 = vmatprep.subr.bf16.mxu0 0
      %3592 = vmatpush1.bf16.xpose.msra.mxu0 0
      %3593 = vmatprep.subr.bf16.mxu0 0
      %3594 = vmatpush1.bf16.xpose.msra.mxu0 0
      %3595 = vmatprep.subr.bf16.mxu0 0
      %3596 = vmatpush1.bf16.xpose.msra.mxu0 0
      %3597 = vmatprep.subr.bf16.mxu0 0
      %3598 = vmatpush1.bf16.xpose.msra.mxu0 0
      %3599 = vmatprep.subr.bf16.mxu0 0
      %3600 = vmatpush1.bf16.xpose.msra.mxu0 0
      %3601 = vmatprep.subr.bf16.mxu0 0
      %3602 = vmatpush1.bf16.xpose.msra.mxu0 0
      %3603 = vmatprep.mubr.bf16.mxu0 0
      %3604 = vmatmul.mubr.bf16.gmra.mrb[0].mxu0 %v3566
      %v3605 = vpop.f32.mrb[0].mxu0
      %v3606 = vadd.f32 0.0, %v3605
      %v3607 = vpop.f32.mrb[0].mxu0
      %v3608 = vpop.f32.mrb[0].mxu0
      %v3609 = vpop.f32.mrb[0].mxu0
      %3610 = vdwg.mxu0
      %3612 = vrot.lane.b32.xlu0 %v3403, 96
      %v3613 = vpop.permute.xlu0 %3612
      %v3615 = vsel %vm1830, %v3403, 0
      %v3618 = vsel %vm1830, %v3613, 0
      %3620 = vmatprep.subr.bf16.mxu0 0
      %3621 = vmatpush1.bf16.xpose.msra.mxu0 %v3618
      %3622 = vmatprep.subr.bf16.mxu0 0
      %3623 = vmatpush1.bf16.xpose.msra.mxu0 0
      %3624 = vmatprep.subr.bf16.mxu0 0
      %3625 = vmatpush1.bf16.xpose.msra.mxu0 0
      %3626 = vmatprep.subr.bf16.mxu0 0
      %3627 = vmatpush1.bf16.xpose.msra.mxu0 0
      %3628 = vmatprep.subr.bf16.mxu0 0
      %3629 = vmatpush1.bf16.xpose.msra.mxu0 0
      %3630 = vmatprep.subr.bf16.mxu0 0
      %3631 = vmatpush1.bf16.xpose.msra.mxu0 0
      %3632 = vmatprep.subr.bf16.mxu0 0
      %3633 = vmatpush1.bf16.xpose.msra.mxu0 0
      %3634 = vmatprep.subr.bf16.mxu0 0
      %3635 = vmatpush1.bf16.xpose.msra.mxu0 0
      %3636 = vmatprep.subr.bf16.mxu0 0
      %3637 = vmatpush1.bf16.xpose.msra.mxu0 0
      %3638 = vmatprep.subr.bf16.mxu0 0
      %3639 = vmatpush1.bf16.xpose.msra.mxu0 0
      %3640 = vmatprep.subr.bf16.mxu0 0
      %3641 = vmatpush1.bf16.xpose.msra.mxu0 0
      %3642 = vmatprep.subr.bf16.mxu0 0
      %3643 = vmatpush1.bf16.xpose.msra.mxu0 0
      %3644 = vmatprep.subr.bf16.mxu0 0
      %3645 = vmatpush1.bf16.xpose.msra.mxu0 0
      %3646 = vmatprep.subr.bf16.mxu0 0
      %3647 = vmatpush1.bf16.xpose.msra.mxu0 0
      %3648 = vmatprep.subr.bf16.mxu0 0
      %3649 = vmatpush1.bf16.xpose.msra.mxu0 0
      %3650 = vmatprep.subr.bf16.mxu0 0
      %3651 = vmatpush1.bf16.xpose.msra.mxu0 0
      %3652 = vmatprep.mubr.bf16.mxu0 0
      %3653 = vmatmul.mubr.bf16.gmra.mrb[0].mxu0 %v3615
      %v3654 = vpop.f32.mrb[0].mxu0
      %v3655 = vadd.f32 0.0, %v3654
      %v3656 = vpop.f32.mrb[0].mxu0
      %v3657 = vpop.f32.mrb[0].mxu0
      %v3658 = vpop.f32.mrb[0].mxu0
      %3659 = vdwg.mxu0
      %3661 = vrot.lane.b32.xlu0 %v3404, 96
      %v3662 = vpop.permute.xlu0 %3661
      %v3664 = vsel %vm1830, %v3404, 0
      %v3667 = vsel %vm1830, %v3662, 0
      %3669 = vmatprep.subr.bf16.mxu0 0
      %3670 = vmatpush1.bf16.xpose.msra.mxu0 %v3667
      %3671 = vmatprep.subr.bf16.mxu0 0
      %3672 = vmatpush1.bf16.xpose.msra.mxu0 0
      %3673 = vmatprep.subr.bf16.mxu0 0
      %3674 = vmatpush1.bf16.xpose.msra.mxu0 0
      %3675 = vmatprep.subr.bf16.mxu0 0
      %3676 = vmatpush1.bf16.xpose.msra.mxu0 0
      %3677 = vmatprep.subr.bf16.mxu0 0
      %3678 = vmatpush1.bf16.xpose.msra.mxu0 0
      %3679 = vmatprep.subr.bf16.mxu0 0
      %3680 = vmatpush1.bf16.xpose.msra.mxu0 0
      %3681 = vmatprep.subr.bf16.mxu0 0
      %3682 = vmatpush1.bf16.xpose.msra.mxu0 0
      %3683 = vmatprep.subr.bf16.mxu0 0
      %3684 = vmatpush1.bf16.xpose.msra.mxu0 0
      %3685 = vmatprep.subr.bf16.mxu0 0
      %3686 = vmatpush1.bf16.xpose.msra.mxu0 0
      %3687 = vmatprep.subr.bf16.mxu0 0
      %3688 = vmatpush1.bf16.xpose.msra.mxu0 0
      %3689 = vmatprep.subr.bf16.mxu0 0
      %3690 = vmatpush1.bf16.xpose.msra.mxu0 0
      %3691 = vmatprep.subr.bf16.mxu0 0
      %3692 = vmatpush1.bf16.xpose.msra.mxu0 0
      %3693 = vmatprep.subr.bf16.mxu0 0
      %3694 = vmatpush1.bf16.xpose.msra.mxu0 0
      %3695 = vmatprep.subr.bf16.mxu0 0
      %3696 = vmatpush1.bf16.xpose.msra.mxu0 0
      %3697 = vmatprep.subr.bf16.mxu0 0
      %3698 = vmatpush1.bf16.xpose.msra.mxu0 0
      %3699 = vmatprep.subr.bf16.mxu0 0
      %3700 = vmatpush1.bf16.xpose.msra.mxu0 0
      %3701 = vmatprep.mubr.bf16.mxu0 0
      %3702 = vmatmul.mubr.bf16.gmra.mrb[0].mxu0 %v3664
      %v3703 = vpop.f32.mrb[0].mxu0
      %v3704 = vadd.f32 0.0, %v3703
      %v3705 = vpop.f32.mrb[0].mxu0
      %v3706 = vpop.f32.mrb[0].mxu0
      %v3707 = vpop.f32.mrb[0].mxu0
      %3708 = vdwg.mxu0
      %3710 = vrot.lane.b32.xlu0 %v3405, 96
      %v3711 = vpop.permute.xlu0 %3710
      %v3713 = vsel %vm1830, %v3405, 0
      %v3716 = vsel %vm1830, %v3711, 0
      %3718 = vmatprep.subr.bf16.mxu0 0
      %3719 = vmatpush1.bf16.xpose.msra.mxu0 %v3716
      %3720 = vmatprep.subr.bf16.mxu0 0
      %3721 = vmatpush1.bf16.xpose.msra.mxu0 0
      %3722 = vmatprep.subr.bf16.mxu0 0
      %3723 = vmatpush1.bf16.xpose.msra.mxu0 0
      %3724 = vmatprep.subr.bf16.mxu0 0
      %3725 = vmatpush1.bf16.xpose.msra.mxu0 0
      %3726 = vmatprep.subr.bf16.mxu0 0
      %3727 = vmatpush1.bf16.xpose.msra.mxu0 0
      %3728 = vmatprep.subr.bf16.mxu0 0
      %3729 = vmatpush1.bf16.xpose.msra.mxu0 0
      %3730 = vmatprep.subr.bf16.mxu0 0
      %3731 = vmatpush1.bf16.xpose.msra.mxu0 0
      %3732 = vmatprep.subr.bf16.mxu0 0
      %3733 = vmatpush1.bf16.xpose.msra.mxu0 0
      %3734 = vmatprep.subr.bf16.mxu0 0
      %3735 = vmatpush1.bf16.xpose.msra.mxu0 0
      %3736 = vmatprep.subr.bf16.mxu0 0
      %3737 = vmatpush1.bf16.xpose.msra.mxu0 0
      %3738 = vmatprep.subr.bf16.mxu0 0
      %3739 = vmatpush1.bf16.xpose.msra.mxu0 0
      %3740 = vmatprep.subr.bf16.mxu0 0
      %3741 = vmatpush1.bf16.xpose.msra.mxu0 0
      %3742 = vmatprep.subr.bf16.mxu0 0
      %3743 = vmatpush1.bf16.xpose.msra.mxu0 0
      %3744 = vmatprep.subr.bf16.mxu0 0
      %3745 = vmatpush1.bf16.xpose.msra.mxu0 0
      %3746 = vmatprep.subr.bf16.mxu0 0
      %3747 = vmatpush1.bf16.xpose.msra.mxu0 0
      %3748 = vmatprep.subr.bf16.mxu0 0
      %3749 = vmatpush1.bf16.xpose.msra.mxu0 0
      %3750 = vmatprep.mubr.bf16.mxu0 0
      %3751 = vmatmul.mubr.bf16.gmra.mrb[0].mxu0 %v3713
      %v3752 = vpop.f32.mrb[0].mxu0
      %v3753 = vadd.f32 0.0, %v3752
      %v3754 = vpop.f32.mrb[0].mxu0
      %v3755 = vpop.f32.mrb[0].mxu0
      %v3756 = vpop.f32.mrb[0].mxu0
      %3757 = vdwg.mxu0
      %3759 = vrot.lane.b32.xlu0 %v3406, 96
      %v3760 = vpop.permute.xlu0 %3759
      %v3762 = vsel %vm1830, %v3406, 0
      %v3765 = vsel %vm1830, %v3760, 0
      %3767 = vmatprep.subr.bf16.mxu0 0
      %3768 = vmatpush1.bf16.xpose.msra.mxu0 %v3765
      %3769 = vmatprep.subr.bf16.mxu0 0
      %3770 = vmatpush1.bf16.xpose.msra.mxu0 0
      %3771 = vmatprep.subr.bf16.mxu0 0
      %3772 = vmatpush1.bf16.xpose.msra.mxu0 0
      %3773 = vmatprep.subr.bf16.mxu0 0
      %3774 = vmatpush1.bf16.xpose.msra.mxu0 0
      %3775 = vmatprep.subr.bf16.mxu0 0
      %3776 = vmatpush1.bf16.xpose.msra.mxu0 0
      %3777 = vmatprep.subr.bf16.mxu0 0
      %3778 = vmatpush1.bf16.xpose.msra.mxu0 0
      %3779 = vmatprep.subr.bf16.mxu0 0
      %3780 = vmatpush1.bf16.xpose.msra.mxu0 0
      %3781 = vmatprep.subr.bf16.mxu0 0
      %3782 = vmatpush1.bf16.xpose.msra.mxu0 0
      %3783 = vmatprep.subr.bf16.mxu0 0
      %3784 = vmatpush1.bf16.xpose.msra.mxu0 0
      %3785 = vmatprep.subr.bf16.mxu0 0
      %3786 = vmatpush1.bf16.xpose.msra.mxu0 0
      %3787 = vmatprep.subr.bf16.mxu0 0
      %3788 = vmatpush1.bf16.xpose.msra.mxu0 0
      %3789 = vmatprep.subr.bf16.mxu0 0
      %3790 = vmatpush1.bf16.xpose.msra.mxu0 0
      %3791 = vmatprep.subr.bf16.mxu0 0
      %3792 = vmatpush1.bf16.xpose.msra.mxu0 0
      %3793 = vmatprep.subr.bf16.mxu0 0
      %3794 = vmatpush1.bf16.xpose.msra.mxu0 0
      %3795 = vmatprep.subr.bf16.mxu0 0
      %3796 = vmatpush1.bf16.xpose.msra.mxu0 0
      %3797 = vmatprep.subr.bf16.mxu0 0
      %3798 = vmatpush1.bf16.xpose.msra.mxu0 0
      %3799 = vmatprep.mubr.bf16.mxu0 0
      %3800 = vmatmul.mubr.bf16.gmra.mrb[0].mxu0 %v3762
      %v3801 = vpop.f32.mrb[0].mxu0
      %v3802 = vadd.f32 0.0, %v3801
      %v3803 = vpop.f32.mrb[0].mxu0
      %v3804 = vpop.f32.mrb[0].mxu0
      %v3805 = vpop.f32.mrb[0].mxu0
      %3806 = vdwg.mxu0
      %3808 = vrot.lane.b32.xlu0 %v3407, 96
      %v3809 = vpop.permute.xlu0 %3808
      %v3811 = vsel %vm1830, %v3407, 0
      %v3814 = vsel %vm1830, %v3809, 0
      %3816 = vmatprep.subr.bf16.mxu0 0
      %3817 = vmatpush1.bf16.xpose.msra.mxu0 %v3814
      %3818 = vmatprep.subr.bf16.mxu0 0
      %3819 = vmatpush1.bf16.xpose.msra.mxu0 0
      %3820 = vmatprep.subr.bf16.mxu0 0
      %3821 = vmatpush1.bf16.xpose.msra.mxu0 0
      %3822 = vmatprep.subr.bf16.mxu0 0
      %3823 = vmatpush1.bf16.xpose.msra.mxu0 0
      %3824 = vmatprep.subr.bf16.mxu0 0
      %3825 = vmatpush1.bf16.xpose.msra.mxu0 0
      %3826 = vmatprep.subr.bf16.mxu0 0
      %3827 = vmatpush1.bf16.xpose.msra.mxu0 0
      %3828 = vmatprep.subr.bf16.mxu0 0
      %3829 = vmatpush1.bf16.xpose.msra.mxu0 0
      %3830 = vmatprep.subr.bf16.mxu0 0
      %3831 = vmatpush1.bf16.xpose.msra.mxu0 0
      %3832 = vmatprep.subr.bf16.mxu0 0
      %3833 = vmatpush1.bf16.xpose.msra.mxu0 0
      %3834 = vmatprep.subr.bf16.mxu0 0
      %3835 = vmatpush1.bf16.xpose.msra.mxu0 0
      %3836 = vmatprep.subr.bf16.mxu0 0
      %3837 = vmatpush1.bf16.xpose.msra.mxu0 0
      %3838 = vmatprep.subr.bf16.mxu0 0
      %3839 = vmatpush1.bf16.xpose.msra.mxu0 0
      %3840 = vmatprep.subr.bf16.mxu0 0
      %3841 = vmatpush1.bf16.xpose.msra.mxu0 0
      %3842 = vmatprep.subr.bf16.mxu0 0
      %3843 = vmatpush1.bf16.xpose.msra.mxu0 0
      %3844 = vmatprep.subr.bf16.mxu0 0
      %3845 = vmatpush1.bf16.xpose.msra.mxu0 0
      %3846 = vmatprep.subr.bf16.mxu0 0
      %3847 = vmatpush1.bf16.xpose.msra.mxu0 0
      %3848 = vmatprep.mubr.bf16.mxu0 0
      %3849 = vmatmul.mubr.bf16.gmra.mrb[0].mxu0 %v3811
      %v3850 = vpop.f32.mrb[0].mxu0
      %v3851 = vadd.f32 0.0, %v3850
      %v3852 = vpop.f32.mrb[0].mxu0
      %v3853 = vpop.f32.mrb[0].mxu0
      %v3854 = vpop.f32.mrb[0].mxu0
      %3855 = vdwg.mxu0
      %3857 = vrot.lane.b32.xlu0 %v3408, 96
      %v3858 = vpop.permute.xlu0 %3857
      %v3860 = vsel %vm1830, %v3408, 0
      %v3863 = vsel %vm1830, %v3858, 0
      %3865 = vmatprep.subr.bf16.mxu0 0
      %3866 = vmatpush1.bf16.xpose.msra.mxu0 %v3863
      %3867 = vmatprep.subr.bf16.mxu0 0
      %3868 = vmatpush1.bf16.xpose.msra.mxu0 0
      %3869 = vmatprep.subr.bf16.mxu0 0
      %3870 = vmatpush1.bf16.xpose.msra.mxu0 0
      %3871 = vmatprep.subr.bf16.mxu0 0
      %3872 = vmatpush1.bf16.xpose.msra.mxu0 0
      %3873 = vmatprep.subr.bf16.mxu0 0
      %3874 = vmatpush1.bf16.xpose.msra.mxu0 0
      %3875 = vmatprep.subr.bf16.mxu0 0
      %3876 = vmatpush1.bf16.xpose.msra.mxu0 0
      %3877 = vmatprep.subr.bf16.mxu0 0
      %3878 = vmatpush1.bf16.xpose.msra.mxu0 0
      %3879 = vmatprep.subr.bf16.mxu0 0
      %3880 = vmatpush1.bf16.xpose.msra.mxu0 0
      %3881 = vmatprep.subr.bf16.mxu0 0
      %3882 = vmatpush1.bf16.xpose.msra.mxu0 0
      %3883 = vmatprep.subr.bf16.mxu0 0
      %3884 = vmatpush1.bf16.xpose.msra.mxu0 0
      %3885 = vmatprep.subr.bf16.mxu0 0
      %3886 = vmatpush1.bf16.xpose.msra.mxu0 0
      %3887 = vmatprep.subr.bf16.mxu0 0
      %3888 = vmatpush1.bf16.xpose.msra.mxu0 0
      %3889 = vmatprep.subr.bf16.mxu0 0
      %3890 = vmatpush1.bf16.xpose.msra.mxu0 0
      %3891 = vmatprep.subr.bf16.mxu0 0
      %3892 = vmatpush1.bf16.xpose.msra.mxu0 0
      %3893 = vmatprep.subr.bf16.mxu0 0
      %3894 = vmatpush1.bf16.xpose.msra.mxu0 0
      %3895 = vmatprep.subr.bf16.mxu0 0
      %3896 = vmatpush1.bf16.xpose.msra.mxu0 0
      %3897 = vmatprep.mubr.bf16.mxu0 0
      %3898 = vmatmul.mubr.bf16.gmra.mrb[0].mxu0 %v3860
      %v3899 = vpop.f32.mrb[0].mxu0
      %v3900 = vadd.f32 0.0, %v3899
      %v3901 = vpop.f32.mrb[0].mxu0
      %v3902 = vpop.f32.mrb[0].mxu0
      %v3903 = vpop.f32.mrb[0].mxu0
      %3904 = vdwg.mxu0
      %3906 = vrot.lane.b32.xlu0 %v3409, 96
      %v3907 = vpop.permute.xlu0 %3906
      %v3909 = vsel %vm1830, %v3409, 0
      %v3912 = vsel %vm1830, %v3907, 0
      %3914 = vmatprep.subr.bf16.mxu0 0
      %3915 = vmatpush1.bf16.xpose.msra.mxu0 %v3912
      %3916 = vmatprep.subr.bf16.mxu0 0
      %3917 = vmatpush1.bf16.xpose.msra.mxu0 0
      %3918 = vmatprep.subr.bf16.mxu0 0
      %3919 = vmatpush1.bf16.xpose.msra.mxu0 0
      %3920 = vmatprep.subr.bf16.mxu0 0
      %3921 = vmatpush1.bf16.xpose.msra.mxu0 0
      %3922 = vmatprep.subr.bf16.mxu0 0
      %3923 = vmatpush1.bf16.xpose.msra.mxu0 0
      %3924 = vmatprep.subr.bf16.mxu0 0
      %3925 = vmatpush1.bf16.xpose.msra.mxu0 0
      %3926 = vmatprep.subr.bf16.mxu0 0
      %3927 = vmatpush1.bf16.xpose.msra.mxu0 0
      %3928 = vmatprep.subr.bf16.mxu0 0
      %3929 = vmatpush1.bf16.xpose.msra.mxu0 0
      %3930 = vmatprep.subr.bf16.mxu0 0
      %3931 = vmatpush1.bf16.xpose.msra.mxu0 0
      %3932 = vmatprep.subr.bf16.mxu0 0
      %3933 = vmatpush1.bf16.xpose.msra.mxu0 0
      %3934 = vmatprep.subr.bf16.mxu0 0
      %3935 = vmatpush1.bf16.xpose.msra.mxu0 0
      %3936 = vmatprep.subr.bf16.mxu0 0
      %3937 = vmatpush1.bf16.xpose.msra.mxu0 0
      %3938 = vmatprep.subr.bf16.mxu0 0
      %3939 = vmatpush1.bf16.xpose.msra.mxu0 0
      %3940 = vmatprep.subr.bf16.mxu0 0
      %3941 = vmatpush1.bf16.xpose.msra.mxu0 0
      %3942 = vmatprep.subr.bf16.mxu0 0
      %3943 = vmatpush1.bf16.xpose.msra.mxu0 0
      %3944 = vmatprep.subr.bf16.mxu0 0
      %3945 = vmatpush1.bf16.xpose.msra.mxu0 0
      %3946 = vmatprep.mubr.bf16.mxu0 0
      %3947 = vmatmul.mubr.bf16.gmra.mrb[0].mxu0 %v3909
      %v3948 = vpop.f32.mrb[0].mxu0
      %v3949 = vadd.f32 0.0, %v3948
      %v3950 = vpop.f32.mrb[0].mxu0
      %v3951 = vpop.f32.mrb[0].mxu0
      %v3952 = vpop.f32.mrb[0].mxu0
      %3953 = vdwg.mxu0
      %3955 = vrot.lane.b32.xlu0 %v3410, 96
      %v3956 = vpop.permute.xlu0 %3955
      %v3958 = vsel %vm1830, %v3410, 0
      %v3961 = vsel %vm1830, %v3956, 0
      %3963 = vmatprep.subr.bf16.mxu0 0
      %3964 = vmatpush1.bf16.xpose.msra.mxu0 %v3961
      %3965 = vmatprep.subr.bf16.mxu0 0
      %3966 = vmatpush1.bf16.xpose.msra.mxu0 0
      %3967 = vmatprep.subr.bf16.mxu0 0
      %3968 = vmatpush1.bf16.xpose.msra.mxu0 0
      %3969 = vmatprep.subr.bf16.mxu0 0
      %3970 = vmatpush1.bf16.xpose.msra.mxu0 0
      %3971 = vmatprep.subr.bf16.mxu0 0
      %3972 = vmatpush1.bf16.xpose.msra.mxu0 0
      %3973 = vmatprep.subr.bf16.mxu0 0
      %3974 = vmatpush1.bf16.xpose.msra.mxu0 0
      %3975 = vmatprep.subr.bf16.mxu0 0
      %3976 = vmatpush1.bf16.xpose.msra.mxu0 0
      %3977 = vmatprep.subr.bf16.mxu0 0
      %3978 = vmatpush1.bf16.xpose.msra.mxu0 0
      %3979 = vmatprep.subr.bf16.mxu0 0
      %3980 = vmatpush1.bf16.xpose.msra.mxu0 0
      %3981 = vmatprep.subr.bf16.mxu0 0
      %3982 = vmatpush1.bf16.xpose.msra.mxu0 0
      %3983 = vmatprep.subr.bf16.mxu0 0
      %3984 = vmatpush1.bf16.xpose.msra.mxu0 0
      %3985 = vmatprep.subr.bf16.mxu0 0
      %3986 = vmatpush1.bf16.xpose.msra.mxu0 0
      %3987 = vmatprep.subr.bf16.mxu0 0
      %3988 = vmatpush1.bf16.xpose.msra.mxu0 0
      %3989 = vmatprep.subr.bf16.mxu0 0
      %3990 = vmatpush1.bf16.xpose.msra.mxu0 0
      %3991 = vmatprep.subr.bf16.mxu0 0
      %3992 = vmatpush1.bf16.xpose.msra.mxu0 0
      %3993 = vmatprep.subr.bf16.mxu0 0
      %3994 = vmatpush1.bf16.xpose.msra.mxu0 0
      %3995 = vmatprep.mubr.bf16.mxu0 0
      %3996 = vmatmul.mubr.bf16.gmra.mrb[0].mxu0 %v3958
      %v3997 = vpop.f32.mrb[0].mxu0
      %v3998 = vadd.f32 0.0, %v3997
      %v3999 = vpop.f32.mrb[0].mxu0
      %v4000 = vpop.f32.mrb[0].mxu0
      %v4001 = vpop.f32.mrb[0].mxu0
      %4002 = vdwg.mxu0
      %4004 = vrot.lane.b32.xlu0 %v3411, 96
      %v4005 = vpop.permute.xlu0 %4004
      %v4007 = vsel %vm1830, %v3411, 0
      %v4010 = vsel %vm1830, %v4005, 0
      %4012 = vmatprep.subr.bf16.mxu0 0
      %4013 = vmatpush1.bf16.xpose.msra.mxu0 %v4010
      %4014 = vmatprep.subr.bf16.mxu0 0
      %4015 = vmatpush1.bf16.xpose.msra.mxu0 0
      %4016 = vmatprep.subr.bf16.mxu0 0
      %4017 = vmatpush1.bf16.xpose.msra.mxu0 0
      %4018 = vmatprep.subr.bf16.mxu0 0
      %4019 = vmatpush1.bf16.xpose.msra.mxu0 0
      %4020 = vmatprep.subr.bf16.mxu0 0
      %4021 = vmatpush1.bf16.xpose.msra.mxu0 0
      %4022 = vmatprep.subr.bf16.mxu0 0
      %4023 = vmatpush1.bf16.xpose.msra.mxu0 0
      %4024 = vmatprep.subr.bf16.mxu0 0
      %4025 = vmatpush1.bf16.xpose.msra.mxu0 0
      %4026 = vmatprep.subr.bf16.mxu0 0
      %4027 = vmatpush1.bf16.xpose.msra.mxu0 0
      %4028 = vmatprep.subr.bf16.mxu0 0
      %4029 = vmatpush1.bf16.xpose.msra.mxu0 0
      %4030 = vmatprep.subr.bf16.mxu0 0
      %4031 = vmatpush1.bf16.xpose.msra.mxu0 0
      %4032 = vmatprep.subr.bf16.mxu0 0
      %4033 = vmatpush1.bf16.xpose.msra.mxu0 0
      %4034 = vmatprep.subr.bf16.mxu0 0
      %4035 = vmatpush1.bf16.xpose.msra.mxu0 0
      %4036 = vmatprep.subr.bf16.mxu0 0
      %4037 = vmatpush1.bf16.xpose.msra.mxu0 0
      %4038 = vmatprep.subr.bf16.mxu0 0
      %4039 = vmatpush1.bf16.xpose.msra.mxu0 0
      %4040 = vmatprep.subr.bf16.mxu0 0
      %4041 = vmatpush1.bf16.xpose.msra.mxu0 0
      %4042 = vmatprep.subr.bf16.mxu0 0
      %4043 = vmatpush1.bf16.xpose.msra.mxu0 0
      %4044 = vmatprep.mubr.bf16.mxu0 0
      %4045 = vmatmul.mubr.bf16.gmra.mrb[0].mxu0 %v4007
      %v4046 = vpop.f32.mrb[0].mxu0
      %v4047 = vadd.f32 0.0, %v4046
      %v4048 = vpop.f32.mrb[0].mxu0
      %v4049 = vpop.f32.mrb[0].mxu0
      %v4050 = vpop.f32.mrb[0].mxu0
      %4051 = vdwg.mxu0
      %4053 = vrot.lane.b32.xlu0 %v3412, 96
      %v4054 = vpop.permute.xlu0 %4053
      %v4056 = vsel %vm1830, %v3412, 0
      %v4059 = vsel %vm1830, %v4054, 0
      %4061 = vmatprep.subr.bf16.mxu0 0
      %4062 = vmatpush1.bf16.xpose.msra.mxu0 %v4059
      %4063 = vmatprep.subr.bf16.mxu0 0
      %4064 = vmatpush1.bf16.xpose.msra.mxu0 0
      %4065 = vmatprep.subr.bf16.mxu0 0
      %4066 = vmatpush1.bf16.xpose.msra.mxu0 0
      %4067 = vmatprep.subr.bf16.mxu0 0
      %4068 = vmatpush1.bf16.xpose.msra.mxu0 0
      %4069 = vmatprep.subr.bf16.mxu0 0
      %4070 = vmatpush1.bf16.xpose.msra.mxu0 0
      %4071 = vmatprep.subr.bf16.mxu0 0
      %4072 = vmatpush1.bf16.xpose.msra.mxu0 0
      %4073 = vmatprep.subr.bf16.mxu0 0
      %4074 = vmatpush1.bf16.xpose.msra.mxu0 0
      %4075 = vmatprep.subr.bf16.mxu0 0
      %4076 = vmatpush1.bf16.xpose.msra.mxu0 0
      %4077 = vmatprep.subr.bf16.mxu0 0
      %4078 = vmatpush1.bf16.xpose.msra.mxu0 0
      %4079 = vmatprep.subr.bf16.mxu0 0
      %4080 = vmatpush1.bf16.xpose.msra.mxu0 0
      %4081 = vmatprep.subr.bf16.mxu0 0
      %4082 = vmatpush1.bf16.xpose.msra.mxu0 0
      %4083 = vmatprep.subr.bf16.mxu0 0
      %4084 = vmatpush1.bf16.xpose.msra.mxu0 0
      %4085 = vmatprep.subr.bf16.mxu0 0
      %4086 = vmatpush1.bf16.xpose.msra.mxu0 0
      %4087 = vmatprep.subr.bf16.mxu0 0
      %4088 = vmatpush1.bf16.xpose.msra.mxu0 0
      %4089 = vmatprep.subr.bf16.mxu0 0
      %4090 = vmatpush1.bf16.xpose.msra.mxu0 0
      %4091 = vmatprep.subr.bf16.mxu0 0
      %4092 = vmatpush1.bf16.xpose.msra.mxu0 0
      %4093 = vmatprep.mubr.bf16.mxu0 0
      %4094 = vmatmul.mubr.bf16.gmra.mrb[0].mxu0 %v4056
      %v4095 = vpop.f32.mrb[0].mxu0
      %v4096 = vadd.f32 0.0, %v4095
      %v4097 = vpop.f32.mrb[0].mxu0
      %v4098 = vpop.f32.mrb[0].mxu0
      %v4099 = vpop.f32.mrb[0].mxu0
      %4100 = vdwg.mxu0
      %4102 = vrot.lane.b32.xlu0 %v3413, 96
      %v4103 = vpop.permute.xlu0 %4102
      %v4105 = vsel %vm1830, %v3413, 0
      %v4108 = vsel %vm1830, %v4103, 0
      %4110 = vmatprep.subr.bf16.mxu0 0
      %4111 = vmatpush1.bf16.xpose.msra.mxu0 %v4108
      %4112 = vmatprep.subr.bf16.mxu0 0
      %4113 = vmatpush1.bf16.xpose.msra.mxu0 0
      %4114 = vmatprep.subr.bf16.mxu0 0
      %4115 = vmatpush1.bf16.xpose.msra.mxu0 0
      %4116 = vmatprep.subr.bf16.mxu0 0
      %4117 = vmatpush1.bf16.xpose.msra.mxu0 0
      %4118 = vmatprep.subr.bf16.mxu0 0
      %4119 = vmatpush1.bf16.xpose.msra.mxu0 0
      %4120 = vmatprep.subr.bf16.mxu0 0
      %4121 = vmatpush1.bf16.xpose.msra.mxu0 0
      %4122 = vmatprep.subr.bf16.mxu0 0
      %4123 = vmatpush1.bf16.xpose.msra.mxu0 0
      %4124 = vmatprep.subr.bf16.mxu0 0
      %4125 = vmatpush1.bf16.xpose.msra.mxu0 0
      %4126 = vmatprep.subr.bf16.mxu0 0
      %4127 = vmatpush1.bf16.xpose.msra.mxu0 0
      %4128 = vmatprep.subr.bf16.mxu0 0
      %4129 = vmatpush1.bf16.xpose.msra.mxu0 0
      %4130 = vmatprep.subr.bf16.mxu0 0
      %4131 = vmatpush1.bf16.xpose.msra.mxu0 0
      %4132 = vmatprep.subr.bf16.mxu0 0
      %4133 = vmatpush1.bf16.xpose.msra.mxu0 0
      %4134 = vmatprep.subr.bf16.mxu0 0
      %4135 = vmatpush1.bf16.xpose.msra.mxu0 0
      %4136 = vmatprep.subr.bf16.mxu0 0
      %4137 = vmatpush1.bf16.xpose.msra.mxu0 0
      %4138 = vmatprep.subr.bf16.mxu0 0
      %4139 = vmatpush1.bf16.xpose.msra.mxu0 0
      %4140 = vmatprep.subr.bf16.mxu0 0
      %4141 = vmatpush1.bf16.xpose.msra.mxu0 0
      %4142 = vmatprep.mubr.bf16.mxu0 0
      %4143 = vmatmul.mubr.bf16.gmra.mrb[0].mxu0 %v4105
      %v4144 = vpop.f32.mrb[0].mxu0
      %v4145 = vadd.f32 0.0, %v4144
      %v4146 = vpop.f32.mrb[0].mxu0
      %v4147 = vpop.f32.mrb[0].mxu0
      %v4148 = vpop.f32.mrb[0].mxu0
      %4149 = vdwg.mxu0
      %4151 = vrot.lane.b32.xlu0 %v3414, 96
      %v4152 = vpop.permute.xlu0 %4151
      %v4154 = vsel %vm1830, %v3414, 0
      %v4157 = vsel %vm1830, %v4152, 0
      %4159 = vmatprep.subr.bf16.mxu0 0
      %4160 = vmatpush1.bf16.xpose.msra.mxu0 %v4157
      %4161 = vmatprep.subr.bf16.mxu0 0
      %4162 = vmatpush1.bf16.xpose.msra.mxu0 0
      %4163 = vmatprep.subr.bf16.mxu0 0
      %4164 = vmatpush1.bf16.xpose.msra.mxu0 0
      %4165 = vmatprep.subr.bf16.mxu0 0
      %4166 = vmatpush1.bf16.xpose.msra.mxu0 0
      %4167 = vmatprep.subr.bf16.mxu0 0
      %4168 = vmatpush1.bf16.xpose.msra.mxu0 0
      %4169 = vmatprep.subr.bf16.mxu0 0
      %4170 = vmatpush1.bf16.xpose.msra.mxu0 0
      %4171 = vmatprep.subr.bf16.mxu0 0
      %4172 = vmatpush1.bf16.xpose.msra.mxu0 0
      %4173 = vmatprep.subr.bf16.mxu0 0
      %4174 = vmatpush1.bf16.xpose.msra.mxu0 0
      %4175 = vmatprep.subr.bf16.mxu0 0
      %4176 = vmatpush1.bf16.xpose.msra.mxu0 0
      %4177 = vmatprep.subr.bf16.mxu0 0
      %4178 = vmatpush1.bf16.xpose.msra.mxu0 0
      %4179 = vmatprep.subr.bf16.mxu0 0
      %4180 = vmatpush1.bf16.xpose.msra.mxu0 0
      %4181 = vmatprep.subr.bf16.mxu0 0
      %4182 = vmatpush1.bf16.xpose.msra.mxu0 0
      %4183 = vmatprep.subr.bf16.mxu0 0
      %4184 = vmatpush1.bf16.xpose.msra.mxu0 0
      %4185 = vmatprep.subr.bf16.mxu0 0
      %4186 = vmatpush1.bf16.xpose.msra.mxu0 0
      %4187 = vmatprep.subr.bf16.mxu0 0
      %4188 = vmatpush1.bf16.xpose.msra.mxu0 0
      %4189 = vmatprep.subr.bf16.mxu0 0
      %4190 = vmatpush1.bf16.xpose.msra.mxu0 0
      %4191 = vmatprep.mubr.bf16.mxu0 0
      %4192 = vmatmul.mubr.bf16.gmra.mrb[0].mxu0 %v4154
      %v4193 = vpop.f32.mrb[0].mxu0
      %v4194 = vadd.f32 0.0, %v4193
      %v4195 = vpop.f32.mrb[0].mxu0
      %v4196 = vpop.f32.mrb[0].mxu0
      %v4197 = vpop.f32.mrb[0].mxu0
      %4198 = vdwg.mxu0
      %4200 = vrot.lane.b32.xlu0 %v3415, 96
      %v4201 = vpop.permute.xlu0 %4200
      %v4203 = vsel %vm1830, %v3415, 0
      %v4206 = vsel %vm1830, %v4201, 0
      %4208 = vmatprep.subr.bf16.mxu0 0
      %4209 = vmatpush1.bf16.xpose.msra.mxu0 %v4206
      %4210 = vmatprep.subr.bf16.mxu0 0
      %4211 = vmatpush1.bf16.xpose.msra.mxu0 0
      %4212 = vmatprep.subr.bf16.mxu0 0
      %4213 = vmatpush1.bf16.xpose.msra.mxu0 0
      %4214 = vmatprep.subr.bf16.mxu0 0
      %4215 = vmatpush1.bf16.xpose.msra.mxu0 0
      %4216 = vmatprep.subr.bf16.mxu0 0
      %4217 = vmatpush1.bf16.xpose.msra.mxu0 0
      %4218 = vmatprep.subr.bf16.mxu0 0
      %4219 = vmatpush1.bf16.xpose.msra.mxu0 0
      %4220 = vmatprep.subr.bf16.mxu0 0
      %4221 = vmatpush1.bf16.xpose.msra.mxu0 0
      %4222 = vmatprep.subr.bf16.mxu0 0
      %4223 = vmatpush1.bf16.xpose.msra.mxu0 0
      %4224 = vmatprep.subr.bf16.mxu0 0
      %4225 = vmatpush1.bf16.xpose.msra.mxu0 0
      %4226 = vmatprep.subr.bf16.mxu0 0
      %4227 = vmatpush1.bf16.xpose.msra.mxu0 0
      %4228 = vmatprep.subr.bf16.mxu0 0
      %4229 = vmatpush1.bf16.xpose.msra.mxu0 0
      %4230 = vmatprep.subr.bf16.mxu0 0
      %4231 = vmatpush1.bf16.xpose.msra.mxu0 0
      %4232 = vmatprep.subr.bf16.mxu0 0
      %4233 = vmatpush1.bf16.xpose.msra.mxu0 0
      %4234 = vmatprep.subr.bf16.mxu0 0
      %4235 = vmatpush1.bf16.xpose.msra.mxu0 0
      %4236 = vmatprep.subr.bf16.mxu0 0
      %4237 = vmatpush1.bf16.xpose.msra.mxu0 0
      %4238 = vmatprep.subr.bf16.mxu0 0
      %4239 = vmatpush1.bf16.xpose.msra.mxu0 0
      %4240 = vmatprep.mubr.bf16.mxu0 0
      %4241 = vmatmul.mubr.bf16.gmra.mrb[0].mxu0 %v4203
      %v4242 = vpop.f32.mrb[0].mxu0
      %v4243 = vadd.f32 0.0, %v4242
      %v4244 = vpop.f32.mrb[0].mxu0
      %v4245 = vpop.f32.mrb[0].mxu0
      %v4246 = vpop.f32.mrb[0].mxu0
      %4247 = vdwg.mxu0
      %4249 = vrot.lane.b32.xlu0 %v3416, 96
      %v4250 = vpop.permute.xlu0 %4249
      %v4252 = vsel %vm1830, %v3416, 0
      %v4255 = vsel %vm1830, %v4250, 0
      %4257 = vmatprep.subr.bf16.mxu0 0
      %4258 = vmatpush1.bf16.xpose.msra.mxu0 %v4255
      %4259 = vmatprep.subr.bf16.mxu0 0
      %4260 = vmatpush1.bf16.xpose.msra.mxu0 0
      %4261 = vmatprep.subr.bf16.mxu0 0
      %4262 = vmatpush1.bf16.xpose.msra.mxu0 0
      %4263 = vmatprep.subr.bf16.mxu0 0
      %4264 = vmatpush1.bf16.xpose.msra.mxu0 0
      %4265 = vmatprep.subr.bf16.mxu0 0
      %4266 = vmatpush1.bf16.xpose.msra.mxu0 0
      %4267 = vmatprep.subr.bf16.mxu0 0
      %4268 = vmatpush1.bf16.xpose.msra.mxu0 0
      %4269 = vmatprep.subr.bf16.mxu0 0
      %4270 = vmatpush1.bf16.xpose.msra.mxu0 0
      %4271 = vmatprep.subr.bf16.mxu0 0
      %4272 = vmatpush1.bf16.xpose.msra.mxu0 0
      %4273 = vmatprep.subr.bf16.mxu0 0
      %4274 = vmatpush1.bf16.xpose.msra.mxu0 0
      %4275 = vmatprep.subr.bf16.mxu0 0
      %4276 = vmatpush1.bf16.xpose.msra.mxu0 0
      %4277 = vmatprep.subr.bf16.mxu0 0
      %4278 = vmatpush1.bf16.xpose.msra.mxu0 0
      %4279 = vmatprep.subr.bf16.mxu0 0
      %4280 = vmatpush1.bf16.xpose.msra.mxu0 0
      %4281 = vmatprep.subr.bf16.mxu0 0
      %4282 = vmatpush1.bf16.xpose.msra.mxu0 0
      %4283 = vmatprep.subr.bf16.mxu0 0
      %4284 = vmatpush1.bf16.xpose.msra.mxu0 0
      %4285 = vmatprep.subr.bf16.mxu0 0
      %4286 = vmatpush1.bf16.xpose.msra.mxu0 0
      %4287 = vmatprep.subr.bf16.mxu0 0
      %4288 = vmatpush1.bf16.xpose.msra.mxu0 0
      %4289 = vmatprep.mubr.bf16.mxu0 0
      %4290 = vmatmul.mubr.bf16.gmra.mrb[0].mxu0 %v4252
      %v4291 = vpop.f32.mrb[0].mxu0
      %v4292 = vadd.f32 0.0, %v4291
      %v4293 = vpop.f32.mrb[0].mxu0
      %v4294 = vpop.f32.mrb[0].mxu0
      %v4295 = vpop.f32.mrb[0].mxu0
      %4296 = vdwg.mxu0
      %4298 = vrot.lane.b32.xlu0 %v3417, 96
      %v4299 = vpop.permute.xlu0 %4298
      %v4301 = vsel %vm1830, %v3417, 0
      %v4304 = vsel %vm1830, %v4299, 0
      %4306 = vmatprep.subr.bf16.mxu0 0
      %4307 = vmatpush1.bf16.xpose.msra.mxu0 %v4304
      %4308 = vmatprep.subr.bf16.mxu0 0
      %4309 = vmatpush1.bf16.xpose.msra.mxu0 0
      %4310 = vmatprep.subr.bf16.mxu0 0
      %4311 = vmatpush1.bf16.xpose.msra.mxu0 0
      %4312 = vmatprep.subr.bf16.mxu0 0
      %4313 = vmatpush1.bf16.xpose.msra.mxu0 0
      %4314 = vmatprep.subr.bf16.mxu0 0
      %4315 = vmatpush1.bf16.xpose.msra.mxu0 0
      %4316 = vmatprep.subr.bf16.mxu0 0
      %4317 = vmatpush1.bf16.xpose.msra.mxu0 0
      %4318 = vmatprep.subr.bf16.mxu0 0
      %4319 = vmatpush1.bf16.xpose.msra.mxu0 0
      %4320 = vmatprep.subr.bf16.mxu0 0
      %4321 = vmatpush1.bf16.xpose.msra.mxu0 0
      %4322 = vmatprep.subr.bf16.mxu0 0
      %4323 = vmatpush1.bf16.xpose.msra.mxu0 0
      %4324 = vmatprep.subr.bf16.mxu0 0
      %4325 = vmatpush1.bf16.xpose.msra.mxu0 0
      %4326 = vmatprep.subr.bf16.mxu0 0
      %4327 = vmatpush1.bf16.xpose.msra.mxu0 0
      %4328 = vmatprep.subr.bf16.mxu0 0
      %4329 = vmatpush1.bf16.xpose.msra.mxu0 0
      %4330 = vmatprep.subr.bf16.mxu0 0
      %4331 = vmatpush1.bf16.xpose.msra.mxu0 0
      %4332 = vmatprep.subr.bf16.mxu0 0
      %4333 = vmatpush1.bf16.xpose.msra.mxu0 0
      %4334 = vmatprep.subr.bf16.mxu0 0
      %4335 = vmatpush1.bf16.xpose.msra.mxu0 0
      %4336 = vmatprep.subr.bf16.mxu0 0
      %4337 = vmatpush1.bf16.xpose.msra.mxu0 0
      %4338 = vmatprep.mubr.bf16.mxu0 0
      %4339 = vmatmul.mubr.bf16.gmra.mrb[0].mxu0 %v4301
      %v4340 = vpop.f32.mrb[0].mxu0
      %v4341 = vadd.f32 0.0, %v4340
      %v4342 = vpop.f32.mrb[0].mxu0
      %v4343 = vpop.f32.mrb[0].mxu0
      %v4344 = vpop.f32.mrb[0].mxu0
      %4345 = vdwg.mxu0
      %4347 = vrot.lane.b32.xlu0 %v3418, 96
      %v4348 = vpop.permute.xlu0 %4347
      %v4350 = vsel %vm1830, %v3418, 0
      %v4353 = vsel %vm1830, %v4348, 0
      %4355 = vmatprep.subr.bf16.mxu0 0
      %4356 = vmatpush1.bf16.xpose.msra.mxu0 %v4353
      %4357 = vmatprep.subr.bf16.mxu0 0
      %4358 = vmatpush1.bf16.xpose.msra.mxu0 0
      %4359 = vmatprep.subr.bf16.mxu0 0
      %4360 = vmatpush1.bf16.xpose.msra.mxu0 0
      %4361 = vmatprep.subr.bf16.mxu0 0
      %4362 = vmatpush1.bf16.xpose.msra.mxu0 0
      %4363 = vmatprep.subr.bf16.mxu0 0
      %4364 = vmatpush1.bf16.xpose.msra.mxu0 0
      %4365 = vmatprep.subr.bf16.mxu0 0
      %4366 = vmatpush1.bf16.xpose.msra.mxu0 0
      %4367 = vmatprep.subr.bf16.mxu0 0
      %4368 = vmatpush1.bf16.xpose.msra.mxu0 0
      %4369 = vmatprep.subr.bf16.mxu0 0
      %4370 = vmatpush1.bf16.xpose.msra.mxu0 0
      %4371 = vmatprep.subr.bf16.mxu0 0
      %4372 = vmatpush1.bf16.xpose.msra.mxu0 0
      %4373 = vmatprep.subr.bf16.mxu0 0
      %4374 = vmatpush1.bf16.xpose.msra.mxu0 0
      %4375 = vmatprep.subr.bf16.mxu0 0
      %4376 = vmatpush1.bf16.xpose.msra.mxu0 0
      %4377 = vmatprep.subr.bf16.mxu0 0
      %4378 = vmatpush1.bf16.xpose.msra.mxu0 0
      %4379 = vmatprep.subr.bf16.mxu0 0
      %4380 = vmatpush1.bf16.xpose.msra.mxu0 0
      %4381 = vmatprep.subr.bf16.mxu0 0
      %4382 = vmatpush1.bf16.xpose.msra.mxu0 0
      %4383 = vmatprep.subr.bf16.mxu0 0
      %4384 = vmatpush1.bf16.xpose.msra.mxu0 0
      %4385 = vmatprep.subr.bf16.mxu0 0
      %4386 = vmatpush1.bf16.xpose.msra.mxu0 0
      %4387 = vmatprep.mubr.bf16.mxu0 0
      %4388 = vmatmul.mubr.bf16.gmra.mrb[0].mxu0 %v4350
      %v4389 = vpop.f32.mrb[0].mxu0
      %v4390 = vadd.f32 0.0, %v4389
      %v4391 = vpop.f32.mrb[0].mxu0
      %v4392 = vpop.f32.mrb[0].mxu0
      %v4393 = vpop.f32.mrb[0].mxu0
      %4394 = vdwg.mxu0
      %4396 = vrot.lane.b32.xlu0 %v3419, 96
      %v4397 = vpop.permute.xlu0 %4396
      %v4399 = vsel %vm1830, %v3419, 0
      %v4402 = vsel %vm1830, %v4397, 0
      %4404 = vmatprep.subr.bf16.mxu0 0
      %4405 = vmatpush1.bf16.xpose.msra.mxu0 %v4402
      %4406 = vmatprep.subr.bf16.mxu0 0
      %4407 = vmatpush1.bf16.xpose.msra.mxu0 0
      %4408 = vmatprep.subr.bf16.mxu0 0
      %4409 = vmatpush1.bf16.xpose.msra.mxu0 0
      %4410 = vmatprep.subr.bf16.mxu0 0
      %4411 = vmatpush1.bf16.xpose.msra.mxu0 0
      %4412 = vmatprep.subr.bf16.mxu0 0
      %4413 = vmatpush1.bf16.xpose.msra.mxu0 0
      %4414 = vmatprep.subr.bf16.mxu0 0
      %4415 = vmatpush1.bf16.xpose.msra.mxu0 0
      %4416 = vmatprep.subr.bf16.mxu0 0
      %4417 = vmatpush1.bf16.xpose.msra.mxu0 0
      %4418 = vmatprep.subr.bf16.mxu0 0
      %4419 = vmatpush1.bf16.xpose.msra.mxu0 0
      %4420 = vmatprep.subr.bf16.mxu0 0
      %4421 = vmatpush1.bf16.xpose.msra.mxu0 0
      %4422 = vmatprep.subr.bf16.mxu0 0
      %4423 = vmatpush1.bf16.xpose.msra.mxu0 0
      %4424 = vmatprep.subr.bf16.mxu0 0
      %4425 = vmatpush1.bf16.xpose.msra.mxu0 0
      %4426 = vmatprep.subr.bf16.mxu0 0
      %4427 = vmatpush1.bf16.xpose.msra.mxu0 0
      %4428 = vmatprep.subr.bf16.mxu0 0
      %4429 = vmatpush1.bf16.xpose.msra.mxu0 0
      %4430 = vmatprep.subr.bf16.mxu0 0
      %4431 = vmatpush1.bf16.xpose.msra.mxu0 0
      %4432 = vmatprep.subr.bf16.mxu0 0
      %4433 = vmatpush1.bf16.xpose.msra.mxu0 0
      %4434 = vmatprep.subr.bf16.mxu0 0
      %4435 = vmatpush1.bf16.xpose.msra.mxu0 0
      %4436 = vmatprep.mubr.bf16.mxu0 0
      %4437 = vmatmul.mubr.bf16.gmra.mrb[0].mxu0 %v4399
      %v4438 = vpop.f32.mrb[0].mxu0
      %v4439 = vadd.f32 0.0, %v4438
      %v4440 = vpop.f32.mrb[0].mxu0
      %v4441 = vpop.f32.mrb[0].mxu0
      %v4442 = vpop.f32.mrb[0].mxu0
      %4443 = vdwg.mxu0
      %4445 = vrot.lane.b32.xlu0 %v3420, 96
      %v4446 = vpop.permute.xlu0 %4445
      %v4448 = vsel %vm1830, %v3420, 0
      %v4451 = vsel %vm1830, %v4446, 0
      %4453 = vmatprep.subr.bf16.mxu0 0
      %4454 = vmatpush1.bf16.xpose.msra.mxu0 %v4451
      %4455 = vmatprep.subr.bf16.mxu0 0
      %4456 = vmatpush1.bf16.xpose.msra.mxu0 0
      %4457 = vmatprep.subr.bf16.mxu0 0
      %4458 = vmatpush1.bf16.xpose.msra.mxu0 0
      %4459 = vmatprep.subr.bf16.mxu0 0
      %4460 = vmatpush1.bf16.xpose.msra.mxu0 0
      %4461 = vmatprep.subr.bf16.mxu0 0
      %4462 = vmatpush1.bf16.xpose.msra.mxu0 0
      %4463 = vmatprep.subr.bf16.mxu0 0
      %4464 = vmatpush1.bf16.xpose.msra.mxu0 0
      %4465 = vmatprep.subr.bf16.mxu0 0
      %4466 = vmatpush1.bf16.xpose.msra.mxu0 0
      %4467 = vmatprep.subr.bf16.mxu0 0
      %4468 = vmatpush1.bf16.xpose.msra.mxu0 0
      %4469 = vmatprep.subr.bf16.mxu0 0
      %4470 = vmatpush1.bf16.xpose.msra.mxu0 0
      %4471 = vmatprep.subr.bf16.mxu0 0
      %4472 = vmatpush1.bf16.xpose.msra.mxu0 0
      %4473 = vmatprep.subr.bf16.mxu0 0
      %4474 = vmatpush1.bf16.xpose.msra.mxu0 0
      %4475 = vmatprep.subr.bf16.mxu0 0
      %4476 = vmatpush1.bf16.xpose.msra.mxu0 0
      %4477 = vmatprep.subr.bf16.mxu0 0
      %4478 = vmatpush1.bf16.xpose.msra.mxu0 0
      %4479 = vmatprep.subr.bf16.mxu0 0
      %4480 = vmatpush1.bf16.xpose.msra.mxu0 0
      %4481 = vmatprep.subr.bf16.mxu0 0
      %4482 = vmatpush1.bf16.xpose.msra.mxu0 0
      %4483 = vmatprep.subr.bf16.mxu0 0
      %4484 = vmatpush1.bf16.xpose.msra.mxu0 0
      %4485 = vmatprep.mubr.bf16.mxu0 0
      %4486 = vmatmul.mubr.bf16.gmra.mrb[0].mxu0 %v4448
      %v4487 = vpop.f32.mrb[0].mxu0
      %v4488 = vadd.f32 0.0, %v4487
      %v4489 = vpop.f32.mrb[0].mxu0
      %v4490 = vpop.f32.mrb[0].mxu0
      %v4491 = vpop.f32.mrb[0].mxu0
      %4492 = vdwg.mxu0
      %4494 = vrot.lane.b32.xlu0 %v3421, 96
      %v4495 = vpop.permute.xlu0 %4494
      %v4497 = vsel %vm1830, %v3421, 0
      %v4500 = vsel %vm1830, %v4495, 0
      %4502 = vmatprep.subr.bf16.mxu0 0
      %4503 = vmatpush1.bf16.xpose.msra.mxu0 %v4500
      %4504 = vmatprep.subr.bf16.mxu0 0
      %4505 = vmatpush1.bf16.xpose.msra.mxu0 0
      %4506 = vmatprep.subr.bf16.mxu0 0
      %4507 = vmatpush1.bf16.xpose.msra.mxu0 0
      %4508 = vmatprep.subr.bf16.mxu0 0
      %4509 = vmatpush1.bf16.xpose.msra.mxu0 0
      %4510 = vmatprep.subr.bf16.mxu0 0
      %4511 = vmatpush1.bf16.xpose.msra.mxu0 0
      %4512 = vmatprep.subr.bf16.mxu0 0
      %4513 = vmatpush1.bf16.xpose.msra.mxu0 0
      %4514 = vmatprep.subr.bf16.mxu0 0
      %4515 = vmatpush1.bf16.xpose.msra.mxu0 0
      %4516 = vmatprep.subr.bf16.mxu0 0
      %4517 = vmatpush1.bf16.xpose.msra.mxu0 0
      %4518 = vmatprep.subr.bf16.mxu0 0
      %4519 = vmatpush1.bf16.xpose.msra.mxu0 0
      %4520 = vmatprep.subr.bf16.mxu0 0
      %4521 = vmatpush1.bf16.xpose.msra.mxu0 0
      %4522 = vmatprep.subr.bf16.mxu0 0
      %4523 = vmatpush1.bf16.xpose.msra.mxu0 0
      %4524 = vmatprep.subr.bf16.mxu0 0
      %4525 = vmatpush1.bf16.xpose.msra.mxu0 0
      %4526 = vmatprep.subr.bf16.mxu0 0
      %4527 = vmatpush1.bf16.xpose.msra.mxu0 0
      %4528 = vmatprep.subr.bf16.mxu0 0
      %4529 = vmatpush1.bf16.xpose.msra.mxu0 0
      %4530 = vmatprep.subr.bf16.mxu0 0
      %4531 = vmatpush1.bf16.xpose.msra.mxu0 0
      %4532 = vmatprep.subr.bf16.mxu0 0
      %4533 = vmatpush1.bf16.xpose.msra.mxu0 0
      %4534 = vmatprep.mubr.bf16.mxu0 0
      %4535 = vmatmul.mubr.bf16.gmra.mrb[0].mxu0 %v4497
      %v4536 = vpop.f32.mrb[0].mxu0
      %v4537 = vadd.f32 0.0, %v4536
      %v4538 = vpop.f32.mrb[0].mxu0
      %v4539 = vpop.f32.mrb[0].mxu0
      %v4540 = vpop.f32.mrb[0].mxu0
      %4541 = vdwg.mxu0
      %4543 = vrot.lane.b32.xlu0 %v3422, 96
      %v4544 = vpop.permute.xlu0 %4543
      %v4546 = vsel %vm1830, %v3422, 0
      %v4549 = vsel %vm1830, %v4544, 0
      %4551 = vmatprep.subr.bf16.mxu0 0
      %4552 = vmatpush1.bf16.xpose.msra.mxu0 %v4549
      %4553 = vmatprep.subr.bf16.mxu0 0
      %4554 = vmatpush1.bf16.xpose.msra.mxu0 0
      %4555 = vmatprep.subr.bf16.mxu0 0
      %4556 = vmatpush1.bf16.xpose.msra.mxu0 0
      %4557 = vmatprep.subr.bf16.mxu0 0
      %4558 = vmatpush1.bf16.xpose.msra.mxu0 0
      %4559 = vmatprep.subr.bf16.mxu0 0
      %4560 = vmatpush1.bf16.xpose.msra.mxu0 0
      %4561 = vmatprep.subr.bf16.mxu0 0
      %4562 = vmatpush1.bf16.xpose.msra.mxu0 0
      %4563 = vmatprep.subr.bf16.mxu0 0
      %4564 = vmatpush1.bf16.xpose.msra.mxu0 0
      %4565 = vmatprep.subr.bf16.mxu0 0
      %4566 = vmatpush1.bf16.xpose.msra.mxu0 0
      %4567 = vmatprep.subr.bf16.mxu0 0
      %4568 = vmatpush1.bf16.xpose.msra.mxu0 0
      %4569 = vmatprep.subr.bf16.mxu0 0
      %4570 = vmatpush1.bf16.xpose.msra.mxu0 0
      %4571 = vmatprep.subr.bf16.mxu0 0
      %4572 = vmatpush1.bf16.xpose.msra.mxu0 0
      %4573 = vmatprep.subr.bf16.mxu0 0
      %4574 = vmatpush1.bf16.xpose.msra.mxu0 0
      %4575 = vmatprep.subr.bf16.mxu0 0
      %4576 = vmatpush1.bf16.xpose.msra.mxu0 0
      %4577 = vmatprep.subr.bf16.mxu0 0
      %4578 = vmatpush1.bf16.xpose.msra.mxu0 0
      %4579 = vmatprep.subr.bf16.mxu0 0
      %4580 = vmatpush1.bf16.xpose.msra.mxu0 0
      %4581 = vmatprep.subr.bf16.mxu0 0
      %4582 = vmatpush1.bf16.xpose.msra.mxu0 0
      %4583 = vmatprep.mubr.bf16.mxu0 0
      %4584 = vmatmul.mubr.bf16.gmra.mrb[0].mxu0 %v4546
      %v4585 = vpop.f32.mrb[0].mxu0
      %v4586 = vadd.f32 0.0, %v4585
      %v4587 = vpop.f32.mrb[0].mxu0
      %v4588 = vpop.f32.mrb[0].mxu0
      %v4589 = vpop.f32.mrb[0].mxu0
      %4590 = vdwg.mxu0
      %4592 = vrot.lane.b32.xlu0 %v3423, 96
      %v4593 = vpop.permute.xlu0 %4592
      %v4595 = vsel %vm1830, %v3423, 0
      %v4598 = vsel %vm1830, %v4593, 0
      %4600 = vmatprep.subr.bf16.mxu0 0
      %4601 = vmatpush1.bf16.xpose.msra.mxu0 %v4598
      %4602 = vmatprep.subr.bf16.mxu0 0
      %4603 = vmatpush1.bf16.xpose.msra.mxu0 0
      %4604 = vmatprep.subr.bf16.mxu0 0
      %4605 = vmatpush1.bf16.xpose.msra.mxu0 0
      %4606 = vmatprep.subr.bf16.mxu0 0
      %4607 = vmatpush1.bf16.xpose.msra.mxu0 0
      %4608 = vmatprep.subr.bf16.mxu0 0
      %4609 = vmatpush1.bf16.xpose.msra.mxu0 0
      %4610 = vmatprep.subr.bf16.mxu0 0
      %4611 = vmatpush1.bf16.xpose.msra.mxu0 0
      %4612 = vmatprep.subr.bf16.mxu0 0
      %4613 = vmatpush1.bf16.xpose.msra.mxu0 0
      %4614 = vmatprep.subr.bf16.mxu0 0
      %4615 = vmatpush1.bf16.xpose.msra.mxu0 0
      %4616 = vmatprep.subr.bf16.mxu0 0
      %4617 = vmatpush1.bf16.xpose.msra.mxu0 0
      %4618 = vmatprep.subr.bf16.mxu0 0
      %4619 = vmatpush1.bf16.xpose.msra.mxu0 0
      %4620 = vmatprep.subr.bf16.mxu0 0
      %4621 = vmatpush1.bf16.xpose.msra.mxu0 0
      %4622 = vmatprep.subr.bf16.mxu0 0
      %4623 = vmatpush1.bf16.xpose.msra.mxu0 0
      %4624 = vmatprep.subr.bf16.mxu0 0
      %4625 = vmatpush1.bf16.xpose.msra.mxu0 0
      %4626 = vmatprep.subr.bf16.mxu0 0
      %4627 = vmatpush1.bf16.xpose.msra.mxu0 0
      %4628 = vmatprep.subr.bf16.mxu0 0
      %4629 = vmatpush1.bf16.xpose.msra.mxu0 0
      %4630 = vmatprep.subr.bf16.mxu0 0
      %4631 = vmatpush1.bf16.xpose.msra.mxu0 0
      %4632 = vmatprep.mubr.bf16.mxu0 0
      %4633 = vmatmul.mubr.bf16.gmra.mrb[0].mxu0 %v4595
      %v4634 = vpop.f32.mrb[0].mxu0
      %v4635 = vadd.f32 0.0, %v4634
      %v4636 = vpop.f32.mrb[0].mxu0
      %v4637 = vpop.f32.mrb[0].mxu0
      %v4638 = vpop.f32.mrb[0].mxu0
      %4639 = vdwg.mxu0
      %4641 = vrot.lane.b32.xlu0 %v3424, 96
      %v4642 = vpop.permute.xlu0 %4641
      %v4644 = vsel %vm1830, %v3424, 0
      %v4647 = vsel %vm1830, %v4642, 0
      %4649 = vmatprep.subr.bf16.mxu0 0
      %4650 = vmatpush1.bf16.xpose.msra.mxu0 %v4647
      %4651 = vmatprep.subr.bf16.mxu0 0
      %4652 = vmatpush1.bf16.xpose.msra.mxu0 0
      %4653 = vmatprep.subr.bf16.mxu0 0
      %4654 = vmatpush1.bf16.xpose.msra.mxu0 0
      %4655 = vmatprep.subr.bf16.mxu0 0
      %4656 = vmatpush1.bf16.xpose.msra.mxu0 0
      %4657 = vmatprep.subr.bf16.mxu0 0
      %4658 = vmatpush1.bf16.xpose.msra.mxu0 0
      %4659 = vmatprep.subr.bf16.mxu0 0
      %4660 = vmatpush1.bf16.xpose.msra.mxu0 0
      %4661 = vmatprep.subr.bf16.mxu0 0
      %4662 = vmatpush1.bf16.xpose.msra.mxu0 0
      %4663 = vmatprep.subr.bf16.mxu0 0
      %4664 = vmatpush1.bf16.xpose.msra.mxu0 0
      %4665 = vmatprep.subr.bf16.mxu0 0
      %4666 = vmatpush1.bf16.xpose.msra.mxu0 0
      %4667 = vmatprep.subr.bf16.mxu0 0
      %4668 = vmatpush1.bf16.xpose.msra.mxu0 0
      %4669 = vmatprep.subr.bf16.mxu0 0
      %4670 = vmatpush1.bf16.xpose.msra.mxu0 0
      %4671 = vmatprep.subr.bf16.mxu0 0
      %4672 = vmatpush1.bf16.xpose.msra.mxu0 0
      %4673 = vmatprep.subr.bf16.mxu0 0
      %4674 = vmatpush1.bf16.xpose.msra.mxu0 0
      %4675 = vmatprep.subr.bf16.mxu0 0
      %4676 = vmatpush1.bf16.xpose.msra.mxu0 0
      %4677 = vmatprep.subr.bf16.mxu0 0
      %4678 = vmatpush1.bf16.xpose.msra.mxu0 0
      %4679 = vmatprep.subr.bf16.mxu0 0
      %4680 = vmatpush1.bf16.xpose.msra.mxu0 0
      %4681 = vmatprep.mubr.bf16.mxu0 0
      %4682 = vmatmul.mubr.bf16.gmra.mrb[0].mxu0 %v4644
      %v4683 = vpop.f32.mrb[0].mxu0
      %v4684 = vadd.f32 0.0, %v4683
      %v4685 = vpop.f32.mrb[0].mxu0
      %v4686 = vpop.f32.mrb[0].mxu0
      %v4687 = vpop.f32.mrb[0].mxu0
      %4688 = vdwg.mxu0
      %4690 = vrot.lane.b32.xlu0 %v3425, 96
      %v4691 = vpop.permute.xlu0 %4690
      %v4693 = vsel %vm1830, %v3425, 0
      %v4696 = vsel %vm1830, %v4691, 0
      %4698 = vmatprep.subr.bf16.mxu0 0
      %4699 = vmatpush1.bf16.xpose.msra.mxu0 %v4696
      %4700 = vmatprep.subr.bf16.mxu0 0
      %4701 = vmatpush1.bf16.xpose.msra.mxu0 0
      %4702 = vmatprep.subr.bf16.mxu0 0
      %4703 = vmatpush1.bf16.xpose.msra.mxu0 0
      %4704 = vmatprep.subr.bf16.mxu0 0
      %4705 = vmatpush1.bf16.xpose.msra.mxu0 0
      %4706 = vmatprep.subr.bf16.mxu0 0
      %4707 = vmatpush1.bf16.xpose.msra.mxu0 0
      %4708 = vmatprep.subr.bf16.mxu0 0
      %4709 = vmatpush1.bf16.xpose.msra.mxu0 0
      %4710 = vmatprep.subr.bf16.mxu0 0
      %4711 = vmatpush1.bf16.xpose.msra.mxu0 0
      %4712 = vmatprep.subr.bf16.mxu0 0
      %4713 = vmatpush1.bf16.xpose.msra.mxu0 0
      %4714 = vmatprep.subr.bf16.mxu0 0
      %4715 = vmatpush1.bf16.xpose.msra.mxu0 0
      %4716 = vmatprep.subr.bf16.mxu0 0
      %4717 = vmatpush1.bf16.xpose.msra.mxu0 0
      %4718 = vmatprep.subr.bf16.mxu0 0
      %4719 = vmatpush1.bf16.xpose.msra.mxu0 0
      %4720 = vmatprep.subr.bf16.mxu0 0
      %4721 = vmatpush1.bf16.xpose.msra.mxu0 0
      %4722 = vmatprep.subr.bf16.mxu0 0
      %4723 = vmatpush1.bf16.xpose.msra.mxu0 0
      %4724 = vmatprep.subr.bf16.mxu0 0
      %4725 = vmatpush1.bf16.xpose.msra.mxu0 0
      %4726 = vmatprep.subr.bf16.mxu0 0
      %4727 = vmatpush1.bf16.xpose.msra.mxu0 0
      %4728 = vmatprep.subr.bf16.mxu0 0
      %4729 = vmatpush1.bf16.xpose.msra.mxu0 0
      %4730 = vmatprep.mubr.bf16.mxu0 0
      %4731 = vmatmul.mubr.bf16.gmra.mrb[0].mxu0 %v4693
      %v4732 = vpop.f32.mrb[0].mxu0
      %v4733 = vadd.f32 0.0, %v4732
      %v4734 = vpop.f32.mrb[0].mxu0
      %v4735 = vpop.f32.mrb[0].mxu0
      %v4736 = vpop.f32.mrb[0].mxu0
      %4737 = vdwg.mxu0
      %4739 = vrot.lane.b32.xlu0 %v3426, 96
      %v4740 = vpop.permute.xlu0 %4739
      %v4742 = vsel %vm1830, %v3426, 0
      %v4745 = vsel %vm1830, %v4740, 0
      %4747 = vmatprep.subr.bf16.mxu0 0
      %4748 = vmatpush1.bf16.xpose.msra.mxu0 %v4745
      %4749 = vmatprep.subr.bf16.mxu0 0
      %4750 = vmatpush1.bf16.xpose.msra.mxu0 0
      %4751 = vmatprep.subr.bf16.mxu0 0
      %4752 = vmatpush1.bf16.xpose.msra.mxu0 0
      %4753 = vmatprep.subr.bf16.mxu0 0
      %4754 = vmatpush1.bf16.xpose.msra.mxu0 0
      %4755 = vmatprep.subr.bf16.mxu0 0
      %4756 = vmatpush1.bf16.xpose.msra.mxu0 0
      %4757 = vmatprep.subr.bf16.mxu0 0
      %4758 = vmatpush1.bf16.xpose.msra.mxu0 0
      %4759 = vmatprep.subr.bf16.mxu0 0
      %4760 = vmatpush1.bf16.xpose.msra.mxu0 0
      %4761 = vmatprep.subr.bf16.mxu0 0
      %4762 = vmatpush1.bf16.xpose.msra.mxu0 0
      %4763 = vmatprep.subr.bf16.mxu0 0
      %4764 = vmatpush1.bf16.xpose.msra.mxu0 0
      %4765 = vmatprep.subr.bf16.mxu0 0
      %4766 = vmatpush1.bf16.xpose.msra.mxu0 0
      %4767 = vmatprep.subr.bf16.mxu0 0
      %4768 = vmatpush1.bf16.xpose.msra.mxu0 0
      %4769 = vmatprep.subr.bf16.mxu0 0
      %4770 = vmatpush1.bf16.xpose.msra.mxu0 0
      %4771 = vmatprep.subr.bf16.mxu0 0
      %4772 = vmatpush1.bf16.xpose.msra.mxu0 0
      %4773 = vmatprep.subr.bf16.mxu0 0
      %4774 = vmatpush1.bf16.xpose.msra.mxu0 0
      %4775 = vmatprep.subr.bf16.mxu0 0
      %4776 = vmatpush1.bf16.xpose.msra.mxu0 0
      %4777 = vmatprep.subr.bf16.mxu0 0
      %4778 = vmatpush1.bf16.xpose.msra.mxu0 0
      %4779 = vmatprep.mubr.bf16.mxu0 0
      %4780 = vmatmul.mubr.bf16.gmra.mrb[0].mxu0 %v4742
      %v4781 = vpop.f32.mrb[0].mxu0
      %v4782 = vadd.f32 0.0, %v4781
      %v4783 = vpop.f32.mrb[0].mxu0
      %v4784 = vpop.f32.mrb[0].mxu0
      %v4785 = vpop.f32.mrb[0].mxu0
      %4786 = vdwg.mxu0
      %4788 = vrot.lane.b32.xlu0 %v3427, 96
      %v4789 = vpop.permute.xlu0 %4788
      %v4791 = vsel %vm1830, %v3427, 0
      %v4794 = vsel %vm1830, %v4789, 0
      %4796 = vmatprep.subr.bf16.mxu0 0
      %4797 = vmatpush1.bf16.xpose.msra.mxu0 %v4794
      %4798 = vmatprep.subr.bf16.mxu0 0
      %4799 = vmatpush1.bf16.xpose.msra.mxu0 0
      %4800 = vmatprep.subr.bf16.mxu0 0
      %4801 = vmatpush1.bf16.xpose.msra.mxu0 0
      %4802 = vmatprep.subr.bf16.mxu0 0
      %4803 = vmatpush1.bf16.xpose.msra.mxu0 0
      %4804 = vmatprep.subr.bf16.mxu0 0
      %4805 = vmatpush1.bf16.xpose.msra.mxu0 0
      %4806 = vmatprep.subr.bf16.mxu0 0
      %4807 = vmatpush1.bf16.xpose.msra.mxu0 0
      %4808 = vmatprep.subr.bf16.mxu0 0
      %4809 = vmatpush1.bf16.xpose.msra.mxu0 0
      %4810 = vmatprep.subr.bf16.mxu0 0
      %4811 = vmatpush1.bf16.xpose.msra.mxu0 0
      %4812 = vmatprep.subr.bf16.mxu0 0
      %4813 = vmatpush1.bf16.xpose.msra.mxu0 0
      %4814 = vmatprep.subr.bf16.mxu0 0
      %4815 = vmatpush1.bf16.xpose.msra.mxu0 0
      %4816 = vmatprep.subr.bf16.mxu0 0
      %4817 = vmatpush1.bf16.xpose.msra.mxu0 0
      %4818 = vmatprep.subr.bf16.mxu0 0
      %4819 = vmatpush1.bf16.xpose.msra.mxu0 0
      %4820 = vmatprep.subr.bf16.mxu0 0
      %4821 = vmatpush1.bf16.xpose.msra.mxu0 0
      %4822 = vmatprep.subr.bf16.mxu0 0
      %4823 = vmatpush1.bf16.xpose.msra.mxu0 0
      %4824 = vmatprep.subr.bf16.mxu0 0
      %4825 = vmatpush1.bf16.xpose.msra.mxu0 0
      %4826 = vmatprep.subr.bf16.mxu0 0
      %4827 = vmatpush1.bf16.xpose.msra.mxu0 0
      %4828 = vmatprep.mubr.bf16.mxu0 0
      %4829 = vmatmul.mubr.bf16.gmra.mrb[0].mxu0 %v4791
      %v4830 = vpop.f32.mrb[0].mxu0
      %v4831 = vadd.f32 0.0, %v4830
      %v4832 = vpop.f32.mrb[0].mxu0
      %v4833 = vpop.f32.mrb[0].mxu0
      %v4834 = vpop.f32.mrb[0].mxu0
      %4835 = vdwg.mxu0
      %4837 = vrot.lane.b32.xlu0 %v3428, 96
      %v4838 = vpop.permute.xlu0 %4837
      %v4840 = vsel %vm1830, %v3428, 0
      %v4843 = vsel %vm1830, %v4838, 0
      %4845 = vmatprep.subr.bf16.mxu0 0
      %4846 = vmatpush1.bf16.xpose.msra.mxu0 %v4843
      %4847 = vmatprep.subr.bf16.mxu0 0
      %4848 = vmatpush1.bf16.xpose.msra.mxu0 0
      %4849 = vmatprep.subr.bf16.mxu0 0
      %4850 = vmatpush1.bf16.xpose.msra.mxu0 0
      %4851 = vmatprep.subr.bf16.mxu0 0
      %4852 = vmatpush1.bf16.xpose.msra.mxu0 0
      %4853 = vmatprep.subr.bf16.mxu0 0
      %4854 = vmatpush1.bf16.xpose.msra.mxu0 0
      %4855 = vmatprep.subr.bf16.mxu0 0
      %4856 = vmatpush1.bf16.xpose.msra.mxu0 0
      %4857 = vmatprep.subr.bf16.mxu0 0
      %4858 = vmatpush1.bf16.xpose.msra.mxu0 0
      %4859 = vmatprep.subr.bf16.mxu0 0
      %4860 = vmatpush1.bf16.xpose.msra.mxu0 0
      %4861 = vmatprep.subr.bf16.mxu0 0
      %4862 = vmatpush1.bf16.xpose.msra.mxu0 0
      %4863 = vmatprep.subr.bf16.mxu0 0
      %4864 = vmatpush1.bf16.xpose.msra.mxu0 0
      %4865 = vmatprep.subr.bf16.mxu0 0
      %4866 = vmatpush1.bf16.xpose.msra.mxu0 0
      %4867 = vmatprep.subr.bf16.mxu0 0
      %4868 = vmatpush1.bf16.xpose.msra.mxu0 0
      %4869 = vmatprep.subr.bf16.mxu0 0
      %4870 = vmatpush1.bf16.xpose.msra.mxu0 0
      %4871 = vmatprep.subr.bf16.mxu0 0
      %4872 = vmatpush1.bf16.xpose.msra.mxu0 0
      %4873 = vmatprep.subr.bf16.mxu0 0
      %4874 = vmatpush1.bf16.xpose.msra.mxu0 0
      %4875 = vmatprep.subr.bf16.mxu0 0
      %4876 = vmatpush1.bf16.xpose.msra.mxu0 0
      %4877 = vmatprep.mubr.bf16.mxu0 0
      %4878 = vmatmul.mubr.bf16.gmra.mrb[0].mxu0 %v4840
      %v4879 = vpop.f32.mrb[0].mxu0
      %v4880 = vadd.f32 0.0, %v4879
      %v4881 = vpop.f32.mrb[0].mxu0
      %v4882 = vpop.f32.mrb[0].mxu0
      %v4883 = vpop.f32.mrb[0].mxu0
      %4884 = vdwg.mxu0
      %4886 = vrot.lane.b32.xlu0 %v3429, 96
      %v4887 = vpop.permute.xlu0 %4886
      %v4889 = vsel %vm1830, %v3429, 0
      %v4892 = vsel %vm1830, %v4887, 0
      %4894 = vmatprep.subr.bf16.mxu0 0
      %4895 = vmatpush1.bf16.xpose.msra.mxu0 %v4892
      %4896 = vmatprep.subr.bf16.mxu0 0
      %4897 = vmatpush1.bf16.xpose.msra.mxu0 0
      %4898 = vmatprep.subr.bf16.mxu0 0
      %4899 = vmatpush1.bf16.xpose.msra.mxu0 0
      %4900 = vmatprep.subr.bf16.mxu0 0
      %4901 = vmatpush1.bf16.xpose.msra.mxu0 0
      %4902 = vmatprep.subr.bf16.mxu0 0
      %4903 = vmatpush1.bf16.xpose.msra.mxu0 0
      %4904 = vmatprep.subr.bf16.mxu0 0
      %4905 = vmatpush1.bf16.xpose.msra.mxu0 0
      %4906 = vmatprep.subr.bf16.mxu0 0
      %4907 = vmatpush1.bf16.xpose.msra.mxu0 0
      %4908 = vmatprep.subr.bf16.mxu0 0
      %4909 = vmatpush1.bf16.xpose.msra.mxu0 0
      %4910 = vmatprep.subr.bf16.mxu0 0
      %4911 = vmatpush1.bf16.xpose.msra.mxu0 0
      %4912 = vmatprep.subr.bf16.mxu0 0
      %4913 = vmatpush1.bf16.xpose.msra.mxu0 0
      %4914 = vmatprep.subr.bf16.mxu0 0
      %4915 = vmatpush1.bf16.xpose.msra.mxu0 0
      %4916 = vmatprep.subr.bf16.mxu0 0
      %4917 = vmatpush1.bf16.xpose.msra.mxu0 0
      %4918 = vmatprep.subr.bf16.mxu0 0
      %4919 = vmatpush1.bf16.xpose.msra.mxu0 0
      %4920 = vmatprep.subr.bf16.mxu0 0
      %4921 = vmatpush1.bf16.xpose.msra.mxu0 0
      %4922 = vmatprep.subr.bf16.mxu0 0
      %4923 = vmatpush1.bf16.xpose.msra.mxu0 0
      %4924 = vmatprep.subr.bf16.mxu0 0
      %4925 = vmatpush1.bf16.xpose.msra.mxu0 0
      %4926 = vmatprep.mubr.bf16.mxu0 0
      %4927 = vmatmul.mubr.bf16.gmra.mrb[0].mxu0 %v4889
      %v4928 = vpop.f32.mrb[0].mxu0
      %v4929 = vadd.f32 0.0, %v4928
      %v4930 = vpop.f32.mrb[0].mxu0
      %v4931 = vpop.f32.mrb[0].mxu0
      %v4932 = vpop.f32.mrb[0].mxu0
      %4933 = vdwg.mxu0
      %4935 = vrot.lane.b32.xlu0 %v3430, 96
      %v4936 = vpop.permute.xlu0 %4935
      %v4938 = vsel %vm1830, %v3430, 0
      %v4941 = vsel %vm1830, %v4936, 0
      %4943 = vmatprep.subr.bf16.mxu0 0
      %4944 = vmatpush1.bf16.xpose.msra.mxu0 %v4941
      %4945 = vmatprep.subr.bf16.mxu0 0
      %4946 = vmatpush1.bf16.xpose.msra.mxu0 0
      %4947 = vmatprep.subr.bf16.mxu0 0
      %4948 = vmatpush1.bf16.xpose.msra.mxu0 0
      %4949 = vmatprep.subr.bf16.mxu0 0
      %4950 = vmatpush1.bf16.xpose.msra.mxu0 0
      %4951 = vmatprep.subr.bf16.mxu0 0
      %4952 = vmatpush1.bf16.xpose.msra.mxu0 0
      %4953 = vmatprep.subr.bf16.mxu0 0
      %4954 = vmatpush1.bf16.xpose.msra.mxu0 0
      %4955 = vmatprep.subr.bf16.mxu0 0
      %4956 = vmatpush1.bf16.xpose.msra.mxu0 0
      %4957 = vmatprep.subr.bf16.mxu0 0
      %4958 = vmatpush1.bf16.xpose.msra.mxu0 0
      %4959 = vmatprep.subr.bf16.mxu0 0
      %4960 = vmatpush1.bf16.xpose.msra.mxu0 0
      %4961 = vmatprep.subr.bf16.mxu0 0
      %4962 = vmatpush1.bf16.xpose.msra.mxu0 0
      %4963 = vmatprep.subr.bf16.mxu0 0
      %4964 = vmatpush1.bf16.xpose.msra.mxu0 0
      %4965 = vmatprep.subr.bf16.mxu0 0
      %4966 = vmatpush1.bf16.xpose.msra.mxu0 0
      %4967 = vmatprep.subr.bf16.mxu0 0
      %4968 = vmatpush1.bf16.xpose.msra.mxu0 0
      %4969 = vmatprep.subr.bf16.mxu0 0
      %4970 = vmatpush1.bf16.xpose.msra.mxu0 0
      %4971 = vmatprep.subr.bf16.mxu0 0
      %4972 = vmatpush1.bf16.xpose.msra.mxu0 0
      %4973 = vmatprep.subr.bf16.mxu0 0
      %4974 = vmatpush1.bf16.xpose.msra.mxu0 0
      %4975 = vmatprep.mubr.bf16.mxu0 0
      %4976 = vmatmul.mubr.bf16.gmra.mrb[0].mxu0 %v4938
      %v4977 = vpop.f32.mrb[0].mxu0
      %v4978 = vadd.f32 0.0, %v4977
      %v4979 = vpop.f32.mrb[0].mxu0
      %v4980 = vpop.f32.mrb[0].mxu0
      %v4981 = vpop.f32.mrb[0].mxu0
      %4982 = vdwg.mxu0
      %4984 = vrot.lane.b32.xlu0 %v3431, 96
      %v4985 = vpop.permute.xlu0 %4984
      %v4987 = vsel %vm1830, %v3431, 0
      %v4990 = vsel %vm1830, %v4985, 0
      %4992 = vmatprep.subr.bf16.mxu0 0
      %4993 = vmatpush1.bf16.xpose.msra.mxu0 %v4990
      %4994 = vmatprep.subr.bf16.mxu0 0
      %4995 = vmatpush1.bf16.xpose.msra.mxu0 0
      %4996 = vmatprep.subr.bf16.mxu0 0
      %4997 = vmatpush1.bf16.xpose.msra.mxu0 0
      %4998 = vmatprep.subr.bf16.mxu0 0
      %4999 = vmatpush1.bf16.xpose.msra.mxu0 0
      %5000 = vmatprep.subr.bf16.mxu0 0
      %5001 = vmatpush1.bf16.xpose.msra.mxu0 0
      %5002 = vmatprep.subr.bf16.mxu0 0
      %5003 = vmatpush1.bf16.xpose.msra.mxu0 0
      %5004 = vmatprep.subr.bf16.mxu0 0
      %5005 = vmatpush1.bf16.xpose.msra.mxu0 0
      %5006 = vmatprep.subr.bf16.mxu0 0
      %5007 = vmatpush1.bf16.xpose.msra.mxu0 0
      %5008 = vmatprep.subr.bf16.mxu0 0
      %5009 = vmatpush1.bf16.xpose.msra.mxu0 0
      %5010 = vmatprep.subr.bf16.mxu0 0
      %5011 = vmatpush1.bf16.xpose.msra.mxu0 0
      %5012 = vmatprep.subr.bf16.mxu0 0
      %5013 = vmatpush1.bf16.xpose.msra.mxu0 0
      %5014 = vmatprep.subr.bf16.mxu0 0
      %5015 = vmatpush1.bf16.xpose.msra.mxu0 0
      %5016 = vmatprep.subr.bf16.mxu0 0
      %5017 = vmatpush1.bf16.xpose.msra.mxu0 0
      %5018 = vmatprep.subr.bf16.mxu0 0
      %5019 = vmatpush1.bf16.xpose.msra.mxu0 0
      %5020 = vmatprep.subr.bf16.mxu0 0
      %5021 = vmatpush1.bf16.xpose.msra.mxu0 0
      %5022 = vmatprep.subr.bf16.mxu0 0
      %5023 = vmatpush1.bf16.xpose.msra.mxu0 0
      %5024 = vmatprep.mubr.bf16.mxu0 0
      %5025 = vmatmul.mubr.bf16.gmra.mrb[0].mxu0 %v4987
      %v5026 = vpop.f32.mrb[0].mxu0
      %v5027 = vadd.f32 0.0, %v5026
      %v5028 = vpop.f32.mrb[0].mxu0
      %v5029 = vpop.f32.mrb[0].mxu0
      %v5030 = vpop.f32.mrb[0].mxu0
      %5031 = vdwg.mxu0
      %5033 = vrot.lane.b32.xlu0 %v3432, 96
      %v5034 = vpop.permute.xlu0 %5033
      %v5036 = vsel %vm1830, %v3432, 0
      %v5039 = vsel %vm1830, %v5034, 0
      %5041 = vmatprep.subr.bf16.mxu0 0
      %5042 = vmatpush1.bf16.xpose.msra.mxu0 %v5039
      %5043 = vmatprep.subr.bf16.mxu0 0
      %5044 = vmatpush1.bf16.xpose.msra.mxu0 0
      %5045 = vmatprep.subr.bf16.mxu0 0
      %5046 = vmatpush1.bf16.xpose.msra.mxu0 0
      %5047 = vmatprep.subr.bf16.mxu0 0
      %5048 = vmatpush1.bf16.xpose.msra.mxu0 0
      %5049 = vmatprep.subr.bf16.mxu0 0
      %5050 = vmatpush1.bf16.xpose.msra.mxu0 0
      %5051 = vmatprep.subr.bf16.mxu0 0
      %5052 = vmatpush1.bf16.xpose.msra.mxu0 0
      %5053 = vmatprep.subr.bf16.mxu0 0
      %5054 = vmatpush1.bf16.xpose.msra.mxu0 0
      %5055 = vmatprep.subr.bf16.mxu0 0
      %5056 = vmatpush1.bf16.xpose.msra.mxu0 0
      %5057 = vmatprep.subr.bf16.mxu0 0
      %5058 = vmatpush1.bf16.xpose.msra.mxu0 0
      %5059 = vmatprep.subr.bf16.mxu0 0
      %5060 = vmatpush1.bf16.xpose.msra.mxu0 0
      %5061 = vmatprep.subr.bf16.mxu0 0
      %5062 = vmatpush1.bf16.xpose.msra.mxu0 0
      %5063 = vmatprep.subr.bf16.mxu0 0
      %5064 = vmatpush1.bf16.xpose.msra.mxu0 0
      %5065 = vmatprep.subr.bf16.mxu0 0
      %5066 = vmatpush1.bf16.xpose.msra.mxu0 0
      %5067 = vmatprep.subr.bf16.mxu0 0
      %5068 = vmatpush1.bf16.xpose.msra.mxu0 0
      %5069 = vmatprep.subr.bf16.mxu0 0
      %5070 = vmatpush1.bf16.xpose.msra.mxu0 0
      %5071 = vmatprep.subr.bf16.mxu0 0
      %5072 = vmatpush1.bf16.xpose.msra.mxu0 0
      %5073 = vmatprep.mubr.bf16.mxu0 0
      %5074 = vmatmul.mubr.bf16.gmra.mrb[0].mxu0 %v5036
      %v5075 = vpop.f32.mrb[0].mxu0
      %v5076 = vadd.f32 0.0, %v5075
      %v5077 = vpop.f32.mrb[0].mxu0
      %v5078 = vpop.f32.mrb[0].mxu0
      %v5079 = vpop.f32.mrb[0].mxu0
      %5080 = vdwg.mxu0
      %5082 = vrot.lane.b32.xlu0 %v3433, 96
      %v5083 = vpop.permute.xlu0 %5082
      %v5085 = vsel %vm1830, %v3433, 0
      %v5088 = vsel %vm1830, %v5083, 0
      %5090 = vmatprep.subr.bf16.mxu0 0
      %5091 = vmatpush1.bf16.xpose.msra.mxu0 %v5088
      %5092 = vmatprep.subr.bf16.mxu0 0
      %5093 = vmatpush1.bf16.xpose.msra.mxu0 0
      %5094 = vmatprep.subr.bf16.mxu0 0
      %5095 = vmatpush1.bf16.xpose.msra.mxu0 0
      %5096 = vmatprep.subr.bf16.mxu0 0
      %5097 = vmatpush1.bf16.xpose.msra.mxu0 0
      %5098 = vmatprep.subr.bf16.mxu0 0
      %5099 = vmatpush1.bf16.xpose.msra.mxu0 0
      %5100 = vmatprep.subr.bf16.mxu0 0
      %5101 = vmatpush1.bf16.xpose.msra.mxu0 0
      %5102 = vmatprep.subr.bf16.mxu0 0
      %5103 = vmatpush1.bf16.xpose.msra.mxu0 0
      %5104 = vmatprep.subr.bf16.mxu0 0
      %5105 = vmatpush1.bf16.xpose.msra.mxu0 0
      %5106 = vmatprep.subr.bf16.mxu0 0
      %5107 = vmatpush1.bf16.xpose.msra.mxu0 0
      %5108 = vmatprep.subr.bf16.mxu0 0
      %5109 = vmatpush1.bf16.xpose.msra.mxu0 0
      %5110 = vmatprep.subr.bf16.mxu0 0
      %5111 = vmatpush1.bf16.xpose.msra.mxu0 0
      %5112 = vmatprep.subr.bf16.mxu0 0
      %5113 = vmatpush1.bf16.xpose.msra.mxu0 0
      %5114 = vmatprep.subr.bf16.mxu0 0
      %5115 = vmatpush1.bf16.xpose.msra.mxu0 0
      %5116 = vmatprep.subr.bf16.mxu0 0
      %5117 = vmatpush1.bf16.xpose.msra.mxu0 0
      %5118 = vmatprep.subr.bf16.mxu0 0
      %5119 = vmatpush1.bf16.xpose.msra.mxu0 0
      %5120 = vmatprep.subr.bf16.mxu0 0
      %5121 = vmatpush1.bf16.xpose.msra.mxu0 0
      %5122 = vmatprep.mubr.bf16.mxu0 0
      %5123 = vmatmul.mubr.bf16.gmra.mrb[0].mxu0 %v5085
      %v5124 = vpop.f32.mrb[0].mxu0
      %v5125 = vadd.f32 0.0, %v5124
      %v5126 = vpop.f32.mrb[0].mxu0
      %v5127 = vpop.f32.mrb[0].mxu0
      %v5128 = vpop.f32.mrb[0].mxu0
      %5129 = vdwg.mxu0
      %5131 = vrot.lane.b32.xlu0 %v3434, 96
      %v5132 = vpop.permute.xlu0 %5131
      %v5134 = vsel %vm1830, %v3434, 0
      %v5137 = vsel %vm1830, %v5132, 0
      %5139 = vmatprep.subr.bf16.mxu0 0
      %5140 = vmatpush1.bf16.xpose.msra.mxu0 %v5137
      %5141 = vmatprep.subr.bf16.mxu0 0
      %5142 = vmatpush1.bf16.xpose.msra.mxu0 0
      %5143 = vmatprep.subr.bf16.mxu0 0
      %5144 = vmatpush1.bf16.xpose.msra.mxu0 0
      %5145 = vmatprep.subr.bf16.mxu0 0
      %5146 = vmatpush1.bf16.xpose.msra.mxu0 0
      %5147 = vmatprep.subr.bf16.mxu0 0
      %5148 = vmatpush1.bf16.xpose.msra.mxu0 0
      %5149 = vmatprep.subr.bf16.mxu0 0
      %5150 = vmatpush1.bf16.xpose.msra.mxu0 0
      %5151 = vmatprep.subr.bf16.mxu0 0
      %5152 = vmatpush1.bf16.xpose.msra.mxu0 0
      %5153 = vmatprep.subr.bf16.mxu0 0
      %5154 = vmatpush1.bf16.xpose.msra.mxu0 0
      %5155 = vmatprep.subr.bf16.mxu0 0
      %5156 = vmatpush1.bf16.xpose.msra.mxu0 0
      %5157 = vmatprep.subr.bf16.mxu0 0
      %5158 = vmatpush1.bf16.xpose.msra.mxu0 0
      %5159 = vmatprep.subr.bf16.mxu0 0
      %5160 = vmatpush1.bf16.xpose.msra.mxu0 0
      %5161 = vmatprep.subr.bf16.mxu0 0
      %5162 = vmatpush1.bf16.xpose.msra.mxu0 0
      %5163 = vmatprep.subr.bf16.mxu0 0
      %5164 = vmatpush1.bf16.xpose.msra.mxu0 0
      %5165 = vmatprep.subr.bf16.mxu0 0
      %5166 = vmatpush1.bf16.xpose.msra.mxu0 0
      %5167 = vmatprep.subr.bf16.mxu0 0
      %5168 = vmatpush1.bf16.xpose.msra.mxu0 0
      %5169 = vmatprep.subr.bf16.mxu0 0
      %5170 = vmatpush1.bf16.xpose.msra.mxu0 0
      %5171 = vmatprep.mubr.bf16.mxu0 0
      %5172 = vmatmul.mubr.bf16.gmra.mrb[0].mxu0 %v5134
      %v5173 = vpop.f32.mrb[0].mxu0
      %v5174 = vadd.f32 0.0, %v5173
      %v5175 = vpop.f32.mrb[0].mxu0
      %v5176 = vpop.f32.mrb[0].mxu0
      %v5177 = vpop.f32.mrb[0].mxu0
      %5178 = vdwg.mxu0
      %5180 = vrot.lane.b32.xlu0 %v3435, 96
      %v5181 = vpop.permute.xlu0 %5180
      %v5183 = vsel %vm1830, %v3435, 0
      %v5186 = vsel %vm1830, %v5181, 0
      %5188 = vmatprep.subr.bf16.mxu0 0
      %5189 = vmatpush1.bf16.xpose.msra.mxu0 %v5186
      %5190 = vmatprep.subr.bf16.mxu0 0
      %5191 = vmatpush1.bf16.xpose.msra.mxu0 0
      %5192 = vmatprep.subr.bf16.mxu0 0
      %5193 = vmatpush1.bf16.xpose.msra.mxu0 0
      %5194 = vmatprep.subr.bf16.mxu0 0
      %5195 = vmatpush1.bf16.xpose.msra.mxu0 0
      %5196 = vmatprep.subr.bf16.mxu0 0
      %5197 = vmatpush1.bf16.xpose.msra.mxu0 0
      %5198 = vmatprep.subr.bf16.mxu0 0
      %5199 = vmatpush1.bf16.xpose.msra.mxu0 0
      %5200 = vmatprep.subr.bf16.mxu0 0
      %5201 = vmatpush1.bf16.xpose.msra.mxu0 0
      %5202 = vmatprep.subr.bf16.mxu0 0
      %5203 = vmatpush1.bf16.xpose.msra.mxu0 0
      %5204 = vmatprep.subr.bf16.mxu0 0
      %5205 = vmatpush1.bf16.xpose.msra.mxu0 0
      %5206 = vmatprep.subr.bf16.mxu0 0
      %5207 = vmatpush1.bf16.xpose.msra.mxu0 0
      %5208 = vmatprep.subr.bf16.mxu0 0
      %5209 = vmatpush1.bf16.xpose.msra.mxu0 0
      %5210 = vmatprep.subr.bf16.mxu0 0
      %5211 = vmatpush1.bf16.xpose.msra.mxu0 0
      %5212 = vmatprep.subr.bf16.mxu0 0
      %5213 = vmatpush1.bf16.xpose.msra.mxu0 0
      %5214 = vmatprep.subr.bf16.mxu0 0
      %5215 = vmatpush1.bf16.xpose.msra.mxu0 0
      %5216 = vmatprep.subr.bf16.mxu0 0
      %5217 = vmatpush1.bf16.xpose.msra.mxu0 0
      %5218 = vmatprep.subr.bf16.mxu0 0
      %5219 = vmatpush1.bf16.xpose.msra.mxu0 0
      %5220 = vmatprep.mubr.bf16.mxu0 0
      %5221 = vmatmul.mubr.bf16.gmra.mrb[0].mxu0 %v5183
      %v5222 = vpop.f32.mrb[0].mxu0
      %v5223 = vadd.f32 0.0, %v5222
      %v5224 = vpop.f32.mrb[0].mxu0
      %v5225 = vpop.f32.mrb[0].mxu0
      %v5226 = vpop.f32.mrb[0].mxu0
      %5227 = vdwg.mxu0
      %5229 = vrot.lane.b32.xlu0 %v3436, 96
      %v5230 = vpop.permute.xlu0 %5229
      %v5232 = vsel %vm1830, %v3436, 0
      %v5235 = vsel %vm1830, %v5230, 0
      %5237 = vmatprep.subr.bf16.mxu0 0
      %5238 = vmatpush1.bf16.xpose.msra.mxu0 %v5235
      %5239 = vmatprep.subr.bf16.mxu0 0
      %5240 = vmatpush1.bf16.xpose.msra.mxu0 0
      %5241 = vmatprep.subr.bf16.mxu0 0
      %5242 = vmatpush1.bf16.xpose.msra.mxu0 0
      %5243 = vmatprep.subr.bf16.mxu0 0
      %5244 = vmatpush1.bf16.xpose.msra.mxu0 0
      %5245 = vmatprep.subr.bf16.mxu0 0
      %5246 = vmatpush1.bf16.xpose.msra.mxu0 0
      %5247 = vmatprep.subr.bf16.mxu0 0
      %5248 = vmatpush1.bf16.xpose.msra.mxu0 0
      %5249 = vmatprep.subr.bf16.mxu0 0
      %5250 = vmatpush1.bf16.xpose.msra.mxu0 0
      %5251 = vmatprep.subr.bf16.mxu0 0
      %5252 = vmatpush1.bf16.xpose.msra.mxu0 0
      %5253 = vmatprep.subr.bf16.mxu0 0
      %5254 = vmatpush1.bf16.xpose.msra.mxu0 0
      %5255 = vmatprep.subr.bf16.mxu0 0
      %5256 = vmatpush1.bf16.xpose.msra.mxu0 0
      %5257 = vmatprep.subr.bf16.mxu0 0
      %5258 = vmatpush1.bf16.xpose.msra.mxu0 0
      %5259 = vmatprep.subr.bf16.mxu0 0
      %5260 = vmatpush1.bf16.xpose.msra.mxu0 0
      %5261 = vmatprep.subr.bf16.mxu0 0
      %5262 = vmatpush1.bf16.xpose.msra.mxu0 0
      %5263 = vmatprep.subr.bf16.mxu0 0
      %5264 = vmatpush1.bf16.xpose.msra.mxu0 0
      %5265 = vmatprep.subr.bf16.mxu0 0
      %5266 = vmatpush1.bf16.xpose.msra.mxu0 0
      %5267 = vmatprep.subr.bf16.mxu0 0
      %5268 = vmatpush1.bf16.xpose.msra.mxu0 0
      %5269 = vmatprep.mubr.bf16.mxu0 0
      %5270 = vmatmul.mubr.bf16.gmra.mrb[0].mxu0 %v5232
      %v5271 = vpop.f32.mrb[0].mxu0
      %v5272 = vadd.f32 0.0, %v5271
      %v5273 = vpop.f32.mrb[0].mxu0
      %v5274 = vpop.f32.mrb[0].mxu0
      %v5275 = vpop.f32.mrb[0].mxu0
      %5276 = vdwg.mxu0
      %5278 = vrot.lane.b32.xlu0 %v3437, 96
      %v5279 = vpop.permute.xlu0 %5278
      %v5281 = vsel %vm1830, %v3437, 0
      %v5284 = vsel %vm1830, %v5279, 0
      %5286 = vmatprep.subr.bf16.mxu0 0
      %5287 = vmatpush1.bf16.xpose.msra.mxu0 %v5284
      %5288 = vmatprep.subr.bf16.mxu0 0
      %5289 = vmatpush1.bf16.xpose.msra.mxu0 0
      %5290 = vmatprep.subr.bf16.mxu0 0
      %5291 = vmatpush1.bf16.xpose.msra.mxu0 0
      %5292 = vmatprep.subr.bf16.mxu0 0
      %5293 = vmatpush1.bf16.xpose.msra.mxu0 0
      %5294 = vmatprep.subr.bf16.mxu0 0
      %5295 = vmatpush1.bf16.xpose.msra.mxu0 0
      %5296 = vmatprep.subr.bf16.mxu0 0
      %5297 = vmatpush1.bf16.xpose.msra.mxu0 0
      %5298 = vmatprep.subr.bf16.mxu0 0
      %5299 = vmatpush1.bf16.xpose.msra.mxu0 0
      %5300 = vmatprep.subr.bf16.mxu0 0
      %5301 = vmatpush1.bf16.xpose.msra.mxu0 0
      %5302 = vmatprep.subr.bf16.mxu0 0
      %5303 = vmatpush1.bf16.xpose.msra.mxu0 0
      %5304 = vmatprep.subr.bf16.mxu0 0
      %5305 = vmatpush1.bf16.xpose.msra.mxu0 0
      %5306 = vmatprep.subr.bf16.mxu0 0
      %5307 = vmatpush1.bf16.xpose.msra.mxu0 0
      %5308 = vmatprep.subr.bf16.mxu0 0
      %5309 = vmatpush1.bf16.xpose.msra.mxu0 0
      %5310 = vmatprep.subr.bf16.mxu0 0
      %5311 = vmatpush1.bf16.xpose.msra.mxu0 0
      %5312 = vmatprep.subr.bf16.mxu0 0
      %5313 = vmatpush1.bf16.xpose.msra.mxu0 0
      %5314 = vmatprep.subr.bf16.mxu0 0
      %5315 = vmatpush1.bf16.xpose.msra.mxu0 0
      %5316 = vmatprep.subr.bf16.mxu0 0
      %5317 = vmatpush1.bf16.xpose.msra.mxu0 0
      %5318 = vmatprep.mubr.bf16.mxu0 0
      %5319 = vmatmul.mubr.bf16.gmra.mrb[0].mxu0 %v5281
      %v5320 = vpop.f32.mrb[0].mxu0
      %v5321 = vadd.f32 0.0, %v5320
      %v5322 = vpop.f32.mrb[0].mxu0
      %v5323 = vpop.f32.mrb[0].mxu0
      %v5324 = vpop.f32.mrb[0].mxu0
      %5325 = vdwg.mxu0
      %5327 = vrot.lane.b32.xlu0 %v3438, 96
      %v5328 = vpop.permute.xlu0 %5327
      %v5330 = vsel %vm1830, %v3438, 0
      %v5333 = vsel %vm1830, %v5328, 0
      %5335 = vmatprep.subr.bf16.mxu0 0
      %5336 = vmatpush1.bf16.xpose.msra.mxu0 %v5333
      %5337 = vmatprep.subr.bf16.mxu0 0
      %5338 = vmatpush1.bf16.xpose.msra.mxu0 0
      %5339 = vmatprep.subr.bf16.mxu0 0
      %5340 = vmatpush1.bf16.xpose.msra.mxu0 0
      %5341 = vmatprep.subr.bf16.mxu0 0
      %5342 = vmatpush1.bf16.xpose.msra.mxu0 0
      %5343 = vmatprep.subr.bf16.mxu0 0
      %5344 = vmatpush1.bf16.xpose.msra.mxu0 0
      %5345 = vmatprep.subr.bf16.mxu0 0
      %5346 = vmatpush1.bf16.xpose.msra.mxu0 0
      %5347 = vmatprep.subr.bf16.mxu0 0
      %5348 = vmatpush1.bf16.xpose.msra.mxu0 0
      %5349 = vmatprep.subr.bf16.mxu0 0
      %5350 = vmatpush1.bf16.xpose.msra.mxu0 0
      %5351 = vmatprep.subr.bf16.mxu0 0
      %5352 = vmatpush1.bf16.xpose.msra.mxu0 0
      %5353 = vmatprep.subr.bf16.mxu0 0
      %5354 = vmatpush1.bf16.xpose.msra.mxu0 0
      %5355 = vmatprep.subr.bf16.mxu0 0
      %5356 = vmatpush1.bf16.xpose.msra.mxu0 0
      %5357 = vmatprep.subr.bf16.mxu0 0
      %5358 = vmatpush1.bf16.xpose.msra.mxu0 0
      %5359 = vmatprep.subr.bf16.mxu0 0
      %5360 = vmatpush1.bf16.xpose.msra.mxu0 0
      %5361 = vmatprep.subr.bf16.mxu0 0
      %5362 = vmatpush1.bf16.xpose.msra.mxu0 0
      %5363 = vmatprep.subr.bf16.mxu0 0
      %5364 = vmatpush1.bf16.xpose.msra.mxu0 0
      %5365 = vmatprep.subr.bf16.mxu0 0
      %5366 = vmatpush1.bf16.xpose.msra.mxu0 0
      %5367 = vmatprep.mubr.bf16.mxu0 0
      %5368 = vmatmul.mubr.bf16.gmra.mrb[0].mxu0 %v5330
      %v5369 = vpop.f32.mrb[0].mxu0
      %v5370 = vadd.f32 0.0, %v5369
      %v5371 = vpop.f32.mrb[0].mxu0
      %v5372 = vpop.f32.mrb[0].mxu0
      %v5373 = vpop.f32.mrb[0].mxu0
      %5374 = vdwg.mxu0
      %5376 = vrot.lane.b32.xlu0 %v3439, 96
      %v5377 = vpop.permute.xlu0 %5376
      %v5379 = vsel %vm1830, %v3439, 0
      %v5382 = vsel %vm1830, %v5377, 0
      %5384 = vmatprep.subr.bf16.mxu0 0
      %5385 = vmatpush1.bf16.xpose.msra.mxu0 %v5382
      %5386 = vmatprep.subr.bf16.mxu0 0
      %5387 = vmatpush1.bf16.xpose.msra.mxu0 0
      %5388 = vmatprep.subr.bf16.mxu0 0
      %5389 = vmatpush1.bf16.xpose.msra.mxu0 0
      %5390 = vmatprep.subr.bf16.mxu0 0
      %5391 = vmatpush1.bf16.xpose.msra.mxu0 0
      %5392 = vmatprep.subr.bf16.mxu0 0
      %5393 = vmatpush1.bf16.xpose.msra.mxu0 0
      %5394 = vmatprep.subr.bf16.mxu0 0
      %5395 = vmatpush1.bf16.xpose.msra.mxu0 0
      %5396 = vmatprep.subr.bf16.mxu0 0
      %5397 = vmatpush1.bf16.xpose.msra.mxu0 0
      %5398 = vmatprep.subr.bf16.mxu0 0
      %5399 = vmatpush1.bf16.xpose.msra.mxu0 0
      %5400 = vmatprep.subr.bf16.mxu0 0
      %5401 = vmatpush1.bf16.xpose.msra.mxu0 0
      %5402 = vmatprep.subr.bf16.mxu0 0
      %5403 = vmatpush1.bf16.xpose.msra.mxu0 0
      %5404 = vmatprep.subr.bf16.mxu0 0
      %5405 = vmatpush1.bf16.xpose.msra.mxu0 0
      %5406 = vmatprep.subr.bf16.mxu0 0
      %5407 = vmatpush1.bf16.xpose.msra.mxu0 0
      %5408 = vmatprep.subr.bf16.mxu0 0
      %5409 = vmatpush1.bf16.xpose.msra.mxu0 0
      %5410 = vmatprep.subr.bf16.mxu0 0
      %5411 = vmatpush1.bf16.xpose.msra.mxu0 0
      %5412 = vmatprep.subr.bf16.mxu0 0
      %5413 = vmatpush1.bf16.xpose.msra.mxu0 0
      %5414 = vmatprep.subr.bf16.mxu0 0
      %5415 = vmatpush1.bf16.xpose.msra.mxu0 0
      %5416 = vmatprep.mubr.bf16.mxu0 0
      %5417 = vmatmul.mubr.bf16.gmra.mrb[0].mxu0 %v5379
      %v5418 = vpop.f32.mrb[0].mxu0
      %v5419 = vadd.f32 0.0, %v5418
      %v5420 = vpop.f32.mrb[0].mxu0
      %v5421 = vpop.f32.mrb[0].mxu0
      %v5422 = vpop.f32.mrb[0].mxu0
      %5423 = vdwg.mxu0
      %5425 = vrot.lane.b32.xlu0 %v3440, 96
      %v5426 = vpop.permute.xlu0 %5425
      %v5428 = vsel %vm1830, %v3440, 0
      %v5431 = vsel %vm1830, %v5426, 0
      %5433 = vmatprep.subr.bf16.mxu0 0
      %5434 = vmatpush1.bf16.xpose.msra.mxu0 %v5431
      %5435 = vmatprep.subr.bf16.mxu0 0
      %5436 = vmatpush1.bf16.xpose.msra.mxu0 0
      %5437 = vmatprep.subr.bf16.mxu0 0
      %5438 = vmatpush1.bf16.xpose.msra.mxu0 0
      %5439 = vmatprep.subr.bf16.mxu0 0
      %5440 = vmatpush1.bf16.xpose.msra.mxu0 0
      %5441 = vmatprep.subr.bf16.mxu0 0
      %5442 = vmatpush1.bf16.xpose.msra.mxu0 0
      %5443 = vmatprep.subr.bf16.mxu0 0
      %5444 = vmatpush1.bf16.xpose.msra.mxu0 0
      %5445 = vmatprep.subr.bf16.mxu0 0
      %5446 = vmatpush1.bf16.xpose.msra.mxu0 0
      %5447 = vmatprep.subr.bf16.mxu0 0
      %5448 = vmatpush1.bf16.xpose.msra.mxu0 0
      %5449 = vmatprep.subr.bf16.mxu0 0
      %5450 = vmatpush1.bf16.xpose.msra.mxu0 0
      %5451 = vmatprep.subr.bf16.mxu0 0
      %5452 = vmatpush1.bf16.xpose.msra.mxu0 0
      %5453 = vmatprep.subr.bf16.mxu0 0
      %5454 = vmatpush1.bf16.xpose.msra.mxu0 0
      %5455 = vmatprep.subr.bf16.mxu0 0
      %5456 = vmatpush1.bf16.xpose.msra.mxu0 0
      %5457 = vmatprep.subr.bf16.mxu0 0
      %5458 = vmatpush1.bf16.xpose.msra.mxu0 0
      %5459 = vmatprep.subr.bf16.mxu0 0
      %5460 = vmatpush1.bf16.xpose.msra.mxu0 0
      %5461 = vmatprep.subr.bf16.mxu0 0
      %5462 = vmatpush1.bf16.xpose.msra.mxu0 0
      %5463 = vmatprep.subr.bf16.mxu0 0
      %5464 = vmatpush1.bf16.xpose.msra.mxu0 0
      %5465 = vmatprep.mubr.bf16.mxu0 0
      %5466 = vmatmul.mubr.bf16.gmra.mrb[0].mxu0 %v5428
      %v5467 = vpop.f32.mrb[0].mxu0
      %v5468 = vadd.f32 0.0, %v5467
      %v5469 = vpop.f32.mrb[0].mxu0
      %v5470 = vpop.f32.mrb[0].mxu0
      %v5471 = vpop.f32.mrb[0].mxu0
      %5472 = vdwg.mxu0
      %5474 = vrot.lane.b32.xlu0 %v3441, 96
      %v5475 = vpop.permute.xlu0 %5474
      %v5477 = vsel %vm1830, %v3441, 0
      %v5480 = vsel %vm1830, %v5475, 0
      %5482 = vmatprep.subr.bf16.mxu0 0
      %5483 = vmatpush1.bf16.xpose.msra.mxu0 %v5480
      %5484 = vmatprep.subr.bf16.mxu0 0
      %5485 = vmatpush1.bf16.xpose.msra.mxu0 0
      %5486 = vmatprep.subr.bf16.mxu0 0
      %5487 = vmatpush1.bf16.xpose.msra.mxu0 0
      %5488 = vmatprep.subr.bf16.mxu0 0
      %5489 = vmatpush1.bf16.xpose.msra.mxu0 0
      %5490 = vmatprep.subr.bf16.mxu0 0
      %5491 = vmatpush1.bf16.xpose.msra.mxu0 0
      %5492 = vmatprep.subr.bf16.mxu0 0
      %5493 = vmatpush1.bf16.xpose.msra.mxu0 0
      %5494 = vmatprep.subr.bf16.mxu0 0
      %5495 = vmatpush1.bf16.xpose.msra.mxu0 0
      %5496 = vmatprep.subr.bf16.mxu0 0
      %5497 = vmatpush1.bf16.xpose.msra.mxu0 0
      %5498 = vmatprep.subr.bf16.mxu0 0
      %5499 = vmatpush1.bf16.xpose.msra.mxu0 0
      %5500 = vmatprep.subr.bf16.mxu0 0
      %5501 = vmatpush1.bf16.xpose.msra.mxu0 0
      %5502 = vmatprep.subr.bf16.mxu0 0
      %5503 = vmatpush1.bf16.xpose.msra.mxu0 0
      %5504 = vmatprep.subr.bf16.mxu0 0
      %5505 = vmatpush1.bf16.xpose.msra.mxu0 0
      %5506 = vmatprep.subr.bf16.mxu0 0
      %5507 = vmatpush1.bf16.xpose.msra.mxu0 0
      %5508 = vmatprep.subr.bf16.mxu0 0
      %5509 = vmatpush1.bf16.xpose.msra.mxu0 0
      %5510 = vmatprep.subr.bf16.mxu0 0
      %5511 = vmatpush1.bf16.xpose.msra.mxu0 0
      %5512 = vmatprep.subr.bf16.mxu0 0
      %5513 = vmatpush1.bf16.xpose.msra.mxu0 0
      %5514 = vmatprep.mubr.bf16.mxu0 0
      %5515 = vmatmul.mubr.bf16.gmra.mrb[0].mxu0 %v5477
      %v5516 = vpop.f32.mrb[0].mxu0
      %v5517 = vadd.f32 0.0, %v5516
      %v5518 = vpop.f32.mrb[0].mxu0
      %v5519 = vpop.f32.mrb[0].mxu0
      %v5520 = vpop.f32.mrb[0].mxu0
      %5521 = vdwg.mxu0
      %5523 = vrot.lane.b32.xlu0 %v3442, 96
      %v5524 = vpop.permute.xlu0 %5523
      %v5526 = vsel %vm1830, %v3442, 0
      %v5529 = vsel %vm1830, %v5524, 0
      %5531 = vmatprep.subr.bf16.mxu0 0
      %5532 = vmatpush1.bf16.xpose.msra.mxu0 %v5529
      %5533 = vmatprep.subr.bf16.mxu0 0
      %5534 = vmatpush1.bf16.xpose.msra.mxu0 0
      %5535 = vmatprep.subr.bf16.mxu0 0
      %5536 = vmatpush1.bf16.xpose.msra.mxu0 0
      %5537 = vmatprep.subr.bf16.mxu0 0
      %5538 = vmatpush1.bf16.xpose.msra.mxu0 0
      %5539 = vmatprep.subr.bf16.mxu0 0
      %5540 = vmatpush1.bf16.xpose.msra.mxu0 0
      %5541 = vmatprep.subr.bf16.mxu0 0
      %5542 = vmatpush1.bf16.xpose.msra.mxu0 0
      %5543 = vmatprep.subr.bf16.mxu0 0
      %5544 = vmatpush1.bf16.xpose.msra.mxu0 0
      %5545 = vmatprep.subr.bf16.mxu0 0
      %5546 = vmatpush1.bf16.xpose.msra.mxu0 0
      %5547 = vmatprep.subr.bf16.mxu0 0
      %5548 = vmatpush1.bf16.xpose.msra.mxu0 0
      %5549 = vmatprep.subr.bf16.mxu0 0
      %5550 = vmatpush1.bf16.xpose.msra.mxu0 0
      %5551 = vmatprep.subr.bf16.mxu0 0
      %5552 = vmatpush1.bf16.xpose.msra.mxu0 0
      %5553 = vmatprep.subr.bf16.mxu0 0
      %5554 = vmatpush1.bf16.xpose.msra.mxu0 0
      %5555 = vmatprep.subr.bf16.mxu0 0
      %5556 = vmatpush1.bf16.xpose.msra.mxu0 0
      %5557 = vmatprep.subr.bf16.mxu0 0
      %5558 = vmatpush1.bf16.xpose.msra.mxu0 0
      %5559 = vmatprep.subr.bf16.mxu0 0
      %5560 = vmatpush1.bf16.xpose.msra.mxu0 0
      %5561 = vmatprep.subr.bf16.mxu0 0
      %5562 = vmatpush1.bf16.xpose.msra.mxu0 0
      %5563 = vmatprep.mubr.bf16.mxu0 0
      %5564 = vmatmul.mubr.bf16.gmra.mrb[0].mxu0 %v5526
      %v5565 = vpop.f32.mrb[0].mxu0
      %v5566 = vadd.f32 0.0, %v5565
      %v5567 = vpop.f32.mrb[0].mxu0
      %v5568 = vpop.f32.mrb[0].mxu0
      %v5569 = vpop.f32.mrb[0].mxu0
      %5570 = vdwg.mxu0
      %5572 = vrot.lane.b32.xlu0 %v3443, 96
      %v5573 = vpop.permute.xlu0 %5572
      %v5575 = vsel %vm1830, %v3443, 0
      %v5578 = vsel %vm1830, %v5573, 0
      %5580 = vmatprep.subr.bf16.mxu0 0
      %5581 = vmatpush1.bf16.xpose.msra.mxu0 %v5578
      %5582 = vmatprep.subr.bf16.mxu0 0
      %5583 = vmatpush1.bf16.xpose.msra.mxu0 0
      %5584 = vmatprep.subr.bf16.mxu0 0
      %5585 = vmatpush1.bf16.xpose.msra.mxu0 0
      %5586 = vmatprep.subr.bf16.mxu0 0
      %5587 = vmatpush1.bf16.xpose.msra.mxu0 0
      %5588 = vmatprep.subr.bf16.mxu0 0
      %5589 = vmatpush1.bf16.xpose.msra.mxu0 0
      %5590 = vmatprep.subr.bf16.mxu0 0
      %5591 = vmatpush1.bf16.xpose.msra.mxu0 0
      %5592 = vmatprep.subr.bf16.mxu0 0
      %5593 = vmatpush1.bf16.xpose.msra.mxu0 0
      %5594 = vmatprep.subr.bf16.mxu0 0
      %5595 = vmatpush1.bf16.xpose.msra.mxu0 0
      %5596 = vmatprep.subr.bf16.mxu0 0
      %5597 = vmatpush1.bf16.xpose.msra.mxu0 0
      %5598 = vmatprep.subr.bf16.mxu0 0
      %5599 = vmatpush1.bf16.xpose.msra.mxu0 0
      %5600 = vmatprep.subr.bf16.mxu0 0
      %5601 = vmatpush1.bf16.xpose.msra.mxu0 0
      %5602 = vmatprep.subr.bf16.mxu0 0
      %5603 = vmatpush1.bf16.xpose.msra.mxu0 0
      %5604 = vmatprep.subr.bf16.mxu0 0
      %5605 = vmatpush1.bf16.xpose.msra.mxu0 0
      %5606 = vmatprep.subr.bf16.mxu0 0
      %5607 = vmatpush1.bf16.xpose.msra.mxu0 0
      %5608 = vmatprep.subr.bf16.mxu0 0
      %5609 = vmatpush1.bf16.xpose.msra.mxu0 0
      %5610 = vmatprep.subr.bf16.mxu0 0
      %5611 = vmatpush1.bf16.xpose.msra.mxu0 0
      %5612 = vmatprep.mubr.bf16.mxu0 0
      %5613 = vmatmul.mubr.bf16.gmra.mrb[0].mxu0 %v5575
      %v5614 = vpop.f32.mrb[0].mxu0
      %v5615 = vadd.f32 0.0, %v5614
      %v5616 = vpop.f32.mrb[0].mxu0
      %v5617 = vpop.f32.mrb[0].mxu0
      %v5618 = vpop.f32.mrb[0].mxu0
      %5619 = vdwg.mxu0
      %5621 = vrot.lane.b32.xlu0 %v3444, 96
      %v5622 = vpop.permute.xlu0 %5621
      %v5624 = vsel %vm1830, %v3444, 0
      %v5627 = vsel %vm1830, %v5622, 0
      %5629 = vmatprep.subr.bf16.mxu0 0
      %5630 = vmatpush1.bf16.xpose.msra.mxu0 %v5627
      %5631 = vmatprep.subr.bf16.mxu0 0
      %5632 = vmatpush1.bf16.xpose.msra.mxu0 0
      %5633 = vmatprep.subr.bf16.mxu0 0
      %5634 = vmatpush1.bf16.xpose.msra.mxu0 0
      %5635 = vmatprep.subr.bf16.mxu0 0
      %5636 = vmatpush1.bf16.xpose.msra.mxu0 0
      %5637 = vmatprep.subr.bf16.mxu0 0
      %5638 = vmatpush1.bf16.xpose.msra.mxu0 0
      %5639 = vmatprep.subr.bf16.mxu0 0
      %5640 = vmatpush1.bf16.xpose.msra.mxu0 0
      %5641 = vmatprep.subr.bf16.mxu0 0
      %5642 = vmatpush1.bf16.xpose.msra.mxu0 0
      %5643 = vmatprep.subr.bf16.mxu0 0
      %5644 = vmatpush1.bf16.xpose.msra.mxu0 0
      %5645 = vmatprep.subr.bf16.mxu0 0
      %5646 = vmatpush1.bf16.xpose.msra.mxu0 0
      %5647 = vmatprep.subr.bf16.mxu0 0
      %5648 = vmatpush1.bf16.xpose.msra.mxu0 0
      %5649 = vmatprep.subr.bf16.mxu0 0
      %5650 = vmatpush1.bf16.xpose.msra.mxu0 0
      %5651 = vmatprep.subr.bf16.mxu0 0
      %5652 = vmatpush1.bf16.xpose.msra.mxu0 0
      %5653 = vmatprep.subr.bf16.mxu0 0
      %5654 = vmatpush1.bf16.xpose.msra.mxu0 0
      %5655 = vmatprep.subr.bf16.mxu0 0
      %5656 = vmatpush1.bf16.xpose.msra.mxu0 0
      %5657 = vmatprep.subr.bf16.mxu0 0
      %5658 = vmatpush1.bf16.xpose.msra.mxu0 0
      %5659 = vmatprep.subr.bf16.mxu0 0
      %5660 = vmatpush1.bf16.xpose.msra.mxu0 0
      %5661 = vmatprep.mubr.bf16.mxu0 0
      %5662 = vmatmul.mubr.bf16.gmra.mrb[0].mxu0 %v5624
      %v5663 = vpop.f32.mrb[0].mxu0
      %v5664 = vadd.f32 0.0, %v5663
      %v5665 = vpop.f32.mrb[0].mxu0
      %v5666 = vpop.f32.mrb[0].mxu0
      %v5667 = vpop.f32.mrb[0].mxu0
      %5668 = vdwg.mxu0
      %5670 = vrot.lane.b32.xlu0 %v3445, 96
      %v5671 = vpop.permute.xlu0 %5670
      %v5673 = vsel %vm1830, %v3445, 0
      %v5676 = vsel %vm1830, %v5671, 0
      %5678 = vmatprep.subr.bf16.mxu0 0
      %5679 = vmatpush1.bf16.xpose.msra.mxu0 %v5676
      %5680 = vmatprep.subr.bf16.mxu0 0
      %5681 = vmatpush1.bf16.xpose.msra.mxu0 0
      %5682 = vmatprep.subr.bf16.mxu0 0
      %5683 = vmatpush1.bf16.xpose.msra.mxu0 0
      %5684 = vmatprep.subr.bf16.mxu0 0
      %5685 = vmatpush1.bf16.xpose.msra.mxu0 0
      %5686 = vmatprep.subr.bf16.mxu0 0
      %5687 = vmatpush1.bf16.xpose.msra.mxu0 0
      %5688 = vmatprep.subr.bf16.mxu0 0
      %5689 = vmatpush1.bf16.xpose.msra.mxu0 0
      %5690 = vmatprep.subr.bf16.mxu0 0
      %5691 = vmatpush1.bf16.xpose.msra.mxu0 0
      %5692 = vmatprep.subr.bf16.mxu0 0
      %5693 = vmatpush1.bf16.xpose.msra.mxu0 0
      %5694 = vmatprep.subr.bf16.mxu0 0
      %5695 = vmatpush1.bf16.xpose.msra.mxu0 0
      %5696 = vmatprep.subr.bf16.mxu0 0
      %5697 = vmatpush1.bf16.xpose.msra.mxu0 0
      %5698 = vmatprep.subr.bf16.mxu0 0
      %5699 = vmatpush1.bf16.xpose.msra.mxu0 0
      %5700 = vmatprep.subr.bf16.mxu0 0
      %5701 = vmatpush1.bf16.xpose.msra.mxu0 0
      %5702 = vmatprep.subr.bf16.mxu0 0
      %5703 = vmatpush1.bf16.xpose.msra.mxu0 0
      %5704 = vmatprep.subr.bf16.mxu0 0
      %5705 = vmatpush1.bf16.xpose.msra.mxu0 0
      %5706 = vmatprep.subr.bf16.mxu0 0
      %5707 = vmatpush1.bf16.xpose.msra.mxu0 0
      %5708 = vmatprep.subr.bf16.mxu0 0
      %5709 = vmatpush1.bf16.xpose.msra.mxu0 0
      %5710 = vmatprep.mubr.bf16.mxu0 0
      %5711 = vmatmul.mubr.bf16.gmra.mrb[0].mxu0 %v5673
      %v5712 = vpop.f32.mrb[0].mxu0
      %v5713 = vadd.f32 0.0, %v5712
      %v5714 = vpop.f32.mrb[0].mxu0
      %v5715 = vpop.f32.mrb[0].mxu0
      %v5716 = vpop.f32.mrb[0].mxu0
      %5717 = vdwg.mxu0
      %5719 = vrot.lane.b32.xlu0 %v3446, 96
      %v5720 = vpop.permute.xlu0 %5719
      %v5722 = vsel %vm1830, %v3446, 0
      %v5725 = vsel %vm1830, %v5720, 0
      %5727 = vmatprep.subr.bf16.mxu0 0
      %5728 = vmatpush1.bf16.xpose.msra.mxu0 %v5725
      %5729 = vmatprep.subr.bf16.mxu0 0
      %5730 = vmatpush1.bf16.xpose.msra.mxu0 0
      %5731 = vmatprep.subr.bf16.mxu0 0
      %5732 = vmatpush1.bf16.xpose.msra.mxu0 0
      %5733 = vmatprep.subr.bf16.mxu0 0
      %5734 = vmatpush1.bf16.xpose.msra.mxu0 0
      %5735 = vmatprep.subr.bf16.mxu0 0
      %5736 = vmatpush1.bf16.xpose.msra.mxu0 0
      %5737 = vmatprep.subr.bf16.mxu0 0
      %5738 = vmatpush1.bf16.xpose.msra.mxu0 0
      %5739 = vmatprep.subr.bf16.mxu0 0
      %5740 = vmatpush1.bf16.xpose.msra.mxu0 0
      %5741 = vmatprep.subr.bf16.mxu0 0
      %5742 = vmatpush1.bf16.xpose.msra.mxu0 0
      %5743 = vmatprep.subr.bf16.mxu0 0
      %5744 = vmatpush1.bf16.xpose.msra.mxu0 0
      %5745 = vmatprep.subr.bf16.mxu0 0
      %5746 = vmatpush1.bf16.xpose.msra.mxu0 0
      %5747 = vmatprep.subr.bf16.mxu0 0
      %5748 = vmatpush1.bf16.xpose.msra.mxu0 0
      %5749 = vmatprep.subr.bf16.mxu0 0
      %5750 = vmatpush1.bf16.xpose.msra.mxu0 0
      %5751 = vmatprep.subr.bf16.mxu0 0
      %5752 = vmatpush1.bf16.xpose.msra.mxu0 0
      %5753 = vmatprep.subr.bf16.mxu0 0
      %5754 = vmatpush1.bf16.xpose.msra.mxu0 0
      %5755 = vmatprep.subr.bf16.mxu0 0
      %5756 = vmatpush1.bf16.xpose.msra.mxu0 0
      %5757 = vmatprep.subr.bf16.mxu0 0
      %5758 = vmatpush1.bf16.xpose.msra.mxu0 0
      %5759 = vmatprep.mubr.bf16.mxu0 0
      %5760 = vmatmul.mubr.bf16.gmra.mrb[0].mxu0 %v5722
      %v5761 = vpop.f32.mrb[0].mxu0
      %v5762 = vadd.f32 0.0, %v5761
      %v5763 = vpop.f32.mrb[0].mxu0
      %v5764 = vpop.f32.mrb[0].mxu0
      %v5765 = vpop.f32.mrb[0].mxu0
      %5766 = vdwg.mxu0
      %5768 = vrot.lane.b32.xlu0 %v3447, 96
      %v5769 = vpop.permute.xlu0 %5768
      %v5771 = vsel %vm1830, %v3447, 0
      %v5774 = vsel %vm1830, %v5769, 0
      %5776 = vmatprep.subr.bf16.mxu0 0
      %5777 = vmatpush1.bf16.xpose.msra.mxu0 %v5774
      %5778 = vmatprep.subr.bf16.mxu0 0
      %5779 = vmatpush1.bf16.xpose.msra.mxu0 0
      %5780 = vmatprep.subr.bf16.mxu0 0
      %5781 = vmatpush1.bf16.xpose.msra.mxu0 0
      %5782 = vmatprep.subr.bf16.mxu0 0
      %5783 = vmatpush1.bf16.xpose.msra.mxu0 0
      %5784 = vmatprep.subr.bf16.mxu0 0
      %5785 = vmatpush1.bf16.xpose.msra.mxu0 0
      %5786 = vmatprep.subr.bf16.mxu0 0
      %5787 = vmatpush1.bf16.xpose.msra.mxu0 0
      %5788 = vmatprep.subr.bf16.mxu0 0
      %5789 = vmatpush1.bf16.xpose.msra.mxu0 0
      %5790 = vmatprep.subr.bf16.mxu0 0
      %5791 = vmatpush1.bf16.xpose.msra.mxu0 0
      %5792 = vmatprep.subr.bf16.mxu0 0
      %5793 = vmatpush1.bf16.xpose.msra.mxu0 0
      %5794 = vmatprep.subr.bf16.mxu0 0
      %5795 = vmatpush1.bf16.xpose.msra.mxu0 0
      %5796 = vmatprep.subr.bf16.mxu0 0
      %5797 = vmatpush1.bf16.xpose.msra.mxu0 0
      %5798 = vmatprep.subr.bf16.mxu0 0
      %5799 = vmatpush1.bf16.xpose.msra.mxu0 0
      %5800 = vmatprep.subr.bf16.mxu0 0
      %5801 = vmatpush1.bf16.xpose.msra.mxu0 0
      %5802 = vmatprep.subr.bf16.mxu0 0
      %5803 = vmatpush1.bf16.xpose.msra.mxu0 0
      %5804 = vmatprep.subr.bf16.mxu0 0
      %5805 = vmatpush1.bf16.xpose.msra.mxu0 0
      %5806 = vmatprep.subr.bf16.mxu0 0
      %5807 = vmatpush1.bf16.xpose.msra.mxu0 0
      %5808 = vmatprep.mubr.bf16.mxu0 0
      %5809 = vmatmul.mubr.bf16.gmra.mrb[0].mxu0 %v5771
      %v5810 = vpop.f32.mrb[0].mxu0
      %v5811 = vadd.f32 0.0, %v5810
      %v5812 = vpop.f32.mrb[0].mxu0
      %v5813 = vpop.f32.mrb[0].mxu0
      %v5814 = vpop.f32.mrb[0].mxu0
      %5815 = vdwg.mxu0
      %5817 = vrot.lane.b32.xlu0 %v3448, 96
      %v5818 = vpop.permute.xlu0 %5817
      %v5820 = vsel %vm1830, %v3448, 0
      %v5823 = vsel %vm1830, %v5818, 0
      %5825 = vmatprep.subr.bf16.mxu0 0
      %5826 = vmatpush1.bf16.xpose.msra.mxu0 %v5823
      %5827 = vmatprep.subr.bf16.mxu0 0
      %5828 = vmatpush1.bf16.xpose.msra.mxu0 0
      %5829 = vmatprep.subr.bf16.mxu0 0
      %5830 = vmatpush1.bf16.xpose.msra.mxu0 0
      %5831 = vmatprep.subr.bf16.mxu0 0
      %5832 = vmatpush1.bf16.xpose.msra.mxu0 0
      %5833 = vmatprep.subr.bf16.mxu0 0
      %5834 = vmatpush1.bf16.xpose.msra.mxu0 0
      %5835 = vmatprep.subr.bf16.mxu0 0
      %5836 = vmatpush1.bf16.xpose.msra.mxu0 0
      %5837 = vmatprep.subr.bf16.mxu0 0
      %5838 = vmatpush1.bf16.xpose.msra.mxu0 0
      %5839 = vmatprep.subr.bf16.mxu0 0
      %5840 = vmatpush1.bf16.xpose.msra.mxu0 0
      %5841 = vmatprep.subr.bf16.mxu0 0
      %5842 = vmatpush1.bf16.xpose.msra.mxu0 0
      %5843 = vmatprep.subr.bf16.mxu0 0
      %5844 = vmatpush1.bf16.xpose.msra.mxu0 0
      %5845 = vmatprep.subr.bf16.mxu0 0
      %5846 = vmatpush1.bf16.xpose.msra.mxu0 0
      %5847 = vmatprep.subr.bf16.mxu0 0
      %5848 = vmatpush1.bf16.xpose.msra.mxu0 0
      %5849 = vmatprep.subr.bf16.mxu0 0
      %5850 = vmatpush1.bf16.xpose.msra.mxu0 0
      %5851 = vmatprep.subr.bf16.mxu0 0
      %5852 = vmatpush1.bf16.xpose.msra.mxu0 0
      %5853 = vmatprep.subr.bf16.mxu0 0
      %5854 = vmatpush1.bf16.xpose.msra.mxu0 0
      %5855 = vmatprep.subr.bf16.mxu0 0
      %5856 = vmatpush1.bf16.xpose.msra.mxu0 0
      %5857 = vmatprep.mubr.bf16.mxu0 0
      %5858 = vmatmul.mubr.bf16.gmra.mrb[0].mxu0 %v5820
      %v5859 = vpop.f32.mrb[0].mxu0
      %v5860 = vadd.f32 0.0, %v5859
      %v5861 = vpop.f32.mrb[0].mxu0
      %v5862 = vpop.f32.mrb[0].mxu0
      %v5863 = vpop.f32.mrb[0].mxu0
      %5864 = vdwg.mxu0
      %5866 = vrot.lane.b32.xlu0 %v3449, 96
      %v5867 = vpop.permute.xlu0 %5866
      %v5869 = vsel %vm1830, %v3449, 0
      %v5872 = vsel %vm1830, %v5867, 0
      %5874 = vmatprep.subr.bf16.mxu0 0
      %5875 = vmatpush1.bf16.xpose.msra.mxu0 %v5872
      %5876 = vmatprep.subr.bf16.mxu0 0
      %5877 = vmatpush1.bf16.xpose.msra.mxu0 0
      %5878 = vmatprep.subr.bf16.mxu0 0
      %5879 = vmatpush1.bf16.xpose.msra.mxu0 0
      %5880 = vmatprep.subr.bf16.mxu0 0
      %5881 = vmatpush1.bf16.xpose.msra.mxu0 0
      %5882 = vmatprep.subr.bf16.mxu0 0
      %5883 = vmatpush1.bf16.xpose.msra.mxu0 0
      %5884 = vmatprep.subr.bf16.mxu0 0
      %5885 = vmatpush1.bf16.xpose.msra.mxu0 0
      %5886 = vmatprep.subr.bf16.mxu0 0
      %5887 = vmatpush1.bf16.xpose.msra.mxu0 0
      %5888 = vmatprep.subr.bf16.mxu0 0
      %5889 = vmatpush1.bf16.xpose.msra.mxu0 0
      %5890 = vmatprep.subr.bf16.mxu0 0
      %5891 = vmatpush1.bf16.xpose.msra.mxu0 0
      %5892 = vmatprep.subr.bf16.mxu0 0
      %5893 = vmatpush1.bf16.xpose.msra.mxu0 0
      %5894 = vmatprep.subr.bf16.mxu0 0
      %5895 = vmatpush1.bf16.xpose.msra.mxu0 0
      %5896 = vmatprep.subr.bf16.mxu0 0
      %5897 = vmatpush1.bf16.xpose.msra.mxu0 0
      %5898 = vmatprep.subr.bf16.mxu0 0
      %5899 = vmatpush1.bf16.xpose.msra.mxu0 0
      %5900 = vmatprep.subr.bf16.mxu0 0
      %5901 = vmatpush1.bf16.xpose.msra.mxu0 0
      %5902 = vmatprep.subr.bf16.mxu0 0
      %5903 = vmatpush1.bf16.xpose.msra.mxu0 0
      %5904 = vmatprep.subr.bf16.mxu0 0
      %5905 = vmatpush1.bf16.xpose.msra.mxu0 0
      %5906 = vmatprep.mubr.bf16.mxu0 0
      %5907 = vmatmul.mubr.bf16.gmra.mrb[0].mxu0 %v5869
      %v5908 = vpop.f32.mrb[0].mxu0
      %v5909 = vadd.f32 0.0, %v5908
      %v5910 = vpop.f32.mrb[0].mxu0
      %v5911 = vpop.f32.mrb[0].mxu0
      %v5912 = vpop.f32.mrb[0].mxu0
      %5913 = vdwg.mxu0
      %5915 = vrot.lane.b32.xlu0 %v3450, 96
      %v5916 = vpop.permute.xlu0 %5915
      %v5918 = vsel %vm1830, %v3450, 0
      %v5921 = vsel %vm1830, %v5916, 0
      %5923 = vmatprep.subr.bf16.mxu0 0
      %5924 = vmatpush1.bf16.xpose.msra.mxu0 %v5921
      %5925 = vmatprep.subr.bf16.mxu0 0
      %5926 = vmatpush1.bf16.xpose.msra.mxu0 0
      %5927 = vmatprep.subr.bf16.mxu0 0
      %5928 = vmatpush1.bf16.xpose.msra.mxu0 0
      %5929 = vmatprep.subr.bf16.mxu0 0
      %5930 = vmatpush1.bf16.xpose.msra.mxu0 0
      %5931 = vmatprep.subr.bf16.mxu0 0
      %5932 = vmatpush1.bf16.xpose.msra.mxu0 0
      %5933 = vmatprep.subr.bf16.mxu0 0
      %5934 = vmatpush1.bf16.xpose.msra.mxu0 0
      %5935 = vmatprep.subr.bf16.mxu0 0
      %5936 = vmatpush1.bf16.xpose.msra.mxu0 0
      %5937 = vmatprep.subr.bf16.mxu0 0
      %5938 = vmatpush1.bf16.xpose.msra.mxu0 0
      %5939 = vmatprep.subr.bf16.mxu0 0
      %5940 = vmatpush1.bf16.xpose.msra.mxu0 0
      %5941 = vmatprep.subr.bf16.mxu0 0
      %5942 = vmatpush1.bf16.xpose.msra.mxu0 0
      %5943 = vmatprep.subr.bf16.mxu0 0
      %5944 = vmatpush1.bf16.xpose.msra.mxu0 0
      %5945 = vmatprep.subr.bf16.mxu0 0
      %5946 = vmatpush1.bf16.xpose.msra.mxu0 0
      %5947 = vmatprep.subr.bf16.mxu0 0
      %5948 = vmatpush1.bf16.xpose.msra.mxu0 0
      %5949 = vmatprep.subr.bf16.mxu0 0
      %5950 = vmatpush1.bf16.xpose.msra.mxu0 0
      %5951 = vmatprep.subr.bf16.mxu0 0
      %5952 = vmatpush1.bf16.xpose.msra.mxu0 0
      %5953 = vmatprep.subr.bf16.mxu0 0
      %5954 = vmatpush1.bf16.xpose.msra.mxu0 0
      %5955 = vmatprep.mubr.bf16.mxu0 0
      %5956 = vmatmul.mubr.bf16.gmra.mrb[0].mxu0 %v5918
      %v5957 = vpop.f32.mrb[0].mxu0
      %v5958 = vadd.f32 0.0, %v5957
      %v5959 = vpop.f32.mrb[0].mxu0
      %v5960 = vpop.f32.mrb[0].mxu0
      %v5961 = vpop.f32.mrb[0].mxu0
      %5962 = vdwg.mxu0
      %5964 = vrot.lane.b32.xlu0 %v3451, 96
      %v5965 = vpop.permute.xlu0 %5964
      %v5967 = vsel %vm1830, %v3451, 0
      %v5970 = vsel %vm1830, %v5965, 0
      %5972 = vmatprep.subr.bf16.mxu0 0
      %5973 = vmatpush1.bf16.xpose.msra.mxu0 %v5970
      %5974 = vmatprep.subr.bf16.mxu0 0
      %5975 = vmatpush1.bf16.xpose.msra.mxu0 0
      %5976 = vmatprep.subr.bf16.mxu0 0
      %5977 = vmatpush1.bf16.xpose.msra.mxu0 0
      %5978 = vmatprep.subr.bf16.mxu0 0
      %5979 = vmatpush1.bf16.xpose.msra.mxu0 0
      %5980 = vmatprep.subr.bf16.mxu0 0
      %5981 = vmatpush1.bf16.xpose.msra.mxu0 0
      %5982 = vmatprep.subr.bf16.mxu0 0
      %5983 = vmatpush1.bf16.xpose.msra.mxu0 0
      %5984 = vmatprep.subr.bf16.mxu0 0
      %5985 = vmatpush1.bf16.xpose.msra.mxu0 0
      %5986 = vmatprep.subr.bf16.mxu0 0
      %5987 = vmatpush1.bf16.xpose.msra.mxu0 0
      %5988 = vmatprep.subr.bf16.mxu0 0
      %5989 = vmatpush1.bf16.xpose.msra.mxu0 0
      %5990 = vmatprep.subr.bf16.mxu0 0
      %5991 = vmatpush1.bf16.xpose.msra.mxu0 0
      %5992 = vmatprep.subr.bf16.mxu0 0
      %5993 = vmatpush1.bf16.xpose.msra.mxu0 0
      %5994 = vmatprep.subr.bf16.mxu0 0
      %5995 = vmatpush1.bf16.xpose.msra.mxu0 0
      %5996 = vmatprep.subr.bf16.mxu0 0
      %5997 = vmatpush1.bf16.xpose.msra.mxu0 0
      %5998 = vmatprep.subr.bf16.mxu0 0
      %5999 = vmatpush1.bf16.xpose.msra.mxu0 0
      %6000 = vmatprep.subr.bf16.mxu0 0
      %6001 = vmatpush1.bf16.xpose.msra.mxu0 0
      %6002 = vmatprep.subr.bf16.mxu0 0
      %6003 = vmatpush1.bf16.xpose.msra.mxu0 0
      %6004 = vmatprep.mubr.bf16.mxu0 0
      %6005 = vmatmul.mubr.bf16.gmra.mrb[0].mxu0 %v5967
      %v6006 = vpop.f32.mrb[0].mxu0
      %v6007 = vadd.f32 0.0, %v6006
      %v6008 = vpop.f32.mrb[0].mxu0
      %v6009 = vpop.f32.mrb[0].mxu0
      %v6010 = vpop.f32.mrb[0].mxu0
      %6011 = vdwg.mxu0
      %6013 = vrot.lane.b32.xlu0 %v3452, 96
      %v6014 = vpop.permute.xlu0 %6013
      %v6016 = vsel %vm1830, %v3452, 0
      %v6019 = vsel %vm1830, %v6014, 0
      %6021 = vmatprep.subr.bf16.mxu0 0
      %6022 = vmatpush1.bf16.xpose.msra.mxu0 %v6019
      %6023 = vmatprep.subr.bf16.mxu0 0
      %6024 = vmatpush1.bf16.xpose.msra.mxu0 0
      %6025 = vmatprep.subr.bf16.mxu0 0
      %6026 = vmatpush1.bf16.xpose.msra.mxu0 0
      %6027 = vmatprep.subr.bf16.mxu0 0
      %6028 = vmatpush1.bf16.xpose.msra.mxu0 0
      %6029 = vmatprep.subr.bf16.mxu0 0
      %6030 = vmatpush1.bf16.xpose.msra.mxu0 0
      %6031 = vmatprep.subr.bf16.mxu0 0
      %6032 = vmatpush1.bf16.xpose.msra.mxu0 0
      %6033 = vmatprep.subr.bf16.mxu0 0
      %6034 = vmatpush1.bf16.xpose.msra.mxu0 0
      %6035 = vmatprep.subr.bf16.mxu0 0
      %6036 = vmatpush1.bf16.xpose.msra.mxu0 0
      %6037 = vmatprep.subr.bf16.mxu0 0
      %6038 = vmatpush1.bf16.xpose.msra.mxu0 0
      %6039 = vmatprep.subr.bf16.mxu0 0
      %6040 = vmatpush1.bf16.xpose.msra.mxu0 0
      %6041 = vmatprep.subr.bf16.mxu0 0
      %6042 = vmatpush1.bf16.xpose.msra.mxu0 0
      %6043 = vmatprep.subr.bf16.mxu0 0
      %6044 = vmatpush1.bf16.xpose.msra.mxu0 0
      %6045 = vmatprep.subr.bf16.mxu0 0
      %6046 = vmatpush1.bf16.xpose.msra.mxu0 0
      %6047 = vmatprep.subr.bf16.mxu0 0
      %6048 = vmatpush1.bf16.xpose.msra.mxu0 0
      %6049 = vmatprep.subr.bf16.mxu0 0
      %6050 = vmatpush1.bf16.xpose.msra.mxu0 0
      %6051 = vmatprep.subr.bf16.mxu0 0
      %6052 = vmatpush1.bf16.xpose.msra.mxu0 0
      %6053 = vmatprep.mubr.bf16.mxu0 0
      %6054 = vmatmul.mubr.bf16.gmra.mrb[0].mxu0 %v6016
      %v6055 = vpop.f32.mrb[0].mxu0
      %v6056 = vadd.f32 0.0, %v6055
      %v6057 = vpop.f32.mrb[0].mxu0
      %v6058 = vpop.f32.mrb[0].mxu0
      %v6059 = vpop.f32.mrb[0].mxu0
      %6060 = vdwg.mxu0
      %6062 = vrot.lane.b32.xlu0 %v3453, 96
      %v6063 = vpop.permute.xlu0 %6062
      %v6065 = vsel %vm1830, %v3453, 0
      %v6068 = vsel %vm1830, %v6063, 0
      %6070 = vmatprep.subr.bf16.mxu0 0
      %6071 = vmatpush1.bf16.xpose.msra.mxu0 %v6068
      %6072 = vmatprep.subr.bf16.mxu0 0
      %6073 = vmatpush1.bf16.xpose.msra.mxu0 0
      %6074 = vmatprep.subr.bf16.mxu0 0
      %6075 = vmatpush1.bf16.xpose.msra.mxu0 0
      %6076 = vmatprep.subr.bf16.mxu0 0
      %6077 = vmatpush1.bf16.xpose.msra.mxu0 0
      %6078 = vmatprep.subr.bf16.mxu0 0
      %6079 = vmatpush1.bf16.xpose.msra.mxu0 0
      %6080 = vmatprep.subr.bf16.mxu0 0
      %6081 = vmatpush1.bf16.xpose.msra.mxu0 0
      %6082 = vmatprep.subr.bf16.mxu0 0
      %6083 = vmatpush1.bf16.xpose.msra.mxu0 0
      %6084 = vmatprep.subr.bf16.mxu0 0
      %6085 = vmatpush1.bf16.xpose.msra.mxu0 0
      %6086 = vmatprep.subr.bf16.mxu0 0
      %6087 = vmatpush1.bf16.xpose.msra.mxu0 0
      %6088 = vmatprep.subr.bf16.mxu0 0
      %6089 = vmatpush1.bf16.xpose.msra.mxu0 0
      %6090 = vmatprep.subr.bf16.mxu0 0
      %6091 = vmatpush1.bf16.xpose.msra.mxu0 0
      %6092 = vmatprep.subr.bf16.mxu0 0
      %6093 = vmatpush1.bf16.xpose.msra.mxu0 0
      %6094 = vmatprep.subr.bf16.mxu0 0
      %6095 = vmatpush1.bf16.xpose.msra.mxu0 0
      %6096 = vmatprep.subr.bf16.mxu0 0
      %6097 = vmatpush1.bf16.xpose.msra.mxu0 0
      %6098 = vmatprep.subr.bf16.mxu0 0
      %6099 = vmatpush1.bf16.xpose.msra.mxu0 0
      %6100 = vmatprep.subr.bf16.mxu0 0
      %6101 = vmatpush1.bf16.xpose.msra.mxu0 0
      %6102 = vmatprep.mubr.bf16.mxu0 0
      %6103 = vmatmul.mubr.bf16.gmra.mrb[0].mxu0 %v6065
      %v6104 = vpop.f32.mrb[0].mxu0
      %v6105 = vadd.f32 0.0, %v6104
      %v6106 = vpop.f32.mrb[0].mxu0
      %v6107 = vpop.f32.mrb[0].mxu0
      %v6108 = vpop.f32.mrb[0].mxu0
      %6109 = vdwg.mxu0
      %6111 = vrot.lane.b32.xlu0 %v3454, 96
      %v6112 = vpop.permute.xlu0 %6111
      %v6114 = vsel %vm1830, %v3454, 0
      %v6117 = vsel %vm1830, %v6112, 0
      %6119 = vmatprep.subr.bf16.mxu0 0
      %6120 = vmatpush1.bf16.xpose.msra.mxu0 %v6117
      %6121 = vmatprep.subr.bf16.mxu0 0
      %6122 = vmatpush1.bf16.xpose.msra.mxu0 0
      %6123 = vmatprep.subr.bf16.mxu0 0
      %6124 = vmatpush1.bf16.xpose.msra.mxu0 0
      %6125 = vmatprep.subr.bf16.mxu0 0
      %6126 = vmatpush1.bf16.xpose.msra.mxu0 0
      %6127 = vmatprep.subr.bf16.mxu0 0
      %6128 = vmatpush1.bf16.xpose.msra.mxu0 0
      %6129 = vmatprep.subr.bf16.mxu0 0
      %6130 = vmatpush1.bf16.xpose.msra.mxu0 0
      %6131 = vmatprep.subr.bf16.mxu0 0
      %6132 = vmatpush1.bf16.xpose.msra.mxu0 0
      %6133 = vmatprep.subr.bf16.mxu0 0
      %6134 = vmatpush1.bf16.xpose.msra.mxu0 0
      %6135 = vmatprep.subr.bf16.mxu0 0
      %6136 = vmatpush1.bf16.xpose.msra.mxu0 0
      %6137 = vmatprep.subr.bf16.mxu0 0
      %6138 = vmatpush1.bf16.xpose.msra.mxu0 0
      %6139 = vmatprep.subr.bf16.mxu0 0
      %6140 = vmatpush1.bf16.xpose.msra.mxu0 0
      %6141 = vmatprep.subr.bf16.mxu0 0
      %6142 = vmatpush1.bf16.xpose.msra.mxu0 0
      %6143 = vmatprep.subr.bf16.mxu0 0
      %6144 = vmatpush1.bf16.xpose.msra.mxu0 0
      %6145 = vmatprep.subr.bf16.mxu0 0
      %6146 = vmatpush1.bf16.xpose.msra.mxu0 0
      %6147 = vmatprep.subr.bf16.mxu0 0
      %6148 = vmatpush1.bf16.xpose.msra.mxu0 0
      %6149 = vmatprep.subr.bf16.mxu0 0
      %6150 = vmatpush1.bf16.xpose.msra.mxu0 0
      %6151 = vmatprep.mubr.bf16.mxu0 0
      %6152 = vmatmul.mubr.bf16.gmra.mrb[0].mxu0 %v6114
      %v6153 = vpop.f32.mrb[0].mxu0
      %v6154 = vadd.f32 0.0, %v6153
      %v6155 = vpop.f32.mrb[0].mxu0
      %v6156 = vpop.f32.mrb[0].mxu0
      %v6157 = vpop.f32.mrb[0].mxu0
      %6158 = vdwg.mxu0
      %6160 = vrot.lane.b32.xlu0 %v3455, 96
      %v6161 = vpop.permute.xlu0 %6160
      %v6163 = vsel %vm1830, %v3455, 0
      %v6166 = vsel %vm1830, %v6161, 0
      %6168 = vmatprep.subr.bf16.mxu0 0
      %6169 = vmatpush1.bf16.xpose.msra.mxu0 %v6166
      %6170 = vmatprep.subr.bf16.mxu0 0
      %6171 = vmatpush1.bf16.xpose.msra.mxu0 0
      %6172 = vmatprep.subr.bf16.mxu0 0
      %6173 = vmatpush1.bf16.xpose.msra.mxu0 0
      %6174 = vmatprep.subr.bf16.mxu0 0
      %6175 = vmatpush1.bf16.xpose.msra.mxu0 0
      %6176 = vmatprep.subr.bf16.mxu0 0
      %6177 = vmatpush1.bf16.xpose.msra.mxu0 0
      %6178 = vmatprep.subr.bf16.mxu0 0
      %6179 = vmatpush1.bf16.xpose.msra.mxu0 0
      %6180 = vmatprep.subr.bf16.mxu0 0
      %6181 = vmatpush1.bf16.xpose.msra.mxu0 0
      %6182 = vmatprep.subr.bf16.mxu0 0
      %6183 = vmatpush1.bf16.xpose.msra.mxu0 0
      %6184 = vmatprep.subr.bf16.mxu0 0
      %6185 = vmatpush1.bf16.xpose.msra.mxu0 0
      %6186 = vmatprep.subr.bf16.mxu0 0
      %6187 = vmatpush1.bf16.xpose.msra.mxu0 0
      %6188 = vmatprep.subr.bf16.mxu0 0
      %6189 = vmatpush1.bf16.xpose.msra.mxu0 0
      %6190 = vmatprep.subr.bf16.mxu0 0
      %6191 = vmatpush1.bf16.xpose.msra.mxu0 0
      %6192 = vmatprep.subr.bf16.mxu0 0
      %6193 = vmatpush1.bf16.xpose.msra.mxu0 0
      %6194 = vmatprep.subr.bf16.mxu0 0
      %6195 = vmatpush1.bf16.xpose.msra.mxu0 0
      %6196 = vmatprep.subr.bf16.mxu0 0
      %6197 = vmatpush1.bf16.xpose.msra.mxu0 0
      %6198 = vmatprep.subr.bf16.mxu0 0
      %6199 = vmatpush1.bf16.xpose.msra.mxu0 0
      %6200 = vmatprep.mubr.bf16.mxu0 0
      %6201 = vmatmul.mubr.bf16.gmra.mrb[0].mxu0 %v6163
      %v6202 = vpop.f32.mrb[0].mxu0
      %v6203 = vadd.f32 0.0, %v6202
      %v6204 = vpop.f32.mrb[0].mxu0
      %v6205 = vpop.f32.mrb[0].mxu0
      %v6206 = vpop.f32.mrb[0].mxu0
      %6207 = vdwg.mxu0
      %6209 = vrot.lane.b32.xlu0 %v3456, 96
      %v6210 = vpop.permute.xlu0 %6209
      %v6212 = vsel %vm1830, %v3456, 0
      %v6215 = vsel %vm1830, %v6210, 0
      %6217 = vmatprep.subr.bf16.mxu0 0
      %6218 = vmatpush1.bf16.xpose.msra.mxu0 %v6215
      %6219 = vmatprep.subr.bf16.mxu0 0
      %6220 = vmatpush1.bf16.xpose.msra.mxu0 0
      %6221 = vmatprep.subr.bf16.mxu0 0
      %6222 = vmatpush1.bf16.xpose.msra.mxu0 0
      %6223 = vmatprep.subr.bf16.mxu0 0
      %6224 = vmatpush1.bf16.xpose.msra.mxu0 0
      %6225 = vmatprep.subr.bf16.mxu0 0
      %6226 = vmatpush1.bf16.xpose.msra.mxu0 0
      %6227 = vmatprep.subr.bf16.mxu0 0
      %6228 = vmatpush1.bf16.xpose.msra.mxu0 0
      %6229 = vmatprep.subr.bf16.mxu0 0
      %6230 = vmatpush1.bf16.xpose.msra.mxu0 0
      %6231 = vmatprep.subr.bf16.mxu0 0
      %6232 = vmatpush1.bf16.xpose.msra.mxu0 0
      %6233 = vmatprep.subr.bf16.mxu0 0
      %6234 = vmatpush1.bf16.xpose.msra.mxu0 0
      %6235 = vmatprep.subr.bf16.mxu0 0
      %6236 = vmatpush1.bf16.xpose.msra.mxu0 0
      %6237 = vmatprep.subr.bf16.mxu0 0
      %6238 = vmatpush1.bf16.xpose.msra.mxu0 0
      %6239 = vmatprep.subr.bf16.mxu0 0
      %6240 = vmatpush1.bf16.xpose.msra.mxu0 0
      %6241 = vmatprep.subr.bf16.mxu0 0
      %6242 = vmatpush1.bf16.xpose.msra.mxu0 0
      %6243 = vmatprep.subr.bf16.mxu0 0
      %6244 = vmatpush1.bf16.xpose.msra.mxu0 0
      %6245 = vmatprep.subr.bf16.mxu0 0
      %6246 = vmatpush1.bf16.xpose.msra.mxu0 0
      %6247 = vmatprep.subr.bf16.mxu0 0
      %6248 = vmatpush1.bf16.xpose.msra.mxu0 0
      %6249 = vmatprep.mubr.bf16.mxu0 0
      %6250 = vmatmul.mubr.bf16.gmra.mrb[0].mxu0 %v6212
      %v6251 = vpop.f32.mrb[0].mxu0
      %v6252 = vadd.f32 0.0, %v6251
      %v6253 = vpop.f32.mrb[0].mxu0
      %v6254 = vpop.f32.mrb[0].mxu0
      %v6255 = vpop.f32.mrb[0].mxu0
      %6256 = vdwg.mxu0
      %6258 = vrot.lane.b32.xlu0 %v3457, 96
      %v6259 = vpop.permute.xlu0 %6258
      %v6261 = vsel %vm1830, %v3457, 0
      %v6264 = vsel %vm1830, %v6259, 0
      %6266 = vmatprep.subr.bf16.mxu0 0
      %6267 = vmatpush1.bf16.xpose.msra.mxu0 %v6264
      %6268 = vmatprep.subr.bf16.mxu0 0
      %6269 = vmatpush1.bf16.xpose.msra.mxu0 0
      %6270 = vmatprep.subr.bf16.mxu0 0
      %6271 = vmatpush1.bf16.xpose.msra.mxu0 0
      %6272 = vmatprep.subr.bf16.mxu0 0
      %6273 = vmatpush1.bf16.xpose.msra.mxu0 0
      %6274 = vmatprep.subr.bf16.mxu0 0
      %6275 = vmatpush1.bf16.xpose.msra.mxu0 0
      %6276 = vmatprep.subr.bf16.mxu0 0
      %6277 = vmatpush1.bf16.xpose.msra.mxu0 0
      %6278 = vmatprep.subr.bf16.mxu0 0
      %6279 = vmatpush1.bf16.xpose.msra.mxu0 0
      %6280 = vmatprep.subr.bf16.mxu0 0
      %6281 = vmatpush1.bf16.xpose.msra.mxu0 0
      %6282 = vmatprep.subr.bf16.mxu0 0
      %6283 = vmatpush1.bf16.xpose.msra.mxu0 0
      %6284 = vmatprep.subr.bf16.mxu0 0
      %6285 = vmatpush1.bf16.xpose.msra.mxu0 0
      %6286 = vmatprep.subr.bf16.mxu0 0
      %6287 = vmatpush1.bf16.xpose.msra.mxu0 0
      %6288 = vmatprep.subr.bf16.mxu0 0
      %6289 = vmatpush1.bf16.xpose.msra.mxu0 0
      %6290 = vmatprep.subr.bf16.mxu0 0
      %6291 = vmatpush1.bf16.xpose.msra.mxu0 0
      %6292 = vmatprep.subr.bf16.mxu0 0
      %6293 = vmatpush1.bf16.xpose.msra.mxu0 0
      %6294 = vmatprep.subr.bf16.mxu0 0
      %6295 = vmatpush1.bf16.xpose.msra.mxu0 0
      %6296 = vmatprep.subr.bf16.mxu0 0
      %6297 = vmatpush1.bf16.xpose.msra.mxu0 0
      %6298 = vmatprep.mubr.bf16.mxu0 0
      %6299 = vmatmul.mubr.bf16.gmra.mrb[0].mxu0 %v6261
      %v6300 = vpop.f32.mrb[0].mxu0
      %v6301 = vadd.f32 0.0, %v6300
      %v6302 = vpop.f32.mrb[0].mxu0
      %v6303 = vpop.f32.mrb[0].mxu0
      %v6304 = vpop.f32.mrb[0].mxu0
      %6305 = vdwg.mxu0
      %6307 = vrot.lane.b32.xlu0 %v3458, 96
      %v6308 = vpop.permute.xlu0 %6307
      %v6310 = vsel %vm1830, %v3458, 0
      %v6313 = vsel %vm1830, %v6308, 0
      %6315 = vmatprep.subr.bf16.mxu0 0
      %6316 = vmatpush1.bf16.xpose.msra.mxu0 %v6313
      %6317 = vmatprep.subr.bf16.mxu0 0
      %6318 = vmatpush1.bf16.xpose.msra.mxu0 0
      %6319 = vmatprep.subr.bf16.mxu0 0
      %6320 = vmatpush1.bf16.xpose.msra.mxu0 0
      %6321 = vmatprep.subr.bf16.mxu0 0
      %6322 = vmatpush1.bf16.xpose.msra.mxu0 0
      %6323 = vmatprep.subr.bf16.mxu0 0
      %6324 = vmatpush1.bf16.xpose.msra.mxu0 0
      %6325 = vmatprep.subr.bf16.mxu0 0
      %6326 = vmatpush1.bf16.xpose.msra.mxu0 0
      %6327 = vmatprep.subr.bf16.mxu0 0
      %6328 = vmatpush1.bf16.xpose.msra.mxu0 0
      %6329 = vmatprep.subr.bf16.mxu0 0
      %6330 = vmatpush1.bf16.xpose.msra.mxu0 0
      %6331 = vmatprep.subr.bf16.mxu0 0
      %6332 = vmatpush1.bf16.xpose.msra.mxu0 0
      %6333 = vmatprep.subr.bf16.mxu0 0
      %6334 = vmatpush1.bf16.xpose.msra.mxu0 0
      %6335 = vmatprep.subr.bf16.mxu0 0
      %6336 = vmatpush1.bf16.xpose.msra.mxu0 0
      %6337 = vmatprep.subr.bf16.mxu0 0
      %6338 = vmatpush1.bf16.xpose.msra.mxu0 0
      %6339 = vmatprep.subr.bf16.mxu0 0
      %6340 = vmatpush1.bf16.xpose.msra.mxu0 0
      %6341 = vmatprep.subr.bf16.mxu0 0
      %6342 = vmatpush1.bf16.xpose.msra.mxu0 0
      %6343 = vmatprep.subr.bf16.mxu0 0
      %6344 = vmatpush1.bf16.xpose.msra.mxu0 0
      %6345 = vmatprep.subr.bf16.mxu0 0
      %6346 = vmatpush1.bf16.xpose.msra.mxu0 0
      %6347 = vmatprep.mubr.bf16.mxu0 0
      %6348 = vmatmul.mubr.bf16.gmra.mrb[0].mxu0 %v6310
      %v6349 = vpop.f32.mrb[0].mxu0
      %v6350 = vadd.f32 0.0, %v6349
      %v6351 = vpop.f32.mrb[0].mxu0
      %v6352 = vpop.f32.mrb[0].mxu0
      %v6353 = vpop.f32.mrb[0].mxu0
      %6354 = vdwg.mxu0
      %6356 = vrot.lane.b32.xlu0 %v3459, 96
      %v6357 = vpop.permute.xlu0 %6356
      %v6359 = vsel %vm1830, %v3459, 0
      %v6362 = vsel %vm1830, %v6357, 0
      %6364 = vmatprep.subr.bf16.mxu0 0
      %6365 = vmatpush1.bf16.xpose.msra.mxu0 %v6362
      %6366 = vmatprep.subr.bf16.mxu0 0
      %6367 = vmatpush1.bf16.xpose.msra.mxu0 0
      %6368 = vmatprep.subr.bf16.mxu0 0
      %6369 = vmatpush1.bf16.xpose.msra.mxu0 0
      %6370 = vmatprep.subr.bf16.mxu0 0
      %6371 = vmatpush1.bf16.xpose.msra.mxu0 0
      %6372 = vmatprep.subr.bf16.mxu0 0
      %6373 = vmatpush1.bf16.xpose.msra.mxu0 0
      %6374 = vmatprep.subr.bf16.mxu0 0
      %6375 = vmatpush1.bf16.xpose.msra.mxu0 0
      %6376 = vmatprep.subr.bf16.mxu0 0
      %6377 = vmatpush1.bf16.xpose.msra.mxu0 0
      %6378 = vmatprep.subr.bf16.mxu0 0
      %6379 = vmatpush1.bf16.xpose.msra.mxu0 0
      %6380 = vmatprep.subr.bf16.mxu0 0
      %6381 = vmatpush1.bf16.xpose.msra.mxu0 0
      %6382 = vmatprep.subr.bf16.mxu0 0
      %6383 = vmatpush1.bf16.xpose.msra.mxu0 0
      %6384 = vmatprep.subr.bf16.mxu0 0
      %6385 = vmatpush1.bf16.xpose.msra.mxu0 0
      %6386 = vmatprep.subr.bf16.mxu0 0
      %6387 = vmatpush1.bf16.xpose.msra.mxu0 0
      %6388 = vmatprep.subr.bf16.mxu0 0
      %6389 = vmatpush1.bf16.xpose.msra.mxu0 0
      %6390 = vmatprep.subr.bf16.mxu0 0
      %6391 = vmatpush1.bf16.xpose.msra.mxu0 0
      %6392 = vmatprep.subr.bf16.mxu0 0
      %6393 = vmatpush1.bf16.xpose.msra.mxu0 0
      %6394 = vmatprep.subr.bf16.mxu0 0
      %6395 = vmatpush1.bf16.xpose.msra.mxu0 0
      %6396 = vmatprep.mubr.bf16.mxu0 0
      %6397 = vmatmul.mubr.bf16.gmra.mrb[0].mxu0 %v6359
      %v6398 = vpop.f32.mrb[0].mxu0
      %v6399 = vadd.f32 0.0, %v6398
      %v6400 = vpop.f32.mrb[0].mxu0
      %v6401 = vpop.f32.mrb[0].mxu0
      %v6402 = vpop.f32.mrb[0].mxu0
      %6403 = vdwg.mxu0
      %6405 = vrot.lane.b32.xlu0 %v3460, 96
      %v6406 = vpop.permute.xlu0 %6405
      %v6408 = vsel %vm1830, %v3460, 0
      %v6411 = vsel %vm1830, %v6406, 0
      %6413 = vmatprep.subr.bf16.mxu0 0
      %6414 = vmatpush1.bf16.xpose.msra.mxu0 %v6411
      %6415 = vmatprep.subr.bf16.mxu0 0
      %6416 = vmatpush1.bf16.xpose.msra.mxu0 0
      %6417 = vmatprep.subr.bf16.mxu0 0
      %6418 = vmatpush1.bf16.xpose.msra.mxu0 0
      %6419 = vmatprep.subr.bf16.mxu0 0
      %6420 = vmatpush1.bf16.xpose.msra.mxu0 0
      %6421 = vmatprep.subr.bf16.mxu0 0
      %6422 = vmatpush1.bf16.xpose.msra.mxu0 0
      %6423 = vmatprep.subr.bf16.mxu0 0
      %6424 = vmatpush1.bf16.xpose.msra.mxu0 0
      %6425 = vmatprep.subr.bf16.mxu0 0
      %6426 = vmatpush1.bf16.xpose.msra.mxu0 0
      %6427 = vmatprep.subr.bf16.mxu0 0
      %6428 = vmatpush1.bf16.xpose.msra.mxu0 0
      %6429 = vmatprep.subr.bf16.mxu0 0
      %6430 = vmatpush1.bf16.xpose.msra.mxu0 0
      %6431 = vmatprep.subr.bf16.mxu0 0
      %6432 = vmatpush1.bf16.xpose.msra.mxu0 0
      %6433 = vmatprep.subr.bf16.mxu0 0
      %6434 = vmatpush1.bf16.xpose.msra.mxu0 0
      %6435 = vmatprep.subr.bf16.mxu0 0
      %6436 = vmatpush1.bf16.xpose.msra.mxu0 0
      %6437 = vmatprep.subr.bf16.mxu0 0
      %6438 = vmatpush1.bf16.xpose.msra.mxu0 0
      %6439 = vmatprep.subr.bf16.mxu0 0
      %6440 = vmatpush1.bf16.xpose.msra.mxu0 0
      %6441 = vmatprep.subr.bf16.mxu0 0
      %6442 = vmatpush1.bf16.xpose.msra.mxu0 0
      %6443 = vmatprep.subr.bf16.mxu0 0
      %6444 = vmatpush1.bf16.xpose.msra.mxu0 0
      %6445 = vmatprep.mubr.bf16.mxu0 0
      %6446 = vmatmul.mubr.bf16.gmra.mrb[0].mxu0 %v6408
      %v6447 = vpop.f32.mrb[0].mxu0
      %v6448 = vadd.f32 0.0, %v6447
      %v6449 = vpop.f32.mrb[0].mxu0
      %v6450 = vpop.f32.mrb[0].mxu0
      %v6451 = vpop.f32.mrb[0].mxu0
      %6452 = vdwg.mxu0
      %6454 = vrot.lane.b32.xlu0 %v3461, 96
      %v6455 = vpop.permute.xlu0 %6454
      %v6457 = vsel %vm1830, %v3461, 0
      %v6460 = vsel %vm1830, %v6455, 0
      %6462 = vmatprep.subr.bf16.mxu0 0
      %6463 = vmatpush1.bf16.xpose.msra.mxu0 %v6460
      %6464 = vmatprep.subr.bf16.mxu0 0
      %6465 = vmatpush1.bf16.xpose.msra.mxu0 0
      %6466 = vmatprep.subr.bf16.mxu0 0
      %6467 = vmatpush1.bf16.xpose.msra.mxu0 0
      %6468 = vmatprep.subr.bf16.mxu0 0
      %6469 = vmatpush1.bf16.xpose.msra.mxu0 0
      %6470 = vmatprep.subr.bf16.mxu0 0
      %6471 = vmatpush1.bf16.xpose.msra.mxu0 0
      %6472 = vmatprep.subr.bf16.mxu0 0
      %6473 = vmatpush1.bf16.xpose.msra.mxu0 0
      %6474 = vmatprep.subr.bf16.mxu0 0
      %6475 = vmatpush1.bf16.xpose.msra.mxu0 0
      %6476 = vmatprep.subr.bf16.mxu0 0
      %6477 = vmatpush1.bf16.xpose.msra.mxu0 0
      %6478 = vmatprep.subr.bf16.mxu0 0
      %6479 = vmatpush1.bf16.xpose.msra.mxu0 0
      %6480 = vmatprep.subr.bf16.mxu0 0
      %6481 = vmatpush1.bf16.xpose.msra.mxu0 0
      %6482 = vmatprep.subr.bf16.mxu0 0
      %6483 = vmatpush1.bf16.xpose.msra.mxu0 0
      %6484 = vmatprep.subr.bf16.mxu0 0
      %6485 = vmatpush1.bf16.xpose.msra.mxu0 0
      %6486 = vmatprep.subr.bf16.mxu0 0
      %6487 = vmatpush1.bf16.xpose.msra.mxu0 0
      %6488 = vmatprep.subr.bf16.mxu0 0
      %6489 = vmatpush1.bf16.xpose.msra.mxu0 0
      %6490 = vmatprep.subr.bf16.mxu0 0
      %6491 = vmatpush1.bf16.xpose.msra.mxu0 0
      %6492 = vmatprep.subr.bf16.mxu0 0
      %6493 = vmatpush1.bf16.xpose.msra.mxu0 0
      %6494 = vmatprep.mubr.bf16.mxu0 0
      %6495 = vmatmul.mubr.bf16.gmra.mrb[0].mxu0 %v6457
      %v6496 = vpop.f32.mrb[0].mxu0
      %v6497 = vadd.f32 0.0, %v6496
      %v6498 = vpop.f32.mrb[0].mxu0
      %v6499 = vpop.f32.mrb[0].mxu0
      %v6500 = vpop.f32.mrb[0].mxu0
      %6501 = vdwg.mxu0
      %6503 = vrot.lane.b32.xlu0 %v3462, 96
      %v6504 = vpop.permute.xlu0 %6503
      %v6506 = vsel %vm1830, %v3462, 0
      %v6509 = vsel %vm1830, %v6504, 0
      %6511 = vmatprep.subr.bf16.mxu0 0
      %6512 = vmatpush1.bf16.xpose.msra.mxu0 %v6509
      %6513 = vmatprep.subr.bf16.mxu0 0
      %6514 = vmatpush1.bf16.xpose.msra.mxu0 0
      %6515 = vmatprep.subr.bf16.mxu0 0
      %6516 = vmatpush1.bf16.xpose.msra.mxu0 0
      %6517 = vmatprep.subr.bf16.mxu0 0
      %6518 = vmatpush1.bf16.xpose.msra.mxu0 0
      %6519 = vmatprep.subr.bf16.mxu0 0
      %6520 = vmatpush1.bf16.xpose.msra.mxu0 0
      %6521 = vmatprep.subr.bf16.mxu0 0
      %6522 = vmatpush1.bf16.xpose.msra.mxu0 0
      %6523 = vmatprep.subr.bf16.mxu0 0
      %6524 = vmatpush1.bf16.xpose.msra.mxu0 0
      %6525 = vmatprep.subr.bf16.mxu0 0
      %6526 = vmatpush1.bf16.xpose.msra.mxu0 0
      %6527 = vmatprep.subr.bf16.mxu0 0
      %6528 = vmatpush1.bf16.xpose.msra.mxu0 0
      %6529 = vmatprep.subr.bf16.mxu0 0
      %6530 = vmatpush1.bf16.xpose.msra.mxu0 0
      %6531 = vmatprep.subr.bf16.mxu0 0
      %6532 = vmatpush1.bf16.xpose.msra.mxu0 0
      %6533 = vmatprep.subr.bf16.mxu0 0
      %6534 = vmatpush1.bf16.xpose.msra.mxu0 0
      %6535 = vmatprep.subr.bf16.mxu0 0
      %6536 = vmatpush1.bf16.xpose.msra.mxu0 0
      %6537 = vmatprep.subr.bf16.mxu0 0
      %6538 = vmatpush1.bf16.xpose.msra.mxu0 0
      %6539 = vmatprep.subr.bf16.mxu0 0
      %6540 = vmatpush1.bf16.xpose.msra.mxu0 0
      %6541 = vmatprep.subr.bf16.mxu0 0
      %6542 = vmatpush1.bf16.xpose.msra.mxu0 0
      %6543 = vmatprep.mubr.bf16.mxu0 0
      %6544 = vmatmul.mubr.bf16.gmra.mrb[0].mxu0 %v6506
      %v6545 = vpop.f32.mrb[0].mxu0
      %v6546 = vadd.f32 0.0, %v6545
      %v6547 = vpop.f32.mrb[0].mxu0
      %v6548 = vpop.f32.mrb[0].mxu0
      %v6549 = vpop.f32.mrb[0].mxu0
      %6550 = vdwg.mxu0
      %6552 = vrot.lane.b32.xlu0 %v3463, 96
      %v6553 = vpop.permute.xlu0 %6552
      %v6555 = vsel %vm1830, %v3463, 0
      %v6558 = vsel %vm1830, %v6553, 0
      %6560 = vmatprep.subr.bf16.mxu0 0
      %6561 = vmatpush1.bf16.xpose.msra.mxu0 %v6558
      %6562 = vmatprep.subr.bf16.mxu0 0
      %6563 = vmatpush1.bf16.xpose.msra.mxu0 0
      %6564 = vmatprep.subr.bf16.mxu0 0
      %6565 = vmatpush1.bf16.xpose.msra.mxu0 0
      %6566 = vmatprep.subr.bf16.mxu0 0
      %6567 = vmatpush1.bf16.xpose.msra.mxu0 0
      %6568 = vmatprep.subr.bf16.mxu0 0
      %6569 = vmatpush1.bf16.xpose.msra.mxu0 0
      %6570 = vmatprep.subr.bf16.mxu0 0
      %6571 = vmatpush1.bf16.xpose.msra.mxu0 0
      %6572 = vmatprep.subr.bf16.mxu0 0
      %6573 = vmatpush1.bf16.xpose.msra.mxu0 0
      %6574 = vmatprep.subr.bf16.mxu0 0
      %6575 = vmatpush1.bf16.xpose.msra.mxu0 0
      %6576 = vmatprep.subr.bf16.mxu0 0
      %6577 = vmatpush1.bf16.xpose.msra.mxu0 0
      %6578 = vmatprep.subr.bf16.mxu0 0
      %6579 = vmatpush1.bf16.xpose.msra.mxu0 0
      %6580 = vmatprep.subr.bf16.mxu0 0
      %6581 = vmatpush1.bf16.xpose.msra.mxu0 0
      %6582 = vmatprep.subr.bf16.mxu0 0
      %6583 = vmatpush1.bf16.xpose.msra.mxu0 0
      %6584 = vmatprep.subr.bf16.mxu0 0
      %6585 = vmatpush1.bf16.xpose.msra.mxu0 0
      %6586 = vmatprep.subr.bf16.mxu0 0
      %6587 = vmatpush1.bf16.xpose.msra.mxu0 0
      %6588 = vmatprep.subr.bf16.mxu0 0
      %6589 = vmatpush1.bf16.xpose.msra.mxu0 0
      %6590 = vmatprep.subr.bf16.mxu0 0
      %6591 = vmatpush1.bf16.xpose.msra.mxu0 0
      %6592 = vmatprep.mubr.bf16.mxu0 0
      %6593 = vmatmul.mubr.bf16.gmra.mrb[0].mxu0 %v6555
      %v6594 = vpop.f32.mrb[0].mxu0
      %v6595 = vadd.f32 0.0, %v6594
      %v6596 = vpop.f32.mrb[0].mxu0
      %v6597 = vpop.f32.mrb[0].mxu0
      %v6598 = vpop.f32.mrb[0].mxu0
      %6599 = vdwg.mxu0
      %v6600 = vlaneseq
      %v6601 = vand.u32 %v6600, 127
      %vm6602 = vcmp.lt.s32.totalorder %v6601, 6
      %v6603 = vsel %vm6602, 1, 0
      %vm6604 = vcmp.eq.s32.totalorder %v6603, 1
      %v6605 = vsel %vm6604, %v3508, -1e+30
      %v6606 = vsel %vm6604, %v3557, -1e+30
      %v6607 = vsel %vm6604, %v3606, -1e+30
      %v6608 = vsel %vm6604, %v3655, -1e+30
      %v6609 = vsel %vm6604, %v3704, -1e+30
      %v6610 = vsel %vm6604, %v3753, -1e+30
      %v6611 = vsel %vm6604, %v3802, -1e+30
      %v6612 = vsel %vm6604, %v3851, -1e+30
      %v6613 = vsel %vm6604, %v3900, -1e+30
      %v6614 = vsel %vm6604, %v3949, -1e+30
      %v6615 = vsel %vm6604, %v3998, -1e+30
      %v6616 = vsel %vm6604, %v4047, -1e+30
      %v6617 = vsel %vm6604, %v4096, -1e+30
      %v6618 = vsel %vm6604, %v4145, -1e+30
      %v6619 = vsel %vm6604, %v4194, -1e+30
      %v6620 = vsel %vm6604, %v4243, -1e+30
      %v6621 = vsel %vm6604, %v4292, -1e+30
      %v6622 = vsel %vm6604, %v4341, -1e+30
      %v6623 = vsel %vm6604, %v4390, -1e+30
      %v6624 = vsel %vm6604, %v4439, -1e+30
      %v6625 = vsel %vm6604, %v4488, -1e+30
      %v6626 = vsel %vm6604, %v4537, -1e+30
      %v6627 = vsel %vm6604, %v4586, -1e+30
      %v6628 = vsel %vm6604, %v4635, -1e+30
      %v6629 = vsel %vm6604, %v4684, -1e+30
      %v6630 = vsel %vm6604, %v4733, -1e+30
      %v6631 = vsel %vm6604, %v4782, -1e+30
      %v6632 = vsel %vm6604, %v4831, -1e+30
      %v6633 = vsel %vm6604, %v4880, -1e+30
      %v6634 = vsel %vm6604, %v4929, -1e+30
      %v6635 = vsel %vm6604, %v4978, -1e+30
      %v6636 = vsel %vm6604, %v5027, -1e+30
      %v6637 = vsel %vm6604, %v5076, -1e+30
      %v6638 = vsel %vm6604, %v5125, -1e+30
      %v6639 = vsel %vm6604, %v5174, -1e+30
      %v6640 = vsel %vm6604, %v5223, -1e+30
      %v6641 = vsel %vm6604, %v5272, -1e+30
      %v6642 = vsel %vm6604, %v5321, -1e+30
      %v6643 = vsel %vm6604, %v5370, -1e+30
      %v6644 = vsel %vm6604, %v5419, -1e+30
      %v6645 = vsel %vm6604, %v5468, -1e+30
      %v6646 = vsel %vm6604, %v5517, -1e+30
      %v6647 = vsel %vm6604, %v5566, -1e+30
      %v6648 = vsel %vm6604, %v5615, -1e+30
      %v6649 = vsel %vm6604, %v5664, -1e+30
      %v6650 = vsel %vm6604, %v5713, -1e+30
      %v6651 = vsel %vm6604, %v5762, -1e+30
      %v6652 = vsel %vm6604, %v5811, -1e+30
      %v6653 = vsel %vm6604, %v5860, -1e+30
      %v6654 = vsel %vm6604, %v5909, -1e+30
      %v6655 = vsel %vm6604, %v5958, -1e+30
      %v6656 = vsel %vm6604, %v6007, -1e+30
      %v6657 = vsel %vm6604, %v6056, -1e+30
      %v6658 = vsel %vm6604, %v6105, -1e+30
      %v6659 = vsel %vm6604, %v6154, -1e+30
      %v6660 = vsel %vm6604, %v6203, -1e+30
      %v6661 = vsel %vm6604, %v6252, -1e+30
      %v6662 = vsel %vm6604, %v6301, -1e+30
      %v6663 = vsel %vm6604, %v6350, -1e+30
      %v6664 = vsel %vm6604, %v6399, -1e+30
      %v6665 = vsel %vm6604, %v6448, -1e+30
      %v6666 = vsel %vm6604, %v6497, -1e+30
      %v6667 = vsel %vm6604, %v6546, -1e+30
      %v6668 = vsel %vm6604, %v6595, -1e+30
      %vm6669 = vcmask 64512
      %v6670 = vsel %vm6669, %v6605, -inf
      %6671 = vmax.xlane.f32.xlu0 %v6670
      %v6672 = vpop.xlane.xlu0 %6671
      %v6673 = vsel %vm6669, %v6606, -inf
      %6674 = vmax.xlane.f32.xlu0 %v6673
      %v6675 = vpop.xlane.xlu0 %6674
      %v6676 = vsel %vm6669, %v6607, -inf
      %6677 = vmax.xlane.f32.xlu0 %v6676
      %v6678 = vpop.xlane.xlu0 %6677
      %v6679 = vsel %vm6669, %v6608, -inf
      %6680 = vmax.xlane.f32.xlu0 %v6679
      %v6681 = vpop.xlane.xlu0 %6680
      %v6682 = vsel %vm6669, %v6609, -inf
      %6683 = vmax.xlane.f32.xlu0 %v6682
      %v6684 = vpop.xlane.xlu0 %6683
      %v6685 = vsel %vm6669, %v6610, -inf
      %6686 = vmax.xlane.f32.xlu0 %v6685
      %v6687 = vpop.xlane.xlu0 %6686
      %v6688 = vsel %vm6669, %v6611, -inf
      %6689 = vmax.xlane.f32.xlu0 %v6688
      %v6690 = vpop.xlane.xlu0 %6689
      %v6691 = vsel %vm6669, %v6612, -inf
      %6692 = vmax.xlane.f32.xlu0 %v6691
      %v6693 = vpop.xlane.xlu0 %6692
      %v6694 = vsel %vm6669, %v6613, -inf
      %6695 = vmax.xlane.f32.xlu0 %v6694
      %v6696 = vpop.xlane.xlu0 %6695
      %v6697 = vsel %vm6669, %v6614, -inf
      %6698 = vmax.xlane.f32.xlu0 %v6697
      %v6699 = vpop.xlane.xlu0 %6698
      %v6700 = vsel %vm6669, %v6615, -inf
      %6701 = vmax.xlane.f32.xlu0 %v6700
      %v6702 = vpop.xlane.xlu0 %6701
      %v6703 = vsel %vm6669, %v6616, -inf
      %6704 = vmax.xlane.f32.xlu0 %v6703
      %v6705 = vpop.xlane.xlu0 %6704
      %v6706 = vsel %vm6669, %v6617, -inf
      %6707 = vmax.xlane.f32.xlu0 %v6706
      %v6708 = vpop.xlane.xlu0 %6707
      %v6709 = vsel %vm6669, %v6618, -inf
      %6710 = vmax.xlane.f32.xlu0 %v6709
      %v6711 = vpop.xlane.xlu0 %6710
      %v6712 = vsel %vm6669, %v6619, -inf
      %6713 = vmax.xlane.f32.xlu0 %v6712
      %v6714 = vpop.xlane.xlu0 %6713
      %v6715 = vsel %vm6669, %v6620, -inf
      %6716 = vmax.xlane.f32.xlu0 %v6715
      %v6717 = vpop.xlane.xlu0 %6716
      %v6718 = vsel %vm6669, %v6621, -inf
      %6719 = vmax.xlane.f32.xlu0 %v6718
      %v6720 = vpop.xlane.xlu0 %6719
      %v6721 = vsel %vm6669, %v6622, -inf
      %6722 = vmax.xlane.f32.xlu0 %v6721
      %v6723 = vpop.xlane.xlu0 %6722
      %v6724 = vsel %vm6669, %v6623, -inf
      %6725 = vmax.xlane.f32.xlu0 %v6724
      %v6726 = vpop.xlane.xlu0 %6725
      %v6727 = vsel %vm6669, %v6624, -inf
      %6728 = vmax.xlane.f32.xlu0 %v6727
      %v6729 = vpop.xlane.xlu0 %6728
      %v6730 = vsel %vm6669, %v6625, -inf
      %6731 = vmax.xlane.f32.xlu0 %v6730
      %v6732 = vpop.xlane.xlu0 %6731
      %v6733 = vsel %vm6669, %v6626, -inf
      %6734 = vmax.xlane.f32.xlu0 %v6733
      %v6735 = vpop.xlane.xlu0 %6734
      %v6736 = vsel %vm6669, %v6627, -inf
      %6737 = vmax.xlane.f32.xlu0 %v6736
      %v6738 = vpop.xlane.xlu0 %6737
      %v6739 = vsel %vm6669, %v6628, -inf
      %6740 = vmax.xlane.f32.xlu0 %v6739
      %v6741 = vpop.xlane.xlu0 %6740
      %v6742 = vsel %vm6669, %v6629, -inf
      %6743 = vmax.xlane.f32.xlu0 %v6742
      %v6744 = vpop.xlane.xlu0 %6743
      %v6745 = vsel %vm6669, %v6630, -inf
      %6746 = vmax.xlane.f32.xlu0 %v6745
      %v6747 = vpop.xlane.xlu0 %6746
      %v6748 = vsel %vm6669, %v6631, -inf
      %6749 = vmax.xlane.f32.xlu0 %v6748
      %v6750 = vpop.xlane.xlu0 %6749
      %v6751 = vsel %vm6669, %v6632, -inf
      %6752 = vmax.xlane.f32.xlu0 %v6751
      %v6753 = vpop.xlane.xlu0 %6752
      %v6754 = vsel %vm6669, %v6633, -inf
      %6755 = vmax.xlane.f32.xlu0 %v6754
      %v6756 = vpop.xlane.xlu0 %6755
      %v6757 = vsel %vm6669, %v6634, -inf
      %6758 = vmax.xlane.f32.xlu0 %v6757
      %v6759 = vpop.xlane.xlu0 %6758
      %v6760 = vsel %vm6669, %v6635, -inf
      %6761 = vmax.xlane.f32.xlu0 %v6760
      %v6762 = vpop.xlane.xlu0 %6761
      %v6763 = vsel %vm6669, %v6636, -inf
      %6764 = vmax.xlane.f32.xlu0 %v6763
      %v6765 = vpop.xlane.xlu0 %6764
      %v6766 = vsel %vm6669, %v6637, -inf
      %6767 = vmax.xlane.f32.xlu0 %v6766
      %v6768 = vpop.xlane.xlu0 %6767
      %v6769 = vsel %vm6669, %v6638, -inf
      %6770 = vmax.xlane.f32.xlu0 %v6769
      %v6771 = vpop.xlane.xlu0 %6770
      %v6772 = vsel %vm6669, %v6639, -inf
      %6773 = vmax.xlane.f32.xlu0 %v6772
      %v6774 = vpop.xlane.xlu0 %6773
      %v6775 = vsel %vm6669, %v6640, -inf
      %6776 = vmax.xlane.f32.xlu0 %v6775
      %v6777 = vpop.xlane.xlu0 %6776
      %v6778 = vsel %vm6669, %v6641, -inf
      %6779 = vmax.xlane.f32.xlu0 %v6778
      %v6780 = vpop.xlane.xlu0 %6779
      %v6781 = vsel %vm6669, %v6642, -inf
      %6782 = vmax.xlane.f32.xlu0 %v6781
      %v6783 = vpop.xlane.xlu0 %6782
      %v6784 = vsel %vm6669, %v6643, -inf
      %6785 = vmax.xlane.f32.xlu0 %v6784
      %v6786 = vpop.xlane.xlu0 %6785
      %v6787 = vsel %vm6669, %v6644, -inf
      %6788 = vmax.xlane.f32.xlu0 %v6787
      %v6789 = vpop.xlane.xlu0 %6788
      %v6790 = vsel %vm6669, %v6645, -inf
      %6791 = vmax.xlane.f32.xlu0 %v6790
      %v6792 = vpop.xlane.xlu0 %6791
      %v6793 = vsel %vm6669, %v6646, -inf
      %6794 = vmax.xlane.f32.xlu0 %v6793
      %v6795 = vpop.xlane.xlu0 %6794
      %v6796 = vsel %vm6669, %v6647, -inf
      %6797 = vmax.xlane.f32.xlu0 %v6796
      %v6798 = vpop.xlane.xlu0 %6797
      %v6799 = vsel %vm6669, %v6648, -inf
      %6800 = vmax.xlane.f32.xlu0 %v6799
      %v6801 = vpop.xlane.xlu0 %6800
      %v6802 = vsel %vm6669, %v6649, -inf
      %6803 = vmax.xlane.f32.xlu0 %v6802
      %v6804 = vpop.xlane.xlu0 %6803
      %v6805 = vsel %vm6669, %v6650, -inf
      %6806 = vmax.xlane.f32.xlu0 %v6805
      %v6807 = vpop.xlane.xlu0 %6806
      %v6808 = vsel %vm6669, %v6651, -inf
      %6809 = vmax.xlane.f32.xlu0 %v6808
      %v6810 = vpop.xlane.xlu0 %6809
      %v6811 = vsel %vm6669, %v6652, -inf
      %6812 = vmax.xlane.f32.xlu0 %v6811
      %v6813 = vpop.xlane.xlu0 %6812
      %v6814 = vsel %vm6669, %v6653, -inf
      %6815 = vmax.xlane.f32.xlu0 %v6814
      %v6816 = vpop.xlane.xlu0 %6815
      %v6817 = vsel %vm6669, %v6654, -inf
      %6818 = vmax.xlane.f32.xlu0 %v6817
      %v6819 = vpop.xlane.xlu0 %6818
      %v6820 = vsel %vm6669, %v6655, -inf
      %6821 = vmax.xlane.f32.xlu0 %v6820
      %v6822 = vpop.xlane.xlu0 %6821
      %v6823 = vsel %vm6669, %v6656, -inf
      %6824 = vmax.xlane.f32.xlu0 %v6823
      %v6825 = vpop.xlane.xlu0 %6824
      %v6826 = vsel %vm6669, %v6657, -inf
      %6827 = vmax.xlane.f32.xlu0 %v6826
      %v6828 = vpop.xlane.xlu0 %6827
      %v6829 = vsel %vm6669, %v6658, -inf
      %6830 = vmax.xlane.f32.xlu0 %v6829
      %v6831 = vpop.xlane.xlu0 %6830
      %v6832 = vsel %vm6669, %v6659, -inf
      %6833 = vmax.xlane.f32.xlu0 %v6832
      %v6834 = vpop.xlane.xlu0 %6833
      %v6835 = vsel %vm6669, %v6660, -inf
      %6836 = vmax.xlane.f32.xlu0 %v6835
      %v6837 = vpop.xlane.xlu0 %6836
      %v6838 = vsel %vm6669, %v6661, -inf
      %6839 = vmax.xlane.f32.xlu0 %v6838
      %v6840 = vpop.xlane.xlu0 %6839
      %v6841 = vsel %vm6669, %v6662, -inf
      %6842 = vmax.xlane.f32.xlu0 %v6841
      %v6843 = vpop.xlane.xlu0 %6842
      %v6844 = vsel %vm6669, %v6663, -inf
      %6845 = vmax.xlane.f32.xlu0 %v6844
      %v6846 = vpop.xlane.xlu0 %6845
      %v6847 = vsel %vm6669, %v6664, -inf
      %6848 = vmax.xlane.f32.xlu0 %v6847
      %v6849 = vpop.xlane.xlu0 %6848
      %v6850 = vsel %vm6669, %v6665, -inf
      %6851 = vmax.xlane.f32.xlu0 %v6850
      %v6852 = vpop.xlane.xlu0 %6851
      %v6853 = vsel %vm6669, %v6666, -inf
      %6854 = vmax.xlane.f32.xlu0 %v6853
      %v6855 = vpop.xlane.xlu0 %6854
      %v6856 = vsel %vm6669, %v6667, -inf
      %6857 = vmax.xlane.f32.xlu0 %v6856
      %v6858 = vpop.xlane.xlu0 %6857
      %v6859 = vsel %vm6669, %v6668, -inf
      %6860 = vmax.xlane.f32.xlu0 %v6859
      %v6861 = vpop.xlane.xlu0 %6860
      %v6862 = vsub.f32 %v6605, %v6672
      %v6863 = vsub.f32 %v6606, %v6675
      %v6864 = vsub.f32 %v6607, %v6678
      %v6865 = vsub.f32 %v6608, %v6681
      %v6866 = vsub.f32 %v6609, %v6684
      %v6867 = vsub.f32 %v6610, %v6687
      %v6868 = vsub.f32 %v6611, %v6690
      %v6869 = vsub.f32 %v6612, %v6693
      %v6870 = vsub.f32 %v6613, %v6696
      %v6871 = vsub.f32 %v6614, %v6699
      %v6872 = vsub.f32 %v6615, %v6702
      %v6873 = vsub.f32 %v6616, %v6705
      %v6874 = vsub.f32 %v6617, %v6708
      %v6875 = vsub.f32 %v6618, %v6711
      %v6876 = vsub.f32 %v6619, %v6714
      %v6877 = vsub.f32 %v6620, %v6717
      %v6878 = vsub.f32 %v6621, %v6720
      %v6879 = vsub.f32 %v6622, %v6723
      %v6880 = vsub.f32 %v6623, %v6726
      %v6881 = vsub.f32 %v6624, %v6729
      %v6882 = vsub.f32 %v6625, %v6732
      %v6883 = vsub.f32 %v6626, %v6735
      %v6884 = vsub.f32 %v6627, %v6738
      %v6885 = vsub.f32 %v6628, %v6741
      %v6886 = vsub.f32 %v6629, %v6744
      %v6887 = vsub.f32 %v6630, %v6747
      %v6888 = vsub.f32 %v6631, %v6750
      %v6889 = vsub.f32 %v6632, %v6753
      %v6890 = vsub.f32 %v6633, %v6756
      %v6891 = vsub.f32 %v6634, %v6759
      %v6892 = vsub.f32 %v6635, %v6762
      %v6893 = vsub.f32 %v6636, %v6765
      %v6894 = vsub.f32 %v6637, %v6768
      %v6895 = vsub.f32 %v6638, %v6771
      %v6896 = vsub.f32 %v6639, %v6774
      %v6897 = vsub.f32 %v6640, %v6777
      %v6898 = vsub.f32 %v6641, %v6780
      %v6899 = vsub.f32 %v6642, %v6783
      %v6900 = vsub.f32 %v6643, %v6786
      %v6901 = vsub.f32 %v6644, %v6789
      %v6902 = vsub.f32 %v6645, %v6792
      %v6903 = vsub.f32 %v6646, %v6795
      %v6904 = vsub.f32 %v6647, %v6798
      %v6905 = vsub.f32 %v6648, %v6801
      %v6906 = vsub.f32 %v6649, %v6804
      %v6907 = vsub.f32 %v6650, %v6807
      %v6908 = vsub.f32 %v6651, %v6810
      %v6909 = vsub.f32 %v6652, %v6813
      %v6910 = vsub.f32 %v6653, %v6816
      %v6911 = vsub.f32 %v6654, %v6819
      %v6912 = vsub.f32 %v6655, %v6822
      %v6913 = vsub.f32 %v6656, %v6825
      %v6914 = vsub.f32 %v6657, %v6828
      %v6915 = vsub.f32 %v6658, %v6831
      %v6916 = vsub.f32 %v6659, %v6834
      %v6917 = vsub.f32 %v6660, %v6837
      %v6918 = vsub.f32 %v6661, %v6840
      %v6919 = vsub.f32 %v6662, %v6843
      %v6920 = vsub.f32 %v6663, %v6846
      %v6921 = vsub.f32 %v6664, %v6849
      %v6922 = vsub.f32 %v6665, %v6852
      %v6923 = vsub.f32 %v6666, %v6855
      %v6924 = vsub.f32 %v6667, %v6858
      %v6925 = vsub.f32 %v6668, %v6861
      %v6926 = vmul.f32 %v6862, 1.442695
      %v6927 = vpow.pop %v6926
      %v6928 = vmul.f32 %v6863, 1.442695
      %v6929 = vpow.pop %v6928
      %v6930 = vmul.f32 %v6864, 1.442695
      %v6931 = vpow.pop %v6930
      %v6932 = vmul.f32 %v6865, 1.442695
      %v6933 = vpow.pop %v6932
      %v6934 = vmul.f32 %v6866, 1.442695
      %v6935 = vpow.pop %v6934
      %v6936 = vmul.f32 %v6867, 1.442695
      %v6937 = vpow.pop %v6936
      %v6938 = vmul.f32 %v6868, 1.442695
      %v6939 = vpow.pop %v6938
      %v6940 = vmul.f32 %v6869, 1.442695
      %v6941 = vpow.pop %v6940
      %v6942 = vmul.f32 %v6870, 1.442695
      %v6943 = vpow.pop %v6942
      %v6944 = vmul.f32 %v6871, 1.442695
      %v6945 = vpow.pop %v6944
      %v6946 = vmul.f32 %v6872, 1.442695
      %v6947 = vpow.pop %v6946
      %v6948 = vmul.f32 %v6873, 1.442695
      %v6949 = vpow.pop %v6948
      %v6950 = vmul.f32 %v6874, 1.442695
      %v6951 = vpow.pop %v6950
      %v6952 = vmul.f32 %v6875, 1.442695
      %v6953 = vpow.pop %v6952
      %v6954 = vmul.f32 %v6876, 1.442695
      %v6955 = vpow.pop %v6954
      %v6956 = vmul.f32 %v6877, 1.442695
      %v6957 = vpow.pop %v6956
      %v6958 = vmul.f32 %v6878, 1.442695
      %v6959 = vpow.pop %v6958
      %v6960 = vmul.f32 %v6879, 1.442695
      %v6961 = vpow.pop %v6960
      %v6962 = vmul.f32 %v6880, 1.442695
      %v6963 = vpow.pop %v6962
      %v6964 = vmul.f32 %v6881, 1.442695
      %v6965 = vpow.pop %v6964
      %v6966 = vmul.f32 %v6882, 1.442695
      %v6967 = vpow.pop %v6966
      %v6968 = vmul.f32 %v6883, 1.442695
      %v6969 = vpow.pop %v6968
      %v6970 = vmul.f32 %v6884, 1.442695
      %v6971 = vpow.pop %v6970
      %v6972 = vmul.f32 %v6885, 1.442695
      %v6973 = vpow.pop %v6972
      %v6974 = vmul.f32 %v6886, 1.442695
      %v6975 = vpow.pop %v6974
      %v6976 = vmul.f32 %v6887, 1.442695
      %v6977 = vpow.pop %v6976
      %v6978 = vmul.f32 %v6888, 1.442695
      %v6979 = vpow.pop %v6978
      %v6980 = vmul.f32 %v6889, 1.442695
      %v6981 = vpow.pop %v6980
      %v6982 = vmul.f32 %v6890, 1.442695
      %v6983 = vpow.pop %v6982
      %v6984 = vmul.f32 %v6891, 1.442695
      %v6985 = vpow.pop %v6984
      %v6986 = vmul.f32 %v6892, 1.442695
      %v6987 = vpow.pop %v6986
      %v6988 = vmul.f32 %v6893, 1.442695
      %v6989 = vpow.pop %v6988
      %v6990 = vmul.f32 %v6894, 1.442695
      %v6991 = vpow.pop %v6990
      %v6992 = vmul.f32 %v6895, 1.442695
      %v6993 = vpow.pop %v6992
      %v6994 = vmul.f32 %v6896, 1.442695
      %v6995 = vpow.pop %v6994
      %v6996 = vmul.f32 %v6897, 1.442695
      %v6997 = vpow.pop %v6996
      %v6998 = vmul.f32 %v6898, 1.442695
      %v6999 = vpow.pop %v6998
      %v7000 = vmul.f32 %v6899, 1.442695
      %v7001 = vpow.pop %v7000
      %v7002 = vmul.f32 %v6900, 1.442695
      %v7003 = vpow.pop %v7002
      %v7004 = vmul.f32 %v6901, 1.442695
      %v7005 = vpow.pop %v7004
      %v7006 = vmul.f32 %v6902, 1.442695
      %v7007 = vpow.pop %v7006
      %v7008 = vmul.f32 %v6903, 1.442695
      %v7009 = vpow.pop %v7008
      %v7010 = vmul.f32 %v6904, 1.442695
      %v7011 = vpow.pop %v7010
      %v7012 = vmul.f32 %v6905, 1.442695
      %v7013 = vpow.pop %v7012
      %v7014 = vmul.f32 %v6906, 1.442695
      %v7015 = vpow.pop %v7014
      %v7016 = vmul.f32 %v6907, 1.442695
      %v7017 = vpow.pop %v7016
      %v7018 = vmul.f32 %v6908, 1.442695
      %v7019 = vpow.pop %v7018
      %v7020 = vmul.f32 %v6909, 1.442695
      %v7021 = vpow.pop %v7020
      %v7022 = vmul.f32 %v6910, 1.442695
      %v7023 = vpow.pop %v7022
      %v7024 = vmul.f32 %v6911, 1.442695
      %v7025 = vpow.pop %v7024
      %v7026 = vmul.f32 %v6912, 1.442695
      %v7027 = vpow.pop %v7026
      %v7028 = vmul.f32 %v6913, 1.442695
      %v7029 = vpow.pop %v7028
      %v7030 = vmul.f32 %v6914, 1.442695
      %v7031 = vpow.pop %v7030
      %v7032 = vmul.f32 %v6915, 1.442695
      %v7033 = vpow.pop %v7032
      %v7034 = vmul.f32 %v6916, 1.442695
      %v7035 = vpow.pop %v7034
      %v7036 = vmul.f32 %v6917, 1.442695
      %v7037 = vpow.pop %v7036
      %v7038 = vmul.f32 %v6918, 1.442695
      %v7039 = vpow.pop %v7038
      %v7040 = vmul.f32 %v6919, 1.442695
      %v7041 = vpow.pop %v7040
      %v7042 = vmul.f32 %v6920, 1.442695
      %v7043 = vpow.pop %v7042
      %v7044 = vmul.f32 %v6921, 1.442695
      %v7045 = vpow.pop %v7044
      %v7046 = vmul.f32 %v6922, 1.442695
      %v7047 = vpow.pop %v7046
      %v7048 = vmul.f32 %v6923, 1.442695
      %v7049 = vpow.pop %v7048
      %v7050 = vmul.f32 %v6924, 1.442695
      %v7051 = vpow.pop %v7050
      %v7052 = vmul.f32 %v6925, 1.442695
      %v7053 = vpow.pop %v7052
      %v7054 = vsel %vm6669, %v6927, 0.0
      %7055 = vadd.xlane.f32.xlu0 %v7054
      %v7056 = vpop.xlane.xlu0 %7055
      %v7057 = vsel %vm6669, %v6929, 0.0
      %7058 = vadd.xlane.f32.xlu0 %v7057
      %v7059 = vpop.xlane.xlu0 %7058
      %v7060 = vsel %vm6669, %v6931, 0.0
      %7061 = vadd.xlane.f32.xlu0 %v7060
      %v7062 = vpop.xlane.xlu0 %7061
      %v7063 = vsel %vm6669, %v6933, 0.0
      %7064 = vadd.xlane.f32.xlu0 %v7063
      %v7065 = vpop.xlane.xlu0 %7064
      %v7066 = vsel %vm6669, %v6935, 0.0
      %7067 = vadd.xlane.f32.xlu0 %v7066
      %v7068 = vpop.xlane.xlu0 %7067
      %v7069 = vsel %vm6669, %v6937, 0.0
      %7070 = vadd.xlane.f32.xlu0 %v7069
      %v7071 = vpop.xlane.xlu0 %7070
      %v7072 = vsel %vm6669, %v6939, 0.0
      %7073 = vadd.xlane.f32.xlu0 %v7072
      %v7074 = vpop.xlane.xlu0 %7073
      %v7075 = vsel %vm6669, %v6941, 0.0
      %7076 = vadd.xlane.f32.xlu0 %v7075
      %v7077 = vpop.xlane.xlu0 %7076
      %v7078 = vsel %vm6669, %v6943, 0.0
      %7079 = vadd.xlane.f32.xlu0 %v7078
      %v7080 = vpop.xlane.xlu0 %7079
      %v7081 = vsel %vm6669, %v6945, 0.0
      %7082 = vadd.xlane.f32.xlu0 %v7081
      %v7083 = vpop.xlane.xlu0 %7082
      %v7084 = vsel %vm6669, %v6947, 0.0
      %7085 = vadd.xlane.f32.xlu0 %v7084
      %v7086 = vpop.xlane.xlu0 %7085
      %v7087 = vsel %vm6669, %v6949, 0.0
      %7088 = vadd.xlane.f32.xlu0 %v7087
      %v7089 = vpop.xlane.xlu0 %7088
      %v7090 = vsel %vm6669, %v6951, 0.0
      %7091 = vadd.xlane.f32.xlu0 %v7090
      %v7092 = vpop.xlane.xlu0 %7091
      %v7093 = vsel %vm6669, %v6953, 0.0
      %7094 = vadd.xlane.f32.xlu0 %v7093
      %v7095 = vpop.xlane.xlu0 %7094
      %v7096 = vsel %vm6669, %v6955, 0.0
      %7097 = vadd.xlane.f32.xlu0 %v7096
      %v7098 = vpop.xlane.xlu0 %7097
      %v7099 = vsel %vm6669, %v6957, 0.0
      %7100 = vadd.xlane.f32.xlu0 %v7099
      %v7101 = vpop.xlane.xlu0 %7100
      %v7102 = vsel %vm6669, %v6959, 0.0
      %7103 = vadd.xlane.f32.xlu0 %v7102
      %v7104 = vpop.xlane.xlu0 %7103
      %v7105 = vsel %vm6669, %v6961, 0.0
      %7106 = vadd.xlane.f32.xlu0 %v7105
      %v7107 = vpop.xlane.xlu0 %7106
      %v7108 = vsel %vm6669, %v6963, 0.0
      %7109 = vadd.xlane.f32.xlu0 %v7108
      %v7110 = vpop.xlane.xlu0 %7109
      %v7111 = vsel %vm6669, %v6965, 0.0
      %7112 = vadd.xlane.f32.xlu0 %v7111
      %v7113 = vpop.xlane.xlu0 %7112
      %v7114 = vsel %vm6669, %v6967, 0.0
      %7115 = vadd.xlane.f32.xlu0 %v7114
      %v7116 = vpop.xlane.xlu0 %7115
      %v7117 = vsel %vm6669, %v6969, 0.0
      %7118 = vadd.xlane.f32.xlu0 %v7117
      %v7119 = vpop.xlane.xlu0 %7118
      %v7120 = vsel %vm6669, %v6971, 0.0
      %7121 = vadd.xlane.f32.xlu0 %v7120
      %v7122 = vpop.xlane.xlu0 %7121
      %v7123 = vsel %vm6669, %v6973, 0.0
      %7124 = vadd.xlane.f32.xlu0 %v7123
      %v7125 = vpop.xlane.xlu0 %7124
      %v7126 = vsel %vm6669, %v6975, 0.0
      %7127 = vadd.xlane.f32.xlu0 %v7126
      %v7128 = vpop.xlane.xlu0 %7127
      %v7129 = vsel %vm6669, %v6977, 0.0
      %7130 = vadd.xlane.f32.xlu0 %v7129
      %v7131 = vpop.xlane.xlu0 %7130
      %v7132 = vsel %vm6669, %v6979, 0.0
      %7133 = vadd.xlane.f32.xlu0 %v7132
      %v7134 = vpop.xlane.xlu0 %7133
      %v7135 = vsel %vm6669, %v6981, 0.0
      %7136 = vadd.xlane.f32.xlu0 %v7135
      %v7137 = vpop.xlane.xlu0 %7136
      %v7138 = vsel %vm6669, %v6983, 0.0
      %7139 = vadd.xlane.f32.xlu0 %v7138
      %v7140 = vpop.xlane.xlu0 %7139
      %v7141 = vsel %vm6669, %v6985, 0.0
      %7142 = vadd.xlane.f32.xlu0 %v7141
      %v7143 = vpop.xlane.xlu0 %7142
      %v7144 = vsel %vm6669, %v6987, 0.0
      %7145 = vadd.xlane.f32.xlu0 %v7144
      %v7146 = vpop.xlane.xlu0 %7145
      %v7147 = vsel %vm6669, %v6989, 0.0
      %7148 = vadd.xlane.f32.xlu0 %v7147
      %v7149 = vpop.xlane.xlu0 %7148
      %v7150 = vsel %vm6669, %v6991, 0.0
      %7151 = vadd.xlane.f32.xlu0 %v7150
      %v7152 = vpop.xlane.xlu0 %7151
      %v7153 = vsel %vm6669, %v6993, 0.0
      %7154 = vadd.xlane.f32.xlu0 %v7153
      %v7155 = vpop.xlane.xlu0 %7154
      %v7156 = vsel %vm6669, %v6995, 0.0
      %7157 = vadd.xlane.f32.xlu0 %v7156
      %v7158 = vpop.xlane.xlu0 %7157
      %v7159 = vsel %vm6669, %v6997, 0.0
      %7160 = vadd.xlane.f32.xlu0 %v7159
      %v7161 = vpop.xlane.xlu0 %7160
      %v7162 = vsel %vm6669, %v6999, 0.0
      %7163 = vadd.xlane.f32.xlu0 %v7162
      %v7164 = vpop.xlane.xlu0 %7163
      %v7165 = vsel %vm6669, %v7001, 0.0
      %7166 = vadd.xlane.f32.xlu0 %v7165
      %v7167 = vpop.xlane.xlu0 %7166
      %v7168 = vsel %vm6669, %v7003, 0.0
      %7169 = vadd.xlane.f32.xlu0 %v7168
      %v7170 = vpop.xlane.xlu0 %7169
      %v7171 = vsel %vm6669, %v7005, 0.0
      %7172 = vadd.xlane.f32.xlu0 %v7171
      %v7173 = vpop.xlane.xlu0 %7172
      %v7174 = vsel %vm6669, %v7007, 0.0
      %7175 = vadd.xlane.f32.xlu0 %v7174
      %v7176 = vpop.xlane.xlu0 %7175
      %v7177 = vsel %vm6669, %v7009, 0.0
      %7178 = vadd.xlane.f32.xlu0 %v7177
      %v7179 = vpop.xlane.xlu0 %7178
      %v7180 = vsel %vm6669, %v7011, 0.0
      %7181 = vadd.xlane.f32.xlu0 %v7180
      %v7182 = vpop.xlane.xlu0 %7181
      %v7183 = vsel %vm6669, %v7013, 0.0
      %7184 = vadd.xlane.f32.xlu0 %v7183
      %v7185 = vpop.xlane.xlu0 %7184
      %v7186 = vsel %vm6669, %v7015, 0.0
      %7187 = vadd.xlane.f32.xlu0 %v7186
      %v7188 = vpop.xlane.xlu0 %7187
      %v7189 = vsel %vm6669, %v7017, 0.0
      %7190 = vadd.xlane.f32.xlu0 %v7189
      %v7191 = vpop.xlane.xlu0 %7190
      %v7192 = vsel %vm6669, %v7019, 0.0
      %7193 = vadd.xlane.f32.xlu0 %v7192
      %v7194 = vpop.xlane.xlu0 %7193
      %v7195 = vsel %vm6669, %v7021, 0.0
      %7196 = vadd.xlane.f32.xlu0 %v7195
      %v7197 = vpop.xlane.xlu0 %7196
      %v7198 = vsel %vm6669, %v7023, 0.0
      %7199 = vadd.xlane.f32.xlu0 %v7198
      %v7200 = vpop.xlane.xlu0 %7199
      %v7201 = vsel %vm6669, %v7025, 0.0
      %7202 = vadd.xlane.f32.xlu0 %v7201
      %v7203 = vpop.xlane.xlu0 %7202
      %v7204 = vsel %vm6669, %v7027, 0.0
      %7205 = vadd.xlane.f32.xlu0 %v7204
      %v7206 = vpop.xlane.xlu0 %7205
      %v7207 = vsel %vm6669, %v7029, 0.0
      %7208 = vadd.xlane.f32.xlu0 %v7207
      %v7209 = vpop.xlane.xlu0 %7208
      %v7210 = vsel %vm6669, %v7031, 0.0
      %7211 = vadd.xlane.f32.xlu0 %v7210
      %v7212 = vpop.xlane.xlu0 %7211
      %v7213 = vsel %vm6669, %v7033, 0.0
      %7214 = vadd.xlane.f32.xlu0 %v7213
      %v7215 = vpop.xlane.xlu0 %7214
      %v7216 = vsel %vm6669, %v7035, 0.0
      %7217 = vadd.xlane.f32.xlu0 %v7216
      %v7218 = vpop.xlane.xlu0 %7217
      %v7219 = vsel %vm6669, %v7037, 0.0
      %7220 = vadd.xlane.f32.xlu0 %v7219
      %v7221 = vpop.xlane.xlu0 %7220
      %v7222 = vsel %vm6669, %v7039, 0.0
      %7223 = vadd.xlane.f32.xlu0 %v7222
      %v7224 = vpop.xlane.xlu0 %7223
      %v7225 = vsel %vm6669, %v7041, 0.0
      %7226 = vadd.xlane.f32.xlu0 %v7225
      %v7227 = vpop.xlane.xlu0 %7226
      %v7228 = vsel %vm6669, %v7043, 0.0
      %7229 = vadd.xlane.f32.xlu0 %v7228
      %v7230 = vpop.xlane.xlu0 %7229
      %v7231 = vsel %vm6669, %v7045, 0.0
      %7232 = vadd.xlane.f32.xlu0 %v7231
      %v7233 = vpop.xlane.xlu0 %7232
      %v7234 = vsel %vm6669, %v7047, 0.0
      %7235 = vadd.xlane.f32.xlu0 %v7234
      %v7236 = vpop.xlane.xlu0 %7235
      %v7237 = vsel %vm6669, %v7049, 0.0
      %7238 = vadd.xlane.f32.xlu0 %v7237
      %v7239 = vpop.xlane.xlu0 %7238
      %v7240 = vsel %vm6669, %v7051, 0.0
      %7241 = vadd.xlane.f32.xlu0 %v7240
      %v7242 = vpop.xlane.xlu0 %7241
      %v7243 = vsel %vm6669, %v7053, 0.0
      %7244 = vadd.xlane.f32.xlu0 %v7243
      %v7245 = vpop.xlane.xlu0 %7244
      %v7246 = vrcp.pop %v7056
      %v7247 = vrcp.pop %v7059
      %v7248 = vrcp.pop %v7062
      %v7249 = vrcp.pop %v7065
      %v7250 = vrcp.pop %v7068
      %v7251 = vrcp.pop %v7071
      %v7252 = vrcp.pop %v7074
      %v7253 = vrcp.pop %v7077
      %v7254 = vrcp.pop %v7080
      %v7255 = vrcp.pop %v7083
      %v7256 = vrcp.pop %v7086
      %v7257 = vrcp.pop %v7089
      %v7258 = vrcp.pop %v7092
      %v7259 = vrcp.pop %v7095
      %v7260 = vrcp.pop %v7098
      %v7261 = vrcp.pop %v7101
      %v7262 = vrcp.pop %v7104
      %v7263 = vrcp.pop %v7107
      %v7264 = vrcp.pop %v7110
      %v7265 = vrcp.pop %v7113
      %v7266 = vrcp.pop %v7116
      %v7267 = vrcp.pop %v7119
      %v7268 = vrcp.pop %v7122
      %v7269 = vrcp.pop %v7125
      %v7270 = vrcp.pop %v7128
      %v7271 = vrcp.pop %v7131
      %v7272 = vrcp.pop %v7134
      %v7273 = vrcp.pop %v7137
      %v7274 = vrcp.pop %v7140
      %v7275 = vrcp.pop %v7143
      %v7276 = vrcp.pop %v7146
      %v7277 = vrcp.pop %v7149
      %v7278 = vrcp.pop %v7152
      %v7279 = vrcp.pop %v7155
      %v7280 = vrcp.pop %v7158
      %v7281 = vrcp.pop %v7161
      %v7282 = vrcp.pop %v7164
      %v7283 = vrcp.pop %v7167
      %v7284 = vrcp.pop %v7170
      %v7285 = vrcp.pop %v7173
      %v7286 = vrcp.pop %v7176
      %v7287 = vrcp.pop %v7179
      %v7288 = vrcp.pop %v7182
      %v7289 = vrcp.pop %v7185
      %v7290 = vrcp.pop %v7188
      %v7291 = vrcp.pop %v7191
      %v7292 = vrcp.pop %v7194
      %v7293 = vrcp.pop %v7197
      %v7294 = vrcp.pop %v7200
      %v7295 = vrcp.pop %v7203
      %v7296 = vrcp.pop %v7206
      %v7297 = vrcp.pop %v7209
      %v7298 = vrcp.pop %v7212
      %v7299 = vrcp.pop %v7215
      %v7300 = vrcp.pop %v7218
      %v7301 = vrcp.pop %v7221
      %v7302 = vrcp.pop %v7224
      %v7303 = vrcp.pop %v7227
      %v7304 = vrcp.pop %v7230
      %v7305 = vrcp.pop %v7233
      %v7306 = vrcp.pop %v7236
      %v7307 = vrcp.pop %v7239
      %v7308 = vrcp.pop %v7242
      %v7309 = vrcp.pop %v7245
      %v7310 = vmul.f32 %v6927, %v7246
      %v7311 = vmul.f32 %v6929, %v7247
      %v7312 = vmul.f32 %v6931, %v7248
      %v7313 = vmul.f32 %v6933, %v7249
      %v7314 = vmul.f32 %v6935, %v7250
      %v7315 = vmul.f32 %v6937, %v7251
      %v7316 = vmul.f32 %v6939, %v7252
      %v7317 = vmul.f32 %v6941, %v7253
      %v7318 = vmul.f32 %v6943, %v7254
      %v7319 = vmul.f32 %v6945, %v7255
      %v7320 = vmul.f32 %v6947, %v7256
      %v7321 = vmul.f32 %v6949, %v7257
      %v7322 = vmul.f32 %v6951, %v7258
      %v7323 = vmul.f32 %v6953, %v7259
      %v7324 = vmul.f32 %v6955, %v7260
      %v7325 = vmul.f32 %v6957, %v7261
      %v7326 = vmul.f32 %v6959, %v7262
      %v7327 = vmul.f32 %v6961, %v7263
      %v7328 = vmul.f32 %v6963, %v7264
      %v7329 = vmul.f32 %v6965, %v7265
      %v7330 = vmul.f32 %v6967, %v7266
      %v7331 = vmul.f32 %v6969, %v7267
      %v7332 = vmul.f32 %v6971, %v7268
      %v7333 = vmul.f32 %v6973, %v7269
      %v7334 = vmul.f32 %v6975, %v7270
      %v7335 = vmul.f32 %v6977, %v7271
      %v7336 = vmul.f32 %v6979, %v7272
      %v7337 = vmul.f32 %v6981, %v7273
      %v7338 = vmul.f32 %v6983, %v7274
      %v7339 = vmul.f32 %v6985, %v7275
      %v7340 = vmul.f32 %v6987, %v7276
      %v7341 = vmul.f32 %v6989, %v7277
      %v7342 = vmul.f32 %v6991, %v7278
      %v7343 = vmul.f32 %v6993, %v7279
      %v7344 = vmul.f32 %v6995, %v7280
      %v7345 = vmul.f32 %v6997, %v7281
      %v7346 = vmul.f32 %v6999, %v7282
      %v7347 = vmul.f32 %v7001, %v7283
      %v7348 = vmul.f32 %v7003, %v7284
      %v7349 = vmul.f32 %v7005, %v7285
      %v7350 = vmul.f32 %v7007, %v7286
      %v7351 = vmul.f32 %v7009, %v7287
      %v7352 = vmul.f32 %v7011, %v7288
      %v7353 = vmul.f32 %v7013, %v7289
      %v7354 = vmul.f32 %v7015, %v7290
      %v7355 = vmul.f32 %v7017, %v7291
      %v7356 = vmul.f32 %v7019, %v7292
      %v7357 = vmul.f32 %v7021, %v7293
      %v7358 = vmul.f32 %v7023, %v7294
      %v7359 = vmul.f32 %v7025, %v7295
      %v7360 = vmul.f32 %v7027, %v7296
      %v7361 = vmul.f32 %v7029, %v7297
      %v7362 = vmul.f32 %v7031, %v7298
      %v7363 = vmul.f32 %v7033, %v7299
      %v7364 = vmul.f32 %v7035, %v7300
      %v7365 = vmul.f32 %v7037, %v7301
      %v7366 = vmul.f32 %v7039, %v7302
      %v7367 = vmul.f32 %v7041, %v7303
      %v7368 = vmul.f32 %v7043, %v7304
      %v7369 = vmul.f32 %v7045, %v7305
      %v7370 = vmul.f32 %v7047, %v7306
      %v7371 = vmul.f32 %v7049, %v7307
      %v7372 = vmul.f32 %v7051, %v7308
      %v7373 = vmul.f32 %v7053, %v7309
      %v7374 = vlaneseq
      %v7375 = vshrl.u32 %v7374, 7
      %vm7376 = vcmp.lt.s32.totalorder %v7375, 6
      %v7377 = vsel %vm7376, 1, 0
      %v7378 = vcvt.s32.f32 %v7377
      %v7379 = vmul.f32 %v7310, %v7378
      %v7380 = vmul.f32 %v7311, %v7378
      %v7381 = vmul.f32 %v7312, %v7378
      %v7382 = vmul.f32 %v7313, %v7378
      %v7383 = vmul.f32 %v7314, %v7378
      %v7384 = vmul.f32 %v7315, %v7378
      %v7385 = vmul.f32 %v7316, %v7378
      %v7386 = vmul.f32 %v7317, %v7378
      %v7387 = vmul.f32 %v7318, %v7378
      %v7388 = vmul.f32 %v7319, %v7378
      %v7389 = vmul.f32 %v7320, %v7378
      %v7390 = vmul.f32 %v7321, %v7378
      %v7391 = vmul.f32 %v7322, %v7378
      %v7392 = vmul.f32 %v7323, %v7378
      %v7393 = vmul.f32 %v7324, %v7378
      %v7394 = vmul.f32 %v7325, %v7378
      %v7395 = vmul.f32 %v7326, %v7378
      %v7396 = vmul.f32 %v7327, %v7378
      %v7397 = vmul.f32 %v7328, %v7378
      %v7398 = vmul.f32 %v7329, %v7378
      %v7399 = vmul.f32 %v7330, %v7378
      %v7400 = vmul.f32 %v7331, %v7378
      %v7401 = vmul.f32 %v7332, %v7378
      %v7402 = vmul.f32 %v7333, %v7378
      %v7403 = vmul.f32 %v7334, %v7378
      %v7404 = vmul.f32 %v7335, %v7378
      %v7405 = vmul.f32 %v7336, %v7378
      %v7406 = vmul.f32 %v7337, %v7378
      %v7407 = vmul.f32 %v7338, %v7378
      %v7408 = vmul.f32 %v7339, %v7378
      %v7409 = vmul.f32 %v7340, %v7378
      %v7410 = vmul.f32 %v7341, %v7378
      %v7411 = vmul.f32 %v7342, %v7378
      %v7412 = vmul.f32 %v7343, %v7378
      %v7413 = vmul.f32 %v7344, %v7378
      %v7414 = vmul.f32 %v7345, %v7378
      %v7415 = vmul.f32 %v7346, %v7378
      %v7416 = vmul.f32 %v7347, %v7378
      %v7417 = vmul.f32 %v7348, %v7378
      %v7418 = vmul.f32 %v7349, %v7378
      %v7419 = vmul.f32 %v7350, %v7378
      %v7420 = vmul.f32 %v7351, %v7378
      %v7421 = vmul.f32 %v7352, %v7378
      %v7422 = vmul.f32 %v7353, %v7378
      %v7423 = vmul.f32 %v7354, %v7378
      %v7424 = vmul.f32 %v7355, %v7378
      %v7425 = vmul.f32 %v7356, %v7378
      %v7426 = vmul.f32 %v7357, %v7378
      %v7427 = vmul.f32 %v7358, %v7378
      %v7428 = vmul.f32 %v7359, %v7378
      %v7429 = vmul.f32 %v7360, %v7378
      %v7430 = vmul.f32 %v7361, %v7378
      %v7431 = vmul.f32 %v7362, %v7378
      %v7432 = vmul.f32 %v7363, %v7378
      %v7433 = vmul.f32 %v7364, %v7378
      %v7434 = vmul.f32 %v7365, %v7378
      %v7435 = vmul.f32 %v7366, %v7378
      %v7436 = vmul.f32 %v7367, %v7378
      %v7437 = vmul.f32 %v7368, %v7378
      %v7438 = vmul.f32 %v7369, %v7378
      %v7439 = vmul.f32 %v7370, %v7378
      %v7440 = vmul.f32 %v7371, %v7378
      %v7441 = vmul.f32 %v7372, %v7378
      %v7442 = vmul.f32 %v7373, %v7378
      %v7443 = vsel %vm6669, %v7379, 0.0
      %v7444 = vrot.slane %v7443, 4
      %v7445 = vadd.f32 %v7443, %v7444
      %v7446 = vrot.slane %v7445, 2
      %v7447 = vadd.f32 %v7445, %v7446
      %v7448 = vrot.slane %v7447, 1
      %v7449 = vadd.f32 %v7447, %v7448
      %v7450 = vsel %vm6669, %v7380, 0.0
      %v7451 = vrot.slane %v7450, 4
      %v7452 = vadd.f32 %v7450, %v7451
      %v7453 = vrot.slane %v7452, 2
      %v7454 = vadd.f32 %v7452, %v7453
      %v7455 = vrot.slane %v7454, 1
      %v7456 = vadd.f32 %v7454, %v7455
      %v7457 = vsel %vm6669, %v7381, 0.0
      %v7458 = vrot.slane %v7457, 4
      %v7459 = vadd.f32 %v7457, %v7458
      %v7460 = vrot.slane %v7459, 2
      %v7461 = vadd.f32 %v7459, %v7460
      %v7462 = vrot.slane %v7461, 1
      %v7463 = vadd.f32 %v7461, %v7462
      %v7464 = vsel %vm6669, %v7382, 0.0
      %v7465 = vrot.slane %v7464, 4
      %v7466 = vadd.f32 %v7464, %v7465
      %v7467 = vrot.slane %v7466, 2
      %v7468 = vadd.f32 %v7466, %v7467
      %v7469 = vrot.slane %v7468, 1
      %v7470 = vadd.f32 %v7468, %v7469
      %v7471 = vsel %vm6669, %v7383, 0.0
      %v7472 = vrot.slane %v7471, 4
      %v7473 = vadd.f32 %v7471, %v7472
      %v7474 = vrot.slane %v7473, 2
      %v7475 = vadd.f32 %v7473, %v7474
      %v7476 = vrot.slane %v7475, 1
      %v7477 = vadd.f32 %v7475, %v7476
      %v7478 = vsel %vm6669, %v7384, 0.0
      %v7479 = vrot.slane %v7478, 4
      %v7480 = vadd.f32 %v7478, %v7479
      %v7481 = vrot.slane %v7480, 2
      %v7482 = vadd.f32 %v7480, %v7481
      %v7483 = vrot.slane %v7482, 1
      %v7484 = vadd.f32 %v7482, %v7483
      %v7485 = vsel %vm6669, %v7385, 0.0
      %v7486 = vrot.slane %v7485, 4
      %v7487 = vadd.f32 %v7485, %v7486
      %v7488 = vrot.slane %v7487, 2
      %v7489 = vadd.f32 %v7487, %v7488
      %v7490 = vrot.slane %v7489, 1
      %v7491 = vadd.f32 %v7489, %v7490
      %v7492 = vsel %vm6669, %v7386, 0.0
      %v7493 = vrot.slane %v7492, 4
      %v7494 = vadd.f32 %v7492, %v7493
      %v7495 = vrot.slane %v7494, 2
      %v7496 = vadd.f32 %v7494, %v7495
      %v7497 = vrot.slane %v7496, 1
      %v7498 = vadd.f32 %v7496, %v7497
      %v7499 = vsel %vm6669, %v7387, 0.0
      %v7500 = vrot.slane %v7499, 4
      %v7501 = vadd.f32 %v7499, %v7500
      %v7502 = vrot.slane %v7501, 2
      %v7503 = vadd.f32 %v7501, %v7502
      %v7504 = vrot.slane %v7503, 1
      %v7505 = vadd.f32 %v7503, %v7504
      %v7506 = vsel %vm6669, %v7388, 0.0
      %v7507 = vrot.slane %v7506, 4
      %v7508 = vadd.f32 %v7506, %v7507
      %v7509 = vrot.slane %v7508, 2
      %v7510 = vadd.f32 %v7508, %v7509
      %v7511 = vrot.slane %v7510, 1
      %v7512 = vadd.f32 %v7510, %v7511
      %v7513 = vsel %vm6669, %v7389, 0.0
      %v7514 = vrot.slane %v7513, 4
      %v7515 = vadd.f32 %v7513, %v7514
      %v7516 = vrot.slane %v7515, 2
      %v7517 = vadd.f32 %v7515, %v7516
      %v7518 = vrot.slane %v7517, 1
      %v7519 = vadd.f32 %v7517, %v7518
      %v7520 = vsel %vm6669, %v7390, 0.0
      %v7521 = vrot.slane %v7520, 4
      %v7522 = vadd.f32 %v7520, %v7521
      %v7523 = vrot.slane %v7522, 2
      %v7524 = vadd.f32 %v7522, %v7523
      %v7525 = vrot.slane %v7524, 1
      %v7526 = vadd.f32 %v7524, %v7525
      %v7527 = vsel %vm6669, %v7391, 0.0
      %v7528 = vrot.slane %v7527, 4
      %v7529 = vadd.f32 %v7527, %v7528
      %v7530 = vrot.slane %v7529, 2
      %v7531 = vadd.f32 %v7529, %v7530
      %v7532 = vrot.slane %v7531, 1
      %v7533 = vadd.f32 %v7531, %v7532
      %v7534 = vsel %vm6669, %v7392, 0.0
      %v7535 = vrot.slane %v7534, 4
      %v7536 = vadd.f32 %v7534, %v7535
      %v7537 = vrot.slane %v7536, 2
      %v7538 = vadd.f32 %v7536, %v7537
      %v7539 = vrot.slane %v7538, 1
      %v7540 = vadd.f32 %v7538, %v7539
      %v7541 = vsel %vm6669, %v7393, 0.0
      %v7542 = vrot.slane %v7541, 4
      %v7543 = vadd.f32 %v7541, %v7542
      %v7544 = vrot.slane %v7543, 2
      %v7545 = vadd.f32 %v7543, %v7544
      %v7546 = vrot.slane %v7545, 1
      %v7547 = vadd.f32 %v7545, %v7546
      %v7548 = vsel %vm6669, %v7394, 0.0
      %v7549 = vrot.slane %v7548, 4
      %v7550 = vadd.f32 %v7548, %v7549
      %v7551 = vrot.slane %v7550, 2
      %v7552 = vadd.f32 %v7550, %v7551
      %v7553 = vrot.slane %v7552, 1
      %v7554 = vadd.f32 %v7552, %v7553
      %v7555 = vsel %vm6669, %v7395, 0.0
      %v7556 = vrot.slane %v7555, 4
      %v7557 = vadd.f32 %v7555, %v7556
      %v7558 = vrot.slane %v7557, 2
      %v7559 = vadd.f32 %v7557, %v7558
      %v7560 = vrot.slane %v7559, 1
      %v7561 = vadd.f32 %v7559, %v7560
      %v7562 = vsel %vm6669, %v7396, 0.0
      %v7563 = vrot.slane %v7562, 4
      %v7564 = vadd.f32 %v7562, %v7563
      %v7565 = vrot.slane %v7564, 2
      %v7566 = vadd.f32 %v7564, %v7565
      %v7567 = vrot.slane %v7566, 1
      %v7568 = vadd.f32 %v7566, %v7567
      %v7569 = vsel %vm6669, %v7397, 0.0
      %v7570 = vrot.slane %v7569, 4
      %v7571 = vadd.f32 %v7569, %v7570
      %v7572 = vrot.slane %v7571, 2
      %v7573 = vadd.f32 %v7571, %v7572
      %v7574 = vrot.slane %v7573, 1
      %v7575 = vadd.f32 %v7573, %v7574
      %v7576 = vsel %vm6669, %v7398, 0.0
      %v7577 = vrot.slane %v7576, 4
      %v7578 = vadd.f32 %v7576, %v7577
      %v7579 = vrot.slane %v7578, 2
      %v7580 = vadd.f32 %v7578, %v7579
      %v7581 = vrot.slane %v7580, 1
      %v7582 = vadd.f32 %v7580, %v7581
      %v7583 = vsel %vm6669, %v7399, 0.0
      %v7584 = vrot.slane %v7583, 4
      %v7585 = vadd.f32 %v7583, %v7584
      %v7586 = vrot.slane %v7585, 2
      %v7587 = vadd.f32 %v7585, %v7586
      %v7588 = vrot.slane %v7587, 1
      %v7589 = vadd.f32 %v7587, %v7588
      %v7590 = vsel %vm6669, %v7400, 0.0
      %v7591 = vrot.slane %v7590, 4
      %v7592 = vadd.f32 %v7590, %v7591
      %v7593 = vrot.slane %v7592, 2
      %v7594 = vadd.f32 %v7592, %v7593
      %v7595 = vrot.slane %v7594, 1
      %v7596 = vadd.f32 %v7594, %v7595
      %v7597 = vsel %vm6669, %v7401, 0.0
      %v7598 = vrot.slane %v7597, 4
      %v7599 = vadd.f32 %v7597, %v7598
      %v7600 = vrot.slane %v7599, 2
      %v7601 = vadd.f32 %v7599, %v7600
      %v7602 = vrot.slane %v7601, 1
      %v7603 = vadd.f32 %v7601, %v7602
      %v7604 = vsel %vm6669, %v7402, 0.0
      %v7605 = vrot.slane %v7604, 4
      %v7606 = vadd.f32 %v7604, %v7605
      %v7607 = vrot.slane %v7606, 2
      %v7608 = vadd.f32 %v7606, %v7607
      %v7609 = vrot.slane %v7608, 1
      %v7610 = vadd.f32 %v7608, %v7609
      %v7611 = vsel %vm6669, %v7403, 0.0
      %v7612 = vrot.slane %v7611, 4
      %v7613 = vadd.f32 %v7611, %v7612
      %v7614 = vrot.slane %v7613, 2
      %v7615 = vadd.f32 %v7613, %v7614
      %v7616 = vrot.slane %v7615, 1
      %v7617 = vadd.f32 %v7615, %v7616
      %v7618 = vsel %vm6669, %v7404, 0.0
      %v7619 = vrot.slane %v7618, 4
      %v7620 = vadd.f32 %v7618, %v7619
      %v7621 = vrot.slane %v7620, 2
      %v7622 = vadd.f32 %v7620, %v7621
      %v7623 = vrot.slane %v7622, 1
      %v7624 = vadd.f32 %v7622, %v7623
      %v7625 = vsel %vm6669, %v7405, 0.0
      %v7626 = vrot.slane %v7625, 4
      %v7627 = vadd.f32 %v7625, %v7626
      %v7628 = vrot.slane %v7627, 2
      %v7629 = vadd.f32 %v7627, %v7628
      %v7630 = vrot.slane %v7629, 1
      %v7631 = vadd.f32 %v7629, %v7630
      %v7632 = vsel %vm6669, %v7406, 0.0
      %v7633 = vrot.slane %v7632, 4
      %v7634 = vadd.f32 %v7632, %v7633
      %v7635 = vrot.slane %v7634, 2
      %v7636 = vadd.f32 %v7634, %v7635
      %v7637 = vrot.slane %v7636, 1
      %v7638 = vadd.f32 %v7636, %v7637
      %v7639 = vsel %vm6669, %v7407, 0.0
      %v7640 = vrot.slane %v7639, 4
      %v7641 = vadd.f32 %v7639, %v7640
      %v7642 = vrot.slane %v7641, 2
      %v7643 = vadd.f32 %v7641, %v7642
      %v7644 = vrot.slane %v7643, 1
      %v7645 = vadd.f32 %v7643, %v7644
      %v7646 = vsel %vm6669, %v7408, 0.0
      %v7647 = vrot.slane %v7646, 4
      %v7648 = vadd.f32 %v7646, %v7647
      %v7649 = vrot.slane %v7648, 2
      %v7650 = vadd.f32 %v7648, %v7649
      %v7651 = vrot.slane %v7650, 1
      %v7652 = vadd.f32 %v7650, %v7651
      %v7653 = vsel %vm6669, %v7409, 0.0
      %v7654 = vrot.slane %v7653, 4
      %v7655 = vadd.f32 %v7653, %v7654
      %v7656 = vrot.slane %v7655, 2
      %v7657 = vadd.f32 %v7655, %v7656
      %v7658 = vrot.slane %v7657, 1
      %v7659 = vadd.f32 %v7657, %v7658
      %v7660 = vsel %vm6669, %v7410, 0.0
      %v7661 = vrot.slane %v7660, 4
      %v7662 = vadd.f32 %v7660, %v7661
      %v7663 = vrot.slane %v7662, 2
      %v7664 = vadd.f32 %v7662, %v7663
      %v7665 = vrot.slane %v7664, 1
      %v7666 = vadd.f32 %v7664, %v7665
      %v7667 = vsel %vm6669, %v7411, 0.0
      %v7668 = vrot.slane %v7667, 4
      %v7669 = vadd.f32 %v7667, %v7668
      %v7670 = vrot.slane %v7669, 2
      %v7671 = vadd.f32 %v7669, %v7670
      %v7672 = vrot.slane %v7671, 1
      %v7673 = vadd.f32 %v7671, %v7672
      %v7674 = vsel %vm6669, %v7412, 0.0
      %v7675 = vrot.slane %v7674, 4
      %v7676 = vadd.f32 %v7674, %v7675
      %v7677 = vrot.slane %v7676, 2
      %v7678 = vadd.f32 %v7676, %v7677
      %v7679 = vrot.slane %v7678, 1
      %v7680 = vadd.f32 %v7678, %v7679
      %v7681 = vsel %vm6669, %v7413, 0.0
      %v7682 = vrot.slane %v7681, 4
      %v7683 = vadd.f32 %v7681, %v7682
      %v7684 = vrot.slane %v7683, 2
      %v7685 = vadd.f32 %v7683, %v7684
      %v7686 = vrot.slane %v7685, 1
      %v7687 = vadd.f32 %v7685, %v7686
      %v7688 = vsel %vm6669, %v7414, 0.0
      %v7689 = vrot.slane %v7688, 4
      %v7690 = vadd.f32 %v7688, %v7689
      %v7691 = vrot.slane %v7690, 2
      %v7692 = vadd.f32 %v7690, %v7691
      %v7693 = vrot.slane %v7692, 1
      %v7694 = vadd.f32 %v7692, %v7693
      %v7695 = vsel %vm6669, %v7415, 0.0
      %v7696 = vrot.slane %v7695, 4
      %v7697 = vadd.f32 %v7695, %v7696
      %v7698 = vrot.slane %v7697, 2
      %v7699 = vadd.f32 %v7697, %v7698
      %v7700 = vrot.slane %v7699, 1
      %v7701 = vadd.f32 %v7699, %v7700
      %v7702 = vsel %vm6669, %v7416, 0.0
      %v7703 = vrot.slane %v7702, 4
      %v7704 = vadd.f32 %v7702, %v7703
      %v7705 = vrot.slane %v7704, 2
      %v7706 = vadd.f32 %v7704, %v7705
      %v7707 = vrot.slane %v7706, 1
      %v7708 = vadd.f32 %v7706, %v7707
      %v7709 = vsel %vm6669, %v7417, 0.0
      %v7710 = vrot.slane %v7709, 4
      %v7711 = vadd.f32 %v7709, %v7710
      %v7712 = vrot.slane %v7711, 2
      %v7713 = vadd.f32 %v7711, %v7712
      %v7714 = vrot.slane %v7713, 1
      %v7715 = vadd.f32 %v7713, %v7714
      %v7716 = vsel %vm6669, %v7418, 0.0
      %v7717 = vrot.slane %v7716, 4
      %v7718 = vadd.f32 %v7716, %v7717
      %v7719 = vrot.slane %v7718, 2
      %v7720 = vadd.f32 %v7718, %v7719
      %v7721 = vrot.slane %v7720, 1
      %v7722 = vadd.f32 %v7720, %v7721
      %v7723 = vsel %vm6669, %v7419, 0.0
      %v7724 = vrot.slane %v7723, 4
      %v7725 = vadd.f32 %v7723, %v7724
      %v7726 = vrot.slane %v7725, 2
      %v7727 = vadd.f32 %v7725, %v7726
      %v7728 = vrot.slane %v7727, 1
      %v7729 = vadd.f32 %v7727, %v7728
      %v7730 = vsel %vm6669, %v7420, 0.0
      %v7731 = vrot.slane %v7730, 4
      %v7732 = vadd.f32 %v7730, %v7731
      %v7733 = vrot.slane %v7732, 2
      %v7734 = vadd.f32 %v7732, %v7733
      %v7735 = vrot.slane %v7734, 1
      %v7736 = vadd.f32 %v7734, %v7735
      %v7737 = vsel %vm6669, %v7421, 0.0
      %v7738 = vrot.slane %v7737, 4
      %v7739 = vadd.f32 %v7737, %v7738
      %v7740 = vrot.slane %v7739, 2
      %v7741 = vadd.f32 %v7739, %v7740
      %v7742 = vrot.slane %v7741, 1
      %v7743 = vadd.f32 %v7741, %v7742
      %v7744 = vsel %vm6669, %v7422, 0.0
      %v7745 = vrot.slane %v7744, 4
      %v7746 = vadd.f32 %v7744, %v7745
      %v7747 = vrot.slane %v7746, 2
      %v7748 = vadd.f32 %v7746, %v7747
      %v7749 = vrot.slane %v7748, 1
      %v7750 = vadd.f32 %v7748, %v7749
      %v7751 = vsel %vm6669, %v7423, 0.0
      %v7752 = vrot.slane %v7751, 4
      %v7753 = vadd.f32 %v7751, %v7752
      %v7754 = vrot.slane %v7753, 2
      %v7755 = vadd.f32 %v7753, %v7754
      %v7756 = vrot.slane %v7755, 1
      %v7757 = vadd.f32 %v7755, %v7756
      %v7758 = vsel %vm6669, %v7424, 0.0
      %v7759 = vrot.slane %v7758, 4
      %v7760 = vadd.f32 %v7758, %v7759
      %v7761 = vrot.slane %v7760, 2
      %v7762 = vadd.f32 %v7760, %v7761
      %v7763 = vrot.slane %v7762, 1
      %v7764 = vadd.f32 %v7762, %v7763
      %v7765 = vsel %vm6669, %v7425, 0.0
      %v7766 = vrot.slane %v7765, 4
      %v7767 = vadd.f32 %v7765, %v7766
      %v7768 = vrot.slane %v7767, 2
      %v7769 = vadd.f32 %v7767, %v7768
      %v7770 = vrot.slane %v7769, 1
      %v7771 = vadd.f32 %v7769, %v7770
      %v7772 = vsel %vm6669, %v7426, 0.0
      %v7773 = vrot.slane %v7772, 4
      %v7774 = vadd.f32 %v7772, %v7773
      %v7775 = vrot.slane %v7774, 2
      %v7776 = vadd.f32 %v7774, %v7775
      %v7777 = vrot.slane %v7776, 1
      %v7778 = vadd.f32 %v7776, %v7777
      %v7779 = vsel %vm6669, %v7427, 0.0
      %v7780 = vrot.slane %v7779, 4
      %v7781 = vadd.f32 %v7779, %v7780
      %v7782 = vrot.slane %v7781, 2
      %v7783 = vadd.f32 %v7781, %v7782
      %v7784 = vrot.slane %v7783, 1
      %v7785 = vadd.f32 %v7783, %v7784
      %v7786 = vsel %vm6669, %v7428, 0.0
      %v7787 = vrot.slane %v7786, 4
      %v7788 = vadd.f32 %v7786, %v7787
      %v7789 = vrot.slane %v7788, 2
      %v7790 = vadd.f32 %v7788, %v7789
      %v7791 = vrot.slane %v7790, 1
      %v7792 = vadd.f32 %v7790, %v7791
      %v7793 = vsel %vm6669, %v7429, 0.0
      %v7794 = vrot.slane %v7793, 4
      %v7795 = vadd.f32 %v7793, %v7794
      %v7796 = vrot.slane %v7795, 2
      %v7797 = vadd.f32 %v7795, %v7796
      %v7798 = vrot.slane %v7797, 1
      %v7799 = vadd.f32 %v7797, %v7798
      %v7800 = vsel %vm6669, %v7430, 0.0
      %v7801 = vrot.slane %v7800, 4
      %v7802 = vadd.f32 %v7800, %v7801
      %v7803 = vrot.slane %v7802, 2
      %v7804 = vadd.f32 %v7802, %v7803
      %v7805 = vrot.slane %v7804, 1
      %v7806 = vadd.f32 %v7804, %v7805
      %v7807 = vsel %vm6669, %v7431, 0.0
      %v7808 = vrot.slane %v7807, 4
      %v7809 = vadd.f32 %v7807, %v7808
      %v7810 = vrot.slane %v7809, 2
      %v7811 = vadd.f32 %v7809, %v7810
      %v7812 = vrot.slane %v7811, 1
      %v7813 = vadd.f32 %v7811, %v7812
      %v7814 = vsel %vm6669, %v7432, 0.0
      %v7815 = vrot.slane %v7814, 4
      %v7816 = vadd.f32 %v7814, %v7815
      %v7817 = vrot.slane %v7816, 2
      %v7818 = vadd.f32 %v7816, %v7817
      %v7819 = vrot.slane %v7818, 1
      %v7820 = vadd.f32 %v7818, %v7819
      %v7821 = vsel %vm6669, %v7433, 0.0
      %v7822 = vrot.slane %v7821, 4
      %v7823 = vadd.f32 %v7821, %v7822
      %v7824 = vrot.slane %v7823, 2
      %v7825 = vadd.f32 %v7823, %v7824
      %v7826 = vrot.slane %v7825, 1
      %v7827 = vadd.f32 %v7825, %v7826
      %v7828 = vsel %vm6669, %v7434, 0.0
      %v7829 = vrot.slane %v7828, 4
      %v7830 = vadd.f32 %v7828, %v7829
      %v7831 = vrot.slane %v7830, 2
      %v7832 = vadd.f32 %v7830, %v7831
      %v7833 = vrot.slane %v7832, 1
      %v7834 = vadd.f32 %v7832, %v7833
      %v7835 = vsel %vm6669, %v7435, 0.0
      %v7836 = vrot.slane %v7835, 4
      %v7837 = vadd.f32 %v7835, %v7836
      %v7838 = vrot.slane %v7837, 2
      %v7839 = vadd.f32 %v7837, %v7838
      %v7840 = vrot.slane %v7839, 1
      %v7841 = vadd.f32 %v7839, %v7840
      %v7842 = vsel %vm6669, %v7436, 0.0
      %v7843 = vrot.slane %v7842, 4
      %v7844 = vadd.f32 %v7842, %v7843
      %v7845 = vrot.slane %v7844, 2
      %v7846 = vadd.f32 %v7844, %v7845
      %v7847 = vrot.slane %v7846, 1
      %v7848 = vadd.f32 %v7846, %v7847
      %v7849 = vsel %vm6669, %v7437, 0.0
      %v7850 = vrot.slane %v7849, 4
      %v7851 = vadd.f32 %v7849, %v7850
      %v7852 = vrot.slane %v7851, 2
      %v7853 = vadd.f32 %v7851, %v7852
      %v7854 = vrot.slane %v7853, 1
      %v7855 = vadd.f32 %v7853, %v7854
      %v7856 = vsel %vm6669, %v7438, 0.0
      %v7857 = vrot.slane %v7856, 4
      %v7858 = vadd.f32 %v7856, %v7857
      %v7859 = vrot.slane %v7858, 2
      %v7860 = vadd.f32 %v7858, %v7859
      %v7861 = vrot.slane %v7860, 1
      %v7862 = vadd.f32 %v7860, %v7861
      %v7863 = vsel %vm6669, %v7439, 0.0
      %v7864 = vrot.slane %v7863, 4
      %v7865 = vadd.f32 %v7863, %v7864
      %v7866 = vrot.slane %v7865, 2
      %v7867 = vadd.f32 %v7865, %v7866
      %v7868 = vrot.slane %v7867, 1
      %v7869 = vadd.f32 %v7867, %v7868
      %v7870 = vsel %vm6669, %v7440, 0.0
      %v7871 = vrot.slane %v7870, 4
      %v7872 = vadd.f32 %v7870, %v7871
      %v7873 = vrot.slane %v7872, 2
      %v7874 = vadd.f32 %v7872, %v7873
      %v7875 = vrot.slane %v7874, 1
      %v7876 = vadd.f32 %v7874, %v7875
      %v7877 = vsel %vm6669, %v7441, 0.0
      %v7878 = vrot.slane %v7877, 4
      %v7879 = vadd.f32 %v7877, %v7878
      %v7880 = vrot.slane %v7879, 2
      %v7881 = vadd.f32 %v7879, %v7880
      %v7882 = vrot.slane %v7881, 1
      %v7883 = vadd.f32 %v7881, %v7882
      %v7884 = vsel %vm6669, %v7442, 0.0
      %v7885 = vrot.slane %v7884, 4
      %v7886 = vadd.f32 %v7884, %v7885
      %v7887 = vrot.slane %v7886, 2
      %v7888 = vadd.f32 %v7886, %v7887
      %v7889 = vrot.slane %v7888, 1
      %v7890 = vadd.f32 %v7888, %v7889
      %7892 = vbcast.lane.b32.xlu0 %v7449, 256
      %v7893 = vpop.permute.xlu0 %7892
      %7895 = vbcast.lane.b32.xlu0 %v7456, 256
      %v7896 = vpop.permute.xlu0 %7895
      %7898 = vbcast.lane.b32.xlu0 %v7463, 256
      %v7899 = vpop.permute.xlu0 %7898
      %7901 = vbcast.lane.b32.xlu0 %v7470, 256
      %v7902 = vpop.permute.xlu0 %7901
      %7904 = vbcast.lane.b32.xlu0 %v7477, 256
      %v7905 = vpop.permute.xlu0 %7904
      %7907 = vbcast.lane.b32.xlu0 %v7484, 256
      %v7908 = vpop.permute.xlu0 %7907
      %7910 = vbcast.lane.b32.xlu0 %v7491, 256
      %v7911 = vpop.permute.xlu0 %7910
      %7913 = vbcast.lane.b32.xlu0 %v7498, 256
      %v7914 = vpop.permute.xlu0 %7913
      %7916 = vbcast.lane.b32.xlu0 %v7505, 256
      %v7917 = vpop.permute.xlu0 %7916
      %7919 = vbcast.lane.b32.xlu0 %v7512, 256
      %v7920 = vpop.permute.xlu0 %7919
      %7922 = vbcast.lane.b32.xlu0 %v7519, 256
      %v7923 = vpop.permute.xlu0 %7922
      %7925 = vbcast.lane.b32.xlu0 %v7526, 256
      %v7926 = vpop.permute.xlu0 %7925
      %7928 = vbcast.lane.b32.xlu0 %v7533, 256
      %v7929 = vpop.permute.xlu0 %7928
      %7931 = vbcast.lane.b32.xlu0 %v7540, 256
      %v7932 = vpop.permute.xlu0 %7931
      %7934 = vbcast.lane.b32.xlu0 %v7547, 256
      %v7935 = vpop.permute.xlu0 %7934
      %7937 = vbcast.lane.b32.xlu0 %v7554, 256
      %v7938 = vpop.permute.xlu0 %7937
      %7940 = vbcast.lane.b32.xlu0 %v7561, 256
      %v7941 = vpop.permute.xlu0 %7940
      %7943 = vbcast.lane.b32.xlu0 %v7568, 256
      %v7944 = vpop.permute.xlu0 %7943
      %7946 = vbcast.lane.b32.xlu0 %v7575, 256
      %v7947 = vpop.permute.xlu0 %7946
      %7949 = vbcast.lane.b32.xlu0 %v7582, 256
      %v7950 = vpop.permute.xlu0 %7949
      %7952 = vbcast.lane.b32.xlu0 %v7589, 256
      %v7953 = vpop.permute.xlu0 %7952
      %7955 = vbcast.lane.b32.xlu0 %v7596, 256
      %v7956 = vpop.permute.xlu0 %7955
      %7958 = vbcast.lane.b32.xlu0 %v7603, 256
      %v7959 = vpop.permute.xlu0 %7958
      %7961 = vbcast.lane.b32.xlu0 %v7610, 256
      %v7962 = vpop.permute.xlu0 %7961
      %7964 = vbcast.lane.b32.xlu0 %v7617, 256
      %v7965 = vpop.permute.xlu0 %7964
      %7967 = vbcast.lane.b32.xlu0 %v7624, 256
      %v7968 = vpop.permute.xlu0 %7967
      %7970 = vbcast.lane.b32.xlu0 %v7631, 256
      %v7971 = vpop.permute.xlu0 %7970
      %7973 = vbcast.lane.b32.xlu0 %v7638, 256
      %v7974 = vpop.permute.xlu0 %7973
      %7976 = vbcast.lane.b32.xlu0 %v7645, 256
      %v7977 = vpop.permute.xlu0 %7976
      %7979 = vbcast.lane.b32.xlu0 %v7652, 256
      %v7980 = vpop.permute.xlu0 %7979
      %7982 = vbcast.lane.b32.xlu0 %v7659, 256
      %v7983 = vpop.permute.xlu0 %7982
      %7985 = vbcast.lane.b32.xlu0 %v7666, 256
      %v7986 = vpop.permute.xlu0 %7985
      %7988 = vbcast.lane.b32.xlu0 %v7673, 256
      %v7989 = vpop.permute.xlu0 %7988
      %7991 = vbcast.lane.b32.xlu0 %v7680, 256
      %v7992 = vpop.permute.xlu0 %7991
      %7994 = vbcast.lane.b32.xlu0 %v7687, 256
      %v7995 = vpop.permute.xlu0 %7994
      %7997 = vbcast.lane.b32.xlu0 %v7694, 256
      %v7998 = vpop.permute.xlu0 %7997
      %8000 = vbcast.lane.b32.xlu0 %v7701, 256
      %v8001 = vpop.permute.xlu0 %8000
      %8003 = vbcast.lane.b32.xlu0 %v7708, 256
      %v8004 = vpop.permute.xlu0 %8003
      %8006 = vbcast.lane.b32.xlu0 %v7715, 256
      %v8007 = vpop.permute.xlu0 %8006
      %8009 = vbcast.lane.b32.xlu0 %v7722, 256
      %v8010 = vpop.permute.xlu0 %8009
      %8012 = vbcast.lane.b32.xlu0 %v7729, 256
      %v8013 = vpop.permute.xlu0 %8012
      %8015 = vbcast.lane.b32.xlu0 %v7736, 256
      %v8016 = vpop.permute.xlu0 %8015
      %8018 = vbcast.lane.b32.xlu0 %v7743, 256
      %v8019 = vpop.permute.xlu0 %8018
      %8021 = vbcast.lane.b32.xlu0 %v7750, 256
      %v8022 = vpop.permute.xlu0 %8021
      %8024 = vbcast.lane.b32.xlu0 %v7757, 256
      %v8025 = vpop.permute.xlu0 %8024
      %8027 = vbcast.lane.b32.xlu0 %v7764, 256
      %v8028 = vpop.permute.xlu0 %8027
      %8030 = vbcast.lane.b32.xlu0 %v7771, 256
      %v8031 = vpop.permute.xlu0 %8030
      %8033 = vbcast.lane.b32.xlu0 %v7778, 256
      %v8034 = vpop.permute.xlu0 %8033
      %8036 = vbcast.lane.b32.xlu0 %v7785, 256
      %v8037 = vpop.permute.xlu0 %8036
      %8039 = vbcast.lane.b32.xlu0 %v7792, 256
      %v8040 = vpop.permute.xlu0 %8039
      %8042 = vbcast.lane.b32.xlu0 %v7799, 256
      %v8043 = vpop.permute.xlu0 %8042
      %8045 = vbcast.lane.b32.xlu0 %v7806, 256
      %v8046 = vpop.permute.xlu0 %8045
      %8048 = vbcast.lane.b32.xlu0 %v7813, 256
      %v8049 = vpop.permute.xlu0 %8048
      %8051 = vbcast.lane.b32.xlu0 %v7820, 256
      %v8052 = vpop.permute.xlu0 %8051
      %8054 = vbcast.lane.b32.xlu0 %v7827, 256
      %v8055 = vpop.permute.xlu0 %8054
      %8057 = vbcast.lane.b32.xlu0 %v7834, 256
      %v8058 = vpop.permute.xlu0 %8057
      %8060 = vbcast.lane.b32.xlu0 %v7841, 256
      %v8061 = vpop.permute.xlu0 %8060
      %8063 = vbcast.lane.b32.xlu0 %v7848, 256
      %v8064 = vpop.permute.xlu0 %8063
      %8066 = vbcast.lane.b32.xlu0 %v7855, 256
      %v8067 = vpop.permute.xlu0 %8066
      %8069 = vbcast.lane.b32.xlu0 %v7862, 256
      %v8070 = vpop.permute.xlu0 %8069
      %8072 = vbcast.lane.b32.xlu0 %v7869, 256
      %v8073 = vpop.permute.xlu0 %8072
      %8075 = vbcast.lane.b32.xlu0 %v7876, 256
      %v8076 = vpop.permute.xlu0 %8075
      %8078 = vbcast.lane.b32.xlu0 %v7883, 256
      %v8079 = vpop.permute.xlu0 %8078
      %8081 = vbcast.lane.b32.xlu0 %v7890, 256
      %v8082 = vpop.permute.xlu0 %8081
      %v8083 = vmul.f32 %v7893, %v3146
      %v8084 = vmul.f32 %v7896, %v3149
      %v8085 = vmul.f32 %v7899, %v3154
      %v8086 = vmul.f32 %v7902, %v3157
      %v8087 = vmul.f32 %v7905, %v3162
      %v8088 = vmul.f32 %v7908, %v3165
      %v8089 = vmul.f32 %v7911, %v3170
      %v8090 = vmul.f32 %v7914, %v3173
      %v8091 = vmul.f32 %v7917, %v3178
      %v8092 = vmul.f32 %v7920, %v3181
      %v8093 = vmul.f32 %v7923, %v3186
      %v8094 = vmul.f32 %v7926, %v3189
      %v8095 = vmul.f32 %v7929, %v3194
      %v8096 = vmul.f32 %v7932, %v3197
      %v8097 = vmul.f32 %v7935, %v3202
      %v8098 = vmul.f32 %v7938, %v3205
      %v8099 = vmul.f32 %v7941, %v3210
      %v8100 = vmul.f32 %v7944, %v3213
      %v8101 = vmul.f32 %v7947, %v3218
      %v8102 = vmul.f32 %v7950, %v3221
      %v8103 = vmul.f32 %v7953, %v3226
      %v8104 = vmul.f32 %v7956, %v3229
      %v8105 = vmul.f32 %v7959, %v3234
      %v8106 = vmul.f32 %v7962, %v3237
      %v8107 = vmul.f32 %v7965, %v3242
      %v8108 = vmul.f32 %v7968, %v3245
      %v8109 = vmul.f32 %v7971, %v3250
      %v8110 = vmul.f32 %v7974, %v3253
      %v8111 = vmul.f32 %v7977, %v3258
      %v8112 = vmul.f32 %v7980, %v3261
      %v8113 = vmul.f32 %v7983, %v3266
      %v8114 = vmul.f32 %v7986, %v3269
      %v8115 = vmul.f32 %v7989, %v3274
      %v8116 = vmul.f32 %v7992, %v3277
      %v8117 = vmul.f32 %v7995, %v3282
      %v8118 = vmul.f32 %v7998, %v3285
      %v8119 = vmul.f32 %v8001, %v3290
      %v8120 = vmul.f32 %v8004, %v3293
      %v8121 = vmul.f32 %v8007, %v3298
      %v8122 = vmul.f32 %v8010, %v3301
      %v8123 = vmul.f32 %v8013, %v3306
      %v8124 = vmul.f32 %v8016, %v3309
      %v8125 = vmul.f32 %v8019, %v3314
      %v8126 = vmul.f32 %v8022, %v3317
      %v8127 = vmul.f32 %v8025, %v3322
      %v8128 = vmul.f32 %v8028, %v3325
      %v8129 = vmul.f32 %v8031, %v3330
      %v8130 = vmul.f32 %v8034, %v3333
      %v8131 = vmul.f32 %v8037, %v3338
      %v8132 = vmul.f32 %v8040, %v3341
      %v8133 = vmul.f32 %v8043, %v3346
      %v8134 = vmul.f32 %v8046, %v3349
      %v8135 = vmul.f32 %v8049, %v3354
      %v8136 = vmul.f32 %v8052, %v3357
      %v8137 = vmul.f32 %v8055, %v3362
      %v8138 = vmul.f32 %v8058, %v3365
      %v8139 = vmul.f32 %v8061, %v3370
      %v8140 = vmul.f32 %v8064, %v3373
      %v8141 = vmul.f32 %v8067, %v3378
      %v8142 = vmul.f32 %v8070, %v3381
      %v8143 = vmul.f32 %v8073, %v3386
      %v8144 = vmul.f32 %v8076, %v3389
      %v8145 = vmul.f32 %v8079, %v3394
      %v8146 = vmul.f32 %v8082, %v3397
      %vm8147 = vcmask 785920
      %v8148 = vsel %vm8147, %v8083, 0.0
      %v8149 = vrot.slane %v8148, 4
      %v8150 = vadd.f32 %v8148, %v8149
      %v8151 = vrot.slane %v8150, 2
      %v8152 = vadd.f32 %v8150, %v8151
      %v8153 = vrot.slane %v8152, 1
      %v8154 = vadd.f32 %v8152, %v8153
      %v8155 = vsel %vm8147, %v8084, 0.0
      %v8156 = vrot.slane %v8155, 4
      %v8157 = vadd.f32 %v8155, %v8156
      %v8158 = vrot.slane %v8157, 2
      %v8159 = vadd.f32 %v8157, %v8158
      %v8160 = vrot.slane %v8159, 1
      %v8161 = vadd.f32 %v8159, %v8160
      %v8162 = vsel %vm8147, %v8085, 0.0
      %v8163 = vrot.slane %v8162, 4
      %v8164 = vadd.f32 %v8162, %v8163
      %v8165 = vrot.slane %v8164, 2
      %v8166 = vadd.f32 %v8164, %v8165
      %v8167 = vrot.slane %v8166, 1
      %v8168 = vadd.f32 %v8166, %v8167
      %v8169 = vsel %vm8147, %v8086, 0.0
      %v8170 = vrot.slane %v8169, 4
      %v8171 = vadd.f32 %v8169, %v8170
      %v8172 = vrot.slane %v8171, 2
      %v8173 = vadd.f32 %v8171, %v8172
      %v8174 = vrot.slane %v8173, 1
      %v8175 = vadd.f32 %v8173, %v8174
      %v8176 = vsel %vm8147, %v8087, 0.0
      %v8177 = vrot.slane %v8176, 4
      %v8178 = vadd.f32 %v8176, %v8177
      %v8179 = vrot.slane %v8178, 2
      %v8180 = vadd.f32 %v8178, %v8179
      %v8181 = vrot.slane %v8180, 1
      %v8182 = vadd.f32 %v8180, %v8181
      %v8183 = vsel %vm8147, %v8088, 0.0
      %v8184 = vrot.slane %v8183, 4
      %v8185 = vadd.f32 %v8183, %v8184
      %v8186 = vrot.slane %v8185, 2
      %v8187 = vadd.f32 %v8185, %v8186
      %v8188 = vrot.slane %v8187, 1
      %v8189 = vadd.f32 %v8187, %v8188
      %v8190 = vsel %vm8147, %v8089, 0.0
      %v8191 = vrot.slane %v8190, 4
      %v8192 = vadd.f32 %v8190, %v8191
      %v8193 = vrot.slane %v8192, 2
      %v8194 = vadd.f32 %v8192, %v8193
      %v8195 = vrot.slane %v8194, 1
      %v8196 = vadd.f32 %v8194, %v8195
      %v8197 = vsel %vm8147, %v8090, 0.0
      %v8198 = vrot.slane %v8197, 4
      %v8199 = vadd.f32 %v8197, %v8198
      %v8200 = vrot.slane %v8199, 2
      %v8201 = vadd.f32 %v8199, %v8200
      %v8202 = vrot.slane %v8201, 1
      %v8203 = vadd.f32 %v8201, %v8202
      %v8204 = vsel %vm8147, %v8091, 0.0
      %v8205 = vrot.slane %v8204, 4
      %v8206 = vadd.f32 %v8204, %v8205
      %v8207 = vrot.slane %v8206, 2
      %v8208 = vadd.f32 %v8206, %v8207
      %v8209 = vrot.slane %v8208, 1
      %v8210 = vadd.f32 %v8208, %v8209
      %v8211 = vsel %vm8147, %v8092, 0.0
      %v8212 = vrot.slane %v8211, 4
      %v8213 = vadd.f32 %v8211, %v8212
      %v8214 = vrot.slane %v8213, 2
      %v8215 = vadd.f32 %v8213, %v8214
      %v8216 = vrot.slane %v8215, 1
      %v8217 = vadd.f32 %v8215, %v8216
      %v8218 = vsel %vm8147, %v8093, 0.0
      %v8219 = vrot.slane %v8218, 4
      %v8220 = vadd.f32 %v8218, %v8219
      %v8221 = vrot.slane %v8220, 2
      %v8222 = vadd.f32 %v8220, %v8221
      %v8223 = vrot.slane %v8222, 1
      %v8224 = vadd.f32 %v8222, %v8223
      %v8225 = vsel %vm8147, %v8094, 0.0
      %v8226 = vrot.slane %v8225, 4
      %v8227 = vadd.f32 %v8225, %v8226
      %v8228 = vrot.slane %v8227, 2
      %v8229 = vadd.f32 %v8227, %v8228
      %v8230 = vrot.slane %v8229, 1
      %v8231 = vadd.f32 %v8229, %v8230
      %v8232 = vsel %vm8147, %v8095, 0.0
      %v8233 = vrot.slane %v8232, 4
      %v8234 = vadd.f32 %v8232, %v8233
      %v8235 = vrot.slane %v8234, 2
      %v8236 = vadd.f32 %v8234, %v8235
      %v8237 = vrot.slane %v8236, 1
      %v8238 = vadd.f32 %v8236, %v8237
      %v8239 = vsel %vm8147, %v8096, 0.0
      %v8240 = vrot.slane %v8239, 4
      %v8241 = vadd.f32 %v8239, %v8240
      %v8242 = vrot.slane %v8241, 2
      %v8243 = vadd.f32 %v8241, %v8242
      %v8244 = vrot.slane %v8243, 1
      %v8245 = vadd.f32 %v8243, %v8244
      %v8246 = vsel %vm8147, %v8097, 0.0
      %v8247 = vrot.slane %v8246, 4
      %v8248 = vadd.f32 %v8246, %v8247
      %v8249 = vrot.slane %v8248, 2
      %v8250 = vadd.f32 %v8248, %v8249
      %v8251 = vrot.slane %v8250, 1
      %v8252 = vadd.f32 %v8250, %v8251
      %v8253 = vsel %vm8147, %v8098, 0.0
      %v8254 = vrot.slane %v8253, 4
      %v8255 = vadd.f32 %v8253, %v8254
      %v8256 = vrot.slane %v8255, 2
      %v8257 = vadd.f32 %v8255, %v8256
      %v8258 = vrot.slane %v8257, 1
      %v8259 = vadd.f32 %v8257, %v8258
      %v8260 = vsel %vm8147, %v8099, 0.0
      %v8261 = vrot.slane %v8260, 4
      %v8262 = vadd.f32 %v8260, %v8261
      %v8263 = vrot.slane %v8262, 2
      %v8264 = vadd.f32 %v8262, %v8263
      %v8265 = vrot.slane %v8264, 1
      %v8266 = vadd.f32 %v8264, %v8265
      %v8267 = vsel %vm8147, %v8100, 0.0
      %v8268 = vrot.slane %v8267, 4
      %v8269 = vadd.f32 %v8267, %v8268
      %v8270 = vrot.slane %v8269, 2
      %v8271 = vadd.f32 %v8269, %v8270
      %v8272 = vrot.slane %v8271, 1
      %v8273 = vadd.f32 %v8271, %v8272
      %v8274 = vsel %vm8147, %v8101, 0.0
      %v8275 = vrot.slane %v8274, 4
      %v8276 = vadd.f32 %v8274, %v8275
      %v8277 = vrot.slane %v8276, 2
      %v8278 = vadd.f32 %v8276, %v8277
      %v8279 = vrot.slane %v8278, 1
      %v8280 = vadd.f32 %v8278, %v8279
      %v8281 = vsel %vm8147, %v8102, 0.0
      %v8282 = vrot.slane %v8281, 4
      %v8283 = vadd.f32 %v8281, %v8282
      %v8284 = vrot.slane %v8283, 2
      %v8285 = vadd.f32 %v8283, %v8284
      %v8286 = vrot.slane %v8285, 1
      %v8287 = vadd.f32 %v8285, %v8286
      %v8288 = vsel %vm8147, %v8103, 0.0
      %v8289 = vrot.slane %v8288, 4
      %v8290 = vadd.f32 %v8288, %v8289
      %v8291 = vrot.slane %v8290, 2
      %v8292 = vadd.f32 %v8290, %v8291
      %v8293 = vrot.slane %v8292, 1
      %v8294 = vadd.f32 %v8292, %v8293
      %v8295 = vsel %vm8147, %v8104, 0.0
      %v8296 = vrot.slane %v8295, 4
      %v8297 = vadd.f32 %v8295, %v8296
      %v8298 = vrot.slane %v8297, 2
      %v8299 = vadd.f32 %v8297, %v8298
      %v8300 = vrot.slane %v8299, 1
      %v8301 = vadd.f32 %v8299, %v8300
      %v8302 = vsel %vm8147, %v8105, 0.0
      %v8303 = vrot.slane %v8302, 4
      %v8304 = vadd.f32 %v8302, %v8303
      %v8305 = vrot.slane %v8304, 2
      %v8306 = vadd.f32 %v8304, %v8305
      %v8307 = vrot.slane %v8306, 1
      %v8308 = vadd.f32 %v8306, %v8307
      %v8309 = vsel %vm8147, %v8106, 0.0
      %v8310 = vrot.slane %v8309, 4
      %v8311 = vadd.f32 %v8309, %v8310
      %v8312 = vrot.slane %v8311, 2
      %v8313 = vadd.f32 %v8311, %v8312
      %v8314 = vrot.slane %v8313, 1
      %v8315 = vadd.f32 %v8313, %v8314
      %v8316 = vsel %vm8147, %v8107, 0.0
      %v8317 = vrot.slane %v8316, 4
      %v8318 = vadd.f32 %v8316, %v8317
      %v8319 = vrot.slane %v8318, 2
      %v8320 = vadd.f32 %v8318, %v8319
      %v8321 = vrot.slane %v8320, 1
      %v8322 = vadd.f32 %v8320, %v8321
      %v8323 = vsel %vm8147, %v8108, 0.0
      %v8324 = vrot.slane %v8323, 4
      %v8325 = vadd.f32 %v8323, %v8324
      %v8326 = vrot.slane %v8325, 2
      %v8327 = vadd.f32 %v8325, %v8326
      %v8328 = vrot.slane %v8327, 1
      %v8329 = vadd.f32 %v8327, %v8328
      %v8330 = vsel %vm8147, %v8109, 0.0
      %v8331 = vrot.slane %v8330, 4
      %v8332 = vadd.f32 %v8330, %v8331
      %v8333 = vrot.slane %v8332, 2
      %v8334 = vadd.f32 %v8332, %v8333
      %v8335 = vrot.slane %v8334, 1
      %v8336 = vadd.f32 %v8334, %v8335
      %v8337 = vsel %vm8147, %v8110, 0.0
      %v8338 = vrot.slane %v8337, 4
      %v8339 = vadd.f32 %v8337, %v8338
      %v8340 = vrot.slane %v8339, 2
      %v8341 = vadd.f32 %v8339, %v8340
      %v8342 = vrot.slane %v8341, 1
      %v8343 = vadd.f32 %v8341, %v8342
      %v8344 = vsel %vm8147, %v8111, 0.0
      %v8345 = vrot.slane %v8344, 4
      %v8346 = vadd.f32 %v8344, %v8345
      %v8347 = vrot.slane %v8346, 2
      %v8348 = vadd.f32 %v8346, %v8347
      %v8349 = vrot.slane %v8348, 1
      %v8350 = vadd.f32 %v8348, %v8349
      %v8351 = vsel %vm8147, %v8112, 0.0
      %v8352 = vrot.slane %v8351, 4
      %v8353 = vadd.f32 %v8351, %v8352
      %v8354 = vrot.slane %v8353, 2
      %v8355 = vadd.f32 %v8353, %v8354
      %v8356 = vrot.slane %v8355, 1
      %v8357 = vadd.f32 %v8355, %v8356
      %v8358 = vsel %vm8147, %v8113, 0.0
      %v8359 = vrot.slane %v8358, 4
      %v8360 = vadd.f32 %v8358, %v8359
      %v8361 = vrot.slane %v8360, 2
      %v8362 = vadd.f32 %v8360, %v8361
      %v8363 = vrot.slane %v8362, 1
      %v8364 = vadd.f32 %v8362, %v8363
      %v8365 = vsel %vm8147, %v8114, 0.0
      %v8366 = vrot.slane %v8365, 4
      %v8367 = vadd.f32 %v8365, %v8366
      %v8368 = vrot.slane %v8367, 2
      %v8369 = vadd.f32 %v8367, %v8368
      %v8370 = vrot.slane %v8369, 1
      %v8371 = vadd.f32 %v8369, %v8370
      %v8372 = vsel %vm8147, %v8115, 0.0
      %v8373 = vrot.slane %v8372, 4
      %v8374 = vadd.f32 %v8372, %v8373
      %v8375 = vrot.slane %v8374, 2
      %v8376 = vadd.f32 %v8374, %v8375
      %v8377 = vrot.slane %v8376, 1
      %v8378 = vadd.f32 %v8376, %v8377
      %v8379 = vsel %vm8147, %v8116, 0.0
      %v8380 = vrot.slane %v8379, 4
      %v8381 = vadd.f32 %v8379, %v8380
      %v8382 = vrot.slane %v8381, 2
      %v8383 = vadd.f32 %v8381, %v8382
      %v8384 = vrot.slane %v8383, 1
      %v8385 = vadd.f32 %v8383, %v8384
      %v8386 = vsel %vm8147, %v8117, 0.0
      %v8387 = vrot.slane %v8386, 4
      %v8388 = vadd.f32 %v8386, %v8387
      %v8389 = vrot.slane %v8388, 2
      %v8390 = vadd.f32 %v8388, %v8389
      %v8391 = vrot.slane %v8390, 1
      %v8392 = vadd.f32 %v8390, %v8391
      %v8393 = vsel %vm8147, %v8118, 0.0
      %v8394 = vrot.slane %v8393, 4
      %v8395 = vadd.f32 %v8393, %v8394
      %v8396 = vrot.slane %v8395, 2
      %v8397 = vadd.f32 %v8395, %v8396
      %v8398 = vrot.slane %v8397, 1
      %v8399 = vadd.f32 %v8397, %v8398
      %v8400 = vsel %vm8147, %v8119, 0.0
      %v8401 = vrot.slane %v8400, 4
      %v8402 = vadd.f32 %v8400, %v8401
      %v8403 = vrot.slane %v8402, 2
      %v8404 = vadd.f32 %v8402, %v8403
      %v8405 = vrot.slane %v8404, 1
      %v8406 = vadd.f32 %v8404, %v8405
      %v8407 = vsel %vm8147, %v8120, 0.0
      %v8408 = vrot.slane %v8407, 4
      %v8409 = vadd.f32 %v8407, %v8408
      %v8410 = vrot.slane %v8409, 2
      %v8411 = vadd.f32 %v8409, %v8410
      %v8412 = vrot.slane %v8411, 1
      %v8413 = vadd.f32 %v8411, %v8412
      %v8414 = vsel %vm8147, %v8121, 0.0
      %v8415 = vrot.slane %v8414, 4
      %v8416 = vadd.f32 %v8414, %v8415
      %v8417 = vrot.slane %v8416, 2
      %v8418 = vadd.f32 %v8416, %v8417
      %v8419 = vrot.slane %v8418, 1
      %v8420 = vadd.f32 %v8418, %v8419
      %v8421 = vsel %vm8147, %v8122, 0.0
      %v8422 = vrot.slane %v8421, 4
      %v8423 = vadd.f32 %v8421, %v8422
      %v8424 = vrot.slane %v8423, 2
      %v8425 = vadd.f32 %v8423, %v8424
      %v8426 = vrot.slane %v8425, 1
      %v8427 = vadd.f32 %v8425, %v8426
      %v8428 = vsel %vm8147, %v8123, 0.0
      %v8429 = vrot.slane %v8428, 4
      %v8430 = vadd.f32 %v8428, %v8429
      %v8431 = vrot.slane %v8430, 2
      %v8432 = vadd.f32 %v8430, %v8431
      %v8433 = vrot.slane %v8432, 1
      %v8434 = vadd.f32 %v8432, %v8433
      %v8435 = vsel %vm8147, %v8124, 0.0
      %v8436 = vrot.slane %v8435, 4
      %v8437 = vadd.f32 %v8435, %v8436
      %v8438 = vrot.slane %v8437, 2
      %v8439 = vadd.f32 %v8437, %v8438
      %v8440 = vrot.slane %v8439, 1
      %v8441 = vadd.f32 %v8439, %v8440
      %v8442 = vsel %vm8147, %v8125, 0.0
      %v8443 = vrot.slane %v8442, 4
      %v8444 = vadd.f32 %v8442, %v8443
      %v8445 = vrot.slane %v8444, 2
      %v8446 = vadd.f32 %v8444, %v8445
      %v8447 = vrot.slane %v8446, 1
      %v8448 = vadd.f32 %v8446, %v8447
      %v8449 = vsel %vm8147, %v8126, 0.0
      %v8450 = vrot.slane %v8449, 4
      %v8451 = vadd.f32 %v8449, %v8450
      %v8452 = vrot.slane %v8451, 2
      %v8453 = vadd.f32 %v8451, %v8452
      %v8454 = vrot.slane %v8453, 1
      %v8455 = vadd.f32 %v8453, %v8454
      %v8456 = vsel %vm8147, %v8127, 0.0
      %v8457 = vrot.slane %v8456, 4
      %v8458 = vadd.f32 %v8456, %v8457
      %v8459 = vrot.slane %v8458, 2
      %v8460 = vadd.f32 %v8458, %v8459
      %v8461 = vrot.slane %v8460, 1
      %v8462 = vadd.f32 %v8460, %v8461
      %v8463 = vsel %vm8147, %v8128, 0.0
      %v8464 = vrot.slane %v8463, 4
      %v8465 = vadd.f32 %v8463, %v8464
      %v8466 = vrot.slane %v8465, 2
      %v8467 = vadd.f32 %v8465, %v8466
      %v8468 = vrot.slane %v8467, 1
      %v8469 = vadd.f32 %v8467, %v8468
      %v8470 = vsel %vm8147, %v8129, 0.0
      %v8471 = vrot.slane %v8470, 4
      %v8472 = vadd.f32 %v8470, %v8471
      %v8473 = vrot.slane %v8472, 2
      %v8474 = vadd.f32 %v8472, %v8473
      %v8475 = vrot.slane %v8474, 1
      %v8476 = vadd.f32 %v8474, %v8475
      %v8477 = vsel %vm8147, %v8130, 0.0
      %v8478 = vrot.slane %v8477, 4
      %v8479 = vadd.f32 %v8477, %v8478
      %v8480 = vrot.slane %v8479, 2
      %v8481 = vadd.f32 %v8479, %v8480
      %v8482 = vrot.slane %v8481, 1
      %v8483 = vadd.f32 %v8481, %v8482
      %v8484 = vsel %vm8147, %v8131, 0.0
      %v8485 = vrot.slane %v8484, 4
      %v8486 = vadd.f32 %v8484, %v8485
      %v8487 = vrot.slane %v8486, 2
      %v8488 = vadd.f32 %v8486, %v8487
      %v8489 = vrot.slane %v8488, 1
      %v8490 = vadd.f32 %v8488, %v8489
      %v8491 = vsel %vm8147, %v8132, 0.0
      %v8492 = vrot.slane %v8491, 4
      %v8493 = vadd.f32 %v8491, %v8492
      %v8494 = vrot.slane %v8493, 2
      %v8495 = vadd.f32 %v8493, %v8494
      %v8496 = vrot.slane %v8495, 1
      %v8497 = vadd.f32 %v8495, %v8496
      %v8498 = vsel %vm8147, %v8133, 0.0
      %v8499 = vrot.slane %v8498, 4
      %v8500 = vadd.f32 %v8498, %v8499
      %v8501 = vrot.slane %v8500, 2
      %v8502 = vadd.f32 %v8500, %v8501
      %v8503 = vrot.slane %v8502, 1
      %v8504 = vadd.f32 %v8502, %v8503
      %v8505 = vsel %vm8147, %v8134, 0.0
      %v8506 = vrot.slane %v8505, 4
      %v8507 = vadd.f32 %v8505, %v8506
      %v8508 = vrot.slane %v8507, 2
      %v8509 = vadd.f32 %v8507, %v8508
      %v8510 = vrot.slane %v8509, 1
      %v8511 = vadd.f32 %v8509, %v8510
      %v8512 = vsel %vm8147, %v8135, 0.0
      %v8513 = vrot.slane %v8512, 4
      %v8514 = vadd.f32 %v8512, %v8513
      %v8515 = vrot.slane %v8514, 2
      %v8516 = vadd.f32 %v8514, %v8515
      %v8517 = vrot.slane %v8516, 1
      %v8518 = vadd.f32 %v8516, %v8517
      %v8519 = vsel %vm8147, %v8136, 0.0
      %v8520 = vrot.slane %v8519, 4
      %v8521 = vadd.f32 %v8519, %v8520
      %v8522 = vrot.slane %v8521, 2
      %v8523 = vadd.f32 %v8521, %v8522
      %v8524 = vrot.slane %v8523, 1
      %v8525 = vadd.f32 %v8523, %v8524
      %v8526 = vsel %vm8147, %v8137, 0.0
      %v8527 = vrot.slane %v8526, 4
      %v8528 = vadd.f32 %v8526, %v8527
      %v8529 = vrot.slane %v8528, 2
      %v8530 = vadd.f32 %v8528, %v8529
      %v8531 = vrot.slane %v8530, 1
      %v8532 = vadd.f32 %v8530, %v8531
      %v8533 = vsel %vm8147, %v8138, 0.0
      %v8534 = vrot.slane %v8533, 4
      %v8535 = vadd.f32 %v8533, %v8534
      %v8536 = vrot.slane %v8535, 2
      %v8537 = vadd.f32 %v8535, %v8536
      %v8538 = vrot.slane %v8537, 1
      %v8539 = vadd.f32 %v8537, %v8538
      %v8540 = vsel %vm8147, %v8139, 0.0
      %v8541 = vrot.slane %v8540, 4
      %v8542 = vadd.f32 %v8540, %v8541
      %v8543 = vrot.slane %v8542, 2
      %v8544 = vadd.f32 %v8542, %v8543
      %v8545 = vrot.slane %v8544, 1
      %v8546 = vadd.f32 %v8544, %v8545
      %v8547 = vsel %vm8147, %v8140, 0.0
      %v8548 = vrot.slane %v8547, 4
      %v8549 = vadd.f32 %v8547, %v8548
      %v8550 = vrot.slane %v8549, 2
      %v8551 = vadd.f32 %v8549, %v8550
      %v8552 = vrot.slane %v8551, 1
      %v8553 = vadd.f32 %v8551, %v8552
      %v8554 = vsel %vm8147, %v8141, 0.0
      %v8555 = vrot.slane %v8554, 4
      %v8556 = vadd.f32 %v8554, %v8555
      %v8557 = vrot.slane %v8556, 2
      %v8558 = vadd.f32 %v8556, %v8557
      %v8559 = vrot.slane %v8558, 1
      %v8560 = vadd.f32 %v8558, %v8559
      %v8561 = vsel %vm8147, %v8142, 0.0
      %v8562 = vrot.slane %v8561, 4
      %v8563 = vadd.f32 %v8561, %v8562
      %v8564 = vrot.slane %v8563, 2
      %v8565 = vadd.f32 %v8563, %v8564
      %v8566 = vrot.slane %v8565, 1
      %v8567 = vadd.f32 %v8565, %v8566
      %v8568 = vsel %vm8147, %v8143, 0.0
      %v8569 = vrot.slane %v8568, 4
      %v8570 = vadd.f32 %v8568, %v8569
      %v8571 = vrot.slane %v8570, 2
      %v8572 = vadd.f32 %v8570, %v8571
      %v8573 = vrot.slane %v8572, 1
      %v8574 = vadd.f32 %v8572, %v8573
      %v8575 = vsel %vm8147, %v8144, 0.0
      %v8576 = vrot.slane %v8575, 4
      %v8577 = vadd.f32 %v8575, %v8576
      %v8578 = vrot.slane %v8577, 2
      %v8579 = vadd.f32 %v8577, %v8578
      %v8580 = vrot.slane %v8579, 1
      %v8581 = vadd.f32 %v8579, %v8580
      %v8582 = vsel %vm8147, %v8145, 0.0
      %v8583 = vrot.slane %v8582, 4
      %v8584 = vadd.f32 %v8582, %v8583
      %v8585 = vrot.slane %v8584, 2
      %v8586 = vadd.f32 %v8584, %v8585
      %v8587 = vrot.slane %v8586, 1
      %v8588 = vadd.f32 %v8586, %v8587
      %v8589 = vsel %vm8147, %v8146, 0.0
      %v8590 = vrot.slane %v8589, 4
      %v8591 = vadd.f32 %v8589, %v8590
      %v8592 = vrot.slane %v8591, 2
      %v8593 = vadd.f32 %v8591, %v8592
      %v8594 = vrot.slane %v8593, 1
      %v8595 = vadd.f32 %v8593, %v8594
      %v8596 = vpack.c.bf16 %v8154, %v8154
      %v8597 = vpack.c.bf16 %v8161, %v8161
      %v8598 = vpack.c.bf16 %v8168, %v8168
      %v8599 = vpack.c.bf16 %v8175, %v8175
      %v8600 = vpack.c.bf16 %v8182, %v8182
      %v8601 = vpack.c.bf16 %v8189, %v8189
      %v8602 = vpack.c.bf16 %v8196, %v8196
      %v8603 = vpack.c.bf16 %v8203, %v8203
      %v8604 = vpack.c.bf16 %v8210, %v8210
      %v8605 = vpack.c.bf16 %v8217, %v8217
      %v8606 = vpack.c.bf16 %v8224, %v8224
      %v8607 = vpack.c.bf16 %v8231, %v8231
      %v8608 = vpack.c.bf16 %v8238, %v8238
      %v8609 = vpack.c.bf16 %v8245, %v8245
      %v8610 = vpack.c.bf16 %v8252, %v8252
      %v8611 = vpack.c.bf16 %v8259, %v8259
      %v8612 = vpack.c.bf16 %v8266, %v8266
      %v8613 = vpack.c.bf16 %v8273, %v8273
      %v8614 = vpack.c.bf16 %v8280, %v8280
      %v8615 = vpack.c.bf16 %v8287, %v8287
      %v8616 = vpack.c.bf16 %v8294, %v8294
      %v8617 = vpack.c.bf16 %v8301, %v8301
      %v8618 = vpack.c.bf16 %v8308, %v8308
      %v8619 = vpack.c.bf16 %v8315, %v8315
      %v8620 = vpack.c.bf16 %v8322, %v8322
      %v8621 = vpack.c.bf16 %v8329, %v8329
      %v8622 = vpack.c.bf16 %v8336, %v8336
      %v8623 = vpack.c.bf16 %v8343, %v8343
      %v8624 = vpack.c.bf16 %v8350, %v8350
      %v8625 = vpack.c.bf16 %v8357, %v8357
      %v8626 = vpack.c.bf16 %v8364, %v8364
      %v8627 = vpack.c.bf16 %v8371, %v8371
      %v8628 = vpack.c.bf16 %v8378, %v8378
      %v8629 = vpack.c.bf16 %v8385, %v8385
      %v8630 = vpack.c.bf16 %v8392, %v8392
      %v8631 = vpack.c.bf16 %v8399, %v8399
      %v8632 = vpack.c.bf16 %v8406, %v8406
      %v8633 = vpack.c.bf16 %v8413, %v8413
      %v8634 = vpack.c.bf16 %v8420, %v8420
      %v8635 = vpack.c.bf16 %v8427, %v8427
      %v8636 = vpack.c.bf16 %v8434, %v8434
      %v8637 = vpack.c.bf16 %v8441, %v8441
      %v8638 = vpack.c.bf16 %v8448, %v8448
      %v8639 = vpack.c.bf16 %v8455, %v8455
      %v8640 = vpack.c.bf16 %v8462, %v8462
      %v8641 = vpack.c.bf16 %v8469, %v8469
      %v8642 = vpack.c.bf16 %v8476, %v8476
      %v8643 = vpack.c.bf16 %v8483, %v8483
      %v8644 = vpack.c.bf16 %v8490, %v8490
      %v8645 = vpack.c.bf16 %v8497, %v8497
      %v8646 = vpack.c.bf16 %v8504, %v8504
      %v8647 = vpack.c.bf16 %v8511, %v8511
      %v8648 = vpack.c.bf16 %v8518, %v8518
      %v8649 = vpack.c.bf16 %v8525, %v8525
      %v8650 = vpack.c.bf16 %v8532, %v8532
      %v8651 = vpack.c.bf16 %v8539, %v8539
      %v8652 = vpack.c.bf16 %v8546, %v8546
      %v8653 = vpack.c.bf16 %v8553, %v8553
      %v8654 = vpack.c.bf16 %v8560, %v8560
      %v8655 = vpack.c.bf16 %v8567, %v8567
      %v8656 = vpack.c.bf16 %v8574, %v8574
      %v8657 = vpack.c.bf16 %v8581, %v8581
      %v8658 = vpack.c.bf16 %v8588, %v8588
      %v8659 = vpack.c.bf16 %v8595, %v8595
      %v8660 = vld [vmem:[%s11] sm:$0xff]
      %v8661 = vld [vmem:[%s11 + $0x8] sm:$0xff]
      %v8662 = vld [vmem:[%s11 + $0x10] sm:$0xff]
      %v8663 = vld [vmem:[%s11 + $0x18] sm:$0xff]
      %v8664 = vld [vmem:[%s12] sm:$0x3]
      %v8666 = vlaneseq
      %v8667 = vshrl.u32 %v8666, 7
      %v8668 = vsub.s32 0, %v8667
      %v8669 = vrot.slane %v8664, %v8668
      %v8670 = vlaneseq
      %v8671 = vshrl.u32 %v8670, 7
      %v8672 = vsub.s32 1, %v8671
      %v8673 = vrot.slane %v8664, %v8672
      %v8740 = vunpack.c.l.b16 %v8596
      %v8741 = vunpack.c.l.b16 %v8597
      %v8742 = vunpack.c.l.b16 %v8598
      %v8743 = vunpack.c.l.b16 %v8599
      %v8744 = vunpack.c.l.b16 %v8600
      %v8745 = vunpack.c.l.b16 %v8601
      %v8746 = vunpack.c.l.b16 %v8602
      %v8747 = vunpack.c.l.b16 %v8603
      %v8748 = vunpack.c.l.b16 %v8604
      %v8749 = vunpack.c.l.b16 %v8605
      %v8750 = vunpack.c.l.b16 %v8606
      %v8751 = vunpack.c.l.b16 %v8607
      %v8752 = vunpack.c.l.b16 %v8608
      %v8753 = vunpack.c.l.b16 %v8609
      %v8754 = vunpack.c.l.b16 %v8610
      %v8755 = vunpack.c.l.b16 %v8611
      %v8756 = vunpack.c.l.b16 %v8612
      %v8757 = vunpack.c.l.b16 %v8613
      %v8758 = vunpack.c.l.b16 %v8614
      %v8759 = vunpack.c.l.b16 %v8615
      %v8760 = vunpack.c.l.b16 %v8616
      %v8761 = vunpack.c.l.b16 %v8617
      %v8762 = vunpack.c.l.b16 %v8618
      %v8763 = vunpack.c.l.b16 %v8619
      %v8764 = vunpack.c.l.b16 %v8620
      %v8765 = vunpack.c.l.b16 %v8621
      %v8766 = vunpack.c.l.b16 %v8622
      %v8767 = vunpack.c.l.b16 %v8623
      %v8768 = vunpack.c.l.b16 %v8624
      %v8769 = vunpack.c.l.b16 %v8625
      %v8770 = vunpack.c.l.b16 %v8626
      %v8771 = vunpack.c.l.b16 %v8627
      %v8772 = vunpack.c.l.b16 %v8628
      %v8773 = vunpack.c.l.b16 %v8629
      %v8774 = vunpack.c.l.b16 %v8630
      %v8775 = vunpack.c.l.b16 %v8631
      %v8776 = vunpack.c.l.b16 %v8632
      %v8777 = vunpack.c.l.b16 %v8633
      %v8778 = vunpack.c.l.b16 %v8634
      %v8779 = vunpack.c.l.b16 %v8635
      %v8780 = vunpack.c.l.b16 %v8636
      %v8781 = vunpack.c.l.b16 %v8637
      %v8782 = vunpack.c.l.b16 %v8638
      %v8783 = vunpack.c.l.b16 %v8639
      %v8784 = vunpack.c.l.b16 %v8640
      %v8785 = vunpack.c.l.b16 %v8641
      %v8786 = vunpack.c.l.b16 %v8642
      %v8787 = vunpack.c.l.b16 %v8643
      %v8788 = vunpack.c.l.b16 %v8644
      %v8789 = vunpack.c.l.b16 %v8645
      %v8790 = vunpack.c.l.b16 %v8646
      %v8791 = vunpack.c.l.b16 %v8647
      %v8792 = vunpack.c.l.b16 %v8648
      %v8793 = vunpack.c.l.b16 %v8649
      %v8794 = vunpack.c.l.b16 %v8650
      %v8795 = vunpack.c.l.b16 %v8651
      %v8796 = vunpack.c.l.b16 %v8652
      %v8797 = vunpack.c.l.b16 %v8653
      %v8798 = vunpack.c.l.b16 %v8654
      %v8799 = vunpack.c.l.b16 %v8655
      %v8800 = vunpack.c.l.b16 %v8656
      %v8801 = vunpack.c.l.b16 %v8657
      %v8802 = vunpack.c.l.b16 %v8658
      %v8803 = vunpack.c.l.b16 %v8659
      %vm8804 = vcmask 1041409
      %v8805 = vsel %vm8804, %v8741, %v8740
      %vm8806 = vcmask 1042434
      %v8807 = vsel %vm8806, %v8742, %v8805
      %vm8808 = vcmask 1043459
      %v8809 = vsel %vm8808, %v8743, %v8807
      %vm8810 = vcmask 1044484
      %v8811 = vsel %vm8810, %v8744, %v8809
      %vm8812 = vcmask 1045509
      %v8813 = vsel %vm8812, %v8745, %v8811
      %vm8814 = vcmask 1046534
      %v8815 = vsel %vm8814, %v8746, %v8813
      %vm8816 = vcmask 1047559
      %v8817 = vsel %vm8816, %v8747, %v8815
      %v8818 = vsel %vm8804, %v8749, %v8748
      %v8819 = vsel %vm8806, %v8750, %v8818
      %v8820 = vsel %vm8808, %v8751, %v8819
      %v8821 = vsel %vm8810, %v8752, %v8820
      %v8822 = vsel %vm8812, %v8753, %v8821
      %v8823 = vsel %vm8814, %v8754, %v8822
      %v8824 = vsel %vm8816, %v8755, %v8823
      %v8825 = vsel %vm8804, %v8757, %v8756
      %v8826 = vsel %vm8806, %v8758, %v8825
      %v8827 = vsel %vm8808, %v8759, %v8826
      %v8828 = vsel %vm8810, %v8760, %v8827
      %v8829 = vsel %vm8812, %v8761, %v8828
      %v8830 = vsel %vm8814, %v8762, %v8829
      %v8831 = vsel %vm8816, %v8763, %v8830
      %v8832 = vsel %vm8804, %v8765, %v8764
      %v8833 = vsel %vm8806, %v8766, %v8832
      %v8834 = vsel %vm8808, %v8767, %v8833
      %v8835 = vsel %vm8810, %v8768, %v8834
      %v8836 = vsel %vm8812, %v8769, %v8835
      %v8837 = vsel %vm8814, %v8770, %v8836
      %v8838 = vsel %vm8816, %v8771, %v8837
      %v8839 = vsel %vm8804, %v8773, %v8772
      %v8840 = vsel %vm8806, %v8774, %v8839
      %v8841 = vsel %vm8808, %v8775, %v8840
      %v8842 = vsel %vm8810, %v8776, %v8841
      %v8843 = vsel %vm8812, %v8777, %v8842
      %v8844 = vsel %vm8814, %v8778, %v8843
      %v8845 = vsel %vm8816, %v8779, %v8844
      %v8846 = vsel %vm8804, %v8781, %v8780
      %v8847 = vsel %vm8806, %v8782, %v8846
      %v8848 = vsel %vm8808, %v8783, %v8847
      %v8849 = vsel %vm8810, %v8784, %v8848
      %v8850 = vsel %vm8812, %v8785, %v8849
      %v8851 = vsel %vm8814, %v8786, %v8850
      %v8852 = vsel %vm8816, %v8787, %v8851
      %v8853 = vsel %vm8804, %v8789, %v8788
      %v8854 = vsel %vm8806, %v8790, %v8853
      %v8855 = vsel %vm8808, %v8791, %v8854
      %v8856 = vsel %vm8810, %v8792, %v8855
      %v8857 = vsel %vm8812, %v8793, %v8856
      %v8858 = vsel %vm8814, %v8794, %v8857
      %v8859 = vsel %vm8816, %v8795, %v8858
      %v8860 = vsel %vm8804, %v8797, %v8796
      %v8861 = vsel %vm8806, %v8798, %v8860
      %v8862 = vsel %vm8808, %v8799, %v8861
      %v8863 = vsel %vm8810, %v8800, %v8862
      %v8864 = vsel %vm8812, %v8801, %v8863
      %v8865 = vsel %vm8814, %v8802, %v8864
      %v8866 = vsel %vm8816, %v8803, %v8865
      %v8867 = vpack.c.b16 %v8824, %v8817
      %v8868 = vpack.c.b16 %v8838, %v8831
      %v8869 = vpack.c.b16 %v8852, %v8845
      %v8870 = vpack.c.b16 %v8866, %v8859
      %8871 = vrot.lane.b32.xlu0 %v8867, 64
      %v8872 = vpop.permute.xlu0 %8871
      %8873 = vrot.lane.b32.xlu0 %v8868, 64
      %v8874 = vpop.permute.xlu0 %8873
      %8875 = vrot.lane.b32.xlu0 %v8869, 64
      %v8876 = vpop.permute.xlu0 %8875
      %8877 = vrot.lane.b32.xlu0 %v8870, 64
      %v8878 = vpop.permute.xlu0 %8877
      %v8883 = vunpack.c.l.b16 %v8660
      %v8884 = vunpack.c.h.b16 %v8660
      %v8885 = vunpack.c.l.b16 %v8661
      %v8886 = vunpack.c.h.b16 %v8661
      %v8887 = vunpack.c.l.b16 %v8662
      %v8888 = vunpack.c.h.b16 %v8662
      %v8889 = vunpack.c.l.b16 %v8663
      %v8890 = vunpack.c.h.b16 %v8663
      %v8891 = vpack.c.b16 %v8885, %v8883
      %v8892 = vpack.c.b16 %v8886, %v8884
      %v8893 = vpack.c.b16 %v8889, %v8887
      %v8894 = vpack.c.b16 %v8890, %v8888
      %v8900 = vsel %vm1830, %v8872, 0
      %v8903 = vsel %vm1830, %v8874, 0
      %v8906 = vsel %vm1830, %v8876, 0
      %v8909 = vsel %vm1830, %v8878, 0
      %8911 = vmatprep.subr.bf16.mxu0 %v8892
      %8912 = vmatpush1.bf16.msra.mxu0 %v8891
      %8913 = vmatprep.subr.bf16.mxu0 %v8894
      %8914 = vmatpush1.bf16.msra.mxu0 %v8893
      %8915 = vmatprep.subr.bf16.mxu0 0
      %8916 = vmatpush1.bf16.msra.mxu0 0
      %8917 = vmatprep.subr.bf16.mxu0 0
      %8918 = vmatpush1.bf16.msra.mxu0 0
      %8919 = vmatprep.subr.bf16.mxu0 0
      %8920 = vmatpush1.bf16.msra.mxu0 0
      %8921 = vmatprep.subr.bf16.mxu0 0
      %8922 = vmatpush1.bf16.msra.mxu0 0
      %8923 = vmatprep.subr.bf16.mxu0 0
      %8924 = vmatpush1.bf16.msra.mxu0 0
      %8925 = vmatprep.subr.bf16.mxu0 0
      %8926 = vmatpush1.bf16.msra.mxu0 0
      %8927 = vmatprep.subr.bf16.mxu0 0
      %8928 = vmatpush1.bf16.msra.mxu0 0
      %8929 = vmatprep.subr.bf16.mxu0 0
      %8930 = vmatpush1.bf16.msra.mxu0 0
      %8931 = vmatprep.subr.bf16.mxu0 0
      %8932 = vmatpush1.bf16.msra.mxu0 0
      %8933 = vmatprep.subr.bf16.mxu0 0
      %8934 = vmatpush1.bf16.msra.mxu0 0
      %8935 = vmatprep.subr.bf16.mxu0 0
      %8936 = vmatpush1.bf16.msra.mxu0 0
      %8937 = vmatprep.subr.bf16.mxu0 0
      %8938 = vmatpush1.bf16.msra.mxu0 0
      %8939 = vmatprep.subr.bf16.mxu0 0
      %8940 = vmatpush1.bf16.msra.mxu0 0
      %8941 = vmatprep.subr.bf16.mxu0 0
      %8942 = vmatpush1.bf16.msra.mxu0 0
      %8943 = vmatprep.mubr.bf16.mxu0 0
      %8944 = vmatmul.mubr.bf16.gmra.mrb[0].mxu0 %v8900
      %v8945 = vpop.f32.mrb[0].mxu0
      %v8946 = vadd.f32 %v8669, %v8945
      %v8947 = vpop.f32.mrb[0].mxu0
      %v8948 = vadd.f32 %v8673, %v8947
      %v8949 = vpop.f32.mrb[0].mxu0
      %v8950 = vadd.f32 %v8669, %v8949
      %v8951 = vpop.f32.mrb[0].mxu0
      %v8952 = vadd.f32 %v8673, %v8951
      %8953 = vmatprep.mubr.bf16.mxu0 0
      %8954 = vmatmul.mubr.bf16.gmra.mrb[0].mxu0 %v8903
      %v8955 = vpop.f32.mrb[0].mxu0
      %v8956 = vadd.f32 %v8669, %v8955
      %v8957 = vpop.f32.mrb[0].mxu0
      %v8958 = vadd.f32 %v8673, %v8957
      %v8959 = vpop.f32.mrb[0].mxu0
      %v8960 = vadd.f32 %v8669, %v8959
      %v8961 = vpop.f32.mrb[0].mxu0
      %v8962 = vadd.f32 %v8673, %v8961
      %8963 = vmatprep.mubr.bf16.mxu0 0
      %8964 = vmatmul.mubr.bf16.gmra.mrb[0].mxu0 %v8906
      %v8965 = vpop.f32.mrb[0].mxu0
      %v8966 = vadd.f32 %v8669, %v8965
      %v8967 = vpop.f32.mrb[0].mxu0
      %v8968 = vadd.f32 %v8673, %v8967
      %v8969 = vpop.f32.mrb[0].mxu0
      %v8970 = vadd.f32 %v8669, %v8969
      %v8971 = vpop.f32.mrb[0].mxu0
      %v8972 = vadd.f32 %v8673, %v8971
      %8973 = vmatprep.mubr.bf16.mxu0 0
      %8974 = vmatmul.mubr.bf16.gmra.mrb[0].mxu0 %v8909
      %v8975 = vpop.f32.mrb[0].mxu0
      %v8976 = vadd.f32 %v8669, %v8975
      %v8977 = vpop.f32.mrb[0].mxu0
      %v8978 = vadd.f32 %v8673, %v8977
      %v8979 = vpop.f32.mrb[0].mxu0
      %v8980 = vadd.f32 %v8669, %v8979
      %v8981 = vpop.f32.mrb[0].mxu0
      %v8982 = vadd.f32 %v8673, %v8981
      %8983 = vdwg.mxu0
      %v8984 = vmax.f32 %v8946, 0.0
      %v8985 = vmax.f32 %v8948, 0.0
      %v8986 = vmax.f32 %v8950, 0.0
      %v8987 = vmax.f32 %v8952, 0.0
      %v8988 = vmax.f32 %v8956, 0.0
      %v8989 = vmax.f32 %v8958, 0.0
      %v8990 = vmax.f32 %v8960, 0.0
      %v8991 = vmax.f32 %v8962, 0.0
      %v8992 = vmax.f32 %v8966, 0.0
      %v8993 = vmax.f32 %v8968, 0.0
      %v8994 = vmax.f32 %v8970, 0.0
      %v8995 = vmax.f32 %v8972, 0.0
      %v8996 = vmax.f32 %v8976, 0.0
      %v8997 = vmax.f32 %v8978, 0.0
      %v8998 = vmax.f32 %v8980, 0.0
      %v8999 = vmax.f32 %v8982, 0.0
      %v9000 = vpack.c.bf16 %v8986, %v8984
      %v9001 = vpack.c.bf16 %v8987, %v8985
      %v9002 = vpack.c.bf16 %v8990, %v8988
      %v9003 = vpack.c.bf16 %v8991, %v8989
      %v9004 = vpack.c.bf16 %v8994, %v8992
      %v9005 = vpack.c.bf16 %v8995, %v8993
      %v9006 = vpack.c.bf16 %v8998, %v8996
      %v9007 = vpack.c.bf16 %v8999, %v8997
      %v9008 = vld [vmem:[%s13] sm:$0xf]
      %v9009 = vld [vmem:[%s13 + $0x4] sm:$0xf]
      %v9010 = vld [vmem:[%s13 + $0x8] sm:$0xf]
      %v9011 = vld [vmem:[%s13 + $0xc] sm:$0xf]
      %v9012 = vld [vmem:[%s13 + $0x10] sm:$0xf]
      %v9013 = vld [vmem:[%s13 + $0x14] sm:$0xf]
      %v9014 = vld [vmem:[%s13 + $0x18] sm:$0xf]
      %v9015 = vld [vmem:[%s13 + $0x1c] sm:$0xf]
      %v9016 = vld [vmem:[%s13 + $0x20] sm:$0xf]
      %v9017 = vld [vmem:[%s13 + $0x24] sm:$0xf]
      %v9018 = vld [vmem:[%s13 + $0x28] sm:$0xf]
      %v9019 = vld [vmem:[%s13 + $0x2c] sm:$0xf]
      %v9020 = vld [vmem:[%s13 + $0x30] sm:$0xf]
      %v9021 = vld [vmem:[%s13 + $0x34] sm:$0xf]
      %v9022 = vld [vmem:[%s13 + $0x38] sm:$0xf]
      %v9023 = vld [vmem:[%s13 + $0x3c] sm:$0xf]
      %v9024 = vld [vmem:[%s13 + $0x40] sm:$0xf]
      %v9025 = vld [vmem:[%s13 + $0x44] sm:$0xf]
      %v9026 = vld [vmem:[%s13 + $0x48] sm:$0xf]
      %v9027 = vld [vmem:[%s13 + $0x4c] sm:$0xf]
      %v9028 = vld [vmem:[%s13 + $0x50] sm:$0xf]
      %v9029 = vld [vmem:[%s13 + $0x54] sm:$0xf]
      %v9030 = vld [vmem:[%s13 + $0x58] sm:$0xf]
      %v9031 = vld [vmem:[%s13 + $0x5c] sm:$0xf]
      %v9032 = vld [vmem:[%s13 + $0x60] sm:$0xf]
      %v9033 = vld [vmem:[%s13 + $0x64] sm:$0xf]
      %v9034 = vld [vmem:[%s13 + $0x68] sm:$0xf]
      %v9035 = vld [vmem:[%s13 + $0x6c] sm:$0xf]
      %v9036 = vld [vmem:[%s13 + $0x70] sm:$0xf]
      %v9037 = vld [vmem:[%s13 + $0x74] sm:$0xf]
      %v9038 = vld [vmem:[%s13 + $0x78] sm:$0xf]
      %v9039 = vld [vmem:[%s13 + $0x7c] sm:$0xf]
      %v9040 = vld [vmem:[%s14] sm:$0x1]
      %v9042 = vlaneseq
      %v9043 = vshrl.u32 %v9042, 7
      %v9044 = vsub.s32 0, %v9043
      %v9045 = vrot.slane %v9040, %v9044
      %v9079 = vunpack.c.l.b16 %v9008
      %v9080 = vunpack.c.l.b16 %v9009
      %v9081 = vunpack.c.l.b16 %v9010
      %v9082 = vunpack.c.l.b16 %v9011
      %v9083 = vunpack.c.l.b16 %v9012
      %v9084 = vunpack.c.l.b16 %v9013
      %v9085 = vunpack.c.l.b16 %v9014
      %v9086 = vunpack.c.l.b16 %v9015
      %v9087 = vunpack.c.l.b16 %v9016
      %v9088 = vunpack.c.l.b16 %v9017
      %v9089 = vunpack.c.l.b16 %v9018
      %v9090 = vunpack.c.l.b16 %v9019
      %v9091 = vunpack.c.l.b16 %v9020
      %v9092 = vunpack.c.l.b16 %v9021
      %v9093 = vunpack.c.l.b16 %v9022
      %v9094 = vunpack.c.l.b16 %v9023
      %v9095 = vunpack.c.l.b16 %v9024
      %v9096 = vunpack.c.l.b16 %v9025
      %v9097 = vunpack.c.l.b16 %v9026
      %v9098 = vunpack.c.l.b16 %v9027
      %v9099 = vunpack.c.l.b16 %v9028
      %v9100 = vunpack.c.l.b16 %v9029
      %v9101 = vunpack.c.l.b16 %v9030
      %v9102 = vunpack.c.l.b16 %v9031
      %v9103 = vunpack.c.l.b16 %v9032
      %v9104 = vunpack.c.l.b16 %v9033
      %v9105 = vunpack.c.l.b16 %v9034
      %v9106 = vunpack.c.l.b16 %v9035
      %v9107 = vunpack.c.l.b16 %v9036
      %v9108 = vunpack.c.l.b16 %v9037
      %v9109 = vunpack.c.l.b16 %v9038
      %v9110 = vunpack.c.l.b16 %v9039
      %v9111 = vpack.c.b16 %v9080, %v9079
      %v9112 = vpack.c.b16 %v9082, %v9081
      %v9113 = vpack.c.b16 %v9084, %v9083
      %v9114 = vpack.c.b16 %v9086, %v9085
      %v9115 = vpack.c.b16 %v9088, %v9087
      %v9116 = vpack.c.b16 %v9090, %v9089
      %v9117 = vpack.c.b16 %v9092, %v9091
      %v9118 = vpack.c.b16 %v9094, %v9093
      %v9119 = vpack.c.b16 %v9096, %v9095
      %v9120 = vpack.c.b16 %v9098, %v9097
      %v9121 = vpack.c.b16 %v9100, %v9099
      %v9122 = vpack.c.b16 %v9102, %v9101
      %v9123 = vpack.c.b16 %v9104, %v9103
      %v9124 = vpack.c.b16 %v9106, %v9105
      %v9125 = vpack.c.b16 %v9108, %v9107
      %v9126 = vpack.c.b16 %v9110, %v9109
      %9143 = vmatprep.subr.bf16.mxu0 0
      %9144 = vmatpush1.bf16.msra.mxu0 %v9111
      %9145 = vmatprep.subr.bf16.mxu0 0
      %9146 = vmatpush1.bf16.msra.mxu0 %v9112
      %9147 = vmatprep.subr.bf16.mxu0 0
      %9148 = vmatpush1.bf16.msra.mxu0 %v9113
      %9149 = vmatprep.subr.bf16.mxu0 0
      %9150 = vmatpush1.bf16.msra.mxu0 %v9114
      %9151 = vmatprep.subr.bf16.mxu0 0
      %9152 = vmatpush1.bf16.msra.mxu0 %v9115
      %9153 = vmatprep.subr.bf16.mxu0 0
      %9154 = vmatpush1.bf16.msra.mxu0 %v9116
      %9155 = vmatprep.subr.bf16.mxu0 0
      %9156 = vmatpush1.bf16.msra.mxu0 %v9117
      %9157 = vmatprep.subr.bf16.mxu0 0
      %9158 = vmatpush1.bf16.msra.mxu0 %v9118
      %9159 = vmatprep.subr.bf16.mxu0 0
      %9160 = vmatpush1.bf16.msra.mxu0 %v9119
      %9161 = vmatprep.subr.bf16.mxu0 0
      %9162 = vmatpush1.bf16.msra.mxu0 %v9120
      %9163 = vmatprep.subr.bf16.mxu0 0
      %9164 = vmatpush1.bf16.msra.mxu0 %v9121
      %9165 = vmatprep.subr.bf16.mxu0 0
      %9166 = vmatpush1.bf16.msra.mxu0 %v9122
      %9167 = vmatprep.subr.bf16.mxu0 0
      %9168 = vmatpush1.bf16.msra.mxu0 %v9123
      %9169 = vmatprep.subr.bf16.mxu0 0
      %9170 = vmatpush1.bf16.msra.mxu0 %v9124
      %9171 = vmatprep.subr.bf16.mxu0 0
      %9172 = vmatpush1.bf16.msra.mxu0 %v9125
      %9173 = vmatprep.subr.bf16.mxu0 0
      %9174 = vmatpush1.bf16.msra.mxu0 %v9126
      %9175 = vmatprep.mubr.bf16.mxu0 %v9001
      %9176 = vmatmul.mubr.bf16.gmra.mrb[0].mxu0 %v9000
      %v9177 = vpop.f32.mrb[0].mxu0
      %v9178 = vadd.f32 %v9045, %v9177
      %v9179 = vpop.f32.mrb[0].mxu0
      %v9180 = vpop.f32.mrb[0].mxu0
      %v9181 = vadd.f32 %v9045, %v9180
      %v9182 = vpop.f32.mrb[0].mxu0
      %9183 = vmatprep.mubr.bf16.mxu0 %v9003
      %9184 = vmatmul.mubr.bf16.gmra.mrb[0].mxu0 %v9002
      %v9185 = vpop.f32.mrb[0].mxu0
      %v9186 = vadd.f32 %v9045, %v9185
      %v9187 = vpop.f32.mrb[0].mxu0
      %v9188 = vpop.f32.mrb[0].mxu0
      %v9189 = vadd.f32 %v9045, %v9188
      %v9190 = vpop.f32.mrb[0].mxu0
      %9191 = vmatprep.mubr.bf16.mxu0 %v9005
      %9192 = vmatmul.mubr.bf16.gmra.mrb[0].mxu0 %v9004
      %v9193 = vpop.f32.mrb[0].mxu0
      %v9194 = vadd.f32 %v9045, %v9193
      %v9195 = vpop.f32.mrb[0].mxu0
      %v9196 = vpop.f32.mrb[0].mxu0
      %v9197 = vadd.f32 %v9045, %v9196
      %v9198 = vpop.f32.mrb[0].mxu0
      %9199 = vmatprep.mubr.bf16.mxu0 %v9007
      %9200 = vmatmul.mubr.bf16.gmra.mrb[0].mxu0 %v9006
      %v9201 = vpop.f32.mrb[0].mxu0
      %v9202 = vadd.f32 %v9045, %v9201
      %v9203 = vpop.f32.mrb[0].mxu0
      %v9204 = vpop.f32.mrb[0].mxu0
      %v9205 = vadd.f32 %v9045, %v9204
      %v9206 = vpop.f32.mrb[0].mxu0
      %9207 = vdwg.mxu0
      %vm9208 = vcmp.lt.s32.totalorder %v6601, 4
      %v9209 = vmax.f32 %v9178, -20.0
      %v9210 = vmax.f32 %v9181, -20.0
      %v9211 = vmax.f32 %v9186, -20.0
      %v9212 = vmax.f32 %v9189, -20.0
      %v9213 = vmax.f32 %v9194, -20.0
      %v9214 = vmax.f32 %v9197, -20.0
      %v9215 = vmax.f32 %v9202, -20.0
      %v9216 = vmax.f32 %v9205, -20.0
      %v9217 = vmin.f32 %v9209, 2.0
      %v9218 = vmin.f32 %v9210, 2.0
      %v9219 = vmin.f32 %v9211, 2.0
      %v9220 = vmin.f32 %v9212, 2.0
      %v9221 = vmin.f32 %v9213, 2.0
      %v9222 = vmin.f32 %v9214, 2.0
      %v9223 = vmin.f32 %v9215, 2.0
      %v9224 = vmin.f32 %v9216, 2.0
      %v9225 = vsel %vm9208, %v9178, %v9217
      %v9226 = vsel %vm9208, %v9181, %v9218
      %v9227 = vsel %vm9208, %v9186, %v9219
      %v9228 = vsel %vm9208, %v9189, %v9220
      %v9229 = vsel %vm9208, %v9194, %v9221
      %v9230 = vsel %vm9208, %v9197, %v9222
      %v9231 = vsel %vm9208, %v9202, %v9223
      %v9232 = vsel %vm9208, %v9205, %v9224
      %9233 = vst.msk [vmem:[%s496] sm:$0xff] %vm6669, %v9225
      %9234 = vst.msk [vmem:[%s496 + $0x8] sm:$0xff] %vm6669, %v9226
      %9235 = vst.msk [vmem:[%s496 + $0x10] sm:$0xff] %vm6669, %v9227
      %9236 = vst.msk [vmem:[%s496 + $0x18] sm:$0xff] %vm6669, %v9228
      %9237 = vst.msk [vmem:[%s496 + $0x20] sm:$0xff] %vm6669, %v9229
      %9238 = vst.msk [vmem:[%s496 + $0x28] sm:$0xff] %vm6669, %v9230
      %9239 = vst.msk [vmem:[%s496 + $0x30] sm:$0xff] %vm6669, %v9231
      %9240 = vst.msk [vmem:[%s496 + $0x38] sm:$0xff] %vm6669, %v9232
      %s9241 = smul.u32 8, %s26
      %p9242 = scmp.lt.s32.totalorder %s9241, 15
      %s9243 = scalar_select %p9242, %s9241, 15
      %s9244 = smul.addr %s9243, 8
      %s9245 = scalar_lea.vmem %s15, %s9244
      // Predicated region
      $region81: #{tpu_custom_call.1} parent=79 // pred_check
        %p9246 = pneg %p364
      $region82: #{tpu_custom_call.1} parent=79 // pred_check_branch
        %9248 = sbr.rel (%p9246) target = $region84
      $region83: #{tpu_custom_call.1} parent=79 // pred_region
        %s9249 = smul.u32 8, %s26
      $region84: #{tpu_custom_call.1} parent=79 // pred_fallthru
        _
    $region80: #{tpu_custom_call.1} parent=5 // pred_fallthru
      _
    %p9250 = scmp.le.s32.totalorder 2, %s21
    // Predicated region
    $region85: #{tpu_custom_call.1} parent=5 // pred_check
      %p9251 = pneg %p9250
    $region86: #{tpu_custom_call.1} parent=5 // pred_check_branch
      %9253 = sbr.rel (%p9251) target = $region88
    $region87: #{tpu_custom_call.1} parent=5 // pred_region
      %s9254 = ssub.s32 %s21, 2
      // Predicated region
      $region89: #{tpu_custom_call.1} parent=87 // pred_check
        %p9255 = pneg %p370
      $region90: #{tpu_custom_call.1} parent=87 // pred_check_branch
        %9257 = sbr.rel (%p9255) target = $region92
      $region91: #{tpu_custom_call.1} parent=87 // pred_region
        %s9258 = smul.u32 8, %s27
        %p9259 = scmp.lt.s32.totalorder %s9258, 15
        %s9260 = scalar_select %p9259, %s9258, 15
        %s9261 = smul.addr %s9260, 8
        %s9262 = scalar_lea.vmem %s15, %s9261
      $region92: #{tpu_custom_call.1} parent=87 // pred_fallthru
        _
    $region88: #{tpu_custom_call.1} parent=5 // pred_fallthru
      _
  $region6: #{tpu_custom_call.1} parent=0 // loop_footer
    %s25 = sadd.s32 1, %s21
  $region7: #{tpu_custom_call.1} parent=0 // loop_footer_branch
    %20 = sbr.rel target = $region3
  $region8: #{tpu_custom_call.1} parent=0 // loop_exit
    _

</llo_original>
